<compile_context>
chip_gen: v6e
topology: v6e:2x2x1
jax: 0.10.0
libtpu: 0.0.40
codegen_flags: <defaults>
</compile_context>

<pallas_src>
import functools

import jax
import jax.numpy as jnp
from jax.experimental import pallas as pl
from jax.experimental.pallas import tpu as pltpu


def _round_up(x, m):
    return ((x + m - 1) // m) * m


def _leaky(y):                                     # nn.LeakyReLU (slope 0.01)
    return jnp.where(y > 0, y, 0.01 * y)


def _elu(y):                                       # nn.ELU
    return jnp.where(y > 0, y, jnp.exp(jnp.minimum(y, 0.0)) - 1.0)


# ---------------------------------------------------------------------------
# Fused conv (+ optional fused 2x2 max-pool) kernels, transposed layout.
# Pooled path: one matmul on the concatenated parity patches [P0|P1|P2|P3],
# then max over four lane-aligned slices (LeakyReLU is monotone, so act/pool
# commute).  Output lane dim is padded to a multiple of 128 (lane-dense store).
# ---------------------------------------------------------------------------
def _conv_pool_kernel(p_ref, w_ref, b_ref, o_ref):
    mp = o_ref.shape[1]
    y = jnp.dot(w_ref[...], p_ref[...],
                preferred_element_type=jnp.float32)        # (OC, 4*Mp) f32
    y = jnp.maximum(jnp.maximum(y[:, 0:mp], y[:, mp:2 * mp]),
                    jnp.maximum(y[:, 2 * mp:3 * mp], y[:, 3 * mp:4 * mp]))
    o_ref[...] = _leaky(y + b_ref[...]).astype(o_ref.dtype)


def _conv_kernel(p_ref, w_ref, b_ref, o_ref):
    y = jnp.dot(w_ref[...], p_ref[...],
                preferred_element_type=jnp.float32)
    o_ref[...] = _leaky(y + b_ref[...]).astype(o_ref.dtype)


def conv_stage(p_cat, w2d, bcol, m_pad, *, pooled):
    OC, K = w2d.shape
    kern = _conv_pool_kernel if pooled else _conv_kernel
    return pl.pallas_call(
        kern,
        grid=(1,),
        out_shape=jax.ShapeDtypeStruct((OC, m_pad), jnp.bfloat16),
        in_specs=[
            pl.BlockSpec(p_cat.shape, lambda i: (0, 0)),
            pl.BlockSpec((OC, K), lambda i: (0, 0)),
            pl.BlockSpec((OC, 1), lambda i: (0, 0)),
        ],
        out_specs=pl.BlockSpec((OC, m_pad), lambda i: (0, 0)),
        compiler_params=pltpu.CompilerParams(dimension_semantics=("arbitrary",)),
    )(p_cat, w2d, bcol)


# ---------------------------------------------------------------------------
# Fused head + GRU kernel:
#   fc1(1568->128)+LeakyReLU -> fc2(128->128)+ELU -> x@W_ih^T (+ combined bias)
#   -> full GRU time loop (10 steps), repeat_interleave(5) via frame reuse.
# All matmul operands bf16, accumulation/state/gates f32.
# ---------------------------------------------------------------------------
def _head_gru_kernel(xflat_ref, w1_ref, b1_ref, w2_ref, b2_ref,
                     wih_ref, bih_ref, whh_ref, bhn_ref, h0_ref,
                     out_ref, hout_ref, *, seq, bs, rep):
    H = h0_ref.shape[1]

    y = jnp.dot(xflat_ref[...], w1_ref[...],
                preferred_element_type=jnp.float32) + b1_ref[...]
    y = _leaky(y)                                                 # fc1 + LeakyReLU
    y = jnp.dot(y.astype(jnp.bfloat16), w2_ref[...],
                preferred_element_type=jnp.float32) + b2_ref[...]
    y = _elu(y)                                                   # fc2 + ELU
    gx = jnp.dot(y.astype(jnp.bfloat16), wih_ref[...],
                 preferred_element_type=jnp.float32) + bih_ref[...]   # (N, 3H) f32

    whh = whh_ref[...]            # (H, 3H) bf16
    bhn = bhn_ref[...]            # (1, H)  f32
    h = h0_ref[...]               # (bs, H) f32

    for f in range(seq):                              # outer: original frames
        gxt = gx[f * bs:(f + 1) * bs, :]
        gr = gxt[:, 0:H]
        gz = gxt[:, H:2 * H]
        gn = gxt[:, 2 * H:3 * H]
        for j in range(rep):                          # inner: 5 repeats / frame
            gh = jnp.dot(h.astype(jnp.bfloat16), whh,
                         preferred_element_type=jnp.float32)
            r = jax.nn.sigmoid(gr + gh[:, 0:H])
            z = jax.nn.sigmoid(gz + gh[:, H:2 * H])
            n = jnp.tanh(gn + r * (gh[:, 2 * H:3 * H] + bhn))
            h = (1.0 - z) * n + z * h
            out_ref[f * rep + j] = h
    hout_ref[...] = h


def head_gru(xflat, w1t, b1, w2t, b2, wiht, bihc, whht, bhn, h0, *, seq, bs, rep=5):
    N, K1 = xflat.shape
    D = w1t.shape[1]
    G = wiht.shape[1]
    H = h0.shape[1]
    T = rep * seq
    kern = functools.partial(_head_gru_kernel, seq=seq, bs=bs, rep=rep)
    return pl.pallas_call(
        kern,
        grid=(1,),
        out_shape=(jax.ShapeDtypeStruct((T, bs, H), jnp.float32),
                   jax.ShapeDtypeStruct((bs, H), jnp.float32)),
        in_specs=[
            pl.BlockSpec((N, K1), lambda i: (0, 0)),
            pl.BlockSpec((K1, D), lambda i: (0, 0)),
            pl.BlockSpec((1, D), lambda i: (0, 0)),
            pl.BlockSpec((D, D), lambda i: (0, 0)),
            pl.BlockSpec((1, D), lambda i: (0, 0)),
            pl.BlockSpec((D, G), lambda i: (0, 0)),
            pl.BlockSpec((1, G), lambda i: (0, 0)),
            pl.BlockSpec((H, G), lambda i: (0, 0)),
            pl.BlockSpec((1, H), lambda i: (0, 0)),
            pl.BlockSpec((bs, H), lambda i: (0, 0)),
        ],
        out_specs=(pl.BlockSpec((T, bs, H), lambda i: (0, 0, 0)),
                   pl.BlockSpec((bs, H), lambda i: (0, 0))),
        compiler_params=pltpu.CompilerParams(dimension_semantics=("arbitrary",)),
    )(xflat, w1t, b1, w2t, b2, wiht, bihc, whht, bhn, h0)


# ---------------------------------------------------------------------------
# XLA glue: im2col patch extraction (static strided slices), bf16, padded to a
# multiple of 128 lanes.  K order (ic, di, dj), M order (n, y, x).
# ---------------------------------------------------------------------------
def _pooled_patch_cat(x_chw, kh, kw, ph, pw, m_pad):
    """Concatenated [P0|P1|P2|P3] (K, 4*m_pad); max_p(W @ P_p) == pool(conv)."""
    IC, N, H, W = x_chw.shape
    m = N * ph * pw
    cache = {}

    def sl(a, b):
        if (a, b) not in cache:
            cache[(a, b)] = x_chw[:, :, a:a + 2 * ph - 1:2, b:b + 2 * pw - 1:2]
        return cache[(a, b)]

    parts = []
    for py in range(2):
        for px in range(2):
            taps = [sl(py + di, px + dj) for di in range(kh) for dj in range(kw)]
            p = jnp.stack(taps, axis=1).reshape(IC * kh * kw, m)
            parts.append(jnp.pad(p, ((0, 0), (0, m_pad - m))))
    return jnp.concatenate(parts, axis=1)


def _patch_mat(x_chw, kh, kw, m_pad):
    IC, N, H, W = x_chw.shape
    oh, ow = H - kh + 1, W - kw + 1
    m = N * oh * ow
    taps = [x_chw[:, :, di:di + oh, dj:dj + ow]
            for di in range(kh) for dj in range(kw)]
    p = jnp.stack(taps, axis=1).reshape(IC * kh * kw, m)
    return jnp.pad(p, ((0, 0), (0, m_pad - m))), oh, ow


# ---------------------------------------------------------------------------
# Parameters (torch layout) + one-time preprocessing (transposes / bf16 casts).
# ---------------------------------------------------------------------------
def init_params(key):
    ks = jax.random.split(key, 14)

    def rnd(k, shape, scale=0.05):
        return (scale * jax.random.normal(k, shape)).astype(jnp.float32)

    return {
        "conv1_w": rnd(ks[0], (16, 1, 5, 5)),   "conv1_b": rnd(ks[1], (16,)),
        "conv2_w": rnd(ks[2], (32, 16, 4, 4)),  "conv2_b": rnd(ks[3], (32,)),
        "conv3_w": rnd(ks[4], (32, 32, 3, 3)),  "conv3_b": rnd(ks[5], (32,)),
        "fc1_w":   rnd(ks[6], (128, 1568)),     "fc1_b":   rnd(ks[7], (128,)),
        "fc2_w":   rnd(ks[8], (128, 128)),      "fc2_b":   rnd(ks[9], (128,)),
        "gru_w_ih": rnd(ks[10], (768, 128)),    "gru_b_ih": rnd(ks[11], (768,)),
        "gru_w_hh": rnd(ks[12], (768, 256)),    "gru_b_hh": rnd(ks[13], (768,)),
    }


def prepare_params(p):
    """Reshape/transpose/cast all weights once, outside the forward."""
    H = 256
    b_hh = p["gru_b_hh"]
    # Fold b_hr / b_hz into the input-projection bias (valid: they appear as a
    # plain additive term).  b_hn must stay inside r*(W_hn h + b_hn), kept apart.
    bih_comb = jnp.concatenate([p["gru_b_ih"][:2 * H] + b_hh[:2 * H],
                                p["gru_b_ih"][2 * H:]])
    bf16 = jnp.bfloat16
    return {
        "conv1_w2d": p["conv1_w"].reshape(16, 25).astype(bf16),
        "conv1_bcol": p["conv1_b"].reshape(16, 1),
        "conv2_w2d": p["conv2_w"].reshape(32, 256).astype(bf16),
        "conv2_bcol": p["conv2_b"].reshape(32, 1),
        "conv3_w2d": p["conv3_w"].reshape(32, 288).astype(bf16),
        "conv3_bcol": p["conv3_b"].reshape(32, 1),
        "fc1_wt": p["fc1_w"].T.astype(bf16),   "fc1_brow": p["fc1_b"].reshape(1, 128),
        "fc2_wt": p["fc2_w"].T.astype(bf16),   "fc2_brow": p["fc2_b"].reshape(1, 128),
        "gru_wih_t": p["gru_w_ih"].T.astype(bf16),
        "gru_bih_comb": bih_comb.reshape(1, 768),
        "gru_whh_t": p["gru_w_hh"].T.astype(bf16),
        "gru_bhn_row": b_hh[2 * H:].reshape(1, 256),
    }


# ---------------------------------------------------------------------------
# Full forward (matches ExtraCorpusQMemory.forward with augment=False)
# ---------------------------------------------------------------------------
def extra_corpus_q_memory_forward(params, x, hidden_in):
    bs, seql, H, W = x.shape
    N = bs * seql

    # Frames ordered (seq, batch) so the head output groups straight into GRU
    # per-frame slices.  bf16 before patch extraction halves the glue traffic.
    frames = x.transpose(1, 0, 2, 3).reshape(1, N, H, W).astype(jnp.bfloat16)

    # conv1(5x5,1->16) + LeakyReLU + MaxPool2d(2), fused
    ph1, pw1 = (H - 4) // 2, (W - 4) // 2
    m1 = N * ph1 * pw1
    m1p = _round_up(m1, 128)
    p1 = _pooled_patch_cat(frames, 5, 5, ph1, pw1, m1p)
    h1 = conv_stage(p1, params["conv1_w2d"], params["conv1_bcol"], m1p, pooled=True)
    h1 = h1[:, :m1].reshape(16, N, ph1, pw1)

    # conv2(4x4,16->32) + LeakyReLU + MaxPool2d(2), fused
    ph2, pw2 = (ph1 - 3) // 2, (pw1 - 3) // 2
    m2 = N * ph2 * pw2
    m2p = _round_up(m2, 128)
    p2 = _pooled_patch_cat(h1, 4, 4, ph2, pw2, m2p)
    h2 = conv_stage(p2, params["conv2_w2d"], params["conv2_bcol"], m2p, pooled=True)
    h2 = h2[:, :m2].reshape(32, N, ph2, pw2)

    # conv3(3x3,32->32) + LeakyReLU
    m3p = _round_up(N * (ph2 - 2) * (pw2 - 2), 128)
    p3, oh3, ow3 = _patch_mat(h2, 3, 3, m3p)
    m3 = N * oh3 * ow3
    h3 = conv_stage(p3, params["conv3_w2d"], params["conv3_bcol"], m3p, pooled=False)
    h3 = h3[:, :m3].reshape(32, N, oh3, ow3)

    # Flatten in torch channel-major order -> (N, 1568) bf16.
    xflat = h3.transpose(1, 0, 2, 3).reshape(N, 32 * oh3 * ow3)

    # Fused fc1/fc2/ELU + GRU input projection + full GRU time loop.
    out_tbh, h_final = head_gru(
        xflat, params["fc1_wt"], params["fc1_brow"],
        params["fc2_wt"], params["fc2_brow"],
        params["gru_wih_t"], params["gru_bih_comb"],
        params["gru_whh_t"], params["gru_bhn_row"],
        hidden_in[0], seq=seql, bs=bs)

    time_latent = out_tbh.transpose(1, 0, 2)          # (bs, 5*seq, 256)
    hidden_out = h_final[None, :, :]                  # (1, bs, 256)
    return time_latent, hidden_out

# TODO(synk): augment path (random_cutout / random_noise / random_shift) is not
# exercised by the forward (augment=False default) and is not implemented.


if __name__ == "__main__":
    key = jax.random.PRNGKey(0)
    kp, kx, kh = jax.random.split(key, 3)
    params = prepare_params(init_params(kp))

    # 48x48 inputs -> 7x7x32 = 1568 after the conv stack, matching Linear(1568, 128)
    bs, seql, H, W = 2, 2, 48, 48
    x = jax.random.normal(kx, (bs, seql, H, W), dtype=jnp.float32)
    hidden_in = jax.random.normal(kh, (1, bs, 256), dtype=jnp.float32)

    fwd = jax.jit(extra_corpus_q_memory_forward)
    time_latent, hidden_out = fwd(params, x, hidden_in)
    jax.block_until_ready((time_latent, hidden_out))

    assert time_latent.shape == (bs, 5 * seql, 256), time_latent.shape
    assert hidden_out.shape == (1, bs, 256), hidden_out.shape
    assert time_latent.dtype == jnp.float32 and hidden_out.dtype == jnp.float32
    print("KERNEL_OK")
</pallas_src>

<mosaic_0001>
module attributes {stable_mosaic.version = 11 : i64} {
  func.func @_conv_pool_kernel(%arg0: i32, %arg1: memref<25x8192xbf16, #tpu.memory_space<vmem>>, %arg2: memref<16x25xbf16, #tpu.memory_space<vmem>>, %arg3: memref<16x1xf32, #tpu.memory_space<vmem>>, %arg4: memref<16x2048xbf16, #tpu.memory_space<vmem>>) attributes {dimension_semantics = [#tpu.dimension_semantics<arbitrary>], iteration_bounds = array<i64: 1>, scalar_prefetch = 0 : i64, scratch_operands = 0 : i64, tpu.core_type = #tpu.core_type<tc>, window_params = [{pipeline_mode = #tpu.pipeline_mode<synchronous>, transform_indices = @transform_0, window_bounds = array<i64: 25, 8192>}, {pipeline_mode = #tpu.pipeline_mode<synchronous>, transform_indices = @transform_1, window_bounds = array<i64: 16, 25>}, {pipeline_mode = #tpu.pipeline_mode<synchronous>, transform_indices = @transform_2, window_bounds = array<i64: 16, 1>}, {pipeline_mode = #tpu.pipeline_mode<synchronous>, transform_indices = @transform_3, window_bounds = array<i64: 16, 2048>}]} {
    %c0 = arith.constant 0 : index
    %c0_0 = arith.constant 0 : index
    %0 = vector.load %arg2[%c0, %c0_0] : memref<16x25xbf16, #tpu.memory_space<vmem>>, vector<16x25xbf16>
    %c0_1 = arith.constant 0 : index
    %c0_2 = arith.constant 0 : index
    %1 = vector.load %arg1[%c0_1, %c0_2] : memref<25x8192xbf16, #tpu.memory_space<vmem>>, vector<25x8192xbf16>
    %cst = arith.constant dense<0.000000e+00> : vector<16x8192xf32>
    %2 = tpu.matmul %0, %1, %cst {dimension_numbers = #tpu.dot_dimension_numbers<[1], [0], [0], [1], [0, 0, 1, 1], [], []>} : vector<16x25xbf16>, vector<25x8192xbf16>, vector<16x8192xf32> -> vector<16x8192xf32>
    %3 = vector.extract_strided_slice %2 {offsets = [0, 0], sizes = [16, 2048], strides = [1, 1]} : vector<16x8192xf32> to vector<16x2048xf32>
    %4 = vector.extract_strided_slice %2 {offsets = [0, 2048], sizes = [16, 2048], strides = [1, 1]} : vector<16x8192xf32> to vector<16x2048xf32>
    %5 = arith.maximumf %3, %4 : vector<16x2048xf32>
    %6 = vector.extract_strided_slice %2 {offsets = [0, 4096], sizes = [16, 2048], strides = [1, 1]} : vector<16x8192xf32> to vector<16x2048xf32>
    %7 = vector.extract_strided_slice %2 {offsets = [0, 6144], sizes = [16, 2048], strides = [1, 1]} : vector<16x8192xf32> to vector<16x2048xf32>
    %8 = arith.maximumf %6, %7 : vector<16x2048xf32>
    %9 = arith.maximumf %5, %8 : vector<16x2048xf32>
    %c0_3 = arith.constant 0 : index
    %c0_4 = arith.constant 0 : index
    %10 = vector.load %arg3[%c0_3, %c0_4] : memref<16x1xf32, #tpu.memory_space<vmem>>, vector<16x1xf32>
    %11 = vector.broadcast %10 : vector<16x1xf32> to vector<16x2048xf32>
    %12 = arith.addf %9, %11 : vector<16x2048xf32>
    %cst_5 = arith.constant 0.000000e+00 : f32
    %13 = vector.broadcast %cst_5 : f32 to vector<16x2048xf32>
    %14 = arith.cmpf ogt, %12, %13 : vector<16x2048xf32>
    %cst_6 = arith.constant 0.00999999977 : f32
    %15 = vector.broadcast %cst_6 : f32 to vector<16x2048xf32>
    %16 = arith.mulf %15, %12 : vector<16x2048xf32>
    %17 = arith.select %14, %12, %16 : vector<16x2048xi1>, vector<16x2048xf32>
    %18 = arith.truncf %17 : vector<16x2048xf32> to vector<16x2048xbf16>
    %c0_7 = arith.constant 0 : index
    %c0_8 = arith.constant 0 : index
    %19 = vector.load %arg4[%c0_7, %c0_8] : memref<16x2048xbf16, #tpu.memory_space<vmem>>, vector<16x2048xbf16>
    tpu.vector_store %arg4[%c0_7, %c0_8], %18 {strides = array<i32>} : memref<16x2048xbf16, #tpu.memory_space<vmem>>, vector<16x2048xbf16>,
    return
  }
  func.func @transform_0(%arg0: i32) -> (i32, i32) {
    %c0_i32 = arith.constant 0 : i32
    %c0_i32_0 = arith.constant 0 : i32
    %c0_i32_1 = arith.constant 0 : i32
    return %c0_i32, %c0_i32_0 : i32, i32
  }
  func.func @transform_1(%arg0: i32) -> (i32, i32) {
    %c0_i32 = arith.constant 0 : i32
    %c0_i32_0 = arith.constant 0 : i32
    %c0_i32_1 = arith.constant 0 : i32
    return %c0_i32, %c0_i32_0 : i32, i32
  }
  func.func @transform_2(%arg0: i32) -> (i32, i32) {
    %c0_i32 = arith.constant 0 : i32
    %c0_i32_0 = arith.constant 0 : i32
    %c0_i32_1 = arith.constant 0 : i32
    return %c0_i32, %c0_i32_0 : i32, i32
  }
  func.func @transform_3(%arg0: i32) -> (i32, i32) {
    %c0_i32 = arith.constant 0 : i32
    %c0_i32_0 = arith.constant 0 : i32
    %c0_i32_1 = arith.constant 0 : i32
    return %c0_i32, %c0_i32_0 : i32, i32
  }
}

module attributes {stable_mosaic.version = 11 : i64} {
  func.func @_conv_pool_kernel(%arg0: i32, %arg1: memref<256x1536xbf16, #tpu.memory_space<vmem>>, %arg2: memref<32x256xbf16, #tpu.memory_space<vmem>>, %arg3: memref<32x1xf32, #tpu.memory_space<vmem>>, %arg4: memref<32x384xbf16, #tpu.memory_space<vmem>>) attributes {dimension_semantics = [#tpu.dimension_semantics<arbitrary>], iteration_bounds = array<i64: 1>, scalar_prefetch = 0 : i64, scratch_operands = 0 : i64, tpu.core_type = #tpu.core_type<tc>, window_params = [{pipeline_mode = #tpu.pipeline_mode<synchronous>, transform_indices = @transform_0, window_bounds = array<i64: 256, 1536>}, {pipeline_mode = #tpu.pipeline_mode<synchronous>, transform_indices = @transform_1, window_bounds = array<i64: 32, 256>}, {pipeline_mode = #tpu.pipeline_mode<synchronous>, transform_indices = @transform_2, window_bounds = array<i64: 32, 1>}, {pipeline_mode = #tpu.pipeline_mode<synchronous>, transform_indices = @transform_3, window_bounds = array<i64: 32, 384>}]} {
    %c0 = arith.constant 0 : index
    %c0_0 = arith.constant 0 : index
    %0 = vector.load %arg2[%c0, %c0_0] : memref<32x256xbf16, #tpu.memory_space<vmem>>, vector<32x256xbf16>
    %c0_1 = arith.constant 0 : index
    %c0_2 = arith.constant 0 : index
    %1 = vector.load %arg1[%c0_1, %c0_2] : memref<256x1536xbf16, #tpu.memory_space<vmem>>, vector<256x1536xbf16>
    %cst = arith.constant dense<0.000000e+00> : vector<32x1536xf32>
    %2 = tpu.matmul %0, %1, %cst {dimension_numbers = #tpu.dot_dimension_numbers<[1], [0], [0], [1], [0, 0, 1, 1], [], []>} : vector<32x256xbf16>, vector<256x1536xbf16>, vector<32x1536xf32> -> vector<32x1536xf32>
    %3 = vector.extract_strided_slice %2 {offsets = [0, 0], sizes = [32, 384], strides = [1, 1]} : vector<32x1536xf32> to vector<32x384xf32>
    %4 = vector.extract_strided_slice %2 {offsets = [0, 384], sizes = [32, 384], strides = [1, 1]} : vector<32x1536xf32> to vector<32x384xf32>
    %5 = arith.maximumf %3, %4 : vector<32x384xf32>
    %6 = vector.extract_strided_slice %2 {offsets = [0, 768], sizes = [32, 384], strides = [1, 1]} : vector<32x1536xf32> to vector<32x384xf32>
    %7 = vector.extract_strided_slice %2 {offsets = [0, 1152], sizes = [32, 384], strides = [1, 1]} : vector<32x1536xf32> to vector<32x384xf32>
    %8 = arith.maximumf %6, %7 : vector<32x384xf32>
    %9 = arith.maximumf %5, %8 : vector<32x384xf32>
    %c0_3 = arith.constant 0 : index
    %c0_4 = arith.constant 0 : index
    %10 = vector.load %arg3[%c0_3, %c0_4] : memref<32x1xf32, #tpu.memory_space<vmem>>, vector<32x1xf32>
    %11 = vector.broadcast %10 : vector<32x1xf32> to vector<32x384xf32>
    %12 = arith.addf %9, %11 : vector<32x384xf32>
    %cst_5 = arith.constant 0.000000e+00 : f32
    %13 = vector.broadcast %cst_5 : f32 to vector<32x384xf32>
    %14 = arith.cmpf ogt, %12, %13 : vector<32x384xf32>
    %cst_6 = arith.constant 0.00999999977 : f32
    %15 = vector.broadcast %cst_6 : f32 to vector<32x384xf32>
    %16 = arith.mulf %15, %12 : vector<32x384xf32>
    %17 = arith.select %14, %12, %16 : vector<32x384xi1>, vector<32x384xf32>
    %18 = arith.truncf %17 : vector<32x384xf32> to vector<32x384xbf16>
    %c0_7 = arith.constant 0 : index
    %c0_8 = arith.constant 0 : index
    %19 = vector.load %arg4[%c0_7, %c0_8] : memref<32x384xbf16, #tpu.memory_space<vmem>>, vector<32x384xbf16>
    tpu.vector_store %arg4[%c0_7, %c0_8], %18 {strides = array<i32>} : memref<32x384xbf16, #tpu.memory_space<vmem>>, vector<32x384xbf16>,
    return
  }
  func.func @transform_0(%arg0: i32) -> (i32, i32) {
    %c0_i32 = arith.constant 0 : i32
    %c0_i32_0 = arith.constant 0 : i32
    %c0_i32_1 = arith.constant 0 : i32
    return %c0_i32, %c0_i32_0 : i32, i32
  }
  func.func @transform_1(%arg0: i32) -> (i32, i32) {
    %c0_i32 = arith.constant 0 : i32
    %c0_i32_0 = arith.constant 0 : i32
    %c0_i32_1 = arith.constant 0 : i32
    return %c0_i32, %c0_i32_0 : i32, i32
  }
  func.func @transform_2(%arg0: i32) -> (i32, i32) {
    %c0_i32 = arith.constant 0 : i32
    %c0_i32_0 = arith.constant 0 : i32
    %c0_i32_1 = arith.constant 0 : i32
    return %c0_i32, %c0_i32_0 : i32, i32
  }
  func.func @transform_3(%arg0: i32) -> (i32, i32) {
    %c0_i32 = arith.constant 0 : i32
    %c0_i32_0 = arith.constant 0 : i32
    %c0_i32_1 = arith.constant 0 : i32
    return %c0_i32, %c0_i32_0 : i32, i32
  }
}

module attributes {stable_mosaic.version = 11 : i64} {
  func.func @_conv_kernel(%arg0: i32, %arg1: memref<288x256xbf16, #tpu.memory_space<vmem>>, %arg2: memref<32x288xbf16, #tpu.memory_space<vmem>>, %arg3: memref<32x1xf32, #tpu.memory_space<vmem>>, %arg4: memref<32x256xbf16, #tpu.memory_space<vmem>>) attributes {dimension_semantics = [#tpu.dimension_semantics<arbitrary>], iteration_bounds = array<i64: 1>, scalar_prefetch = 0 : i64, scratch_operands = 0 : i64, tpu.core_type = #tpu.core_type<tc>, window_params = [{pipeline_mode = #tpu.pipeline_mode<synchronous>, transform_indices = @transform_0, window_bounds = array<i64: 288, 256>}, {pipeline_mode = #tpu.pipeline_mode<synchronous>, transform_indices = @transform_1, window_bounds = array<i64: 32, 288>}, {pipeline_mode = #tpu.pipeline_mode<synchronous>, transform_indices = @transform_2, window_bounds = array<i64: 32, 1>}, {pipeline_mode = #tpu.pipeline_mode<synchronous>, transform_indices = @transform_3, window_bounds = array<i64: 32, 256>}]} {
    %c0 = arith.constant 0 : index
    %c0_0 = arith.constant 0 : index
    %0 = vector.load %arg2[%c0, %c0_0] : memref<32x288xbf16, #tpu.memory_space<vmem>>, vector<32x288xbf16>
    %c0_1 = arith.constant 0 : index
    %c0_2 = arith.constant 0 : index
    %1 = vector.load %arg1[%c0_1, %c0_2] : memref<288x256xbf16, #tpu.memory_space<vmem>>, vector<288x256xbf16>
    %cst = arith.constant dense<0.000000e+00> : vector<32x256xf32>
    %2 = tpu.matmul %0, %1, %cst {dimension_numbers = #tpu.dot_dimension_numbers<[1], [0], [0], [1], [0, 0, 1, 1], [], []>} : vector<32x288xbf16>, vector<288x256xbf16>, vector<32x256xf32> -> vector<32x256xf32>
    %c0_3 = arith.constant 0 : index
    %c0_4 = arith.constant 0 : index
    %3 = vector.load %arg3[%c0_3, %c0_4] : memref<32x1xf32, #tpu.memory_space<vmem>>, vector<32x1xf32>
    %4 = vector.broadcast %3 : vector<32x1xf32> to vector<32x256xf32>
    %5 = arith.addf %2, %4 : vector<32x256xf32>
    %cst_5 = arith.constant 0.000000e+00 : f32
    %6 = vector.broadcast %cst_5 : f32 to vector<32x256xf32>
    %7 = arith.cmpf ogt, %5, %6 : vector<32x256xf32>
    %cst_6 = arith.constant 0.00999999977 : f32
    %8 = vector.broadcast %cst_6 : f32 to vector<32x256xf32>
    %9 = arith.mulf %8, %5 : vector<32x256xf32>
    %10 = arith.select %7, %5, %9 : vector<32x256xi1>, vector<32x256xf32>
    %11 = arith.truncf %10 : vector<32x256xf32> to vector<32x256xbf16>
    %c0_7 = arith.constant 0 : index
    %c0_8 = arith.constant 0 : index
    %12 = vector.load %arg4[%c0_7, %c0_8] : memref<32x256xbf16, #tpu.memory_space<vmem>>, vector<32x256xbf16>
    tpu.vector_store %arg4[%c0_7, %c0_8], %11 {strides = array<i32>} : memref<32x256xbf16, #tpu.memory_space<vmem>>, vector<32x256xbf16>,
    return
  }
  func.func @transform_0(%arg0: i32) -> (i32, i32) {
    %c0_i32 = arith.constant 0 : i32
    %c0_i32_0 = arith.constant 0 : i32
    %c0_i32_1 = arith.constant 0 : i32
    return %c0_i32, %c0_i32_0 : i32, i32
  }
  func.func @transform_1(%arg0: i32) -> (i32, i32) {
    %c0_i32 = arith.constant 0 : i32
    %c0_i32_0 = arith.constant 0 : i32
    %c0_i32_1 = arith.constant 0 : i32
    return %c0_i32, %c0_i32_0 : i32, i32
  }
  func.func @transform_2(%arg0: i32) -> (i32, i32) {
    %c0_i32 = arith.constant 0 : i32
    %c0_i32_0 = arith.constant 0 : i32
    %c0_i32_1 = arith.constant 0 : i32
    return %c0_i32, %c0_i32_0 : i32, i32
  }
  func.func @transform_3(%arg0: i32) -> (i32, i32) {
    %c0_i32 = arith.constant 0 : i32
    %c0_i32_0 = arith.constant 0 : i32
    %c0_i32_1 = arith.constant 0 : i32
    return %c0_i32, %c0_i32_0 : i32, i32
  }
}

module attributes {stable_mosaic.version = 11 : i64} {
  func.func @_head_gru_kernel(%arg0: i32, %arg1: memref<4x1568xbf16, #tpu.memory_space<vmem>>, %arg2: memref<1568x128xbf16, #tpu.memory_space<vmem>>, %arg3: memref<1x128xf32, #tpu.memory_space<vmem>>, %arg4: memref<128x128xbf16, #tpu.memory_space<vmem>>, %arg5: memref<1x128xf32, #tpu.memory_space<vmem>>, %arg6: memref<128x768xbf16, #tpu.memory_space<vmem>>, %arg7: memref<1x768xf32, #tpu.memory_space<vmem>>, %arg8: memref<256x768xbf16, #tpu.memory_space<vmem>>, %arg9: memref<1x256xf32, #tpu.memory_space<vmem>>, %arg10: memref<2x256xf32, #tpu.memory_space<vmem>>, %arg11: memref<10x2x256xf32, #tpu.memory_space<vmem>>, %arg12: memref<2x256xf32, #tpu.memory_space<vmem>>) attributes {dimension_semantics = [#tpu.dimension_semantics<arbitrary>], iteration_bounds = array<i64: 1>, scalar_prefetch = 0 : i64, scratch_operands = 0 : i64, tpu.core_type = #tpu.core_type<tc>, window_params = [{pipeline_mode = #tpu.pipeline_mode<synchronous>, transform_indices = @transform_0, window_bounds = array<i64: 4, 1568>}, {pipeline_mode = #tpu.pipeline_mode<synchronous>, transform_indices = @transform_1, window_bounds = array<i64: 1568, 128>}, {pipeline_mode = #tpu.pipeline_mode<synchronous>, transform_indices = @transform_2, window_bounds = array<i64: 1, 128>}, {pipeline_mode = #tpu.pipeline_mode<synchronous>, transform_indices = @transform_3, window_bounds = array<i64: 128, 128>}, {pipeline_mode = #tpu.pipeline_mode<synchronous>, transform_indices = @transform_4, window_bounds = array<i64: 1, 128>}, {pipeline_mode = #tpu.pipeline_mode<synchronous>, transform_indices = @transform_5, window_bounds = array<i64: 128, 768>}, {pipeline_mode = #tpu.pipeline_mode<synchronous>, transform_indices = @transform_6, window_bounds = array<i64: 1, 768>}, {pipeline_mode = #tpu.pipeline_mode<synchronous>, transform_indices = @transform_7, window_bounds = array<i64: 256, 768>}, {pipeline_mode = #tpu.pipeline_mode<synchronous>, transform_indices = @transform_8, window_bounds = array<i64: 1, 256>}, {pipeline_mode = #tpu.pipeline_mode<synchronous>, transform_indices = @transform_9, window_bounds = array<i64: 2, 256>}, {pipeline_mode = #tpu.pipeline_mode<synchronous>, transform_indices = @transform_10, window_bounds = array<i64: 10, 2, 256>}, {pipeline_mode = #tpu.pipeline_mode<synchronous>, transform_indices = @transform_11, window_bounds = array<i64: 2, 256>}]} {
    %c0 = arith.constant 0 : index
    %c0_0 = arith.constant 0 : index
    %0 = vector.load %arg1[%c0, %c0_0] : memref<4x1568xbf16, #tpu.memory_space<vmem>>, vector<4x1568xbf16>
    %c0_1 = arith.constant 0 : index
    %c0_2 = arith.constant 0 : index
    %1 = vector.load %arg2[%c0_1, %c0_2] : memref<1568x128xbf16, #tpu.memory_space<vmem>>, vector<1568x128xbf16>
    %cst = arith.constant dense<0.000000e+00> : vector<4x128xf32>
    %2 = tpu.matmul %0, %1, %cst {dimension_numbers = #tpu.dot_dimension_numbers<[1], [0], [0], [1], [0, 0, 1, 1], [], []>} : vector<4x1568xbf16>, vector<1568x128xbf16>, vector<4x128xf32> -> vector<4x128xf32>
    %c0_3 = arith.constant 0 : index
    %c0_4 = arith.constant 0 : index
    %3 = vector.load %arg3[%c0_3, %c0_4] : memref<1x128xf32, #tpu.memory_space<vmem>>, vector<1x128xf32>
    %4 = vector.broadcast %3 : vector<1x128xf32> to vector<4x128xf32>
    %5 = arith.addf %2, %4 : vector<4x128xf32>
    %cst_5 = arith.constant 0.000000e+00 : f32
    %6 = vector.broadcast %cst_5 : f32 to vector<4x128xf32>
    %7 = arith.cmpf ogt, %5, %6 : vector<4x128xf32>
    %cst_6 = arith.constant 0.00999999977 : f32
    %8 = vector.broadcast %cst_6 : f32 to vector<4x128xf32>
    %9 = arith.mulf %8, %5 : vector<4x128xf32>
    %10 = arith.select %7, %5, %9 : vector<4x128xi1>, vector<4x128xf32>
    %11 = arith.truncf %10 : vector<4x128xf32> to vector<4x128xbf16>
    %c0_7 = arith.constant 0 : index
    %c0_8 = arith.constant 0 : index
    %12 = vector.load %arg4[%c0_7, %c0_8] : memref<128x128xbf16, #tpu.memory_space<vmem>>, vector<128x128xbf16>
    %cst_9 = arith.constant dense<0.000000e+00> : vector<4x128xf32>
    %13 = tpu.matmul %11, %12, %cst_9 {dimension_numbers = #tpu.dot_dimension_numbers<[1], [0], [0], [1], [0, 0, 1, 1], [], []>} : vector<4x128xbf16>, vector<128x128xbf16>, vector<4x128xf32> -> vector<4x128xf32>
    %c0_10 = arith.constant 0 : index
    %c0_11 = arith.constant 0 : index
    %14 = vector.load %arg5[%c0_10, %c0_11] : memref<1x128xf32, #tpu.memory_space<vmem>>, vector<1x128xf32>
    %15 = vector.broadcast %14 : vector<1x128xf32> to vector<4x128xf32>
    %16 = arith.addf %13, %15 : vector<4x128xf32>
    %cst_12 = arith.constant 0.000000e+00 : f32
    %17 = vector.broadcast %cst_12 : f32 to vector<4x128xf32>
    %18 = arith.cmpf ogt, %16, %17 : vector<4x128xf32>
    %cst_13 = arith.constant 0.000000e+00 : f32
    %19 = vector.broadcast %cst_13 : f32 to vector<4x128xf32>
    %20 = arith.minimumf %16, %19 : vector<4x128xf32>
    %21 = math.exp %20 : vector<4x128xf32>
    %cst_14 = arith.constant 1.000000e+00 : f32
    %22 = vector.broadcast %cst_14 : f32 to vector<4x128xf32>
    %23 = arith.subf %21, %22 : vector<4x128xf32>
    %24 = arith.select %18, %16, %23 : vector<4x128xi1>, vector<4x128xf32>
    %25 = arith.truncf %24 : vector<4x128xf32> to vector<4x128xbf16>
    %c0_15 = arith.constant 0 : index
    %c0_16 = arith.constant 0 : index
    %26 = vector.load %arg6[%c0_15, %c0_16] : memref<128x768xbf16, #tpu.memory_space<vmem>>, vector<128x768xbf16>
    %cst_17 = arith.constant dense<0.000000e+00> : vector<4x768xf32>
    %27 = tpu.matmul %25, %26, %cst_17 {dimension_numbers = #tpu.dot_dimension_numbers<[1], [0], [0], [1], [0, 0, 1, 1], [], []>} : vector<4x128xbf16>, vector<128x768xbf16>, vector<4x768xf32> -> vector<4x768xf32>
    %c0_18 = arith.constant 0 : index
    %c0_19 = arith.constant 0 : index
    %28 = vector.load %arg7[%c0_18, %c0_19] : memref<1x768xf32, #tpu.memory_space<vmem>>, vector<1x768xf32>
    %29 = vector.broadcast %28 : vector<1x768xf32> to vector<4x768xf32>
    %30 = arith.addf %27, %29 : vector<4x768xf32>
    %c0_20 = arith.constant 0 : index
    %c0_21 = arith.constant 0 : index
    %31 = vector.load %arg8[%c0_20, %c0_21] : memref<256x768xbf16, #tpu.memory_space<vmem>>, vector<256x768xbf16>
    %c0_22 = arith.constant 0 : index
    %c0_23 = arith.constant 0 : index
    %32 = vector.load %arg9[%c0_22, %c0_23] : memref<1x256xf32, #tpu.memory_space<vmem>>, vector<1x256xf32>
    %c0_24 = arith.constant 0 : index
    %c0_25 = arith.constant 0 : index
    %33 = vector.load %arg10[%c0_24, %c0_25] : memref<2x256xf32, #tpu.memory_space<vmem>>, vector<2x256xf32>
    %34 = vector.extract_strided_slice %30 {offsets = [0, 0], sizes = [2, 768], strides = [1, 1]} : vector<4x768xf32> to vector<2x768xf32>
    %35 = vector.extract_strided_slice %34 {offsets = [0, 0], sizes = [2, 256], strides = [1, 1]} : vector<2x768xf32> to vector<2x256xf32>
    %36 = vector.extract_strided_slice %34 {offsets = [0, 256], sizes = [2, 256], strides = [1, 1]} : vector<2x768xf32> to vector<2x256xf32>
    %37 = vector.extract_strided_slice %34 {offsets = [0, 512], sizes = [2, 256], strides = [1, 1]} : vector<2x768xf32> to vector<2x256xf32>
    %38 = arith.truncf %33 : vector<2x256xf32> to vector<2x256xbf16>
    %cst_26 = arith.constant dense<0.000000e+00> : vector<2x768xf32>
    %39 = tpu.matmul %38, %31, %cst_26 {dimension_numbers = #tpu.dot_dimension_numbers<[1], [0], [0], [1], [0, 0, 1, 1], [], []>} : vector<2x256xbf16>, vector<256x768xbf16>, vector<2x768xf32> -> vector<2x768xf32>
    %40 = vector.extract_strided_slice %39 {offsets = [0, 0], sizes = [2, 256], strides = [1, 1]} : vector<2x768xf32> to vector<2x256xf32>
    %41 = arith.addf %35, %40 : vector<2x256xf32>
    %42 = arith.negf %41 : vector<2x256xf32>
    %43 = math.exp %42 : vector<2x256xf32>
    %cst_27 = arith.constant 1.000000e+00 : f32
    %44 = vector.broadcast %cst_27 : f32 to vector<2x256xf32>
    %45 = arith.addf %44, %43 : vector<2x256xf32>
    %46 = arith.divf %44, %45 : vector<2x256xf32>
    %47 = vector.extract_strided_slice %39 {offsets = [0, 256], sizes = [2, 256], strides = [1, 1]} : vector<2x768xf32> to vector<2x256xf32>
    %48 = arith.addf %36, %47 : vector<2x256xf32>
    %49 = arith.negf %48 : vector<2x256xf32>
    %50 = math.exp %49 : vector<2x256xf32>
    %cst_28 = arith.constant 1.000000e+00 : f32
    %51 = vector.broadcast %cst_28 : f32 to vector<2x256xf32>
    %52 = arith.addf %51, %50 : vector<2x256xf32>
    %53 = arith.divf %51, %52 : vector<2x256xf32>
    %54 = vector.extract_strided_slice %39 {offsets = [0, 512], sizes = [2, 256], strides = [1, 1]} : vector<2x768xf32> to vector<2x256xf32>
    %55 = vector.broadcast %32 : vector<1x256xf32> to vector<2x256xf32>
    %56 = arith.addf %54, %55 : vector<2x256xf32>
    %57 = arith.mulf %46, %56 : vector<2x256xf32>
    %58 = arith.addf %37, %57 : vector<2x256xf32>
    %59 = math.tanh %58 : vector<2x256xf32>
    %cst_29 = arith.constant 1.000000e+00 : f32
    %60 = vector.broadcast %cst_29 : f32 to vector<2x256xf32>
    %61 = arith.subf %60, %53 : vector<2x256xf32>
    %62 = arith.mulf %61, %59 : vector<2x256xf32>
    %63 = arith.mulf %53, %33 : vector<2x256xf32>
    %64 = arith.addf %62, %63 : vector<2x256xf32>
    %c0_30 = arith.constant 0 : index
    %c0_31 = arith.constant 0 : index
    %c0_32 = arith.constant 0 : index
    %65 = vector.load %arg11[%c0_30, %c0_31, %c0_32] : memref<10x2x256xf32, #tpu.memory_space<vmem>>, vector<1x2x256xf32>
    %66 = vector.shape_cast %65 : vector<1x2x256xf32> to vector<2x256xf32>
    %67 = vector.shape_cast %64 : vector<2x256xf32> to vector<1x2x256xf32>
    tpu.vector_store %arg11[%c0_30, %c0_31, %c0_32], %67 {strides = array<i32>} : memref<10x2x256xf32, #tpu.memory_space<vmem>>, vector<1x2x256xf32>,
    %68 = arith.truncf %64 : vector<2x256xf32> to vector<2x256xbf16>
    %cst_33 = arith.constant dense<0.000000e+00> : vector<2x768xf32>
    %69 = tpu.matmul %68, %31, %cst_33 {dimension_numbers = #tpu.dot_dimension_numbers<[1], [0], [0], [1], [0, 0, 1, 1], [], []>} : vector<2x256xbf16>, vector<256x768xbf16>, vector<2x768xf32> -> vector<2x768xf32>
    %70 = vector.extract_strided_slice %69 {offsets = [0, 0], sizes = [2, 256], strides = [1, 1]} : vector<2x768xf32> to vector<2x256xf32>
    %71 = arith.addf %35, %70 : vector<2x256xf32>
    %72 = arith.negf %71 : vector<2x256xf32>
    %73 = math.exp %72 : vector<2x256xf32>
    %cst_34 = arith.constant 1.000000e+00 : f32
    %74 = vector.broadcast %cst_34 : f32 to vector<2x256xf32>
    %75 = arith.addf %74, %73 : vector<2x256xf32>
    %76 = arith.divf %74, %75 : vector<2x256xf32>
    %77 = vector.extract_strided_slice %69 {offsets = [0, 256], sizes = [2, 256], strides = [1, 1]} : vector<2x768xf32> to vector<2x256xf32>
    %78 = arith.addf %36, %77 : vector<2x256xf32>
    %79 = arith.negf %78 : vector<2x256xf32>
    %80 = math.exp %79 : vector<2x256xf32>
    %cst_35 = arith.constant 1.000000e+00 : f32
    %81 = vector.broadcast %cst_35 : f32 to vector<2x256xf32>
    %82 = arith.addf %81, %80 : vector<2x256xf32>
    %83 = arith.divf %81, %82 : vector<2x256xf32>
    %84 = vector.extract_strided_slice %69 {offsets = [0, 512], sizes = [2, 256], strides = [1, 1]} : vector<2x768xf32> to vector<2x256xf32>
    %85 = vector.broadcast %32 : vector<1x256xf32> to vector<2x256xf32>
    %86 = arith.addf %84, %85 : vector<2x256xf32>
    %87 = arith.mulf %76, %86 : vector<2x256xf32>
    %88 = arith.addf %37, %87 : vector<2x256xf32>
    %89 = math.tanh %88 : vector<2x256xf32>
    %cst_36 = arith.constant 1.000000e+00 : f32
    %90 = vector.broadcast %cst_36 : f32 to vector<2x256xf32>
    %91 = arith.subf %90, %83 : vector<2x256xf32>
    %92 = arith.mulf %91, %89 : vector<2x256xf32>
    %93 = arith.mulf %83, %64 : vector<2x256xf32>
    %94 = arith.addf %92, %93 : vector<2x256xf32>
    %c1 = arith.constant 1 : index
    %c0_37 = arith.constant 0 : index
    %c0_38 = arith.constant 0 : index
    %95 = vector.load %arg11[%c1, %c0_37, %c0_38] : memref<10x2x256xf32, #tpu.memory_space<vmem>>, vector<1x2x256xf32>
    %96 = vector.shape_cast %95 : vector<1x2x256xf32> to vector<2x256xf32>
    %97 = vector.shape_cast %94 : vector<2x256xf32> to vector<1x2x256xf32>
    tpu.vector_store %arg11[%c1, %c0_37, %c0_38], %97 {strides = array<i32>} : memref<10x2x256xf32, #tpu.memory_space<vmem>>, vector<1x2x256xf32>,
    %98 = arith.truncf %94 : vector<2x256xf32> to vector<2x256xbf16>
    %cst_39 = arith.constant dense<0.000000e+00> : vector<2x768xf32>
    %99 = tpu.matmul %98, %31, %cst_39 {dimension_numbers = #tpu.dot_dimension_numbers<[1], [0], [0], [1], [0, 0, 1, 1], [], []>} : vector<2x256xbf16>, vector<256x768xbf16>, vector<2x768xf32> -> vector<2x768xf32>
    %100 = vector.extract_strided_slice %99 {offsets = [0, 0], sizes = [2, 256], strides = [1, 1]} : vector<2x768xf32> to vector<2x256xf32>
    %101 = arith.addf %35, %100 : vector<2x256xf32>
    %102 = arith.negf %101 : vector<2x256xf32>
    %103 = math.exp %102 : vector<2x256xf32>
    %cst_40 = arith.constant 1.000000e+00 : f32
    %104 = vector.broadcast %cst_40 : f32 to vector<2x256xf32>
    %105 = arith.addf %104, %103 : vector<2x256xf32>
    %106 = arith.divf %104, %105 : vector<2x256xf32>
    %107 = vector.extract_strided_slice %99 {offsets = [0, 256], sizes = [2, 256], strides = [1, 1]} : vector<2x768xf32> to vector<2x256xf32>
    %108 = arith.addf %36, %107 : vector<2x256xf32>
    %109 = arith.negf %108 : vector<2x256xf32>
    %110 = math.exp %109 : vector<2x256xf32>
    %cst_41 = arith.constant 1.000000e+00 : f32
    %111 = vector.broadcast %cst_41 : f32 to vector<2x256xf32>
    %112 = arith.addf %111, %110 : vector<2x256xf32>
    %113 = arith.divf %111, %112 : vector<2x256xf32>
    %114 = vector.extract_strided_slice %99 {offsets = [0, 512], sizes = [2, 256], strides = [1, 1]} : vector<2x768xf32> to vector<2x256xf32>
    %115 = vector.broadcast %32 : vector<1x256xf32> to vector<2x256xf32>
    %116 = arith.addf %114, %115 : vector<2x256xf32>
    %117 = arith.mulf %106, %116 : vector<2x256xf32>
    %118 = arith.addf %37, %117 : vector<2x256xf32>
    %119 = math.tanh %118 : vector<2x256xf32>
    %cst_42 = arith.constant 1.000000e+00 : f32
    %120 = vector.broadcast %cst_42 : f32 to vector<2x256xf32>
    %121 = arith.subf %120, %113 : vector<2x256xf32>
    %122 = arith.mulf %121, %119 : vector<2x256xf32>
    %123 = arith.mulf %113, %94 : vector<2x256xf32>
    %124 = arith.addf %122, %123 : vector<2x256xf32>
    %c2 = arith.constant 2 : index
    %c0_43 = arith.constant 0 : index
    %c0_44 = arith.constant 0 : index
    %125 = vector.load %arg11[%c2, %c0_43, %c0_44] : memref<10x2x256xf32, #tpu.memory_space<vmem>>, vector<1x2x256xf32>
    %126 = vector.shape_cast %125 : vector<1x2x256xf32> to vector<2x256xf32>
    %127 = vector.shape_cast %124 : vector<2x256xf32> to vector<1x2x256xf32>
    tpu.vector_store %arg11[%c2, %c0_43, %c0_44], %127 {strides = array<i32>} : memref<10x2x256xf32, #tpu.memory_space<vmem>>, vector<1x2x256xf32>,
    %128 = arith.truncf %124 : vector<2x256xf32> to vector<2x256xbf16>
    %cst_45 = arith.constant dense<0.000000e+00> : vector<2x768xf32>
    %129 = tpu.matmul %128, %31, %cst_45 {dimension_numbers = #tpu.dot_dimension_numbers<[1], [0], [0], [1], [0, 0, 1, 1], [], []>} : vector<2x256xbf16>, vector<256x768xbf16>, vector<2x768xf32> -> vector<2x768xf32>
    %130 = vector.extract_strided_slice %129 {offsets = [0, 0], sizes = [2, 256], strides = [1, 1]} : vector<2x768xf32> to vector<2x256xf32>
    %131 = arith.addf %35, %130 : vector<2x256xf32>
    %132 = arith.negf %131 : vector<2x256xf32>
    %133 = math.exp %132 : vector<2x256xf32>
    %cst_46 = arith.constant 1.000000e+00 : f32
    %134 = vector.broadcast %cst_46 : f32 to vector<2x256xf32>
    %135 = arith.addf %134, %133 : vector<2x256xf32>
    %136 = arith.divf %134, %135 : vector<2x256xf32>
    %137 = vector.extract_strided_slice %129 {offsets = [0, 256], sizes = [2, 256], strides = [1, 1]} : vector<2x768xf32> to vector<2x256xf32>
    %138 = arith.addf %36, %137 : vector<2x256xf32>
    %139 = arith.negf %138 : vector<2x256xf32>
    %140 = math.exp %139 : vector<2x256xf32>
    %cst_47 = arith.constant 1.000000e+00 : f32
    %141 = vector.broadcast %cst_47 : f32 to vector<2x256xf32>
    %142 = arith.addf %141, %140 : vector<2x256xf32>
    %143 = arith.divf %141, %142 : vector<2x256xf32>
    %144 = vector.extract_strided_slice %129 {offsets = [0, 512], sizes = [2, 256], strides = [1, 1]} : vector<2x768xf32> to vector<2x256xf32>
    %145 = vector.broadcast %32 : vector<1x256xf32> to vector<2x256xf32>
    %146 = arith.addf %144, %145 : vector<2x256xf32>
    %147 = arith.mulf %136, %146 : vector<2x256xf32>
    %148 = arith.addf %37, %147 : vector<2x256xf32>
    %149 = math.tanh %148 : vector<2x256xf32>
    %cst_48 = arith.constant 1.000000e+00 : f32
    %150 = vector.broadcast %cst_48 : f32 to vector<2x256xf32>
    %151 = arith.subf %150, %143 : vector<2x256xf32>
    %152 = arith.mulf %151, %149 : vector<2x256xf32>
    %153 = arith.mulf %143, %124 : vector<2x256xf32>
    %154 = arith.addf %152, %153 : vector<2x256xf32>
    %c3 = arith.constant 3 : index
    %c0_49 = arith.constant 0 : index
    %c0_50 = arith.constant 0 : index
    %155 = vector.load %arg11[%c3, %c0_49, %c0_50] : memref<10x2x256xf32, #tpu.memory_space<vmem>>, vector<1x2x256xf32>
    %156 = vector.shape_cast %155 : vector<1x2x256xf32> to vector<2x256xf32>
    %157 = vector.shape_cast %154 : vector<2x256xf32> to vector<1x2x256xf32>
    tpu.vector_store %arg11[%c3, %c0_49, %c0_50], %157 {strides = array<i32>} : memref<10x2x256xf32, #tpu.memory_space<vmem>>, vector<1x2x256xf32>,
    %158 = arith.truncf %154 : vector<2x256xf32> to vector<2x256xbf16>
    %cst_51 = arith.constant dense<0.000000e+00> : vector<2x768xf32>
    %159 = tpu.matmul %158, %31, %cst_51 {dimension_numbers = #tpu.dot_dimension_numbers<[1], [0], [0], [1], [0, 0, 1, 1], [], []>} : vector<2x256xbf16>, vector<256x768xbf16>, vector<2x768xf32> -> vector<2x768xf32>
    %160 = vector.extract_strided_slice %159 {offsets = [0, 0], sizes = [2, 256], strides = [1, 1]} : vector<2x768xf32> to vector<2x256xf32>
    %161 = arith.addf %35, %160 : vector<2x256xf32>
    %162 = arith.negf %161 : vector<2x256xf32>
    %163 = math.exp %162 : vector<2x256xf32>
    %cst_52 = arith.constant 1.000000e+00 : f32
    %164 = vector.broadcast %cst_52 : f32 to vector<2x256xf32>
    %165 = arith.addf %164, %163 : vector<2x256xf32>
    %166 = arith.divf %164, %165 : vector<2x256xf32>
    %167 = vector.extract_strided_slice %159 {offsets = [0, 256], sizes = [2, 256], strides = [1, 1]} : vector<2x768xf32> to vector<2x256xf32>
    %168 = arith.addf %36, %167 : vector<2x256xf32>
    %169 = arith.negf %168 : vector<2x256xf32>
    %170 = math.exp %169 : vector<2x256xf32>
    %cst_53 = arith.constant 1.000000e+00 : f32
    %171 = vector.broadcast %cst_53 : f32 to vector<2x256xf32>
    %172 = arith.addf %171, %170 : vector<2x256xf32>
    %173 = arith.divf %171, %172 : vector<2x256xf32>
    %174 = vector.extract_strided_slice %159 {offsets = [0, 512], sizes = [2, 256], strides = [1, 1]} : vector<2x768xf32> to vector<2x256xf32>
    %175 = vector.broadcast %32 : vector<1x256xf32> to vector<2x256xf32>
    %176 = arith.addf %174, %175 : vector<2x256xf32>
    %177 = arith.mulf %166, %176 : vector<2x256xf32>
    %178 = arith.addf %37, %177 : vector<2x256xf32>
    %179 = math.tanh %178 : vector<2x256xf32>
    %cst_54 = arith.constant 1.000000e+00 : f32
    %180 = vector.broadcast %cst_54 : f32 to vector<2x256xf32>
    %181 = arith.subf %180, %173 : vector<2x256xf32>
    %182 = arith.mulf %181, %179 : vector<2x256xf32>
    %183 = arith.mulf %173, %154 : vector<2x256xf32>
    %184 = arith.addf %182, %183 : vector<2x256xf32>
    %c4 = arith.constant 4 : index
    %c0_55 = arith.constant 0 : index
    %c0_56 = arith.constant 0 : index
    %185 = vector.load %arg11[%c4, %c0_55, %c0_56] : memref<10x2x256xf32, #tpu.memory_space<vmem>>, vector<1x2x256xf32>
    %186 = vector.shape_cast %185 : vector<1x2x256xf32> to vector<2x256xf32>
    %187 = vector.shape_cast %184 : vector<2x256xf32> to vector<1x2x256xf32>
    tpu.vector_store %arg11[%c4, %c0_55, %c0_56], %187 {strides = array<i32>} : memref<10x2x256xf32, #tpu.memory_space<vmem>>, vector<1x2x256xf32>,
    %188 = vector.extract_strided_slice %30 {offsets = [2, 0], sizes = [2, 768], strides = [1, 1]} : vector<4x768xf32> to vector<2x768xf32>
    %189 = vector.extract_strided_slice %188 {offsets = [0, 0], sizes = [2, 256], strides = [1, 1]} : vector<2x768xf32> to vector<2x256xf32>
    %190 = vector.extract_strided_slice %188 {offsets = [0, 256], sizes = [2, 256], strides = [1, 1]} : vector<2x768xf32> to vector<2x256xf32>
    %191 = vector.extract_strided_slice %188 {offsets = [0, 512], sizes = [2, 256], strides = [1, 1]} : vector<2x768xf32> to vector<2x256xf32>
    %192 = arith.truncf %184 : vector<2x256xf32> to vector<2x256xbf16>
    %cst_57 = arith.constant dense<0.000000e+00> : vector<2x768xf32>
    %193 = tpu.matmul %192, %31, %cst_57 {dimension_numbers = #tpu.dot_dimension_numbers<[1], [0], [0], [1], [0, 0, 1, 1], [], []>} : vector<2x256xbf16>, vector<256x768xbf16>, vector<2x768xf32> -> vector<2x768xf32>
    %194 = vector.extract_strided_slice %193 {offsets = [0, 0], sizes = [2, 256], strides = [1, 1]} : vector<2x768xf32> to vector<2x256xf32>
    %195 = arith.addf %189, %194 : vector<2x256xf32>
    %196 = arith.negf %195 : vector<2x256xf32>
    %197 = math.exp %196 : vector<2x256xf32>
    %cst_58 = arith.constant 1.000000e+00 : f32
    %198 = vector.broadcast %cst_58 : f32 to vector<2x256xf32>
    %199 = arith.addf %198, %197 : vector<2x256xf32>
    %200 = arith.divf %198, %199 : vector<2x256xf32>
    %201 = vector.extract_strided_slice %193 {offsets = [0, 256], sizes = [2, 256], strides = [1, 1]} : vector<2x768xf32> to vector<2x256xf32>
    %202 = arith.addf %190, %201 : vector<2x256xf32>
    %203 = arith.negf %202 : vector<2x256xf32>
    %204 = math.exp %203 : vector<2x256xf32>
    %cst_59 = arith.constant 1.000000e+00 : f32
    %205 = vector.broadcast %cst_59 : f32 to vector<2x256xf32>
    %206 = arith.addf %205, %204 : vector<2x256xf32>
    %207 = arith.divf %205, %206 : vector<2x256xf32>
    %208 = vector.extract_strided_slice %193 {offsets = [0, 512], sizes = [2, 256], strides = [1, 1]} : vector<2x768xf32> to vector<2x256xf32>
    %209 = vector.broadcast %32 : vector<1x256xf32> to vector<2x256xf32>
    %210 = arith.addf %208, %209 : vector<2x256xf32>
    %211 = arith.mulf %200, %210 : vector<2x256xf32>
    %212 = arith.addf %191, %211 : vector<2x256xf32>
    %213 = math.tanh %212 : vector<2x256xf32>
    %cst_60 = arith.constant 1.000000e+00 : f32
    %214 = vector.broadcast %cst_60 : f32 to vector<2x256xf32>
    %215 = arith.subf %214, %207 : vector<2x256xf32>
    %216 = arith.mulf %215, %213 : vector<2x256xf32>
    %217 = arith.mulf %207, %184 : vector<2x256xf32>
    %218 = arith.addf %216, %217 : vector<2x256xf32>
    %c5 = arith.constant 5 : index
    %c0_61 = arith.constant 0 : index
    %c0_62 = arith.constant 0 : index
    %219 = vector.load %arg11[%c5, %c0_61, %c0_62] : memref<10x2x256xf32, #tpu.memory_space<vmem>>, vector<1x2x256xf32>
    %220 = vector.shape_cast %219 : vector<1x2x256xf32> to vector<2x256xf32>
    %221 = vector.shape_cast %218 : vector<2x256xf32> to vector<1x2x256xf32>
    tpu.vector_store %arg11[%c5, %c0_61, %c0_62], %221 {strides = array<i32>} : memref<10x2x256xf32, #tpu.memory_space<vmem>>, vector<1x2x256xf32>,
    %222 = arith.truncf %218 : vector<2x256xf32> to vector<2x256xbf16>
    %cst_63 = arith.constant dense<0.000000e+00> : vector<2x768xf32>
    %223 = tpu.matmul %222, %31, %cst_63 {dimension_numbers = #tpu.dot_dimension_numbers<[1], [0], [0], [1], [0, 0, 1, 1], [], []>} : vector<2x256xbf16>, vector<256x768xbf16>, vector<2x768xf32> -> vector<2x768xf32>
    %224 = vector.extract_strided_slice %223 {offsets = [0, 0], sizes = [2, 256], strides = [1, 1]} : vector<2x768xf32> to vector<2x256xf32>
    %225 = arith.addf %189, %224 : vector<2x256xf32>
    %226 = arith.negf %225 : vector<2x256xf32>
    %227 = math.exp %226 : vector<2x256xf32>
    %cst_64 = arith.constant 1.000000e+00 : f32
    %228 = vector.broadcast %cst_64 : f32 to vector<2x256xf32>
    %229 = arith.addf %228, %227 : vector<2x256xf32>
    %230 = arith.divf %228, %229 : vector<2x256xf32>
    %231 = vector.extract_strided_slice %223 {offsets = [0, 256], sizes = [2, 256], strides = [1, 1]} : vector<2x768xf32> to vector<2x256xf32>
    %232 = arith.addf %190, %231 : vector<2x256xf32>
    %233 = arith.negf %232 : vector<2x256xf32>
    %234 = math.exp %233 : vector<2x256xf32>
    %cst_65 = arith.constant 1.000000e+00 : f32
    %235 = vector.broadcast %cst_65 : f32 to vector<2x256xf32>
    %236 = arith.addf %235, %234 : vector<2x256xf32>
    %237 = arith.divf %235, %236 : vector<2x256xf32>
    %238 = vector.extract_strided_slice %223 {offsets = [0, 512], sizes = [2, 256], strides = [1, 1]} : vector<2x768xf32> to vector<2x256xf32>
    %239 = vector.broadcast %32 : vector<1x256xf32> to vector<2x256xf32>
    %240 = arith.addf %238, %239 : vector<2x256xf32>
    %241 = arith.mulf %230, %240 : vector<2x256xf32>
    %242 = arith.addf %191, %241 : vector<2x256xf32>
    %243 = math.tanh %242 : vector<2x256xf32>
    %cst_66 = arith.constant 1.000000e+00 : f32
    %244 = vector.broadcast %cst_66 : f32 to vector<2x256xf32>
    %245 = arith.subf %244, %237 : vector<2x256xf32>
    %246 = arith.mulf %245, %243 : vector<2x256xf32>
    %247 = arith.mulf %237, %218 : vector<2x256xf32>
    %248 = arith.addf %246, %247 : vector<2x256xf32>
    %c6 = arith.constant 6 : index
    %c0_67 = arith.constant 0 : index
    %c0_68 = arith.constant 0 : index
    %249 = vector.load %arg11[%c6, %c0_67, %c0_68] : memref<10x2x256xf32, #tpu.memory_space<vmem>>, vector<1x2x256xf32>
    %250 = vector.shape_cast %249 : vector<1x2x256xf32> to vector<2x256xf32>
    %251 = vector.shape_cast %248 : vector<2x256xf32> to vector<1x2x256xf32>
    tpu.vector_store %arg11[%c6, %c0_67, %c0_68], %251 {strides = array<i32>} : memref<10x2x256xf32, #tpu.memory_space<vmem>>, vector<1x2x256xf32>,
    %252 = arith.truncf %248 : vector<2x256xf32> to vector<2x256xbf16>
    %cst_69 = arith.constant dense<0.000000e+00> : vector<2x768xf32>
    %253 = tpu.matmul %252, %31, %cst_69 {dimension_numbers = #tpu.dot_dimension_numbers<[1], [0], [0], [1], [0, 0, 1, 1], [], []>} : vector<2x256xbf16>, vector<256x768xbf16>, vector<2x768xf32> -> vector<2x768xf32>
    %254 = vector.extract_strided_slice %253 {offsets = [0, 0], sizes = [2, 256], strides = [1, 1]} : vector<2x768xf32> to vector<2x256xf32>
    %255 = arith.addf %189, %254 : vector<2x256xf32>
    %256 = arith.negf %255 : vector<2x256xf32>
    %257 = math.exp %256 : vector<2x256xf32>
    %cst_70 = arith.constant 1.000000e+00 : f32
    %258 = vector.broadcast %cst_70 : f32 to vector<2x256xf32>
    %259 = arith.addf %258, %257 : vector<2x256xf32>
    %260 = arith.divf %258, %259 : vector<2x256xf32>
    %261 = vector.extract_strided_slice %253 {offsets = [0, 256], sizes = [2, 256], strides = [1, 1]} : vector<2x768xf32> to vector<2x256xf32>
    %262 = arith.addf %190, %261 : vector<2x256xf32>
    %263 = arith.negf %262 : vector<2x256xf32>
    %264 = math.exp %263 : vector<2x256xf32>
    %cst_71 = arith.constant 1.000000e+00 : f32
    %265 = vector.broadcast %cst_71 : f32 to vector<2x256xf32>
    %266 = arith.addf %265, %264 : vector<2x256xf32>
    %267 = arith.divf %265, %266 : vector<2x256xf32>
    %268 = vector.extract_strided_slice %253 {offsets = [0, 512], sizes = [2, 256], strides = [1, 1]} : vector<2x768xf32> to vector<2x256xf32>
    %269 = vector.broadcast %32 : vector<1x256xf32> to vector<2x256xf32>
    %270 = arith.addf %268, %269 : vector<2x256xf32>
    %271 = arith.mulf %260, %270 : vector<2x256xf32>
    %272 = arith.addf %191, %271 : vector<2x256xf32>
    %273 = math.tanh %272 : vector<2x256xf32>
    %cst_72 = arith.constant 1.000000e+00 : f32
    %274 = vector.broadcast %cst_72 : f32 to vector<2x256xf32>
    %275 = arith.subf %274, %267 : vector<2x256xf32>
    %276 = arith.mulf %275, %273 : vector<2x256xf32>
    %277 = arith.mulf %267, %248 : vector<2x256xf32>
    %278 = arith.addf %276, %277 : vector<2x256xf32>
    %c7 = arith.constant 7 : index
    %c0_73 = arith.constant 0 : index
    %c0_74 = arith.constant 0 : index
    %279 = vector.load %arg11[%c7, %c0_73, %c0_74] : memref<10x2x256xf32, #tpu.memory_space<vmem>>, vector<1x2x256xf32>
    %280 = vector.shape_cast %279 : vector<1x2x256xf32> to vector<2x256xf32>
    %281 = vector.shape_cast %278 : vector<2x256xf32> to vector<1x2x256xf32>
    tpu.vector_store %arg11[%c7, %c0_73, %c0_74], %281 {strides = array<i32>} : memref<10x2x256xf32, #tpu.memory_space<vmem>>, vector<1x2x256xf32>,
    %282 = arith.truncf %278 : vector<2x256xf32> to vector<2x256xbf16>
    %cst_75 = arith.constant dense<0.000000e+00> : vector<2x768xf32>
    %283 = tpu.matmul %282, %31, %cst_75 {dimension_numbers = #tpu.dot_dimension_numbers<[1], [0], [0], [1], [0, 0, 1, 1], [], []>} : vector<2x256xbf16>, vector<256x768xbf16>, vector<2x768xf32> -> vector<2x768xf32>
    %284 = vector.extract_strided_slice %283 {offsets = [0, 0], sizes = [2, 256], strides = [1, 1]} : vector<2x768xf32> to vector<2x256xf32>
    %285 = arith.addf %189, %284 : vector<2x256xf32>
    %286 = arith.negf %285 : vector<2x256xf32>
    %287 = math.exp %286 : vector<2x256xf32>
    %cst_76 = arith.constant 1.000000e+00 : f32
    %288 = vector.broadcast %cst_76 : f32 to vector<2x256xf32>
    %289 = arith.addf %288, %287 : vector<2x256xf32>
    %290 = arith.divf %288, %289 : vector<2x256xf32>
    %291 = vector.extract_strided_slice %283 {offsets = [0, 256], sizes = [2, 256], strides = [1, 1]} : vector<2x768xf32> to vector<2x256xf32>
    %292 = arith.addf %190, %291 : vector<2x256xf32>
    %293 = arith.negf %292 : vector<2x256xf32>
    %294 = math.exp %293 : vector<2x256xf32>
    %cst_77 = arith.constant 1.000000e+00 : f32
    %295 = vector.broadcast %cst_77 : f32 to vector<2x256xf32>
    %296 = arith.addf %295, %294 : vector<2x256xf32>
    %297 = arith.divf %295, %296 : vector<2x256xf32>
    %298 = vector.extract_strided_slice %283 {offsets = [0, 512], sizes = [2, 256], strides = [1, 1]} : vector<2x768xf32> to vector<2x256xf32>
    %299 = vector.broadcast %32 : vector<1x256xf32> to vector<2x256xf32>
    %300 = arith.addf %298, %299 : vector<2x256xf32>
    %301 = arith.mulf %290, %300 : vector<2x256xf32>
    %302 = arith.addf %191, %301 : vector<2x256xf32>
    %303 = math.tanh %302 : vector<2x256xf32>
    %cst_78 = arith.constant 1.000000e+00 : f32
    %304 = vector.broadcast %cst_78 : f32 to vector<2x256xf32>
    %305 = arith.subf %304, %297 : vector<2x256xf32>
    %306 = arith.mulf %305, %303 : vector<2x256xf32>
    %307 = arith.mulf %297, %278 : vector<2x256xf32>
    %308 = arith.addf %306, %307 : vector<2x256xf32>
    %c8 = arith.constant 8 : index
    %c0_79 = arith.constant 0 : index
    %c0_80 = arith.constant 0 : index
    %309 = vector.load %arg11[%c8, %c0_79, %c0_80] : memref<10x2x256xf32, #tpu.memory_space<vmem>>, vector<1x2x256xf32>
    %310 = vector.shape_cast %309 : vector<1x2x256xf32> to vector<2x256xf32>
    %311 = vector.shape_cast %308 : vector<2x256xf32> to vector<1x2x256xf32>
    tpu.vector_store %arg11[%c8, %c0_79, %c0_80], %311 {strides = array<i32>} : memref<10x2x256xf32, #tpu.memory_space<vmem>>, vector<1x2x256xf32>,
    %312 = arith.truncf %308 : vector<2x256xf32> to vector<2x256xbf16>
    %cst_81 = arith.constant dense<0.000000e+00> : vector<2x768xf32>
    %313 = tpu.matmul %312, %31, %cst_81 {dimension_numbers = #tpu.dot_dimension_numbers<[1], [0], [0], [1], [0, 0, 1, 1], [], []>} : vector<2x256xbf16>, vector<256x768xbf16>, vector<2x768xf32> -> vector<2x768xf32>
    %314 = vector.extract_strided_slice %313 {offsets = [0, 0], sizes = [2, 256], strides = [1, 1]} : vector<2x768xf32> to vector<2x256xf32>
    %315 = arith.addf %189, %314 : vector<2x256xf32>
    %316 = arith.negf %315 : vector<2x256xf32>
    %317 = math.exp %316 : vector<2x256xf32>
    %cst_82 = arith.constant 1.000000e+00 : f32
    %318 = vector.broadcast %cst_82 : f32 to vector<2x256xf32>
    %319 = arith.addf %318, %317 : vector<2x256xf32>
    %320 = arith.divf %318, %319 : vector<2x256xf32>
    %321 = vector.extract_strided_slice %313 {offsets = [0, 256], sizes = [2, 256], strides = [1, 1]} : vector<2x768xf32> to vector<2x256xf32>
    %322 = arith.addf %190, %321 : vector<2x256xf32>
    %323 = arith.negf %322 : vector<2x256xf32>
    %324 = math.exp %323 : vector<2x256xf32>
    %cst_83 = arith.constant 1.000000e+00 : f32
    %325 = vector.broadcast %cst_83 : f32 to vector<2x256xf32>
    %326 = arith.addf %325, %324 : vector<2x256xf32>
    %327 = arith.divf %325, %326 : vector<2x256xf32>
    %328 = vector.extract_strided_slice %313 {offsets = [0, 512], sizes = [2, 256], strides = [1, 1]} : vector<2x768xf32> to vector<2x256xf32>
    %329 = vector.broadcast %32 : vector<1x256xf32> to vector<2x256xf32>
    %330 = arith.addf %328, %329 : vector<2x256xf32>
    %331 = arith.mulf %320, %330 : vector<2x256xf32>
    %332 = arith.addf %191, %331 : vector<2x256xf32>
    %333 = math.tanh %332 : vector<2x256xf32>
    %cst_84 = arith.constant 1.000000e+00 : f32
    %334 = vector.broadcast %cst_84 : f32 to vector<2x256xf32>
    %335 = arith.subf %334, %327 : vector<2x256xf32>
    %336 = arith.mulf %335, %333 : vector<2x256xf32>
    %337 = arith.mulf %327, %308 : vector<2x256xf32>
    %338 = arith.addf %336, %337 : vector<2x256xf32>
    %c9 = arith.constant 9 : index
    %c0_85 = arith.constant 0 : index
    %c0_86 = arith.constant 0 : index
    %339 = vector.load %arg11[%c9, %c0_85, %c0_86] : memref<10x2x256xf32, #tpu.memory_space<vmem>>, vector<1x2x256xf32>
    %340 = vector.shape_cast %339 : vector<1x2x256xf32> to vector<2x256xf32>
    %341 = vector.shape_cast %338 : vector<2x256xf32> to vector<1x2x256xf32>
    tpu.vector_store %arg11[%c9, %c0_85, %c0_86], %341 {strides = array<i32>} : memref<10x2x256xf32, #tpu.memory_space<vmem>>, vector<1x2x256xf32>,
    %c0_87 = arith.constant 0 : index
    %c0_88 = arith.constant 0 : index
    %342 = vector.load %arg12[%c0_87, %c0_88] : memref<2x256xf32, #tpu.memory_space<vmem>>, vector<2x256xf32>
    tpu.vector_store %arg12[%c0_87, %c0_88], %338 {strides = array<i32>} : memref<2x256xf32, #tpu.memory_space<vmem>>, vector<2x256xf32>,
    return
  }
  func.func @transform_0(%arg0: i32) -> (i32, i32) {
    %c0_i32 = arith.constant 0 : i32
    %c0_i32_0 = arith.constant 0 : i32
    %c0_i32_1 = arith.constant 0 : i32
    return %c0_i32, %c0_i32_0 : i32, i32
  }
  func.func @transform_1(%arg0: i32) -> (i32, i32) {
    %c0_i32 = arith.constant 0 : i32
    %c0_i32_0 = arith.constant 0 : i32
    %c0_i32_1 = arith.constant 0 : i32
    return %c0_i32, %c0_i32_0 : i32, i32
  }
  func.func @transform_2(%arg0: i32) -> (i32, i32) {
    %c0_i32 = arith.constant 0 : i32
    %c0_i32_0 = arith.constant 0 : i32
    %c0_i32_1 = arith.constant 0 : i32
    return %c0_i32, %c0_i32_0 : i32, i32
  }
  func.func @transform_3(%arg0: i32) -> (i32, i32) {
    %c0_i32 = arith.constant 0 : i32
    %c0_i32_0 = arith.constant 0 : i32
    %c0_i32_1 = arith.constant 0 : i32
    return %c0_i32, %c0_i32_0 : i32, i32
  }
  func.func @transform_4(%arg0: i32) -> (i32, i32) {
    %c0_i32 = arith.constant 0 : i32
    %c0_i32_0 = arith.constant 0 : i32
    %c0_i32_1 = arith.constant 0 : i32
    return %c0_i32, %c0_i32_0 : i32, i32
  }
  func.func @transform_5(%arg0: i32) -> (i32, i32) {
    %c0_i32 = arith.constant 0 : i32
    %c0_i32_0 = arith.constant 0 : i32
    %c0_i32_1 = arith.constant 0 : i32
    return %c0_i32, %c0_i32_0 : i32, i32
  }
  func.func @transform_6(%arg0: i32) -> (i32, i32) {
    %c0_i32 = arith.constant 0 : i32
    %c0_i32_0 = arith.constant 0 : i32
    %c0_i32_1 = arith.constant 0 : i32
    return %c0_i32, %c0_i32_0 : i32, i32
  }
  func.func @transform_7(%arg0: i32) -> (i32, i32) {
    %c0_i32 = arith.constant 0 : i32
    %c0_i32_0 = arith.constant 0 : i32
    %c0_i32_1 = arith.constant 0 : i32
    return %c0_i32, %c0_i32_0 : i32, i32
  }
  func.func @transform_8(%arg0: i32) -> (i32, i32) {
    %c0_i32 = arith.constant 0 : i32
    %c0_i32_0 = arith.constant 0 : i32
    %c0_i32_1 = arith.constant 0 : i32
    return %c0_i32, %c0_i32_0 : i32, i32
  }
  func.func @transform_9(%arg0: i32) -> (i32, i32) {
    %c0_i32 = arith.constant 0 : i32
    %c0_i32_0 = arith.constant 0 : i32
    %c0_i32_1 = arith.constant 0 : i32
    return %c0_i32, %c0_i32_0 : i32, i32
  }
  func.func @transform_10(%arg0: i32) -> (i32, i32, i32) {
    %c0_i32 = arith.constant 0 : i32
    %c0_i32_0 = arith.constant 0 : i32
    %c0_i32_1 = arith.constant 0 : i32
    %c0_i32_2 = arith.constant 0 : i32
    return %c0_i32, %c0_i32_0, %c0_i32_1 : i32, i32, i32
  }
  func.func @transform_11(%arg0: i32) -> (i32, i32) {
    %c0_i32 = arith.constant 0 : i32
    %c0_i32_0 = arith.constant 0 : i32
    %c0_i32_1 = arith.constant 0 : i32
    return %c0_i32, %c0_i32_0 : i32, i32
  }
}

</mosaic_0001>

<llo_original>
// kernel: extra_corpus_q_memory_forward.4
$region0: #{extra_corpus_q_memory_forward.4}
  #allocation0 [shape = 'u32[]', space=smem, size = 0x4, offset = 0x4, fixed_abs, tag = 'smem constant byte address 0x4 - core index']
  #allocation1 [shape = 'u32[144,128]{1,0:T(1,128)}', space=vmem, size = 0x12000, scoped, tag = 'internal scratch']
  %s0 = inlined_call_operand.vmem [shape: bf16[25,8192], index: 0, kind: input, shape index: {}]
  %s1 = inlined_call_operand.vmem [shape: bf16[16,25], index: 1, kind: input, shape index: {}]
  %s2 = inlined_call_operand.vmem [shape: f32[16,1], index: 2, kind: input, shape index: {}]
  %s3 = inlined_call_operand.vmem [shape: bf16[16,2048], index: 3, kind: output, shape index: {}]
  %s4 = sld [smem:[#allocation0]]
  $region22: #{extra_corpus_q_memory_forward.4} parent=0
    _
  %s6 = ssub.s32 1, %s4
  %s7 = scalar_select 0, %s6, %s4
  // Predicated region
  $region2: #{extra_corpus_q_memory_forward.4} parent=0 // pred_check
    _
  $region3: #{extra_corpus_q_memory_forward.4} parent=0 // pred_check_branch
    %9 = sbr.rel (0) target = $region5
  $region4: #{extra_corpus_q_memory_forward.4} parent=0 // pred_region
    _
  $region5: #{extra_corpus_q_memory_forward.4} parent=0 // pred_fallthru
    _
  // Predicated region
  $region6: #{extra_corpus_q_memory_forward.4} parent=0 // pred_check
    _
  $region7: #{extra_corpus_q_memory_forward.4} parent=0 // pred_check_branch
    %11 = sbr.rel (0) target = $region9
  $region8: #{extra_corpus_q_memory_forward.4} parent=0 // pred_region
    _
  $region9: #{extra_corpus_q_memory_forward.4} parent=0 // pred_fallthru
    _
  // Predicated region
  $region10: #{extra_corpus_q_memory_forward.4} parent=0 // pred_check
    _
  $region11: #{extra_corpus_q_memory_forward.4} parent=0 // pred_check_branch
    %13 = sbr.rel (0) target = $region13
  $region12: #{extra_corpus_q_memory_forward.4} parent=0 // pred_region
    _
  $region13: #{extra_corpus_q_memory_forward.4} parent=0 // pred_fallthru
    _
  %v15 = vld [vmem:[%s1] sm:$0xf]
  %v16 = vld [vmem:[%s1 + $0x4] sm:$0xf]
  %v17 = vld [vmem:[%s0] sm:$0xff]
  %v18 = vld [vmem:[%s0 + $0x8] sm:$0xff]
  %v19 = vld [vmem:[%s0 + $0x10] sm:$0xff]
  %v20 = vld [vmem:[%s0 + $0x18] sm:$0xff]
  %v21 = vld [vmem:[%s0 + $0x20] sm:$0xff]
  %v22 = vld [vmem:[%s0 + $0x28] sm:$0xff]
  %v23 = vld [vmem:[%s0 + $0x30] sm:$0xff]
  %v24 = vld [vmem:[%s0 + $0x38] sm:$0xff]
  %v25 = vld [vmem:[%s0 + $0x40] sm:$0xff]
  %v26 = vld [vmem:[%s0 + $0x48] sm:$0xff]
  %v27 = vld [vmem:[%s0 + $0x50] sm:$0xff]
  %v28 = vld [vmem:[%s0 + $0x58] sm:$0xff]
  %v29 = vld [vmem:[%s0 + $0x60] sm:$0xff]
  %v30 = vld [vmem:[%s0 + $0x68] sm:$0xff]
  %v31 = vld [vmem:[%s0 + $0x70] sm:$0xff]
  %v32 = vld [vmem:[%s0 + $0x78] sm:$0xff]
  %v33 = vld [vmem:[%s0 + $0x80] sm:$0xff]
  %v34 = vld [vmem:[%s0 + $0x88] sm:$0xff]
  %v35 = vld [vmem:[%s0 + $0x90] sm:$0xff]
  %v36 = vld [vmem:[%s0 + $0x98] sm:$0xff]
  %v37 = vld [vmem:[%s0 + $0xa0] sm:$0xff]
  %v38 = vld [vmem:[%s0 + $0xa8] sm:$0xff]
  %v39 = vld [vmem:[%s0 + $0xb0] sm:$0xff]
  %v40 = vld [vmem:[%s0 + $0xb8] sm:$0xff]
  %v41 = vld [vmem:[%s0 + $0xc0] sm:$0xff]
  %v42 = vld [vmem:[%s0 + $0xc8] sm:$0xff]
  %v43 = vld [vmem:[%s0 + $0xd0] sm:$0xff]
  %v44 = vld [vmem:[%s0 + $0xd8] sm:$0xff]
  %v45 = vld [vmem:[%s0 + $0xe0] sm:$0xff]
  %v46 = vld [vmem:[%s0 + $0xe8] sm:$0xff]
  %v47 = vld [vmem:[%s0 + $0xf0] sm:$0xff]
  %v48 = vld [vmem:[%s0 + $0xf8] sm:$0xff]
  %v49 = vld [vmem:[%s0 + $0x100] sm:$0xff]
  %v50 = vld [vmem:[%s0 + $0x108] sm:$0xff]
  %v51 = vld [vmem:[%s0 + $0x110] sm:$0xff]
  %v52 = vld [vmem:[%s0 + $0x118] sm:$0xff]
  %v53 = vld [vmem:[%s0 + $0x120] sm:$0xff]
  %v54 = vld [vmem:[%s0 + $0x128] sm:$0xff]
  %v55 = vld [vmem:[%s0 + $0x130] sm:$0xff]
  %v56 = vld [vmem:[%s0 + $0x138] sm:$0xff]
  %v57 = vld [vmem:[%s0 + $0x140] sm:$0xff]
  %v58 = vld [vmem:[%s0 + $0x148] sm:$0xff]
  %v59 = vld [vmem:[%s0 + $0x150] sm:$0xff]
  %v60 = vld [vmem:[%s0 + $0x158] sm:$0xff]
  %v61 = vld [vmem:[%s0 + $0x160] sm:$0xff]
  %v62 = vld [vmem:[%s0 + $0x168] sm:$0xff]
  %v63 = vld [vmem:[%s0 + $0x170] sm:$0xff]
  %v64 = vld [vmem:[%s0 + $0x178] sm:$0xff]
  %v65 = vld [vmem:[%s0 + $0x180] sm:$0xff]
  %v66 = vld [vmem:[%s0 + $0x188] sm:$0xff]
  %v67 = vld [vmem:[%s0 + $0x190] sm:$0xff]
  %v68 = vld [vmem:[%s0 + $0x198] sm:$0xff]
  %v69 = vld [vmem:[%s0 + $0x1a0] sm:$0xff]
  %v70 = vld [vmem:[%s0 + $0x1a8] sm:$0xff]
  %v71 = vld [vmem:[%s0 + $0x1b0] sm:$0xff]
  %v72 = vld [vmem:[%s0 + $0x1b8] sm:$0xff]
  %v73 = vld [vmem:[%s0 + $0x1c0] sm:$0xff]
  %v74 = vld [vmem:[%s0 + $0x1c8] sm:$0xff]
  %v75 = vld [vmem:[%s0 + $0x1d0] sm:$0xff]
  %v76 = vld [vmem:[%s0 + $0x1d8] sm:$0xff]
  %v77 = vld [vmem:[%s0 + $0x1e0] sm:$0xff]
  %v78 = vld [vmem:[%s0 + $0x1e8] sm:$0xff]
  %v79 = vld [vmem:[%s0 + $0x1f0] sm:$0xff]
  %v80 = vld [vmem:[%s0 + $0x1f8] sm:$0xff]
  %v81 = vld [vmem:[%s0 + $0x200] sm:$0xff]
  %v82 = vld [vmem:[%s0 + $0x208] sm:$0xff]
  %v83 = vld [vmem:[%s0 + $0x210] sm:$0xff]
  %v84 = vld [vmem:[%s0 + $0x218] sm:$0xff]
  %v85 = vld [vmem:[%s0 + $0x220] sm:$0xff]
  %v86 = vld [vmem:[%s0 + $0x228] sm:$0xff]
  %v87 = vld [vmem:[%s0 + $0x230] sm:$0xff]
  %v88 = vld [vmem:[%s0 + $0x238] sm:$0xff]
  %v89 = vld [vmem:[%s0 + $0x240] sm:$0xff]
  %v90 = vld [vmem:[%s0 + $0x248] sm:$0xff]
  %v91 = vld [vmem:[%s0 + $0x250] sm:$0xff]
  %v92 = vld [vmem:[%s0 + $0x258] sm:$0xff]
  %v93 = vld [vmem:[%s0 + $0x260] sm:$0xff]
  %v94 = vld [vmem:[%s0 + $0x268] sm:$0xff]
  %v95 = vld [vmem:[%s0 + $0x270] sm:$0xff]
  %v96 = vld [vmem:[%s0 + $0x278] sm:$0xff]
  %v97 = vld [vmem:[%s0 + $0x280] sm:$0xff]
  %v98 = vld [vmem:[%s0 + $0x288] sm:$0xff]
  %v99 = vld [vmem:[%s0 + $0x290] sm:$0xff]
  %v100 = vld [vmem:[%s0 + $0x298] sm:$0xff]
  %v101 = vld [vmem:[%s0 + $0x2a0] sm:$0xff]
  %v102 = vld [vmem:[%s0 + $0x2a8] sm:$0xff]
  %v103 = vld [vmem:[%s0 + $0x2b0] sm:$0xff]
  %v104 = vld [vmem:[%s0 + $0x2b8] sm:$0xff]
  %v105 = vld [vmem:[%s0 + $0x2c0] sm:$0xff]
  %v106 = vld [vmem:[%s0 + $0x2c8] sm:$0xff]
  %v107 = vld [vmem:[%s0 + $0x2d0] sm:$0xff]
  %v108 = vld [vmem:[%s0 + $0x2d8] sm:$0xff]
  %v109 = vld [vmem:[%s0 + $0x2e0] sm:$0xff]
  %v110 = vld [vmem:[%s0 + $0x2e8] sm:$0xff]
  %v111 = vld [vmem:[%s0 + $0x2f0] sm:$0xff]
  %v112 = vld [vmem:[%s0 + $0x2f8] sm:$0xff]
  %v113 = vld [vmem:[%s0 + $0x300] sm:$0x11]
  %v114 = vld [vmem:[%s0 + $0x308] sm:$0x11]
  %v115 = vld [vmem:[%s0 + $0x310] sm:$0x11]
  %v116 = vld [vmem:[%s0 + $0x318] sm:$0x11]
  %v117 = vld [vmem:[%s0 + $0x320] sm:$0x11]
  %v118 = vld [vmem:[%s0 + $0x328] sm:$0x11]
  %v119 = vld [vmem:[%s0 + $0x330] sm:$0x11]
  %v120 = vld [vmem:[%s0 + $0x338] sm:$0x11]
  %v121 = vld [vmem:[%s0 + $0x340] sm:$0x11]
  %v122 = vld [vmem:[%s0 + $0x348] sm:$0x11]
  %v123 = vld [vmem:[%s0 + $0x350] sm:$0x11]
  %v124 = vld [vmem:[%s0 + $0x358] sm:$0x11]
  %v125 = vld [vmem:[%s0 + $0x360] sm:$0x11]
  %v126 = vld [vmem:[%s0 + $0x368] sm:$0x11]
  %v127 = vld [vmem:[%s0 + $0x370] sm:$0x11]
  %v128 = vld [vmem:[%s0 + $0x378] sm:$0x11]
  %v129 = vld [vmem:[%s0 + $0x380] sm:$0x11]
  %v130 = vld [vmem:[%s0 + $0x388] sm:$0x11]
  %v131 = vld [vmem:[%s0 + $0x390] sm:$0x11]
  %v132 = vld [vmem:[%s0 + $0x398] sm:$0x11]
  %v133 = vld [vmem:[%s0 + $0x3a0] sm:$0x11]
  %v134 = vld [vmem:[%s0 + $0x3a8] sm:$0x11]
  %v135 = vld [vmem:[%s0 + $0x3b0] sm:$0x11]
  %v136 = vld [vmem:[%s0 + $0x3b8] sm:$0x11]
  %v137 = vld [vmem:[%s0 + $0x3c0] sm:$0x11]
  %v138 = vld [vmem:[%s0 + $0x3c8] sm:$0x11]
  %v139 = vld [vmem:[%s0 + $0x3d0] sm:$0x11]
  %v140 = vld [vmem:[%s0 + $0x3d8] sm:$0x11]
  %v141 = vld [vmem:[%s0 + $0x3e0] sm:$0x11]
  %v142 = vld [vmem:[%s0 + $0x3e8] sm:$0x11]
  %v143 = vld [vmem:[%s0 + $0x3f0] sm:$0x11]
  %v144 = vld [vmem:[%s0 + $0x3f8] sm:$0x11]
  %v147 = vunpack.c.l.b16 %v15
  %v148 = vunpack.c.l.b16 %v16
  %v149 = vpack.c.b16 %v148, %v147
  %v278 = vunpack.c.l.b16 %v17
  %v279 = vunpack.c.h.b16 %v17
  %v280 = vunpack.c.l.b16 %v18
  %v281 = vunpack.c.h.b16 %v18
  %v282 = vunpack.c.l.b16 %v19
  %v283 = vunpack.c.h.b16 %v19
  %v284 = vunpack.c.l.b16 %v20
  %v285 = vunpack.c.h.b16 %v20
  %v286 = vunpack.c.l.b16 %v21
  %v287 = vunpack.c.h.b16 %v21
  %v288 = vunpack.c.l.b16 %v22
  %v289 = vunpack.c.h.b16 %v22
  %v290 = vunpack.c.l.b16 %v23
  %v291 = vunpack.c.h.b16 %v23
  %v292 = vunpack.c.l.b16 %v24
  %v293 = vunpack.c.h.b16 %v24
  %v294 = vunpack.c.l.b16 %v25
  %v295 = vunpack.c.h.b16 %v25
  %v296 = vunpack.c.l.b16 %v26
  %v297 = vunpack.c.h.b16 %v26
  %v298 = vunpack.c.l.b16 %v27
  %v299 = vunpack.c.h.b16 %v27
  %v300 = vunpack.c.l.b16 %v28
  %v301 = vunpack.c.h.b16 %v28
  %v302 = vunpack.c.l.b16 %v29
  %v303 = vunpack.c.h.b16 %v29
  %v304 = vunpack.c.l.b16 %v30
  %v305 = vunpack.c.h.b16 %v30
  %v306 = vunpack.c.l.b16 %v31
  %v307 = vunpack.c.h.b16 %v31
  %v308 = vunpack.c.l.b16 %v32
  %v309 = vunpack.c.h.b16 %v32
  %v310 = vunpack.c.l.b16 %v33
  %v311 = vunpack.c.h.b16 %v33
  %v312 = vunpack.c.l.b16 %v34
  %v313 = vunpack.c.h.b16 %v34
  %v314 = vunpack.c.l.b16 %v35
  %v315 = vunpack.c.h.b16 %v35
  %v316 = vunpack.c.l.b16 %v36
  %v317 = vunpack.c.h.b16 %v36
  %v318 = vunpack.c.l.b16 %v37
  %v319 = vunpack.c.h.b16 %v37
  %v320 = vunpack.c.l.b16 %v38
  %v321 = vunpack.c.h.b16 %v38
  %v322 = vunpack.c.l.b16 %v39
  %v323 = vunpack.c.h.b16 %v39
  %v324 = vunpack.c.l.b16 %v40
  %v325 = vunpack.c.h.b16 %v40
  %v326 = vunpack.c.l.b16 %v41
  %v327 = vunpack.c.h.b16 %v41
  %v328 = vunpack.c.l.b16 %v42
  %v329 = vunpack.c.h.b16 %v42
  %v330 = vunpack.c.l.b16 %v43
  %v331 = vunpack.c.h.b16 %v43
  %v332 = vunpack.c.l.b16 %v44
  %v333 = vunpack.c.h.b16 %v44
  %v334 = vunpack.c.l.b16 %v45
  %v335 = vunpack.c.h.b16 %v45
  %v336 = vunpack.c.l.b16 %v46
  %v337 = vunpack.c.h.b16 %v46
  %v338 = vunpack.c.l.b16 %v47
  %v339 = vunpack.c.h.b16 %v47
  %v340 = vunpack.c.l.b16 %v48
  %v341 = vunpack.c.h.b16 %v48
  %v342 = vunpack.c.l.b16 %v49
  %v343 = vunpack.c.h.b16 %v49
  %v344 = vunpack.c.l.b16 %v50
  %v345 = vunpack.c.h.b16 %v50
  %v346 = vunpack.c.l.b16 %v51
  %v347 = vunpack.c.h.b16 %v51
  %v348 = vunpack.c.l.b16 %v52
  %v349 = vunpack.c.h.b16 %v52
  %v350 = vunpack.c.l.b16 %v53
  %v351 = vunpack.c.h.b16 %v53
  %v352 = vunpack.c.l.b16 %v54
  %v353 = vunpack.c.h.b16 %v54
  %v354 = vunpack.c.l.b16 %v55
  %v355 = vunpack.c.h.b16 %v55
  %v356 = vunpack.c.l.b16 %v56
  %v357 = vunpack.c.h.b16 %v56
  %v358 = vunpack.c.l.b16 %v57
  %v359 = vunpack.c.h.b16 %v57
  %v360 = vunpack.c.l.b16 %v58
  %v361 = vunpack.c.h.b16 %v58
  %v362 = vunpack.c.l.b16 %v59
  %v363 = vunpack.c.h.b16 %v59
  %v364 = vunpack.c.l.b16 %v60
  %v365 = vunpack.c.h.b16 %v60
  %v366 = vunpack.c.l.b16 %v61
  %v367 = vunpack.c.h.b16 %v61
  %v368 = vunpack.c.l.b16 %v62
  %v369 = vunpack.c.h.b16 %v62
  %v370 = vunpack.c.l.b16 %v63
  %v371 = vunpack.c.h.b16 %v63
  %v372 = vunpack.c.l.b16 %v64
  %v373 = vunpack.c.h.b16 %v64
  %v374 = vunpack.c.l.b16 %v65
  %v375 = vunpack.c.h.b16 %v65
  %v376 = vunpack.c.l.b16 %v66
  %v377 = vunpack.c.h.b16 %v66
  %v378 = vunpack.c.l.b16 %v67
  %v379 = vunpack.c.h.b16 %v67
  %v380 = vunpack.c.l.b16 %v68
  %v381 = vunpack.c.h.b16 %v68
  %v382 = vunpack.c.l.b16 %v69
  %v383 = vunpack.c.h.b16 %v69
  %v384 = vunpack.c.l.b16 %v70
  %v385 = vunpack.c.h.b16 %v70
  %v386 = vunpack.c.l.b16 %v71
  %v387 = vunpack.c.h.b16 %v71
  %v388 = vunpack.c.l.b16 %v72
  %v389 = vunpack.c.h.b16 %v72
  %v390 = vunpack.c.l.b16 %v73
  %v391 = vunpack.c.h.b16 %v73
  %v392 = vunpack.c.l.b16 %v74
  %v393 = vunpack.c.h.b16 %v74
  %v394 = vunpack.c.l.b16 %v75
  %v395 = vunpack.c.h.b16 %v75
  %v396 = vunpack.c.l.b16 %v76
  %v397 = vunpack.c.h.b16 %v76
  %v398 = vunpack.c.l.b16 %v77
  %v399 = vunpack.c.h.b16 %v77
  %v400 = vunpack.c.l.b16 %v78
  %v401 = vunpack.c.h.b16 %v78
  %v402 = vunpack.c.l.b16 %v79
  %v403 = vunpack.c.h.b16 %v79
  %v404 = vunpack.c.l.b16 %v80
  %v405 = vunpack.c.h.b16 %v80
  %v406 = vunpack.c.l.b16 %v81
  %v407 = vunpack.c.h.b16 %v81
  %v408 = vunpack.c.l.b16 %v82
  %v409 = vunpack.c.h.b16 %v82
  %v410 = vunpack.c.l.b16 %v83
  %v411 = vunpack.c.h.b16 %v83
  %v412 = vunpack.c.l.b16 %v84
  %v413 = vunpack.c.h.b16 %v84
  %v414 = vunpack.c.l.b16 %v85
  %v415 = vunpack.c.h.b16 %v85
  %v416 = vunpack.c.l.b16 %v86
  %v417 = vunpack.c.h.b16 %v86
  %v418 = vunpack.c.l.b16 %v87
  %v419 = vunpack.c.h.b16 %v87
  %v420 = vunpack.c.l.b16 %v88
  %v421 = vunpack.c.h.b16 %v88
  %v422 = vunpack.c.l.b16 %v89
  %v423 = vunpack.c.h.b16 %v89
  %v424 = vunpack.c.l.b16 %v90
  %v425 = vunpack.c.h.b16 %v90
  %v426 = vunpack.c.l.b16 %v91
  %v427 = vunpack.c.h.b16 %v91
  %v428 = vunpack.c.l.b16 %v92
  %v429 = vunpack.c.h.b16 %v92
  %v430 = vunpack.c.l.b16 %v93
  %v431 = vunpack.c.h.b16 %v93
  %v432 = vunpack.c.l.b16 %v94
  %v433 = vunpack.c.h.b16 %v94
  %v434 = vunpack.c.l.b16 %v95
  %v435 = vunpack.c.h.b16 %v95
  %v436 = vunpack.c.l.b16 %v96
  %v437 = vunpack.c.h.b16 %v96
  %v438 = vunpack.c.l.b16 %v97
  %v439 = vunpack.c.h.b16 %v97
  %v440 = vunpack.c.l.b16 %v98
  %v441 = vunpack.c.h.b16 %v98
  %v442 = vunpack.c.l.b16 %v99
  %v443 = vunpack.c.h.b16 %v99
  %v444 = vunpack.c.l.b16 %v100
  %v445 = vunpack.c.h.b16 %v100
  %v446 = vunpack.c.l.b16 %v101
  %v447 = vunpack.c.h.b16 %v101
  %v448 = vunpack.c.l.b16 %v102
  %v449 = vunpack.c.h.b16 %v102
  %v450 = vunpack.c.l.b16 %v103
  %v451 = vunpack.c.h.b16 %v103
  %v452 = vunpack.c.l.b16 %v104
  %v453 = vunpack.c.h.b16 %v104
  %v454 = vunpack.c.l.b16 %v105
  %v455 = vunpack.c.h.b16 %v105
  %v456 = vunpack.c.l.b16 %v106
  %v457 = vunpack.c.h.b16 %v106
  %v458 = vunpack.c.l.b16 %v107
  %v459 = vunpack.c.h.b16 %v107
  %v460 = vunpack.c.l.b16 %v108
  %v461 = vunpack.c.h.b16 %v108
  %v462 = vunpack.c.l.b16 %v109
  %v463 = vunpack.c.h.b16 %v109
  %v464 = vunpack.c.l.b16 %v110
  %v465 = vunpack.c.h.b16 %v110
  %v466 = vunpack.c.l.b16 %v111
  %v467 = vunpack.c.h.b16 %v111
  %v468 = vunpack.c.l.b16 %v112
  %v469 = vunpack.c.h.b16 %v112
  %v470 = vunpack.c.l.b16 %v113
  %v471 = vunpack.c.h.b16 %v113
  %v472 = vunpack.c.l.b16 %v114
  %v473 = vunpack.c.h.b16 %v114
  %v474 = vunpack.c.l.b16 %v115
  %v475 = vunpack.c.h.b16 %v115
  %v476 = vunpack.c.l.b16 %v116
  %v477 = vunpack.c.h.b16 %v116
  %v478 = vunpack.c.l.b16 %v117
  %v479 = vunpack.c.h.b16 %v117
  %v480 = vunpack.c.l.b16 %v118
  %v481 = vunpack.c.h.b16 %v118
  %v482 = vunpack.c.l.b16 %v119
  %v483 = vunpack.c.h.b16 %v119
  %v484 = vunpack.c.l.b16 %v120
  %v485 = vunpack.c.h.b16 %v120
  %v486 = vunpack.c.l.b16 %v121
  %v487 = vunpack.c.h.b16 %v121
  %v488 = vunpack.c.l.b16 %v122
  %v489 = vunpack.c.h.b16 %v122
  %v490 = vunpack.c.l.b16 %v123
  %v491 = vunpack.c.h.b16 %v123
  %v492 = vunpack.c.l.b16 %v124
  %v493 = vunpack.c.h.b16 %v124
  %v494 = vunpack.c.l.b16 %v125
  %v495 = vunpack.c.h.b16 %v125
  %v496 = vunpack.c.l.b16 %v126
  %v497 = vunpack.c.h.b16 %v126
  %v498 = vunpack.c.l.b16 %v127
  %v499 = vunpack.c.h.b16 %v127
  %v500 = vunpack.c.l.b16 %v128
  %v501 = vunpack.c.h.b16 %v128
  %v502 = vunpack.c.l.b16 %v129
  %v503 = vunpack.c.h.b16 %v129
  %v504 = vunpack.c.l.b16 %v130
  %v505 = vunpack.c.h.b16 %v130
  %v506 = vunpack.c.l.b16 %v131
  %v507 = vunpack.c.h.b16 %v131
  %v508 = vunpack.c.l.b16 %v132
  %v509 = vunpack.c.h.b16 %v132
  %v510 = vunpack.c.l.b16 %v133
  %v511 = vunpack.c.h.b16 %v133
  %v512 = vunpack.c.l.b16 %v134
  %v513 = vunpack.c.h.b16 %v134
  %v514 = vunpack.c.l.b16 %v135
  %v515 = vunpack.c.h.b16 %v135
  %v516 = vunpack.c.l.b16 %v136
  %v517 = vunpack.c.h.b16 %v136
  %v518 = vunpack.c.l.b16 %v137
  %v519 = vunpack.c.h.b16 %v137
  %v520 = vunpack.c.l.b16 %v138
  %v521 = vunpack.c.h.b16 %v138
  %v522 = vunpack.c.l.b16 %v139
  %v523 = vunpack.c.h.b16 %v139
  %v524 = vunpack.c.l.b16 %v140
  %v525 = vunpack.c.h.b16 %v140
  %v526 = vunpack.c.l.b16 %v141
  %v527 = vunpack.c.h.b16 %v141
  %v528 = vunpack.c.l.b16 %v142
  %v529 = vunpack.c.h.b16 %v142
  %v530 = vunpack.c.l.b16 %v143
  %v531 = vunpack.c.h.b16 %v143
  %v532 = vunpack.c.l.b16 %v144
  %v533 = vunpack.c.h.b16 %v144
  %v534 = vpack.c.b16 %v342, %v278
  %v535 = vpack.c.b16 %v343, %v279
  %v536 = vpack.c.b16 %v344, %v280
  %v537 = vpack.c.b16 %v345, %v281
  %v538 = vpack.c.b16 %v346, %v282
  %v539 = vpack.c.b16 %v347, %v283
  %v540 = vpack.c.b16 %v348, %v284
  %v541 = vpack.c.b16 %v349, %v285
  %v542 = vpack.c.b16 %v350, %v286
  %v543 = vpack.c.b16 %v351, %v287
  %v544 = vpack.c.b16 %v352, %v288
  %v545 = vpack.c.b16 %v353, %v289
  %v546 = vpack.c.b16 %v354, %v290
  %v547 = vpack.c.b16 %v355, %v291
  %v548 = vpack.c.b16 %v356, %v292
  %v549 = vpack.c.b16 %v357, %v293
  %v550 = vpack.c.b16 %v358, %v294
  %v551 = vpack.c.b16 %v359, %v295
  %v552 = vpack.c.b16 %v360, %v296
  %v553 = vpack.c.b16 %v361, %v297
  %v554 = vpack.c.b16 %v362, %v298
  %v555 = vpack.c.b16 %v363, %v299
  %v556 = vpack.c.b16 %v364, %v300
  %v557 = vpack.c.b16 %v365, %v301
  %v558 = vpack.c.b16 %v366, %v302
  %v559 = vpack.c.b16 %v367, %v303
  %v560 = vpack.c.b16 %v368, %v304
  %v561 = vpack.c.b16 %v369, %v305
  %v562 = vpack.c.b16 %v370, %v306
  %v563 = vpack.c.b16 %v371, %v307
  %v564 = vpack.c.b16 %v372, %v308
  %v565 = vpack.c.b16 %v373, %v309
  %v566 = vpack.c.b16 %v374, %v310
  %v567 = vpack.c.b16 %v375, %v311
  %v568 = vpack.c.b16 %v376, %v312
  %v569 = vpack.c.b16 %v377, %v313
  %v570 = vpack.c.b16 %v378, %v314
  %v571 = vpack.c.b16 %v379, %v315
  %v572 = vpack.c.b16 %v380, %v316
  %v573 = vpack.c.b16 %v381, %v317
  %v574 = vpack.c.b16 %v382, %v318
  %v575 = vpack.c.b16 %v383, %v319
  %v576 = vpack.c.b16 %v384, %v320
  %v577 = vpack.c.b16 %v385, %v321
  %v578 = vpack.c.b16 %v386, %v322
  %v579 = vpack.c.b16 %v387, %v323
  %v580 = vpack.c.b16 %v388, %v324
  %v581 = vpack.c.b16 %v389, %v325
  %v582 = vpack.c.b16 %v390, %v326
  %v583 = vpack.c.b16 %v391, %v327
  %v584 = vpack.c.b16 %v392, %v328
  %v585 = vpack.c.b16 %v393, %v329
  %v586 = vpack.c.b16 %v394, %v330
  %v587 = vpack.c.b16 %v395, %v331
  %v588 = vpack.c.b16 %v396, %v332
  %v589 = vpack.c.b16 %v397, %v333
  %v590 = vpack.c.b16 %v398, %v334
  %v591 = vpack.c.b16 %v399, %v335
  %v592 = vpack.c.b16 %v400, %v336
  %v593 = vpack.c.b16 %v401, %v337
  %v594 = vpack.c.b16 %v402, %v338
  %v595 = vpack.c.b16 %v403, %v339
  %v596 = vpack.c.b16 %v404, %v340
  %v597 = vpack.c.b16 %v405, %v341
  %v598 = vpack.c.b16 %v470, %v406
  %v599 = vpack.c.b16 %v471, %v407
  %v600 = vpack.c.b16 %v472, %v408
  %v601 = vpack.c.b16 %v473, %v409
  %v602 = vpack.c.b16 %v474, %v410
  %v603 = vpack.c.b16 %v475, %v411
  %v604 = vpack.c.b16 %v476, %v412
  %v605 = vpack.c.b16 %v477, %v413
  %v606 = vpack.c.b16 %v478, %v414
  %v607 = vpack.c.b16 %v479, %v415
  %v608 = vpack.c.b16 %v480, %v416
  %v609 = vpack.c.b16 %v481, %v417
  %v610 = vpack.c.b16 %v482, %v418
  %v611 = vpack.c.b16 %v483, %v419
  %v612 = vpack.c.b16 %v484, %v420
  %v613 = vpack.c.b16 %v485, %v421
  %v614 = vpack.c.b16 %v486, %v422
  %v615 = vpack.c.b16 %v487, %v423
  %v616 = vpack.c.b16 %v488, %v424
  %v617 = vpack.c.b16 %v489, %v425
  %v618 = vpack.c.b16 %v490, %v426
  %v619 = vpack.c.b16 %v491, %v427
  %v620 = vpack.c.b16 %v492, %v428
  %v621 = vpack.c.b16 %v493, %v429
  %v622 = vpack.c.b16 %v494, %v430
  %v623 = vpack.c.b16 %v495, %v431
  %v624 = vpack.c.b16 %v496, %v432
  %v625 = vpack.c.b16 %v497, %v433
  %v626 = vpack.c.b16 %v498, %v434
  %v627 = vpack.c.b16 %v499, %v435
  %v628 = vpack.c.b16 %v500, %v436
  %v629 = vpack.c.b16 %v501, %v437
  %v630 = vpack.c.b16 %v502, %v438
  %v631 = vpack.c.b16 %v503, %v439
  %v632 = vpack.c.b16 %v504, %v440
  %v633 = vpack.c.b16 %v505, %v441
  %v634 = vpack.c.b16 %v506, %v442
  %v635 = vpack.c.b16 %v507, %v443
  %v636 = vpack.c.b16 %v508, %v444
  %v637 = vpack.c.b16 %v509, %v445
  %v638 = vpack.c.b16 %v510, %v446
  %v639 = vpack.c.b16 %v511, %v447
  %v640 = vpack.c.b16 %v512, %v448
  %v641 = vpack.c.b16 %v513, %v449
  %v642 = vpack.c.b16 %v514, %v450
  %v643 = vpack.c.b16 %v515, %v451
  %v644 = vpack.c.b16 %v516, %v452
  %v645 = vpack.c.b16 %v517, %v453
  %v646 = vpack.c.b16 %v518, %v454
  %v647 = vpack.c.b16 %v519, %v455
  %v648 = vpack.c.b16 %v520, %v456
  %v649 = vpack.c.b16 %v521, %v457
  %v650 = vpack.c.b16 %v522, %v458
  %v651 = vpack.c.b16 %v523, %v459
  %v652 = vpack.c.b16 %v524, %v460
  %v653 = vpack.c.b16 %v525, %v461
  %v654 = vpack.c.b16 %v526, %v462
  %v655 = vpack.c.b16 %v527, %v463
  %v656 = vpack.c.b16 %v528, %v464
  %v657 = vpack.c.b16 %v529, %v465
  %v658 = vpack.c.b16 %v530, %v466
  %v659 = vpack.c.b16 %v531, %v467
  %v660 = vpack.c.b16 %v532, %v468
  %v661 = vpack.c.b16 %v533, %v469
  %vm726 = vcmask 203776
  %v728 = vsel %vm726, %v149, 0
  %vm730 = vcmask 1043456
  %vm731 = vcmask 1044480
  %v732 = vsel %vm730, 4294967295, 65535
  %v733 = vsel %vm731, %v732, 0
  %v735 = vand.u32 %v598, %v733
  %v738 = vand.u32 %v599, %v733
  %v741 = vand.u32 %v600, %v733
  %v744 = vand.u32 %v601, %v733
  %v747 = vand.u32 %v602, %v733
  %v750 = vand.u32 %v603, %v733
  %v753 = vand.u32 %v604, %v733
  %v756 = vand.u32 %v605, %v733
  %v759 = vand.u32 %v606, %v733
  %v762 = vand.u32 %v607, %v733
  %v765 = vand.u32 %v608, %v733
  %v768 = vand.u32 %v609, %v733
  %v771 = vand.u32 %v610, %v733
  %v774 = vand.u32 %v611, %v733
  %v777 = vand.u32 %v612, %v733
  %v780 = vand.u32 %v613, %v733
  %v783 = vand.u32 %v614, %v733
  %v786 = vand.u32 %v615, %v733
  %v789 = vand.u32 %v616, %v733
  %v792 = vand.u32 %v617, %v733
  %v795 = vand.u32 %v618, %v733
  %v798 = vand.u32 %v619, %v733
  %v801 = vand.u32 %v620, %v733
  %v804 = vand.u32 %v621, %v733
  %v807 = vand.u32 %v622, %v733
  %v810 = vand.u32 %v623, %v733
  %v813 = vand.u32 %v624, %v733
  %v816 = vand.u32 %v625, %v733
  %v819 = vand.u32 %v626, %v733
  %v822 = vand.u32 %v627, %v733
  %v825 = vand.u32 %v628, %v733
  %v828 = vand.u32 %v629, %v733
  %v831 = vand.u32 %v630, %v733
  %v834 = vand.u32 %v631, %v733
  %v837 = vand.u32 %v632, %v733
  %v840 = vand.u32 %v633, %v733
  %v843 = vand.u32 %v634, %v733
  %v846 = vand.u32 %v635, %v733
  %v849 = vand.u32 %v636, %v733
  %v852 = vand.u32 %v637, %v733
  %v855 = vand.u32 %v638, %v733
  %v858 = vand.u32 %v639, %v733
  %v861 = vand.u32 %v640, %v733
  %v864 = vand.u32 %v641, %v733
  %v867 = vand.u32 %v642, %v733
  %v870 = vand.u32 %v643, %v733
  %v873 = vand.u32 %v644, %v733
  %v876 = vand.u32 %v645, %v733
  %v879 = vand.u32 %v646, %v733
  %v882 = vand.u32 %v647, %v733
  %v885 = vand.u32 %v648, %v733
  %v888 = vand.u32 %v649, %v733
  %v891 = vand.u32 %v650, %v733
  %v894 = vand.u32 %v651, %v733
  %v897 = vand.u32 %v652, %v733
  %v900 = vand.u32 %v653, %v733
  %v903 = vand.u32 %v654, %v733
  %v906 = vand.u32 %v655, %v733
  %v909 = vand.u32 %v656, %v733
  %v912 = vand.u32 %v657, %v733
  %v915 = vand.u32 %v658, %v733
  %v918 = vand.u32 %v659, %v733
  %v921 = vand.u32 %v660, %v733
  %v924 = vand.u32 %v661, %v733
  %926 = vmatprep.subr.bf16.mxu0 0
  %927 = vmatpush1.bf16.msra.mxu0 0
  %928 = vmatprep.subr.bf16.mxu0 0
  %929 = vmatpush1.bf16.msra.mxu0 0
  %930 = vmatprep.subr.bf16.mxu0 0
  %931 = vmatpush1.bf16.msra.mxu0 0
  %932 = vmatprep.subr.bf16.mxu0 0
  %933 = vmatpush1.bf16.msra.mxu0 0
  %934 = vmatprep.subr.bf16.mxu0 0
  %935 = vmatpush1.bf16.msra.mxu0 0
  %936 = vmatprep.subr.bf16.mxu0 0
  %937 = vmatpush1.bf16.msra.mxu0 0
  %938 = vmatprep.subr.bf16.mxu0 %v738
  %939 = vmatpush1.bf16.msra.mxu0 %v735
  %940 = vmatprep.subr.bf16.mxu0 %v535
  %941 = vmatpush1.bf16.msra.mxu0 %v534
  %942 = vmatprep.subr.bf16.mxu0 0
  %943 = vmatpush2.bf16.msra.mxu0 0
  %944 = vmatprep.subr.bf16.mxu0 0
  %945 = vmatpush2.bf16.msra.mxu0 0
  %946 = vmatprep.subr.bf16.mxu0 0
  %947 = vmatpush2.bf16.msra.mxu0 0
  %948 = vmatprep.subr.bf16.mxu0 0
  %949 = vmatpush2.bf16.msra.mxu0 0
  %950 = vmatprep.subr.bf16.mxu0 0
  %951 = vmatpush2.bf16.msra.mxu0 0
  %952 = vmatprep.subr.bf16.mxu0 0
  %953 = vmatpush2.bf16.msra.mxu0 0
  %954 = vmatprep.subr.bf16.mxu0 0
  %955 = vmatpush2.bf16.msra.mxu0 0
  %956 = vmatprep.subr.bf16.mxu0 0
  %957 = vmatpush2.bf16.msra.mxu0 0
  %958 = vmatprep.mubr.bf16.mxu0 0
  %959 = vmatmul.mubr.bf16.gmra.mxu0 %v728
  %v960 = vpop.f32.mrf.mxu0
  %v961 = vadd.f32 0.0, %v960
  %v962 = vpop.f32.mrf.mxu0
  %v963 = vadd.f32 0.0, %v962
  %v964 = vpop.f32.mrf.mxu0
  %v965 = vadd.f32 0.0, %v964
  %v966 = vpop.f32.mrf.mxu0
  %v967 = vadd.f32 0.0, %v966
  %968 = vdwg.mxu0
  %969 = vmatprep.subr.bf16.mxu0 0
  %970 = vmatpush1.bf16.msra.mxu0 0
  %971 = vmatprep.subr.bf16.mxu0 0
  %972 = vmatpush1.bf16.msra.mxu0 0
  %973 = vmatprep.subr.bf16.mxu0 0
  %974 = vmatpush1.bf16.msra.mxu0 0
  %975 = vmatprep.subr.bf16.mxu0 0
  %976 = vmatpush1.bf16.msra.mxu0 0
  %977 = vmatprep.subr.bf16.mxu0 0
  %978 = vmatpush1.bf16.msra.mxu0 0
  %979 = vmatprep.subr.bf16.mxu0 0
  %980 = vmatpush1.bf16.msra.mxu0 0
  %981 = vmatprep.subr.bf16.mxu0 %v744
  %982 = vmatpush1.bf16.msra.mxu0 %v741
  %983 = vmatprep.subr.bf16.mxu0 %v537
  %984 = vmatpush1.bf16.msra.mxu0 %v536
  %985 = vmatprep.subr.bf16.mxu0 0
  %986 = vmatpush2.bf16.msra.mxu0 0
  %987 = vmatprep.subr.bf16.mxu0 0
  %988 = vmatpush2.bf16.msra.mxu0 0
  %989 = vmatprep.subr.bf16.mxu0 0
  %990 = vmatpush2.bf16.msra.mxu0 0
  %991 = vmatprep.subr.bf16.mxu0 0
  %992 = vmatpush2.bf16.msra.mxu0 0
  %993 = vmatprep.subr.bf16.mxu0 0
  %994 = vmatpush2.bf16.msra.mxu0 0
  %995 = vmatprep.subr.bf16.mxu0 0
  %996 = vmatpush2.bf16.msra.mxu0 0
  %997 = vmatprep.subr.bf16.mxu0 0
  %998 = vmatpush2.bf16.msra.mxu0 0
  %999 = vmatprep.subr.bf16.mxu0 0
  %1000 = vmatpush2.bf16.msra.mxu0 0
  %1001 = vmatprep.mubr.bf16.mxu0 0
  %1002 = vmatmul.mubr.bf16.gmra.mxu0 %v728
  %v1003 = vpop.f32.mrf.mxu0
  %v1004 = vadd.f32 0.0, %v1003
  %v1005 = vpop.f32.mrf.mxu0
  %v1006 = vadd.f32 0.0, %v1005
  %v1007 = vpop.f32.mrf.mxu0
  %v1008 = vadd.f32 0.0, %v1007
  %v1009 = vpop.f32.mrf.mxu0
  %v1010 = vadd.f32 0.0, %v1009
  %1011 = vdwg.mxu0
  %1012 = vmatprep.subr.bf16.mxu0 0
  %1013 = vmatpush1.bf16.msra.mxu0 0
  %1014 = vmatprep.subr.bf16.mxu0 0
  %1015 = vmatpush1.bf16.msra.mxu0 0
  %1016 = vmatprep.subr.bf16.mxu0 0
  %1017 = vmatpush1.bf16.msra.mxu0 0
  %1018 = vmatprep.subr.bf16.mxu0 0
  %1019 = vmatpush1.bf16.msra.mxu0 0
  %1020 = vmatprep.subr.bf16.mxu0 0
  %1021 = vmatpush1.bf16.msra.mxu0 0
  %1022 = vmatprep.subr.bf16.mxu0 0
  %1023 = vmatpush1.bf16.msra.mxu0 0
  %1024 = vmatprep.subr.bf16.mxu0 %v750
  %1025 = vmatpush1.bf16.msra.mxu0 %v747
  %1026 = vmatprep.subr.bf16.mxu0 %v539
  %1027 = vmatpush1.bf16.msra.mxu0 %v538
  %1028 = vmatprep.subr.bf16.mxu0 0
  %1029 = vmatpush2.bf16.msra.mxu0 0
  %1030 = vmatprep.subr.bf16.mxu0 0
  %1031 = vmatpush2.bf16.msra.mxu0 0
  %1032 = vmatprep.subr.bf16.mxu0 0
  %1033 = vmatpush2.bf16.msra.mxu0 0
  %1034 = vmatprep.subr.bf16.mxu0 0
  %1035 = vmatpush2.bf16.msra.mxu0 0
  %1036 = vmatprep.subr.bf16.mxu0 0
  %1037 = vmatpush2.bf16.msra.mxu0 0
  %1038 = vmatprep.subr.bf16.mxu0 0
  %1039 = vmatpush2.bf16.msra.mxu0 0
  %1040 = vmatprep.subr.bf16.mxu0 0
  %1041 = vmatpush2.bf16.msra.mxu0 0
  %1042 = vmatprep.subr.bf16.mxu0 0
  %1043 = vmatpush2.bf16.msra.mxu0 0
  %1044 = vmatprep.mubr.bf16.mxu0 0
  %1045 = vmatmul.mubr.bf16.gmra.mxu0 %v728
  %v1046 = vpop.f32.mrf.mxu0
  %v1047 = vadd.f32 0.0, %v1046
  %v1048 = vpop.f32.mrf.mxu0
  %v1049 = vadd.f32 0.0, %v1048
  %v1050 = vpop.f32.mrf.mxu0
  %v1051 = vadd.f32 0.0, %v1050
  %v1052 = vpop.f32.mrf.mxu0
  %v1053 = vadd.f32 0.0, %v1052
  %1054 = vdwg.mxu0
  %1055 = vmatprep.subr.bf16.mxu0 0
  %1056 = vmatpush1.bf16.msra.mxu0 0
  %1057 = vmatprep.subr.bf16.mxu0 0
  %1058 = vmatpush1.bf16.msra.mxu0 0
  %1059 = vmatprep.subr.bf16.mxu0 0
  %1060 = vmatpush1.bf16.msra.mxu0 0
  %1061 = vmatprep.subr.bf16.mxu0 0
  %1062 = vmatpush1.bf16.msra.mxu0 0
  %1063 = vmatprep.subr.bf16.mxu0 0
  %1064 = vmatpush1.bf16.msra.mxu0 0
  %1065 = vmatprep.subr.bf16.mxu0 0
  %1066 = vmatpush1.bf16.msra.mxu0 0
  %1067 = vmatprep.subr.bf16.mxu0 %v756
  %1068 = vmatpush1.bf16.msra.mxu0 %v753
  %1069 = vmatprep.subr.bf16.mxu0 %v541
  %1070 = vmatpush1.bf16.msra.mxu0 %v540
  %1071 = vmatprep.subr.bf16.mxu0 0
  %1072 = vmatpush2.bf16.msra.mxu0 0
  %1073 = vmatprep.subr.bf16.mxu0 0
  %1074 = vmatpush2.bf16.msra.mxu0 0
  %1075 = vmatprep.subr.bf16.mxu0 0
  %1076 = vmatpush2.bf16.msra.mxu0 0
  %1077 = vmatprep.subr.bf16.mxu0 0
  %1078 = vmatpush2.bf16.msra.mxu0 0
  %1079 = vmatprep.subr.bf16.mxu0 0
  %1080 = vmatpush2.bf16.msra.mxu0 0
  %1081 = vmatprep.subr.bf16.mxu0 0
  %1082 = vmatpush2.bf16.msra.mxu0 0
  %1083 = vmatprep.subr.bf16.mxu0 0
  %1084 = vmatpush2.bf16.msra.mxu0 0
  %1085 = vmatprep.subr.bf16.mxu0 0
  %1086 = vmatpush2.bf16.msra.mxu0 0
  %1087 = vmatprep.mubr.bf16.mxu0 0
  %1088 = vmatmul.mubr.bf16.gmra.mxu0 %v728
  %v1089 = vpop.f32.mrf.mxu0
  %v1090 = vadd.f32 0.0, %v1089
  %v1091 = vpop.f32.mrf.mxu0
  %v1092 = vadd.f32 0.0, %v1091
  %v1093 = vpop.f32.mrf.mxu0
  %v1094 = vadd.f32 0.0, %v1093
  %v1095 = vpop.f32.mrf.mxu0
  %v1096 = vadd.f32 0.0, %v1095
  %1097 = vdwg.mxu0
  %1098 = vmatprep.subr.bf16.mxu0 0
  %1099 = vmatpush1.bf16.msra.mxu0 0
  %1100 = vmatprep.subr.bf16.mxu0 0
  %1101 = vmatpush1.bf16.msra.mxu0 0
  %1102 = vmatprep.subr.bf16.mxu0 0
  %1103 = vmatpush1.bf16.msra.mxu0 0
  %1104 = vmatprep.subr.bf16.mxu0 0
  %1105 = vmatpush1.bf16.msra.mxu0 0
  %1106 = vmatprep.subr.bf16.mxu0 0
  %1107 = vmatpush1.bf16.msra.mxu0 0
  %1108 = vmatprep.subr.bf16.mxu0 0
  %1109 = vmatpush1.bf16.msra.mxu0 0
  %1110 = vmatprep.subr.bf16.mxu0 %v762
  %1111 = vmatpush1.bf16.msra.mxu0 %v759
  %1112 = vmatprep.subr.bf16.mxu0 %v543
  %1113 = vmatpush1.bf16.msra.mxu0 %v542
  %1114 = vmatprep.subr.bf16.mxu0 0
  %1115 = vmatpush2.bf16.msra.mxu0 0
  %1116 = vmatprep.subr.bf16.mxu0 0
  %1117 = vmatpush2.bf16.msra.mxu0 0
  %1118 = vmatprep.subr.bf16.mxu0 0
  %1119 = vmatpush2.bf16.msra.mxu0 0
  %1120 = vmatprep.subr.bf16.mxu0 0
  %1121 = vmatpush2.bf16.msra.mxu0 0
  %1122 = vmatprep.subr.bf16.mxu0 0
  %1123 = vmatpush2.bf16.msra.mxu0 0
  %1124 = vmatprep.subr.bf16.mxu0 0
  %1125 = vmatpush2.bf16.msra.mxu0 0
  %1126 = vmatprep.subr.bf16.mxu0 0
  %1127 = vmatpush2.bf16.msra.mxu0 0
  %1128 = vmatprep.subr.bf16.mxu0 0
  %1129 = vmatpush2.bf16.msra.mxu0 0
  %1130 = vmatprep.mubr.bf16.mxu0 0
  %1131 = vmatmul.mubr.bf16.gmra.mxu0 %v728
  %v1132 = vpop.f32.mrf.mxu0
  %v1133 = vadd.f32 0.0, %v1132
  %v1134 = vpop.f32.mrf.mxu0
  %v1135 = vadd.f32 0.0, %v1134
  %v1136 = vpop.f32.mrf.mxu0
  %v1137 = vadd.f32 0.0, %v1136
  %v1138 = vpop.f32.mrf.mxu0
  %v1139 = vadd.f32 0.0, %v1138
  %1140 = vdwg.mxu0
  %1141 = vmatprep.subr.bf16.mxu0 0
  %1142 = vmatpush1.bf16.msra.mxu0 0
  %1143 = vmatprep.subr.bf16.mxu0 0
  %1144 = vmatpush1.bf16.msra.mxu0 0
  %1145 = vmatprep.subr.bf16.mxu0 0
  %1146 = vmatpush1.bf16.msra.mxu0 0
  %1147 = vmatprep.subr.bf16.mxu0 0
  %1148 = vmatpush1.bf16.msra.mxu0 0
  %1149 = vmatprep.subr.bf16.mxu0 0
  %1150 = vmatpush1.bf16.msra.mxu0 0
  %1151 = vmatprep.subr.bf16.mxu0 0
  %1152 = vmatpush1.bf16.msra.mxu0 0
  %1153 = vmatprep.subr.bf16.mxu0 %v768
  %1154 = vmatpush1.bf16.msra.mxu0 %v765
  %1155 = vmatprep.subr.bf16.mxu0 %v545
  %1156 = vmatpush1.bf16.msra.mxu0 %v544
  %1157 = vmatprep.subr.bf16.mxu0 0
  %1158 = vmatpush2.bf16.msra.mxu0 0
  %1159 = vmatprep.subr.bf16.mxu0 0
  %1160 = vmatpush2.bf16.msra.mxu0 0
  %1161 = vmatprep.subr.bf16.mxu0 0
  %1162 = vmatpush2.bf16.msra.mxu0 0
  %1163 = vmatprep.subr.bf16.mxu0 0
  %1164 = vmatpush2.bf16.msra.mxu0 0
  %1165 = vmatprep.subr.bf16.mxu0 0
  %1166 = vmatpush2.bf16.msra.mxu0 0
  %1167 = vmatprep.subr.bf16.mxu0 0
  %1168 = vmatpush2.bf16.msra.mxu0 0
  %1169 = vmatprep.subr.bf16.mxu0 0
  %1170 = vmatpush2.bf16.msra.mxu0 0
  %1171 = vmatprep.subr.bf16.mxu0 0
  %1172 = vmatpush2.bf16.msra.mxu0 0
  %1173 = vmatprep.mubr.bf16.mxu0 0
  %1174 = vmatmul.mubr.bf16.gmra.mxu0 %v728
  %v1175 = vpop.f32.mrf.mxu0
  %v1176 = vadd.f32 0.0, %v1175
  %v1177 = vpop.f32.mrf.mxu0
  %v1178 = vadd.f32 0.0, %v1177
  %v1179 = vpop.f32.mrf.mxu0
  %v1180 = vadd.f32 0.0, %v1179
  %v1181 = vpop.f32.mrf.mxu0
  %v1182 = vadd.f32 0.0, %v1181
  %1183 = vdwg.mxu0
  %1184 = vmatprep.subr.bf16.mxu0 0
  %1185 = vmatpush1.bf16.msra.mxu0 0
  %1186 = vmatprep.subr.bf16.mxu0 0
  %1187 = vmatpush1.bf16.msra.mxu0 0
  %1188 = vmatprep.subr.bf16.mxu0 0
  %1189 = vmatpush1.bf16.msra.mxu0 0
  %1190 = vmatprep.subr.bf16.mxu0 0
  %1191 = vmatpush1.bf16.msra.mxu0 0
  %1192 = vmatprep.subr.bf16.mxu0 0
  %1193 = vmatpush1.bf16.msra.mxu0 0
  %1194 = vmatprep.subr.bf16.mxu0 0
  %1195 = vmatpush1.bf16.msra.mxu0 0
  %1196 = vmatprep.subr.bf16.mxu0 %v774
  %1197 = vmatpush1.bf16.msra.mxu0 %v771
  %1198 = vmatprep.subr.bf16.mxu0 %v547
  %1199 = vmatpush1.bf16.msra.mxu0 %v546
  %1200 = vmatprep.subr.bf16.mxu0 0
  %1201 = vmatpush2.bf16.msra.mxu0 0
  %1202 = vmatprep.subr.bf16.mxu0 0
  %1203 = vmatpush2.bf16.msra.mxu0 0
  %1204 = vmatprep.subr.bf16.mxu0 0
  %1205 = vmatpush2.bf16.msra.mxu0 0
  %1206 = vmatprep.subr.bf16.mxu0 0
  %1207 = vmatpush2.bf16.msra.mxu0 0
  %1208 = vmatprep.subr.bf16.mxu0 0
  %1209 = vmatpush2.bf16.msra.mxu0 0
  %1210 = vmatprep.subr.bf16.mxu0 0
  %1211 = vmatpush2.bf16.msra.mxu0 0
  %1212 = vmatprep.subr.bf16.mxu0 0
  %1213 = vmatpush2.bf16.msra.mxu0 0
  %1214 = vmatprep.subr.bf16.mxu0 0
  %1215 = vmatpush2.bf16.msra.mxu0 0
  %1216 = vmatprep.mubr.bf16.mxu0 0
  %1217 = vmatmul.mubr.bf16.gmra.mxu0 %v728
  %v1218 = vpop.f32.mrf.mxu0
  %v1219 = vadd.f32 0.0, %v1218
  %v1220 = vpop.f32.mrf.mxu0
  %v1221 = vadd.f32 0.0, %v1220
  %v1222 = vpop.f32.mrf.mxu0
  %v1223 = vadd.f32 0.0, %v1222
  %v1224 = vpop.f32.mrf.mxu0
  %v1225 = vadd.f32 0.0, %v1224
  %1226 = vdwg.mxu0
  %1227 = vmatprep.subr.bf16.mxu0 0
  %1228 = vmatpush1.bf16.msra.mxu0 0
  %1229 = vmatprep.subr.bf16.mxu0 0
  %1230 = vmatpush1.bf16.msra.mxu0 0
  %1231 = vmatprep.subr.bf16.mxu0 0
  %1232 = vmatpush1.bf16.msra.mxu0 0
  %1233 = vmatprep.subr.bf16.mxu0 0
  %1234 = vmatpush1.bf16.msra.mxu0 0
  %1235 = vmatprep.subr.bf16.mxu0 0
  %1236 = vmatpush1.bf16.msra.mxu0 0
  %1237 = vmatprep.subr.bf16.mxu0 0
  %1238 = vmatpush1.bf16.msra.mxu0 0
  %1239 = vmatprep.subr.bf16.mxu0 %v780
  %1240 = vmatpush1.bf16.msra.mxu0 %v777
  %1241 = vmatprep.subr.bf16.mxu0 %v549
  %1242 = vmatpush1.bf16.msra.mxu0 %v548
  %1243 = vmatprep.subr.bf16.mxu0 0
  %1244 = vmatpush2.bf16.msra.mxu0 0
  %1245 = vmatprep.subr.bf16.mxu0 0
  %1246 = vmatpush2.bf16.msra.mxu0 0
  %1247 = vmatprep.subr.bf16.mxu0 0
  %1248 = vmatpush2.bf16.msra.mxu0 0
  %1249 = vmatprep.subr.bf16.mxu0 0
  %1250 = vmatpush2.bf16.msra.mxu0 0
  %1251 = vmatprep.subr.bf16.mxu0 0
  %1252 = vmatpush2.bf16.msra.mxu0 0
  %1253 = vmatprep.subr.bf16.mxu0 0
  %1254 = vmatpush2.bf16.msra.mxu0 0
  %1255 = vmatprep.subr.bf16.mxu0 0
  %1256 = vmatpush2.bf16.msra.mxu0 0
  %1257 = vmatprep.subr.bf16.mxu0 0
  %1258 = vmatpush2.bf16.msra.mxu0 0
  %1259 = vmatprep.mubr.bf16.mxu0 0
  %1260 = vmatmul.mubr.bf16.gmra.mxu0 %v728
  %v1261 = vpop.f32.mrf.mxu0
  %v1262 = vadd.f32 0.0, %v1261
  %v1263 = vpop.f32.mrf.mxu0
  %v1264 = vadd.f32 0.0, %v1263
  %v1265 = vpop.f32.mrf.mxu0
  %v1266 = vadd.f32 0.0, %v1265
  %v1267 = vpop.f32.mrf.mxu0
  %v1268 = vadd.f32 0.0, %v1267
  %1269 = vdwg.mxu0
  %1270 = vmatprep.subr.bf16.mxu0 0
  %1271 = vmatpush1.bf16.msra.mxu0 0
  %1272 = vmatprep.subr.bf16.mxu0 0
  %1273 = vmatpush1.bf16.msra.mxu0 0
  %1274 = vmatprep.subr.bf16.mxu0 0
  %1275 = vmatpush1.bf16.msra.mxu0 0
  %1276 = vmatprep.subr.bf16.mxu0 0
  %1277 = vmatpush1.bf16.msra.mxu0 0
  %1278 = vmatprep.subr.bf16.mxu0 0
  %1279 = vmatpush1.bf16.msra.mxu0 0
  %1280 = vmatprep.subr.bf16.mxu0 0
  %1281 = vmatpush1.bf16.msra.mxu0 0
  %1282 = vmatprep.subr.bf16.mxu0 %v786
  %1283 = vmatpush1.bf16.msra.mxu0 %v783
  %1284 = vmatprep.subr.bf16.mxu0 %v551
  %1285 = vmatpush1.bf16.msra.mxu0 %v550
  %1286 = vmatprep.subr.bf16.mxu0 0
  %1287 = vmatpush2.bf16.msra.mxu0 0
  %1288 = vmatprep.subr.bf16.mxu0 0
  %1289 = vmatpush2.bf16.msra.mxu0 0
  %1290 = vmatprep.subr.bf16.mxu0 0
  %1291 = vmatpush2.bf16.msra.mxu0 0
  %1292 = vmatprep.subr.bf16.mxu0 0
  %1293 = vmatpush2.bf16.msra.mxu0 0
  %1294 = vmatprep.subr.bf16.mxu0 0
  %1295 = vmatpush2.bf16.msra.mxu0 0
  %1296 = vmatprep.subr.bf16.mxu0 0
  %1297 = vmatpush2.bf16.msra.mxu0 0
  %1298 = vmatprep.subr.bf16.mxu0 0
  %1299 = vmatpush2.bf16.msra.mxu0 0
  %1300 = vmatprep.subr.bf16.mxu0 0
  %1301 = vmatpush2.bf16.msra.mxu0 0
  %1302 = vmatprep.mubr.bf16.mxu0 0
  %1303 = vmatmul.mubr.bf16.gmra.mxu0 %v728
  %v1304 = vpop.f32.mrf.mxu0
  %v1305 = vadd.f32 0.0, %v1304
  %v1306 = vpop.f32.mrf.mxu0
  %v1307 = vadd.f32 0.0, %v1306
  %v1308 = vpop.f32.mrf.mxu0
  %v1309 = vadd.f32 0.0, %v1308
  %v1310 = vpop.f32.mrf.mxu0
  %v1311 = vadd.f32 0.0, %v1310
  %1312 = vdwg.mxu0
  %1313 = vmatprep.subr.bf16.mxu0 0
  %1314 = vmatpush1.bf16.msra.mxu0 0
  %1315 = vmatprep.subr.bf16.mxu0 0
  %1316 = vmatpush1.bf16.msra.mxu0 0
  %1317 = vmatprep.subr.bf16.mxu0 0
  %1318 = vmatpush1.bf16.msra.mxu0 0
  %1319 = vmatprep.subr.bf16.mxu0 0
  %1320 = vmatpush1.bf16.msra.mxu0 0
  %1321 = vmatprep.subr.bf16.mxu0 0
  %1322 = vmatpush1.bf16.msra.mxu0 0
  %1323 = vmatprep.subr.bf16.mxu0 0
  %1324 = vmatpush1.bf16.msra.mxu0 0
  %1325 = vmatprep.subr.bf16.mxu0 %v792
  %1326 = vmatpush1.bf16.msra.mxu0 %v789
  %1327 = vmatprep.subr.bf16.mxu0 %v553
  %1328 = vmatpush1.bf16.msra.mxu0 %v552
  %1329 = vmatprep.subr.bf16.mxu0 0
  %1330 = vmatpush2.bf16.msra.mxu0 0
  %1331 = vmatprep.subr.bf16.mxu0 0
  %1332 = vmatpush2.bf16.msra.mxu0 0
  %1333 = vmatprep.subr.bf16.mxu0 0
  %1334 = vmatpush2.bf16.msra.mxu0 0
  %1335 = vmatprep.subr.bf16.mxu0 0
  %1336 = vmatpush2.bf16.msra.mxu0 0
  %1337 = vmatprep.subr.bf16.mxu0 0
  %1338 = vmatpush2.bf16.msra.mxu0 0
  %1339 = vmatprep.subr.bf16.mxu0 0
  %1340 = vmatpush2.bf16.msra.mxu0 0
  %1341 = vmatprep.subr.bf16.mxu0 0
  %1342 = vmatpush2.bf16.msra.mxu0 0
  %1343 = vmatprep.subr.bf16.mxu0 0
  %1344 = vmatpush2.bf16.msra.mxu0 0
  %1345 = vmatprep.mubr.bf16.mxu0 0
  %1346 = vmatmul.mubr.bf16.gmra.mxu0 %v728
  %v1347 = vpop.f32.mrf.mxu0
  %v1348 = vadd.f32 0.0, %v1347
  %v1349 = vpop.f32.mrf.mxu0
  %v1350 = vadd.f32 0.0, %v1349
  %v1351 = vpop.f32.mrf.mxu0
  %v1352 = vadd.f32 0.0, %v1351
  %v1353 = vpop.f32.mrf.mxu0
  %v1354 = vadd.f32 0.0, %v1353
  %1355 = vdwg.mxu0
  %1356 = vmatprep.subr.bf16.mxu0 0
  %1357 = vmatpush1.bf16.msra.mxu0 0
  %1358 = vmatprep.subr.bf16.mxu0 0
  %1359 = vmatpush1.bf16.msra.mxu0 0
  %1360 = vmatprep.subr.bf16.mxu0 0
  %1361 = vmatpush1.bf16.msra.mxu0 0
  %1362 = vmatprep.subr.bf16.mxu0 0
  %1363 = vmatpush1.bf16.msra.mxu0 0
  %1364 = vmatprep.subr.bf16.mxu0 0
  %1365 = vmatpush1.bf16.msra.mxu0 0
  %1366 = vmatprep.subr.bf16.mxu0 0
  %1367 = vmatpush1.bf16.msra.mxu0 0
  %1368 = vmatprep.subr.bf16.mxu0 %v798
  %1369 = vmatpush1.bf16.msra.mxu0 %v795
  %1370 = vmatprep.subr.bf16.mxu0 %v555
  %1371 = vmatpush1.bf16.msra.mxu0 %v554
  %1372 = vmatprep.subr.bf16.mxu0 0
  %1373 = vmatpush2.bf16.msra.mxu0 0
  %1374 = vmatprep.subr.bf16.mxu0 0
  %1375 = vmatpush2.bf16.msra.mxu0 0
  %1376 = vmatprep.subr.bf16.mxu0 0
  %1377 = vmatpush2.bf16.msra.mxu0 0
  %1378 = vmatprep.subr.bf16.mxu0 0
  %1379 = vmatpush2.bf16.msra.mxu0 0
  %1380 = vmatprep.subr.bf16.mxu0 0
  %1381 = vmatpush2.bf16.msra.mxu0 0
  %1382 = vmatprep.subr.bf16.mxu0 0
  %1383 = vmatpush2.bf16.msra.mxu0 0
  %1384 = vmatprep.subr.bf16.mxu0 0
  %1385 = vmatpush2.bf16.msra.mxu0 0
  %1386 = vmatprep.subr.bf16.mxu0 0
  %1387 = vmatpush2.bf16.msra.mxu0 0
  %1388 = vmatprep.mubr.bf16.mxu0 0
  %1389 = vmatmul.mubr.bf16.gmra.mxu0 %v728
  %v1390 = vpop.f32.mrf.mxu0
  %v1391 = vadd.f32 0.0, %v1390
  %v1392 = vpop.f32.mrf.mxu0
  %v1393 = vadd.f32 0.0, %v1392
  %v1394 = vpop.f32.mrf.mxu0
  %v1395 = vadd.f32 0.0, %v1394
  %v1396 = vpop.f32.mrf.mxu0
  %v1397 = vadd.f32 0.0, %v1396
  %1398 = vdwg.mxu0
  %1399 = vmatprep.subr.bf16.mxu0 0
  %1400 = vmatpush1.bf16.msra.mxu0 0
  %1401 = vmatprep.subr.bf16.mxu0 0
  %1402 = vmatpush1.bf16.msra.mxu0 0
  %1403 = vmatprep.subr.bf16.mxu0 0
  %1404 = vmatpush1.bf16.msra.mxu0 0
  %1405 = vmatprep.subr.bf16.mxu0 0
  %1406 = vmatpush1.bf16.msra.mxu0 0
  %1407 = vmatprep.subr.bf16.mxu0 0
  %1408 = vmatpush1.bf16.msra.mxu0 0
  %1409 = vmatprep.subr.bf16.mxu0 0
  %1410 = vmatpush1.bf16.msra.mxu0 0
  %1411 = vmatprep.subr.bf16.mxu0 %v804
  %1412 = vmatpush1.bf16.msra.mxu0 %v801
  %1413 = vmatprep.subr.bf16.mxu0 %v557
  %1414 = vmatpush1.bf16.msra.mxu0 %v556
  %1415 = vmatprep.subr.bf16.mxu0 0
  %1416 = vmatpush2.bf16.msra.mxu0 0
  %1417 = vmatprep.subr.bf16.mxu0 0
  %1418 = vmatpush2.bf16.msra.mxu0 0
  %1419 = vmatprep.subr.bf16.mxu0 0
  %1420 = vmatpush2.bf16.msra.mxu0 0
  %1421 = vmatprep.subr.bf16.mxu0 0
  %1422 = vmatpush2.bf16.msra.mxu0 0
  %1423 = vmatprep.subr.bf16.mxu0 0
  %1424 = vmatpush2.bf16.msra.mxu0 0
  %1425 = vmatprep.subr.bf16.mxu0 0
  %1426 = vmatpush2.bf16.msra.mxu0 0
  %1427 = vmatprep.subr.bf16.mxu0 0
  %1428 = vmatpush2.bf16.msra.mxu0 0
  %1429 = vmatprep.subr.bf16.mxu0 0
  %1430 = vmatpush2.bf16.msra.mxu0 0
  %1431 = vmatprep.mubr.bf16.mxu0 0
  %1432 = vmatmul.mubr.bf16.gmra.mxu0 %v728
  %v1433 = vpop.f32.mrf.mxu0
  %v1434 = vadd.f32 0.0, %v1433
  %v1435 = vpop.f32.mrf.mxu0
  %v1436 = vadd.f32 0.0, %v1435
  %v1437 = vpop.f32.mrf.mxu0
  %v1438 = vadd.f32 0.0, %v1437
  %v1439 = vpop.f32.mrf.mxu0
  %v1440 = vadd.f32 0.0, %v1439
  %1441 = vdwg.mxu0
  %1442 = vmatprep.subr.bf16.mxu0 0
  %1443 = vmatpush1.bf16.msra.mxu0 0
  %1444 = vmatprep.subr.bf16.mxu0 0
  %1445 = vmatpush1.bf16.msra.mxu0 0
  %1446 = vmatprep.subr.bf16.mxu0 0
  %1447 = vmatpush1.bf16.msra.mxu0 0
  %1448 = vmatprep.subr.bf16.mxu0 0
  %1449 = vmatpush1.bf16.msra.mxu0 0
  %1450 = vmatprep.subr.bf16.mxu0 0
  %1451 = vmatpush1.bf16.msra.mxu0 0
  %1452 = vmatprep.subr.bf16.mxu0 0
  %1453 = vmatpush1.bf16.msra.mxu0 0
  %1454 = vmatprep.subr.bf16.mxu0 %v810
  %1455 = vmatpush1.bf16.msra.mxu0 %v807
  %1456 = vmatprep.subr.bf16.mxu0 %v559
  %1457 = vmatpush1.bf16.msra.mxu0 %v558
  %1458 = vmatprep.subr.bf16.mxu0 0
  %1459 = vmatpush2.bf16.msra.mxu0 0
  %1460 = vmatprep.subr.bf16.mxu0 0
  %1461 = vmatpush2.bf16.msra.mxu0 0
  %1462 = vmatprep.subr.bf16.mxu0 0
  %1463 = vmatpush2.bf16.msra.mxu0 0
  %1464 = vmatprep.subr.bf16.mxu0 0
  %1465 = vmatpush2.bf16.msra.mxu0 0
  %1466 = vmatprep.subr.bf16.mxu0 0
  %1467 = vmatpush2.bf16.msra.mxu0 0
  %1468 = vmatprep.subr.bf16.mxu0 0
  %1469 = vmatpush2.bf16.msra.mxu0 0
  %1470 = vmatprep.subr.bf16.mxu0 0
  %1471 = vmatpush2.bf16.msra.mxu0 0
  %1472 = vmatprep.subr.bf16.mxu0 0
  %1473 = vmatpush2.bf16.msra.mxu0 0
  %1474 = vmatprep.mubr.bf16.mxu0 0
  %1475 = vmatmul.mubr.bf16.gmra.mxu0 %v728
  %v1476 = vpop.f32.mrf.mxu0
  %v1477 = vadd.f32 0.0, %v1476
  %v1478 = vpop.f32.mrf.mxu0
  %v1479 = vadd.f32 0.0, %v1478
  %v1480 = vpop.f32.mrf.mxu0
  %v1481 = vadd.f32 0.0, %v1480
  %v1482 = vpop.f32.mrf.mxu0
  %v1483 = vadd.f32 0.0, %v1482
  %1484 = vdwg.mxu0
  %1485 = vmatprep.subr.bf16.mxu0 0
  %1486 = vmatpush1.bf16.msra.mxu0 0
  %1487 = vmatprep.subr.bf16.mxu0 0
  %1488 = vmatpush1.bf16.msra.mxu0 0
  %1489 = vmatprep.subr.bf16.mxu0 0
  %1490 = vmatpush1.bf16.msra.mxu0 0
  %1491 = vmatprep.subr.bf16.mxu0 0
  %1492 = vmatpush1.bf16.msra.mxu0 0
  %1493 = vmatprep.subr.bf16.mxu0 0
  %1494 = vmatpush1.bf16.msra.mxu0 0
  %1495 = vmatprep.subr.bf16.mxu0 0
  %1496 = vmatpush1.bf16.msra.mxu0 0
  %1497 = vmatprep.subr.bf16.mxu0 %v816
  %1498 = vmatpush1.bf16.msra.mxu0 %v813
  %1499 = vmatprep.subr.bf16.mxu0 %v561
  %1500 = vmatpush1.bf16.msra.mxu0 %v560
  %1501 = vmatprep.subr.bf16.mxu0 0
  %1502 = vmatpush2.bf16.msra.mxu0 0
  %1503 = vmatprep.subr.bf16.mxu0 0
  %1504 = vmatpush2.bf16.msra.mxu0 0
  %1505 = vmatprep.subr.bf16.mxu0 0
  %1506 = vmatpush2.bf16.msra.mxu0 0
  %1507 = vmatprep.subr.bf16.mxu0 0
  %1508 = vmatpush2.bf16.msra.mxu0 0
  %1509 = vmatprep.subr.bf16.mxu0 0
  %1510 = vmatpush2.bf16.msra.mxu0 0
  %1511 = vmatprep.subr.bf16.mxu0 0
  %1512 = vmatpush2.bf16.msra.mxu0 0
  %1513 = vmatprep.subr.bf16.mxu0 0
  %1514 = vmatpush2.bf16.msra.mxu0 0
  %1515 = vmatprep.subr.bf16.mxu0 0
  %1516 = vmatpush2.bf16.msra.mxu0 0
  %1517 = vmatprep.mubr.bf16.mxu0 0
  %1518 = vmatmul.mubr.bf16.gmra.mxu0 %v728
  %v1519 = vpop.f32.mrf.mxu0
  %v1520 = vadd.f32 0.0, %v1519
  %v1521 = vpop.f32.mrf.mxu0
  %v1522 = vadd.f32 0.0, %v1521
  %v1523 = vpop.f32.mrf.mxu0
  %v1524 = vadd.f32 0.0, %v1523
  %v1525 = vpop.f32.mrf.mxu0
  %v1526 = vadd.f32 0.0, %v1525
  %1527 = vdwg.mxu0
  %1528 = vmatprep.subr.bf16.mxu0 0
  %1529 = vmatpush1.bf16.msra.mxu0 0
  %1530 = vmatprep.subr.bf16.mxu0 0
  %1531 = vmatpush1.bf16.msra.mxu0 0
  %1532 = vmatprep.subr.bf16.mxu0 0
  %1533 = vmatpush1.bf16.msra.mxu0 0
  %1534 = vmatprep.subr.bf16.mxu0 0
  %1535 = vmatpush1.bf16.msra.mxu0 0
  %1536 = vmatprep.subr.bf16.mxu0 0
  %1537 = vmatpush1.bf16.msra.mxu0 0
  %1538 = vmatprep.subr.bf16.mxu0 0
  %1539 = vmatpush1.bf16.msra.mxu0 0
  %1540 = vmatprep.subr.bf16.mxu0 %v822
  %1541 = vmatpush1.bf16.msra.mxu0 %v819
  %1542 = vmatprep.subr.bf16.mxu0 %v563
  %1543 = vmatpush1.bf16.msra.mxu0 %v562
  %1544 = vmatprep.subr.bf16.mxu0 0
  %1545 = vmatpush2.bf16.msra.mxu0 0
  %1546 = vmatprep.subr.bf16.mxu0 0
  %1547 = vmatpush2.bf16.msra.mxu0 0
  %1548 = vmatprep.subr.bf16.mxu0 0
  %1549 = vmatpush2.bf16.msra.mxu0 0
  %1550 = vmatprep.subr.bf16.mxu0 0
  %1551 = vmatpush2.bf16.msra.mxu0 0
  %1552 = vmatprep.subr.bf16.mxu0 0
  %1553 = vmatpush2.bf16.msra.mxu0 0
  %1554 = vmatprep.subr.bf16.mxu0 0
  %1555 = vmatpush2.bf16.msra.mxu0 0
  %1556 = vmatprep.subr.bf16.mxu0 0
  %1557 = vmatpush2.bf16.msra.mxu0 0
  %1558 = vmatprep.subr.bf16.mxu0 0
  %1559 = vmatpush2.bf16.msra.mxu0 0
  %1560 = vmatprep.mubr.bf16.mxu0 0
  %1561 = vmatmul.mubr.bf16.gmra.mxu0 %v728
  %v1562 = vpop.f32.mrf.mxu0
  %v1563 = vadd.f32 0.0, %v1562
  %v1564 = vpop.f32.mrf.mxu0
  %v1565 = vadd.f32 0.0, %v1564
  %v1566 = vpop.f32.mrf.mxu0
  %v1567 = vadd.f32 0.0, %v1566
  %v1568 = vpop.f32.mrf.mxu0
  %v1569 = vadd.f32 0.0, %v1568
  %1570 = vdwg.mxu0
  %1571 = vmatprep.subr.bf16.mxu0 0
  %1572 = vmatpush1.bf16.msra.mxu0 0
  %1573 = vmatprep.subr.bf16.mxu0 0
  %1574 = vmatpush1.bf16.msra.mxu0 0
  %1575 = vmatprep.subr.bf16.mxu0 0
  %1576 = vmatpush1.bf16.msra.mxu0 0
  %1577 = vmatprep.subr.bf16.mxu0 0
  %1578 = vmatpush1.bf16.msra.mxu0 0
  %1579 = vmatprep.subr.bf16.mxu0 0
  %1580 = vmatpush1.bf16.msra.mxu0 0
  %1581 = vmatprep.subr.bf16.mxu0 0
  %1582 = vmatpush1.bf16.msra.mxu0 0
  %1583 = vmatprep.subr.bf16.mxu0 %v828
  %1584 = vmatpush1.bf16.msra.mxu0 %v825
  %1585 = vmatprep.subr.bf16.mxu0 %v565
  %1586 = vmatpush1.bf16.msra.mxu0 %v564
  %1587 = vmatprep.subr.bf16.mxu0 0
  %1588 = vmatpush2.bf16.msra.mxu0 0
  %1589 = vmatprep.subr.bf16.mxu0 0
  %1590 = vmatpush2.bf16.msra.mxu0 0
  %1591 = vmatprep.subr.bf16.mxu0 0
  %1592 = vmatpush2.bf16.msra.mxu0 0
  %1593 = vmatprep.subr.bf16.mxu0 0
  %1594 = vmatpush2.bf16.msra.mxu0 0
  %1595 = vmatprep.subr.bf16.mxu0 0
  %1596 = vmatpush2.bf16.msra.mxu0 0
  %1597 = vmatprep.subr.bf16.mxu0 0
  %1598 = vmatpush2.bf16.msra.mxu0 0
  %1599 = vmatprep.subr.bf16.mxu0 0
  %1600 = vmatpush2.bf16.msra.mxu0 0
  %1601 = vmatprep.subr.bf16.mxu0 0
  %1602 = vmatpush2.bf16.msra.mxu0 0
  %1603 = vmatprep.mubr.bf16.mxu0 0
  %1604 = vmatmul.mubr.bf16.gmra.mxu0 %v728
  %v1605 = vpop.f32.mrf.mxu0
  %v1606 = vadd.f32 0.0, %v1605
  %v1607 = vpop.f32.mrf.mxu0
  %v1608 = vadd.f32 0.0, %v1607
  %v1609 = vpop.f32.mrf.mxu0
  %v1610 = vadd.f32 0.0, %v1609
  %v1611 = vpop.f32.mrf.mxu0
  %v1612 = vadd.f32 0.0, %v1611
  %1613 = vdwg.mxu0
  %1614 = vmatprep.subr.bf16.mxu0 0
  %1615 = vmatpush1.bf16.msra.mxu0 0
  %1616 = vmatprep.subr.bf16.mxu0 0
  %1617 = vmatpush1.bf16.msra.mxu0 0
  %1618 = vmatprep.subr.bf16.mxu0 0
  %1619 = vmatpush1.bf16.msra.mxu0 0
  %1620 = vmatprep.subr.bf16.mxu0 0
  %1621 = vmatpush1.bf16.msra.mxu0 0
  %1622 = vmatprep.subr.bf16.mxu0 0
  %1623 = vmatpush1.bf16.msra.mxu0 0
  %1624 = vmatprep.subr.bf16.mxu0 0
  %1625 = vmatpush1.bf16.msra.mxu0 0
  %1626 = vmatprep.subr.bf16.mxu0 %v834
  %1627 = vmatpush1.bf16.msra.mxu0 %v831
  %1628 = vmatprep.subr.bf16.mxu0 %v567
  %1629 = vmatpush1.bf16.msra.mxu0 %v566
  %1630 = vmatprep.subr.bf16.mxu0 0
  %1631 = vmatpush2.bf16.msra.mxu0 0
  %1632 = vmatprep.subr.bf16.mxu0 0
  %1633 = vmatpush2.bf16.msra.mxu0 0
  %1634 = vmatprep.subr.bf16.mxu0 0
  %1635 = vmatpush2.bf16.msra.mxu0 0
  %1636 = vmatprep.subr.bf16.mxu0 0
  %1637 = vmatpush2.bf16.msra.mxu0 0
  %1638 = vmatprep.subr.bf16.mxu0 0
  %1639 = vmatpush2.bf16.msra.mxu0 0
  %1640 = vmatprep.subr.bf16.mxu0 0
  %1641 = vmatpush2.bf16.msra.mxu0 0
  %1642 = vmatprep.subr.bf16.mxu0 0
  %1643 = vmatpush2.bf16.msra.mxu0 0
  %1644 = vmatprep.subr.bf16.mxu0 0
  %1645 = vmatpush2.bf16.msra.mxu0 0
  %1646 = vmatprep.mubr.bf16.mxu0 0
  %1647 = vmatmul.mubr.bf16.gmra.mxu0 %v728
  %v1648 = vpop.f32.mrf.mxu0
  %v1649 = vadd.f32 0.0, %v1648
  %v1650 = vpop.f32.mrf.mxu0
  %v1651 = vadd.f32 0.0, %v1650
  %v1652 = vpop.f32.mrf.mxu0
  %v1653 = vadd.f32 0.0, %v1652
  %v1654 = vpop.f32.mrf.mxu0
  %v1655 = vadd.f32 0.0, %v1654
  %1656 = vdwg.mxu0
  %1657 = vmatprep.subr.bf16.mxu0 0
  %1658 = vmatpush1.bf16.msra.mxu0 0
  %1659 = vmatprep.subr.bf16.mxu0 0
  %1660 = vmatpush1.bf16.msra.mxu0 0
  %1661 = vmatprep.subr.bf16.mxu0 0
  %1662 = vmatpush1.bf16.msra.mxu0 0
  %1663 = vmatprep.subr.bf16.mxu0 0
  %1664 = vmatpush1.bf16.msra.mxu0 0
  %1665 = vmatprep.subr.bf16.mxu0 0
  %1666 = vmatpush1.bf16.msra.mxu0 0
  %1667 = vmatprep.subr.bf16.mxu0 0
  %1668 = vmatpush1.bf16.msra.mxu0 0
  %1669 = vmatprep.subr.bf16.mxu0 %v840
  %1670 = vmatpush1.bf16.msra.mxu0 %v837
  %1671 = vmatprep.subr.bf16.mxu0 %v569
  %1672 = vmatpush1.bf16.msra.mxu0 %v568
  %1673 = vmatprep.subr.bf16.mxu0 0
  %1674 = vmatpush2.bf16.msra.mxu0 0
  %1675 = vmatprep.subr.bf16.mxu0 0
  %1676 = vmatpush2.bf16.msra.mxu0 0
  %1677 = vmatprep.subr.bf16.mxu0 0
  %1678 = vmatpush2.bf16.msra.mxu0 0
  %1679 = vmatprep.subr.bf16.mxu0 0
  %1680 = vmatpush2.bf16.msra.mxu0 0
  %1681 = vmatprep.subr.bf16.mxu0 0
  %1682 = vmatpush2.bf16.msra.mxu0 0
  %1683 = vmatprep.subr.bf16.mxu0 0
  %1684 = vmatpush2.bf16.msra.mxu0 0
  %1685 = vmatprep.subr.bf16.mxu0 0
  %1686 = vmatpush2.bf16.msra.mxu0 0
  %1687 = vmatprep.subr.bf16.mxu0 0
  %1688 = vmatpush2.bf16.msra.mxu0 0
  %1689 = vmatprep.mubr.bf16.mxu0 0
  %1690 = vmatmul.mubr.bf16.gmra.mxu0 %v728
  %v1691 = vpop.f32.mrf.mxu0
  %v1692 = vadd.f32 0.0, %v1691
  %v1693 = vpop.f32.mrf.mxu0
  %v1694 = vadd.f32 0.0, %v1693
  %v1695 = vpop.f32.mrf.mxu0
  %v1696 = vadd.f32 0.0, %v1695
  %v1697 = vpop.f32.mrf.mxu0
  %v1698 = vadd.f32 0.0, %v1697
  %1699 = vdwg.mxu0
  %1700 = vmatprep.subr.bf16.mxu0 0
  %1701 = vmatpush1.bf16.msra.mxu0 0
  %1702 = vmatprep.subr.bf16.mxu0 0
  %1703 = vmatpush1.bf16.msra.mxu0 0
  %1704 = vmatprep.subr.bf16.mxu0 0
  %1705 = vmatpush1.bf16.msra.mxu0 0
  %1706 = vmatprep.subr.bf16.mxu0 0
  %1707 = vmatpush1.bf16.msra.mxu0 0
  %1708 = vmatprep.subr.bf16.mxu0 0
  %1709 = vmatpush1.bf16.msra.mxu0 0
  %1710 = vmatprep.subr.bf16.mxu0 0
  %1711 = vmatpush1.bf16.msra.mxu0 0
  %1712 = vmatprep.subr.bf16.mxu0 %v846
  %1713 = vmatpush1.bf16.msra.mxu0 %v843
  %1714 = vmatprep.subr.bf16.mxu0 %v571
  %1715 = vmatpush1.bf16.msra.mxu0 %v570
  %1716 = vmatprep.subr.bf16.mxu0 0
  %1717 = vmatpush2.bf16.msra.mxu0 0
  %1718 = vmatprep.subr.bf16.mxu0 0
  %1719 = vmatpush2.bf16.msra.mxu0 0
  %1720 = vmatprep.subr.bf16.mxu0 0
  %1721 = vmatpush2.bf16.msra.mxu0 0
  %1722 = vmatprep.subr.bf16.mxu0 0
  %1723 = vmatpush2.bf16.msra.mxu0 0
  %1724 = vmatprep.subr.bf16.mxu0 0
  %1725 = vmatpush2.bf16.msra.mxu0 0
  %1726 = vmatprep.subr.bf16.mxu0 0
  %1727 = vmatpush2.bf16.msra.mxu0 0
  %1728 = vmatprep.subr.bf16.mxu0 0
  %1729 = vmatpush2.bf16.msra.mxu0 0
  %1730 = vmatprep.subr.bf16.mxu0 0
  %1731 = vmatpush2.bf16.msra.mxu0 0
  %1732 = vmatprep.mubr.bf16.mxu0 0
  %1733 = vmatmul.mubr.bf16.gmra.mxu0 %v728
  %v1734 = vpop.f32.mrf.mxu0
  %v1735 = vadd.f32 0.0, %v1734
  %v1736 = vpop.f32.mrf.mxu0
  %v1737 = vadd.f32 0.0, %v1736
  %v1738 = vpop.f32.mrf.mxu0
  %v1739 = vadd.f32 0.0, %v1738
  %v1740 = vpop.f32.mrf.mxu0
  %v1741 = vadd.f32 0.0, %v1740
  %1742 = vdwg.mxu0
  %1743 = vmatprep.subr.bf16.mxu0 0
  %1744 = vmatpush1.bf16.msra.mxu0 0
  %1745 = vmatprep.subr.bf16.mxu0 0
  %1746 = vmatpush1.bf16.msra.mxu0 0
  %1747 = vmatprep.subr.bf16.mxu0 0
  %1748 = vmatpush1.bf16.msra.mxu0 0
  %1749 = vmatprep.subr.bf16.mxu0 0
  %1750 = vmatpush1.bf16.msra.mxu0 0
  %1751 = vmatprep.subr.bf16.mxu0 0
  %1752 = vmatpush1.bf16.msra.mxu0 0
  %1753 = vmatprep.subr.bf16.mxu0 0
  %1754 = vmatpush1.bf16.msra.mxu0 0
  %1755 = vmatprep.subr.bf16.mxu0 %v852
  %1756 = vmatpush1.bf16.msra.mxu0 %v849
  %1757 = vmatprep.subr.bf16.mxu0 %v573
  %1758 = vmatpush1.bf16.msra.mxu0 %v572
  %1759 = vmatprep.subr.bf16.mxu0 0
  %1760 = vmatpush2.bf16.msra.mxu0 0
  %1761 = vmatprep.subr.bf16.mxu0 0
  %1762 = vmatpush2.bf16.msra.mxu0 0
  %1763 = vmatprep.subr.bf16.mxu0 0
  %1764 = vmatpush2.bf16.msra.mxu0 0
  %1765 = vmatprep.subr.bf16.mxu0 0
  %1766 = vmatpush2.bf16.msra.mxu0 0
  %1767 = vmatprep.subr.bf16.mxu0 0
  %1768 = vmatpush2.bf16.msra.mxu0 0
  %1769 = vmatprep.subr.bf16.mxu0 0
  %1770 = vmatpush2.bf16.msra.mxu0 0
  %1771 = vmatprep.subr.bf16.mxu0 0
  %1772 = vmatpush2.bf16.msra.mxu0 0
  %1773 = vmatprep.subr.bf16.mxu0 0
  %1774 = vmatpush2.bf16.msra.mxu0 0
  %1775 = vmatprep.mubr.bf16.mxu0 0
  %1776 = vmatmul.mubr.bf16.gmra.mxu0 %v728
  %v1777 = vpop.f32.mrf.mxu0
  %v1778 = vadd.f32 0.0, %v1777
  %v1779 = vpop.f32.mrf.mxu0
  %v1780 = vadd.f32 0.0, %v1779
  %v1781 = vpop.f32.mrf.mxu0
  %v1782 = vadd.f32 0.0, %v1781
  %v1783 = vpop.f32.mrf.mxu0
  %v1784 = vadd.f32 0.0, %v1783
  %1785 = vdwg.mxu0
  %1786 = vmatprep.subr.bf16.mxu0 0
  %1787 = vmatpush1.bf16.msra.mxu0 0
  %1788 = vmatprep.subr.bf16.mxu0 0
  %1789 = vmatpush1.bf16.msra.mxu0 0
  %1790 = vmatprep.subr.bf16.mxu0 0
  %1791 = vmatpush1.bf16.msra.mxu0 0
  %1792 = vmatprep.subr.bf16.mxu0 0
  %1793 = vmatpush1.bf16.msra.mxu0 0
  %1794 = vmatprep.subr.bf16.mxu0 0
  %1795 = vmatpush1.bf16.msra.mxu0 0
  %1796 = vmatprep.subr.bf16.mxu0 0
  %1797 = vmatpush1.bf16.msra.mxu0 0
  %1798 = vmatprep.subr.bf16.mxu0 %v858
  %1799 = vmatpush1.bf16.msra.mxu0 %v855
  %1800 = vmatprep.subr.bf16.mxu0 %v575
  %1801 = vmatpush1.bf16.msra.mxu0 %v574
  %1802 = vmatprep.subr.bf16.mxu0 0
  %1803 = vmatpush2.bf16.msra.mxu0 0
  %1804 = vmatprep.subr.bf16.mxu0 0
  %1805 = vmatpush2.bf16.msra.mxu0 0
  %1806 = vmatprep.subr.bf16.mxu0 0
  %1807 = vmatpush2.bf16.msra.mxu0 0
  %1808 = vmatprep.subr.bf16.mxu0 0
  %1809 = vmatpush2.bf16.msra.mxu0 0
  %1810 = vmatprep.subr.bf16.mxu0 0
  %1811 = vmatpush2.bf16.msra.mxu0 0
  %1812 = vmatprep.subr.bf16.mxu0 0
  %1813 = vmatpush2.bf16.msra.mxu0 0
  %1814 = vmatprep.subr.bf16.mxu0 0
  %1815 = vmatpush2.bf16.msra.mxu0 0
  %1816 = vmatprep.subr.bf16.mxu0 0
  %1817 = vmatpush2.bf16.msra.mxu0 0
  %1818 = vmatprep.mubr.bf16.mxu0 0
  %1819 = vmatmul.mubr.bf16.gmra.mxu0 %v728
  %v1820 = vpop.f32.mrf.mxu0
  %v1821 = vadd.f32 0.0, %v1820
  %v1822 = vpop.f32.mrf.mxu0
  %v1823 = vadd.f32 0.0, %v1822
  %v1824 = vpop.f32.mrf.mxu0
  %v1825 = vadd.f32 0.0, %v1824
  %v1826 = vpop.f32.mrf.mxu0
  %v1827 = vadd.f32 0.0, %v1826
  %1828 = vdwg.mxu0
  %1829 = vmatprep.subr.bf16.mxu0 0
  %1830 = vmatpush1.bf16.msra.mxu0 0
  %1831 = vmatprep.subr.bf16.mxu0 0
  %1832 = vmatpush1.bf16.msra.mxu0 0
  %1833 = vmatprep.subr.bf16.mxu0 0
  %1834 = vmatpush1.bf16.msra.mxu0 0
  %1835 = vmatprep.subr.bf16.mxu0 0
  %1836 = vmatpush1.bf16.msra.mxu0 0
  %1837 = vmatprep.subr.bf16.mxu0 0
  %1838 = vmatpush1.bf16.msra.mxu0 0
  %1839 = vmatprep.subr.bf16.mxu0 0
  %1840 = vmatpush1.bf16.msra.mxu0 0
  %1841 = vmatprep.subr.bf16.mxu0 %v864
  %1842 = vmatpush1.bf16.msra.mxu0 %v861
  %1843 = vmatprep.subr.bf16.mxu0 %v577
  %1844 = vmatpush1.bf16.msra.mxu0 %v576
  %1845 = vmatprep.subr.bf16.mxu0 0
  %1846 = vmatpush2.bf16.msra.mxu0 0
  %1847 = vmatprep.subr.bf16.mxu0 0
  %1848 = vmatpush2.bf16.msra.mxu0 0
  %1849 = vmatprep.subr.bf16.mxu0 0
  %1850 = vmatpush2.bf16.msra.mxu0 0
  %1851 = vmatprep.subr.bf16.mxu0 0
  %1852 = vmatpush2.bf16.msra.mxu0 0
  %1853 = vmatprep.subr.bf16.mxu0 0
  %1854 = vmatpush2.bf16.msra.mxu0 0
  %1855 = vmatprep.subr.bf16.mxu0 0
  %1856 = vmatpush2.bf16.msra.mxu0 0
  %1857 = vmatprep.subr.bf16.mxu0 0
  %1858 = vmatpush2.bf16.msra.mxu0 0
  %1859 = vmatprep.subr.bf16.mxu0 0
  %1860 = vmatpush2.bf16.msra.mxu0 0
  %1861 = vmatprep.mubr.bf16.mxu0 0
  %1862 = vmatmul.mubr.bf16.gmra.mxu0 %v728
  %v1863 = vpop.f32.mrf.mxu0
  %v1864 = vadd.f32 0.0, %v1863
  %v1865 = vpop.f32.mrf.mxu0
  %v1866 = vadd.f32 0.0, %v1865
  %v1867 = vpop.f32.mrf.mxu0
  %v1868 = vadd.f32 0.0, %v1867
  %v1869 = vpop.f32.mrf.mxu0
  %v1870 = vadd.f32 0.0, %v1869
  %1871 = vdwg.mxu0
  %1872 = vmatprep.subr.bf16.mxu0 0
  %1873 = vmatpush1.bf16.msra.mxu0 0
  %1874 = vmatprep.subr.bf16.mxu0 0
  %1875 = vmatpush1.bf16.msra.mxu0 0
  %1876 = vmatprep.subr.bf16.mxu0 0
  %1877 = vmatpush1.bf16.msra.mxu0 0
  %1878 = vmatprep.subr.bf16.mxu0 0
  %1879 = vmatpush1.bf16.msra.mxu0 0
  %1880 = vmatprep.subr.bf16.mxu0 0
  %1881 = vmatpush1.bf16.msra.mxu0 0
  %1882 = vmatprep.subr.bf16.mxu0 0
  %1883 = vmatpush1.bf16.msra.mxu0 0
  %1884 = vmatprep.subr.bf16.mxu0 %v870
  %1885 = vmatpush1.bf16.msra.mxu0 %v867
  %1886 = vmatprep.subr.bf16.mxu0 %v579
  %1887 = vmatpush1.bf16.msra.mxu0 %v578
  %1888 = vmatprep.subr.bf16.mxu0 0
  %1889 = vmatpush2.bf16.msra.mxu0 0
  %1890 = vmatprep.subr.bf16.mxu0 0
  %1891 = vmatpush2.bf16.msra.mxu0 0
  %1892 = vmatprep.subr.bf16.mxu0 0
  %1893 = vmatpush2.bf16.msra.mxu0 0
  %1894 = vmatprep.subr.bf16.mxu0 0
  %1895 = vmatpush2.bf16.msra.mxu0 0
  %1896 = vmatprep.subr.bf16.mxu0 0
  %1897 = vmatpush2.bf16.msra.mxu0 0
  %1898 = vmatprep.subr.bf16.mxu0 0
  %1899 = vmatpush2.bf16.msra.mxu0 0
  %1900 = vmatprep.subr.bf16.mxu0 0
  %1901 = vmatpush2.bf16.msra.mxu0 0
  %1902 = vmatprep.subr.bf16.mxu0 0
  %1903 = vmatpush2.bf16.msra.mxu0 0
  %1904 = vmatprep.mubr.bf16.mxu0 0
  %1905 = vmatmul.mubr.bf16.gmra.mxu0 %v728
  %v1906 = vpop.f32.mrf.mxu0
  %v1907 = vadd.f32 0.0, %v1906
  %v1908 = vpop.f32.mrf.mxu0
  %v1909 = vadd.f32 0.0, %v1908
  %v1910 = vpop.f32.mrf.mxu0
  %v1911 = vadd.f32 0.0, %v1910
  %v1912 = vpop.f32.mrf.mxu0
  %v1913 = vadd.f32 0.0, %v1912
  %1914 = vdwg.mxu0
  %1915 = vmatprep.subr.bf16.mxu0 0
  %1916 = vmatpush1.bf16.msra.mxu0 0
  %1917 = vmatprep.subr.bf16.mxu0 0
  %1918 = vmatpush1.bf16.msra.mxu0 0
  %1919 = vmatprep.subr.bf16.mxu0 0
  %1920 = vmatpush1.bf16.msra.mxu0 0
  %1921 = vmatprep.subr.bf16.mxu0 0
  %1922 = vmatpush1.bf16.msra.mxu0 0
  %1923 = vmatprep.subr.bf16.mxu0 0
  %1924 = vmatpush1.bf16.msra.mxu0 0
  %1925 = vmatprep.subr.bf16.mxu0 0
  %1926 = vmatpush1.bf16.msra.mxu0 0
  %1927 = vmatprep.subr.bf16.mxu0 %v876
  %1928 = vmatpush1.bf16.msra.mxu0 %v873
  %1929 = vmatprep.subr.bf16.mxu0 %v581
  %1930 = vmatpush1.bf16.msra.mxu0 %v580
  %1931 = vmatprep.subr.bf16.mxu0 0
  %1932 = vmatpush2.bf16.msra.mxu0 0
  %1933 = vmatprep.subr.bf16.mxu0 0
  %1934 = vmatpush2.bf16.msra.mxu0 0
  %1935 = vmatprep.subr.bf16.mxu0 0
  %1936 = vmatpush2.bf16.msra.mxu0 0
  %1937 = vmatprep.subr.bf16.mxu0 0
  %1938 = vmatpush2.bf16.msra.mxu0 0
  %1939 = vmatprep.subr.bf16.mxu0 0
  %1940 = vmatpush2.bf16.msra.mxu0 0
  %1941 = vmatprep.subr.bf16.mxu0 0
  %1942 = vmatpush2.bf16.msra.mxu0 0
  %1943 = vmatprep.subr.bf16.mxu0 0
  %1944 = vmatpush2.bf16.msra.mxu0 0
  %1945 = vmatprep.subr.bf16.mxu0 0
  %1946 = vmatpush2.bf16.msra.mxu0 0
  %1947 = vmatprep.mubr.bf16.mxu0 0
  %1948 = vmatmul.mubr.bf16.gmra.mxu0 %v728
  %v1949 = vpop.f32.mrf.mxu0
  %v1950 = vadd.f32 0.0, %v1949
  %v1951 = vpop.f32.mrf.mxu0
  %v1952 = vadd.f32 0.0, %v1951
  %v1953 = vpop.f32.mrf.mxu0
  %v1954 = vadd.f32 0.0, %v1953
  %v1955 = vpop.f32.mrf.mxu0
  %v1956 = vadd.f32 0.0, %v1955
  %1957 = vdwg.mxu0
  %1958 = vmatprep.subr.bf16.mxu0 0
  %1959 = vmatpush1.bf16.msra.mxu0 0
  %1960 = vmatprep.subr.bf16.mxu0 0
  %1961 = vmatpush1.bf16.msra.mxu0 0
  %1962 = vmatprep.subr.bf16.mxu0 0
  %1963 = vmatpush1.bf16.msra.mxu0 0
  %1964 = vmatprep.subr.bf16.mxu0 0
  %1965 = vmatpush1.bf16.msra.mxu0 0
  %1966 = vmatprep.subr.bf16.mxu0 0
  %1967 = vmatpush1.bf16.msra.mxu0 0
  %1968 = vmatprep.subr.bf16.mxu0 0
  %1969 = vmatpush1.bf16.msra.mxu0 0
  %1970 = vmatprep.subr.bf16.mxu0 %v882
  %1971 = vmatpush1.bf16.msra.mxu0 %v879
  %1972 = vmatprep.subr.bf16.mxu0 %v583
  %1973 = vmatpush1.bf16.msra.mxu0 %v582
  %1974 = vmatprep.subr.bf16.mxu0 0
  %1975 = vmatpush2.bf16.msra.mxu0 0
  %1976 = vmatprep.subr.bf16.mxu0 0
  %1977 = vmatpush2.bf16.msra.mxu0 0
  %1978 = vmatprep.subr.bf16.mxu0 0
  %1979 = vmatpush2.bf16.msra.mxu0 0
  %1980 = vmatprep.subr.bf16.mxu0 0
  %1981 = vmatpush2.bf16.msra.mxu0 0
  %1982 = vmatprep.subr.bf16.mxu0 0
  %1983 = vmatpush2.bf16.msra.mxu0 0
  %1984 = vmatprep.subr.bf16.mxu0 0
  %1985 = vmatpush2.bf16.msra.mxu0 0
  %1986 = vmatprep.subr.bf16.mxu0 0
  %1987 = vmatpush2.bf16.msra.mxu0 0
  %1988 = vmatprep.subr.bf16.mxu0 0
  %1989 = vmatpush2.bf16.msra.mxu0 0
  %1990 = vmatprep.mubr.bf16.mxu0 0
  %1991 = vmatmul.mubr.bf16.gmra.mxu0 %v728
  %v1992 = vpop.f32.mrf.mxu0
  %v1993 = vadd.f32 0.0, %v1992
  %v1994 = vpop.f32.mrf.mxu0
  %v1995 = vadd.f32 0.0, %v1994
  %v1996 = vpop.f32.mrf.mxu0
  %v1997 = vadd.f32 0.0, %v1996
  %v1998 = vpop.f32.mrf.mxu0
  %v1999 = vadd.f32 0.0, %v1998
  %2000 = vdwg.mxu0
  %2001 = vmatprep.subr.bf16.mxu0 0
  %2002 = vmatpush1.bf16.msra.mxu0 0
  %2003 = vmatprep.subr.bf16.mxu0 0
  %2004 = vmatpush1.bf16.msra.mxu0 0
  %2005 = vmatprep.subr.bf16.mxu0 0
  %2006 = vmatpush1.bf16.msra.mxu0 0
  %2007 = vmatprep.subr.bf16.mxu0 0
  %2008 = vmatpush1.bf16.msra.mxu0 0
  %2009 = vmatprep.subr.bf16.mxu0 0
  %2010 = vmatpush1.bf16.msra.mxu0 0
  %2011 = vmatprep.subr.bf16.mxu0 0
  %2012 = vmatpush1.bf16.msra.mxu0 0
  %2013 = vmatprep.subr.bf16.mxu0 %v888
  %2014 = vmatpush1.bf16.msra.mxu0 %v885
  %2015 = vmatprep.subr.bf16.mxu0 %v585
  %2016 = vmatpush1.bf16.msra.mxu0 %v584
  %2017 = vmatprep.subr.bf16.mxu0 0
  %2018 = vmatpush2.bf16.msra.mxu0 0
  %2019 = vmatprep.subr.bf16.mxu0 0
  %2020 = vmatpush2.bf16.msra.mxu0 0
  %2021 = vmatprep.subr.bf16.mxu0 0
  %2022 = vmatpush2.bf16.msra.mxu0 0
  %2023 = vmatprep.subr.bf16.mxu0 0
  %2024 = vmatpush2.bf16.msra.mxu0 0
  %2025 = vmatprep.subr.bf16.mxu0 0
  %2026 = vmatpush2.bf16.msra.mxu0 0
  %2027 = vmatprep.subr.bf16.mxu0 0
  %2028 = vmatpush2.bf16.msra.mxu0 0
  %2029 = vmatprep.subr.bf16.mxu0 0
  %2030 = vmatpush2.bf16.msra.mxu0 0
  %2031 = vmatprep.subr.bf16.mxu0 0
  %2032 = vmatpush2.bf16.msra.mxu0 0
  %2033 = vmatprep.mubr.bf16.mxu0 0
  %2034 = vmatmul.mubr.bf16.gmra.mxu0 %v728
  %v2035 = vpop.f32.mrf.mxu0
  %v2036 = vadd.f32 0.0, %v2035
  %v2037 = vpop.f32.mrf.mxu0
  %v2038 = vadd.f32 0.0, %v2037
  %v2039 = vpop.f32.mrf.mxu0
  %v2040 = vadd.f32 0.0, %v2039
  %v2041 = vpop.f32.mrf.mxu0
  %v2042 = vadd.f32 0.0, %v2041
  %2043 = vdwg.mxu0
  %2044 = vmatprep.subr.bf16.mxu0 0
  %2045 = vmatpush1.bf16.msra.mxu0 0
  %2046 = vmatprep.subr.bf16.mxu0 0
  %2047 = vmatpush1.bf16.msra.mxu0 0
  %2048 = vmatprep.subr.bf16.mxu0 0
  %2049 = vmatpush1.bf16.msra.mxu0 0
  %2050 = vmatprep.subr.bf16.mxu0 0
  %2051 = vmatpush1.bf16.msra.mxu0 0
  %2052 = vmatprep.subr.bf16.mxu0 0
  %2053 = vmatpush1.bf16.msra.mxu0 0
  %2054 = vmatprep.subr.bf16.mxu0 0
  %2055 = vmatpush1.bf16.msra.mxu0 0
  %2056 = vmatprep.subr.bf16.mxu0 %v894
  %2057 = vmatpush1.bf16.msra.mxu0 %v891
  %2058 = vmatprep.subr.bf16.mxu0 %v587
  %2059 = vmatpush1.bf16.msra.mxu0 %v586
  %2060 = vmatprep.subr.bf16.mxu0 0
  %2061 = vmatpush2.bf16.msra.mxu0 0
  %2062 = vmatprep.subr.bf16.mxu0 0
  %2063 = vmatpush2.bf16.msra.mxu0 0
  %2064 = vmatprep.subr.bf16.mxu0 0
  %2065 = vmatpush2.bf16.msra.mxu0 0
  %2066 = vmatprep.subr.bf16.mxu0 0
  %2067 = vmatpush2.bf16.msra.mxu0 0
  %2068 = vmatprep.subr.bf16.mxu0 0
  %2069 = vmatpush2.bf16.msra.mxu0 0
  %2070 = vmatprep.subr.bf16.mxu0 0
  %2071 = vmatpush2.bf16.msra.mxu0 0
  %2072 = vmatprep.subr.bf16.mxu0 0
  %2073 = vmatpush2.bf16.msra.mxu0 0
  %2074 = vmatprep.subr.bf16.mxu0 0
  %2075 = vmatpush2.bf16.msra.mxu0 0
  %2076 = vmatprep.mubr.bf16.mxu0 0
  %2077 = vmatmul.mubr.bf16.gmra.mxu0 %v728
  %v2078 = vpop.f32.mrf.mxu0
  %v2079 = vadd.f32 0.0, %v2078
  %v2080 = vpop.f32.mrf.mxu0
  %v2081 = vadd.f32 0.0, %v2080
  %v2082 = vpop.f32.mrf.mxu0
  %v2083 = vadd.f32 0.0, %v2082
  %v2084 = vpop.f32.mrf.mxu0
  %v2085 = vadd.f32 0.0, %v2084
  %2086 = vdwg.mxu0
  %2087 = vmatprep.subr.bf16.mxu0 0
  %2088 = vmatpush1.bf16.msra.mxu0 0
  %2089 = vmatprep.subr.bf16.mxu0 0
  %2090 = vmatpush1.bf16.msra.mxu0 0
  %2091 = vmatprep.subr.bf16.mxu0 0
  %2092 = vmatpush1.bf16.msra.mxu0 0
  %2093 = vmatprep.subr.bf16.mxu0 0
  %2094 = vmatpush1.bf16.msra.mxu0 0
  %2095 = vmatprep.subr.bf16.mxu0 0
  %2096 = vmatpush1.bf16.msra.mxu0 0
  %2097 = vmatprep.subr.bf16.mxu0 0
  %2098 = vmatpush1.bf16.msra.mxu0 0
  %2099 = vmatprep.subr.bf16.mxu0 %v900
  %2100 = vmatpush1.bf16.msra.mxu0 %v897
  %2101 = vmatprep.subr.bf16.mxu0 %v589
  %2102 = vmatpush1.bf16.msra.mxu0 %v588
  %2103 = vmatprep.subr.bf16.mxu0 0
  %2104 = vmatpush2.bf16.msra.mxu0 0
  %2105 = vmatprep.subr.bf16.mxu0 0
  %2106 = vmatpush2.bf16.msra.mxu0 0
  %2107 = vmatprep.subr.bf16.mxu0 0
  %2108 = vmatpush2.bf16.msra.mxu0 0
  %2109 = vmatprep.subr.bf16.mxu0 0
  %2110 = vmatpush2.bf16.msra.mxu0 0
  %2111 = vmatprep.subr.bf16.mxu0 0
  %2112 = vmatpush2.bf16.msra.mxu0 0
  %2113 = vmatprep.subr.bf16.mxu0 0
  %2114 = vmatpush2.bf16.msra.mxu0 0
  %2115 = vmatprep.subr.bf16.mxu0 0
  %2116 = vmatpush2.bf16.msra.mxu0 0
  %2117 = vmatprep.subr.bf16.mxu0 0
  %2118 = vmatpush2.bf16.msra.mxu0 0
  %2119 = vmatprep.mubr.bf16.mxu0 0
  %2120 = vmatmul.mubr.bf16.gmra.mxu0 %v728
  %v2121 = vpop.f32.mrf.mxu0
  %v2122 = vadd.f32 0.0, %v2121
  %v2123 = vpop.f32.mrf.mxu0
  %v2124 = vadd.f32 0.0, %v2123
  %v2125 = vpop.f32.mrf.mxu0
  %v2126 = vadd.f32 0.0, %v2125
  %v2127 = vpop.f32.mrf.mxu0
  %v2128 = vadd.f32 0.0, %v2127
  %2129 = vdwg.mxu0
  %2130 = vmatprep.subr.bf16.mxu0 0
  %2131 = vmatpush1.bf16.msra.mxu0 0
  %2132 = vmatprep.subr.bf16.mxu0 0
  %2133 = vmatpush1.bf16.msra.mxu0 0
  %2134 = vmatprep.subr.bf16.mxu0 0
  %2135 = vmatpush1.bf16.msra.mxu0 0
  %2136 = vmatprep.subr.bf16.mxu0 0
  %2137 = vmatpush1.bf16.msra.mxu0 0
  %2138 = vmatprep.subr.bf16.mxu0 0
  %2139 = vmatpush1.bf16.msra.mxu0 0
  %2140 = vmatprep.subr.bf16.mxu0 0
  %2141 = vmatpush1.bf16.msra.mxu0 0
  %2142 = vmatprep.subr.bf16.mxu0 %v906
  %2143 = vmatpush1.bf16.msra.mxu0 %v903
  %2144 = vmatprep.subr.bf16.mxu0 %v591
  %2145 = vmatpush1.bf16.msra.mxu0 %v590
  %2146 = vmatprep.subr.bf16.mxu0 0
  %2147 = vmatpush2.bf16.msra.mxu0 0
  %2148 = vmatprep.subr.bf16.mxu0 0
  %2149 = vmatpush2.bf16.msra.mxu0 0
  %2150 = vmatprep.subr.bf16.mxu0 0
  %2151 = vmatpush2.bf16.msra.mxu0 0
  %2152 = vmatprep.subr.bf16.mxu0 0
  %2153 = vmatpush2.bf16.msra.mxu0 0
  %2154 = vmatprep.subr.bf16.mxu0 0
  %2155 = vmatpush2.bf16.msra.mxu0 0
  %2156 = vmatprep.subr.bf16.mxu0 0
  %2157 = vmatpush2.bf16.msra.mxu0 0
  %2158 = vmatprep.subr.bf16.mxu0 0
  %2159 = vmatpush2.bf16.msra.mxu0 0
  %2160 = vmatprep.subr.bf16.mxu0 0
  %2161 = vmatpush2.bf16.msra.mxu0 0
  %2162 = vmatprep.mubr.bf16.mxu0 0
  %2163 = vmatmul.mubr.bf16.gmra.mxu0 %v728
  %v2164 = vpop.f32.mrf.mxu0
  %v2165 = vadd.f32 0.0, %v2164
  %v2166 = vpop.f32.mrf.mxu0
  %v2167 = vadd.f32 0.0, %v2166
  %v2168 = vpop.f32.mrf.mxu0
  %v2169 = vadd.f32 0.0, %v2168
  %v2170 = vpop.f32.mrf.mxu0
  %v2171 = vadd.f32 0.0, %v2170
  %2172 = vdwg.mxu0
  %2173 = vmatprep.subr.bf16.mxu0 0
  %2174 = vmatpush1.bf16.msra.mxu0 0
  %2175 = vmatprep.subr.bf16.mxu0 0
  %2176 = vmatpush1.bf16.msra.mxu0 0
  %2177 = vmatprep.subr.bf16.mxu0 0
  %2178 = vmatpush1.bf16.msra.mxu0 0
  %2179 = vmatprep.subr.bf16.mxu0 0
  %2180 = vmatpush1.bf16.msra.mxu0 0
  %2181 = vmatprep.subr.bf16.mxu0 0
  %2182 = vmatpush1.bf16.msra.mxu0 0
  %2183 = vmatprep.subr.bf16.mxu0 0
  %2184 = vmatpush1.bf16.msra.mxu0 0
  %2185 = vmatprep.subr.bf16.mxu0 %v912
  %2186 = vmatpush1.bf16.msra.mxu0 %v909
  %2187 = vmatprep.subr.bf16.mxu0 %v593
  %2188 = vmatpush1.bf16.msra.mxu0 %v592
  %2189 = vmatprep.subr.bf16.mxu0 0
  %2190 = vmatpush2.bf16.msra.mxu0 0
  %2191 = vmatprep.subr.bf16.mxu0 0
  %2192 = vmatpush2.bf16.msra.mxu0 0
  %2193 = vmatprep.subr.bf16.mxu0 0
  %2194 = vmatpush2.bf16.msra.mxu0 0
  %2195 = vmatprep.subr.bf16.mxu0 0
  %2196 = vmatpush2.bf16.msra.mxu0 0
  %2197 = vmatprep.subr.bf16.mxu0 0
  %2198 = vmatpush2.bf16.msra.mxu0 0
  %2199 = vmatprep.subr.bf16.mxu0 0
  %2200 = vmatpush2.bf16.msra.mxu0 0
  %2201 = vmatprep.subr.bf16.mxu0 0
  %2202 = vmatpush2.bf16.msra.mxu0 0
  %2203 = vmatprep.subr.bf16.mxu0 0
  %2204 = vmatpush2.bf16.msra.mxu0 0
  %2205 = vmatprep.mubr.bf16.mxu0 0
  %2206 = vmatmul.mubr.bf16.gmra.mxu0 %v728
  %v2207 = vpop.f32.mrf.mxu0
  %v2208 = vadd.f32 0.0, %v2207
  %v2209 = vpop.f32.mrf.mxu0
  %v2210 = vadd.f32 0.0, %v2209
  %v2211 = vpop.f32.mrf.mxu0
  %v2212 = vadd.f32 0.0, %v2211
  %v2213 = vpop.f32.mrf.mxu0
  %v2214 = vadd.f32 0.0, %v2213
  %2215 = vdwg.mxu0
  %2216 = vmatprep.subr.bf16.mxu0 0
  %2217 = vmatpush1.bf16.msra.mxu0 0
  %2218 = vmatprep.subr.bf16.mxu0 0
  %2219 = vmatpush1.bf16.msra.mxu0 0
  %2220 = vmatprep.subr.bf16.mxu0 0
  %2221 = vmatpush1.bf16.msra.mxu0 0
  %2222 = vmatprep.subr.bf16.mxu0 0
  %2223 = vmatpush1.bf16.msra.mxu0 0
  %2224 = vmatprep.subr.bf16.mxu0 0
  %2225 = vmatpush1.bf16.msra.mxu0 0
  %2226 = vmatprep.subr.bf16.mxu0 0
  %2227 = vmatpush1.bf16.msra.mxu0 0
  %2228 = vmatprep.subr.bf16.mxu0 %v918
  %2229 = vmatpush1.bf16.msra.mxu0 %v915
  %2230 = vmatprep.subr.bf16.mxu0 %v595
  %2231 = vmatpush1.bf16.msra.mxu0 %v594
  %2232 = vmatprep.subr.bf16.mxu0 0
  %2233 = vmatpush2.bf16.msra.mxu0 0
  %2234 = vmatprep.subr.bf16.mxu0 0
  %2235 = vmatpush2.bf16.msra.mxu0 0
  %2236 = vmatprep.subr.bf16.mxu0 0
  %2237 = vmatpush2.bf16.msra.mxu0 0
  %2238 = vmatprep.subr.bf16.mxu0 0
  %2239 = vmatpush2.bf16.msra.mxu0 0
  %2240 = vmatprep.subr.bf16.mxu0 0
  %2241 = vmatpush2.bf16.msra.mxu0 0
  %2242 = vmatprep.subr.bf16.mxu0 0
  %2243 = vmatpush2.bf16.msra.mxu0 0
  %2244 = vmatprep.subr.bf16.mxu0 0
  %2245 = vmatpush2.bf16.msra.mxu0 0
  %2246 = vmatprep.subr.bf16.mxu0 0
  %2247 = vmatpush2.bf16.msra.mxu0 0
  %2248 = vmatprep.mubr.bf16.mxu0 0
  %2249 = vmatmul.mubr.bf16.gmra.mxu0 %v728
  %v2250 = vpop.f32.mrf.mxu0
  %v2251 = vadd.f32 0.0, %v2250
  %v2252 = vpop.f32.mrf.mxu0
  %v2253 = vadd.f32 0.0, %v2252
  %v2254 = vpop.f32.mrf.mxu0
  %v2255 = vadd.f32 0.0, %v2254
  %v2256 = vpop.f32.mrf.mxu0
  %v2257 = vadd.f32 0.0, %v2256
  %2258 = vdwg.mxu0
  %2259 = vmatprep.subr.bf16.mxu0 0
  %2260 = vmatpush1.bf16.msra.mxu0 0
  %2261 = vmatprep.subr.bf16.mxu0 0
  %2262 = vmatpush1.bf16.msra.mxu0 0
  %2263 = vmatprep.subr.bf16.mxu0 0
  %2264 = vmatpush1.bf16.msra.mxu0 0
  %2265 = vmatprep.subr.bf16.mxu0 0
  %2266 = vmatpush1.bf16.msra.mxu0 0
  %2267 = vmatprep.subr.bf16.mxu0 0
  %2268 = vmatpush1.bf16.msra.mxu0 0
  %2269 = vmatprep.subr.bf16.mxu0 0
  %2270 = vmatpush1.bf16.msra.mxu0 0
  %2271 = vmatprep.subr.bf16.mxu0 %v924
  %2272 = vmatpush1.bf16.msra.mxu0 %v921
  %2273 = vmatprep.subr.bf16.mxu0 %v597
  %2274 = vmatpush1.bf16.msra.mxu0 %v596
  %2275 = vmatprep.subr.bf16.mxu0 0
  %2276 = vmatpush2.bf16.msra.mxu0 0
  %2277 = vmatprep.subr.bf16.mxu0 0
  %2278 = vmatpush2.bf16.msra.mxu0 0
  %2279 = vmatprep.subr.bf16.mxu0 0
  %2280 = vmatpush2.bf16.msra.mxu0 0
  %2281 = vmatprep.subr.bf16.mxu0 0
  %2282 = vmatpush2.bf16.msra.mxu0 0
  %2283 = vmatprep.subr.bf16.mxu0 0
  %2284 = vmatpush2.bf16.msra.mxu0 0
  %2285 = vmatprep.subr.bf16.mxu0 0
  %2286 = vmatpush2.bf16.msra.mxu0 0
  %2287 = vmatprep.subr.bf16.mxu0 0
  %2288 = vmatpush2.bf16.msra.mxu0 0
  %2289 = vmatprep.subr.bf16.mxu0 0
  %2290 = vmatpush2.bf16.msra.mxu0 0
  %2291 = vmatprep.mubr.bf16.mxu0 0
  %2292 = vmatmul.mubr.bf16.gmra.mxu0 %v728
  %v2293 = vpop.f32.mrf.mxu0
  %v2294 = vadd.f32 0.0, %v2293
  %v2295 = vpop.f32.mrf.mxu0
  %v2296 = vadd.f32 0.0, %v2295
  %v2297 = vpop.f32.mrf.mxu0
  %v2298 = vadd.f32 0.0, %v2297
  %v2299 = vpop.f32.mrf.mxu0
  %v2300 = vadd.f32 0.0, %v2299
  %2301 = vdwg.mxu0
  %v2302 = vmax.f32 %v961, %v1305
  %v2303 = vmax.f32 %v963, %v1307
  %v2304 = vmax.f32 %v1004, %v1348
  %v2305 = vmax.f32 %v1006, %v1350
  %v2306 = vmax.f32 %v1047, %v1391
  %v2307 = vmax.f32 %v1049, %v1393
  %v2308 = vmax.f32 %v1090, %v1434
  %v2309 = vmax.f32 %v1092, %v1436
  %v2310 = vmax.f32 %v1133, %v1477
  %v2311 = vmax.f32 %v1135, %v1479
  %v2312 = vmax.f32 %v1176, %v1520
  %v2313 = vmax.f32 %v1178, %v1522
  %v2314 = vmax.f32 %v1219, %v1563
  %v2315 = vmax.f32 %v1221, %v1565
  %v2316 = vmax.f32 %v1262, %v1606
  %v2317 = vmax.f32 %v1264, %v1608
  %v2318 = vmax.f32 %v965, %v1309
  %v2319 = vmax.f32 %v967, %v1311
  %v2320 = vmax.f32 %v1008, %v1352
  %v2321 = vmax.f32 %v1010, %v1354
  %v2322 = vmax.f32 %v1051, %v1395
  %v2323 = vmax.f32 %v1053, %v1397
  %v2324 = vmax.f32 %v1094, %v1438
  %v2325 = vmax.f32 %v1096, %v1440
  %v2326 = vmax.f32 %v1137, %v1481
  %v2327 = vmax.f32 %v1139, %v1483
  %v2328 = vmax.f32 %v1180, %v1524
  %v2329 = vmax.f32 %v1182, %v1526
  %v2330 = vmax.f32 %v1223, %v1567
  %v2331 = vmax.f32 %v1225, %v1569
  %v2332 = vmax.f32 %v1266, %v1610
  %v2333 = vmax.f32 %v1268, %v1612
  %v2334 = vmax.f32 %v1649, %v1993
  %v2335 = vmax.f32 %v1651, %v1995
  %v2336 = vmax.f32 %v1692, %v2036
  %v2337 = vmax.f32 %v1694, %v2038
  %v2338 = vmax.f32 %v1735, %v2079
  %v2339 = vmax.f32 %v1737, %v2081
  %v2340 = vmax.f32 %v1778, %v2122
  %v2341 = vmax.f32 %v1780, %v2124
  %v2342 = vmax.f32 %v1821, %v2165
  %v2343 = vmax.f32 %v1823, %v2167
  %v2344 = vmax.f32 %v1864, %v2208
  %v2345 = vmax.f32 %v1866, %v2210
  %v2346 = vmax.f32 %v1907, %v2251
  %v2347 = vmax.f32 %v1909, %v2253
  %v2348 = vmax.f32 %v1950, %v2294
  %v2349 = vmax.f32 %v1952, %v2296
  %v2350 = vmax.f32 %v1653, %v1997
  %v2351 = vmax.f32 %v1655, %v1999
  %v2352 = vmax.f32 %v1696, %v2040
  %v2353 = vmax.f32 %v1698, %v2042
  %v2354 = vmax.f32 %v1739, %v2083
  %v2355 = vmax.f32 %v1741, %v2085
  %v2356 = vmax.f32 %v1782, %v2126
  %v2357 = vmax.f32 %v1784, %v2128
  %v2358 = vmax.f32 %v1825, %v2169
  %v2359 = vmax.f32 %v1827, %v2171
  %v2360 = vmax.f32 %v1868, %v2212
  %v2361 = vmax.f32 %v1870, %v2214
  %v2362 = vmax.f32 %v1911, %v2255
  %v2363 = vmax.f32 %v1913, %v2257
  %v2364 = vmax.f32 %v1954, %v2298
  %v2365 = vmax.f32 %v1956, %v2300
  %v2366 = vmax.f32 %v2302, %v2334
  %v2367 = vmax.f32 %v2303, %v2335
  %v2368 = vmax.f32 %v2304, %v2336
  %v2369 = vmax.f32 %v2305, %v2337
  %v2370 = vmax.f32 %v2306, %v2338
  %v2371 = vmax.f32 %v2307, %v2339
  %v2372 = vmax.f32 %v2308, %v2340
  %v2373 = vmax.f32 %v2309, %v2341
  %v2374 = vmax.f32 %v2310, %v2342
  %v2375 = vmax.f32 %v2311, %v2343
  %v2376 = vmax.f32 %v2312, %v2344
  %v2377 = vmax.f32 %v2313, %v2345
  %v2378 = vmax.f32 %v2314, %v2346
  %v2379 = vmax.f32 %v2315, %v2347
  %v2380 = vmax.f32 %v2316, %v2348
  %v2381 = vmax.f32 %v2317, %v2349
  %v2382 = vmax.f32 %v2318, %v2350
  %v2383 = vmax.f32 %v2319, %v2351
  %v2384 = vmax.f32 %v2320, %v2352
  %v2385 = vmax.f32 %v2321, %v2353
  %v2386 = vmax.f32 %v2322, %v2354
  %v2387 = vmax.f32 %v2323, %v2355
  %v2388 = vmax.f32 %v2324, %v2356
  %v2389 = vmax.f32 %v2325, %v2357
  %v2390 = vmax.f32 %v2326, %v2358
  %v2391 = vmax.f32 %v2327, %v2359
  %v2392 = vmax.f32 %v2328, %v2360
  %v2393 = vmax.f32 %v2329, %v2361
  %v2394 = vmax.f32 %v2330, %v2362
  %v2395 = vmax.f32 %v2331, %v2363
  %v2396 = vmax.f32 %v2332, %v2364
  %v2397 = vmax.f32 %v2333, %v2365
  %v2398 = vld [vmem:[%s2] sm:$0xff]
  %v2399 = vld [vmem:[%s2 + $0x8] sm:$0xff]
  %2401 = vset.pattern.permute.xlu0 0
  %2402 = vperm.xlu0 %2401, %v2398
  %v2403 = vpop.permute.xlu0 %2402
  %2406 = vset.pattern.permute.xlu0 0
  %2407 = vperm.xlu0 %2406, %v2399
  %v2408 = vpop.permute.xlu0 %2407
  %v2410 = vadd.f32 %v2366, %v2403
  %v2411 = vadd.f32 %v2367, %v2403
  %v2412 = vadd.f32 %v2368, %v2403
  %v2413 = vadd.f32 %v2369, %v2403
  %v2414 = vadd.f32 %v2370, %v2403
  %v2415 = vadd.f32 %v2371, %v2403
  %v2416 = vadd.f32 %v2372, %v2403
  %v2417 = vadd.f32 %v2373, %v2403
  %v2418 = vadd.f32 %v2374, %v2403
  %v2419 = vadd.f32 %v2375, %v2403
  %v2420 = vadd.f32 %v2376, %v2403
  %v2421 = vadd.f32 %v2377, %v2403
  %v2422 = vadd.f32 %v2378, %v2403
  %v2423 = vadd.f32 %v2379, %v2403
  %v2424 = vadd.f32 %v2380, %v2403
  %v2425 = vadd.f32 %v2381, %v2403
  %v2426 = vadd.f32 %v2382, %v2408
  %v2427 = vadd.f32 %v2383, %v2408
  %v2428 = vadd.f32 %v2384, %v2408
  %v2429 = vadd.f32 %v2385, %v2408
  %v2430 = vadd.f32 %v2386, %v2408
  %v2431 = vadd.f32 %v2387, %v2408
  %v2432 = vadd.f32 %v2388, %v2408
  %v2433 = vadd.f32 %v2389, %v2408
  %v2434 = vadd.f32 %v2390, %v2408
  %v2435 = vadd.f32 %v2391, %v2408
  %v2436 = vadd.f32 %v2392, %v2408
  %v2437 = vadd.f32 %v2393, %v2408
  %v2438 = vadd.f32 %v2394, %v2408
  %v2439 = vadd.f32 %v2395, %v2408
  %v2440 = vadd.f32 %v2396, %v2408
  %v2441 = vadd.f32 %v2397, %v2408
  %vm2442 = vcmp.gt.f32.partialorder %v2410, 0.0
  %vm2443 = vcmp.gt.f32.partialorder %v2411, 0.0
  %vm2444 = vcmp.gt.f32.partialorder %v2412, 0.0
  %vm2445 = vcmp.gt.f32.partialorder %v2413, 0.0
  %vm2446 = vcmp.gt.f32.partialorder %v2414, 0.0
  %vm2447 = vcmp.gt.f32.partialorder %v2415, 0.0
  %vm2448 = vcmp.gt.f32.partialorder %v2416, 0.0
  %vm2449 = vcmp.gt.f32.partialorder %v2417, 0.0
  %vm2450 = vcmp.gt.f32.partialorder %v2418, 0.0
  %vm2451 = vcmp.gt.f32.partialorder %v2419, 0.0
  %vm2452 = vcmp.gt.f32.partialorder %v2420, 0.0
  %vm2453 = vcmp.gt.f32.partialorder %v2421, 0.0
  %vm2454 = vcmp.gt.f32.partialorder %v2422, 0.0
  %vm2455 = vcmp.gt.f32.partialorder %v2423, 0.0
  %vm2456 = vcmp.gt.f32.partialorder %v2424, 0.0
  %vm2457 = vcmp.gt.f32.partialorder %v2425, 0.0
  %vm2458 = vcmp.gt.f32.partialorder %v2426, 0.0
  %vm2459 = vcmp.gt.f32.partialorder %v2427, 0.0
  %vm2460 = vcmp.gt.f32.partialorder %v2428, 0.0
  %vm2461 = vcmp.gt.f32.partialorder %v2429, 0.0
  %vm2462 = vcmp.gt.f32.partialorder %v2430, 0.0
  %vm2463 = vcmp.gt.f32.partialorder %v2431, 0.0
  %vm2464 = vcmp.gt.f32.partialorder %v2432, 0.0
  %vm2465 = vcmp.gt.f32.partialorder %v2433, 0.0
  %vm2466 = vcmp.gt.f32.partialorder %v2434, 0.0
  %vm2467 = vcmp.gt.f32.partialorder %v2435, 0.0
  %vm2468 = vcmp.gt.f32.partialorder %v2436, 0.0
  %vm2469 = vcmp.gt.f32.partialorder %v2437, 0.0
  %vm2470 = vcmp.gt.f32.partialorder %v2438, 0.0
  %vm2471 = vcmp.gt.f32.partialorder %v2439, 0.0
  %vm2472 = vcmp.gt.f32.partialorder %v2440, 0.0
  %vm2473 = vcmp.gt.f32.partialorder %v2441, 0.0
  %v2474 = vmul.f32 %v2410, 0.01
  %v2475 = vmul.f32 %v2411, 0.01
  %v2476 = vmul.f32 %v2412, 0.01
  %v2477 = vmul.f32 %v2413, 0.01
  %v2478 = vmul.f32 %v2414, 0.01
  %v2479 = vmul.f32 %v2415, 0.01
  %v2480 = vmul.f32 %v2416, 0.01
  %v2481 = vmul.f32 %v2417, 0.01
  %v2482 = vmul.f32 %v2418, 0.01
  %v2483 = vmul.f32 %v2419, 0.01
  %v2484 = vmul.f32 %v2420, 0.01
  %v2485 = vmul.f32 %v2421, 0.01
  %v2486 = vmul.f32 %v2422, 0.01
  %v2487 = vmul.f32 %v2423, 0.01
  %v2488 = vmul.f32 %v2424, 0.01
  %v2489 = vmul.f32 %v2425, 0.01
  %v2490 = vmul.f32 %v2426, 0.01
  %v2491 = vmul.f32 %v2427, 0.01
  %v2492 = vmul.f32 %v2428, 0.01
  %v2493 = vmul.f32 %v2429, 0.01
  %v2494 = vmul.f32 %v2430, 0.01
  %v2495 = vmul.f32 %v2431, 0.01
  %v2496 = vmul.f32 %v2432, 0.01
  %v2497 = vmul.f32 %v2433, 0.01
  %v2498 = vmul.f32 %v2434, 0.01
  %v2499 = vmul.f32 %v2435, 0.01
  %v2500 = vmul.f32 %v2436, 0.01
  %v2501 = vmul.f32 %v2437, 0.01
  %v2502 = vmul.f32 %v2438, 0.01
  %v2503 = vmul.f32 %v2439, 0.01
  %v2504 = vmul.f32 %v2440, 0.01
  %v2505 = vmul.f32 %v2441, 0.01
  %v2506 = vsel %vm2442, %v2410, %v2474
  %v2507 = vsel %vm2443, %v2411, %v2475
  %v2508 = vsel %vm2444, %v2412, %v2476
  %v2509 = vsel %vm2445, %v2413, %v2477
  %v2510 = vsel %vm2446, %v2414, %v2478
  %v2511 = vsel %vm2447, %v2415, %v2479
  %v2512 = vsel %vm2448, %v2416, %v2480
  %v2513 = vsel %vm2449, %v2417, %v2481
  %v2514 = vsel %vm2450, %v2418, %v2482
  %v2515 = vsel %vm2451, %v2419, %v2483
  %v2516 = vsel %vm2452, %v2420, %v2484
  %v2517 = vsel %vm2453, %v2421, %v2485
  %v2518 = vsel %vm2454, %v2422, %v2486
  %v2519 = vsel %vm2455, %v2423, %v2487
  %v2520 = vsel %vm2456, %v2424, %v2488
  %v2521 = vsel %vm2457, %v2425, %v2489
  %v2522 = vsel %vm2458, %v2426, %v2490
  %v2523 = vsel %vm2459, %v2427, %v2491
  %v2524 = vsel %vm2460, %v2428, %v2492
  %v2525 = vsel %vm2461, %v2429, %v2493
  %v2526 = vsel %vm2462, %v2430, %v2494
  %v2527 = vsel %vm2463, %v2431, %v2495
  %v2528 = vsel %vm2464, %v2432, %v2496
  %v2529 = vsel %vm2465, %v2433, %v2497
  %v2530 = vsel %vm2466, %v2434, %v2498
  %v2531 = vsel %vm2467, %v2435, %v2499
  %v2532 = vsel %vm2468, %v2436, %v2500
  %v2533 = vsel %vm2469, %v2437, %v2501
  %v2534 = vsel %vm2470, %v2438, %v2502
  %v2535 = vsel %vm2471, %v2439, %v2503
  %v2536 = vsel %vm2472, %v2440, %v2504
  %v2537 = vsel %vm2473, %v2441, %v2505
  %v2538 = vpack.c.bf16 %v2522, %v2506
  %v2539 = vpack.c.bf16 %v2523, %v2507
  %v2540 = vpack.c.bf16 %v2524, %v2508
  %v2541 = vpack.c.bf16 %v2525, %v2509
  %v2542 = vpack.c.bf16 %v2526, %v2510
  %v2543 = vpack.c.bf16 %v2527, %v2511
  %v2544 = vpack.c.bf16 %v2528, %v2512
  %v2545 = vpack.c.bf16 %v2529, %v2513
  %v2546 = vpack.c.bf16 %v2530, %v2514
  %v2547 = vpack.c.bf16 %v2531, %v2515
  %v2548 = vpack.c.bf16 %v2532, %v2516
  %v2549 = vpack.c.bf16 %v2533, %v2517
  %v2550 = vpack.c.bf16 %v2534, %v2518
  %v2551 = vpack.c.bf16 %v2535, %v2519
  %v2552 = vpack.c.bf16 %v2536, %v2520
  %v2553 = vpack.c.bf16 %v2537, %v2521
  %v2570 = vunpack.c.l.b16 %v2538
  %v2571 = vunpack.c.l.b16 %v2539
  %v2572 = vunpack.c.l.b16 %v2540
  %v2573 = vunpack.c.l.b16 %v2541
  %v2574 = vunpack.c.l.b16 %v2542
  %v2575 = vunpack.c.l.b16 %v2543
  %v2576 = vunpack.c.l.b16 %v2544
  %v2577 = vunpack.c.l.b16 %v2545
  %v2578 = vunpack.c.l.b16 %v2546
  %v2579 = vunpack.c.l.b16 %v2547
  %v2580 = vunpack.c.l.b16 %v2548
  %v2581 = vunpack.c.l.b16 %v2549
  %v2582 = vunpack.c.l.b16 %v2550
  %v2583 = vunpack.c.l.b16 %v2551
  %v2584 = vunpack.c.l.b16 %v2552
  %v2585 = vunpack.c.l.b16 %v2553
  %v2586 = vunpack.c.h.b16 %v2538
  %v2587 = vunpack.c.h.b16 %v2539
  %v2588 = vunpack.c.h.b16 %v2540
  %v2589 = vunpack.c.h.b16 %v2541
  %v2590 = vunpack.c.h.b16 %v2542
  %v2591 = vunpack.c.h.b16 %v2543
  %v2592 = vunpack.c.h.b16 %v2544
  %v2593 = vunpack.c.h.b16 %v2545
  %v2594 = vunpack.c.h.b16 %v2546
  %v2595 = vunpack.c.h.b16 %v2547
  %v2596 = vunpack.c.h.b16 %v2548
  %v2597 = vunpack.c.h.b16 %v2549
  %v2598 = vunpack.c.h.b16 %v2550
  %v2599 = vunpack.c.h.b16 %v2551
  %v2600 = vunpack.c.h.b16 %v2552
  %v2601 = vunpack.c.h.b16 %v2553
  %v2602 = vpack.c.b16 %v2571, %v2570
  %v2603 = vpack.c.b16 %v2573, %v2572
  %v2604 = vpack.c.b16 %v2575, %v2574
  %v2605 = vpack.c.b16 %v2577, %v2576
  %v2606 = vpack.c.b16 %v2579, %v2578
  %v2607 = vpack.c.b16 %v2581, %v2580
  %v2608 = vpack.c.b16 %v2583, %v2582
  %v2609 = vpack.c.b16 %v2585, %v2584
  %v2610 = vpack.c.b16 %v2587, %v2586
  %v2611 = vpack.c.b16 %v2589, %v2588
  %v2612 = vpack.c.b16 %v2591, %v2590
  %v2613 = vpack.c.b16 %v2593, %v2592
  %v2614 = vpack.c.b16 %v2595, %v2594
  %v2615 = vpack.c.b16 %v2597, %v2596
  %v2616 = vpack.c.b16 %v2599, %v2598
  %v2617 = vpack.c.b16 %v2601, %v2600
  %2634 = vst [vmem:[%s3] sm:$0xff] %v2602
  %2635 = vst [vmem:[%s3 + $0x8] sm:$0xff] %v2603
  %2636 = vst [vmem:[%s3 + $0x10] sm:$0xff] %v2604
  %2637 = vst [vmem:[%s3 + $0x18] sm:$0xff] %v2605
  %2638 = vst [vmem:[%s3 + $0x20] sm:$0xff] %v2606
  %2639 = vst [vmem:[%s3 + $0x28] sm:$0xff] %v2607
  %2640 = vst [vmem:[%s3 + $0x30] sm:$0xff] %v2608
  %2641 = vst [vmem:[%s3 + $0x38] sm:$0xff] %v2609
  %2642 = vst [vmem:[%s3 + $0x40] sm:$0xff] %v2610
  %2643 = vst [vmem:[%s3 + $0x48] sm:$0xff] %v2611
  %2644 = vst [vmem:[%s3 + $0x50] sm:$0xff] %v2612
  %2645 = vst [vmem:[%s3 + $0x58] sm:$0xff] %v2613
  %2646 = vst [vmem:[%s3 + $0x60] sm:$0xff] %v2614
  %2647 = vst [vmem:[%s3 + $0x68] sm:$0xff] %v2615
  %2648 = vst [vmem:[%s3 + $0x70] sm:$0xff] %v2616
  %2649 = vst [vmem:[%s3 + $0x78] sm:$0xff] %v2617
  // Predicated region
  $region14: #{extra_corpus_q_memory_forward.4} parent=0 // pred_check
    _
  $region15: #{extra_corpus_q_memory_forward.4} parent=0 // pred_check_branch
    %2651 = sbr.rel (0) target = $region17
  $region16: #{extra_corpus_q_memory_forward.4} parent=0 // pred_region
    _
  $region17: #{extra_corpus_q_memory_forward.4} parent=0 // pred_fallthru
    _
  // Predicated region
  $region18: #{extra_corpus_q_memory_forward.4} parent=0 // pred_check
    _
  $region19: #{extra_corpus_q_memory_forward.4} parent=0 // pred_check_branch
    %2653 = sbr.rel (0) target = $region21
  $region20: #{extra_corpus_q_memory_forward.4} parent=0 // pred_region
    _
  $region21: #{extra_corpus_q_memory_forward.4} parent=0 // pred_fallthru
    _

// kernel: extra_corpus_q_memory_forward.5
$region0: #{extra_corpus_q_memory_forward.5}
  #allocation0 [shape = 'u32[]', space=smem, size = 0x4, offset = 0x4, fixed_abs, tag = 'smem constant byte address 0x4 - core index']
  #allocation1 [shape = 'u32[144,128]{1,0:T(1,128)}', space=vmem, size = 0x12000, scoped, tag = 'internal scratch']
  %s0 = inlined_call_operand.vmem [shape: bf16[256,1536], index: 0, kind: input, shape index: {}]
  %s1 = inlined_call_operand.vmem [shape: bf16[32,256], index: 1, kind: input, shape index: {}]
  %s2 = inlined_call_operand.vmem [shape: f32[32,1], index: 2, kind: input, shape index: {}]
  %s3 = inlined_call_operand.vmem [shape: bf16[32,384], index: 3, kind: output, shape index: {}]
  %s4 = sld [smem:[#allocation0]]
  $region22: #{extra_corpus_q_memory_forward.5} parent=0
    _
  %s6 = ssub.s32 1, %s4
  %s7 = scalar_select 0, %s6, %s4
  // Predicated region
  $region2: #{extra_corpus_q_memory_forward.5} parent=0 // pred_check
    _
  $region3: #{extra_corpus_q_memory_forward.5} parent=0 // pred_check_branch
    %9 = sbr.rel (0) target = $region5
  $region4: #{extra_corpus_q_memory_forward.5} parent=0 // pred_region
    _
  $region5: #{extra_corpus_q_memory_forward.5} parent=0 // pred_fallthru
    _
  // Predicated region
  $region6: #{extra_corpus_q_memory_forward.5} parent=0 // pred_check
    _
  $region7: #{extra_corpus_q_memory_forward.5} parent=0 // pred_check_branch
    %11 = sbr.rel (0) target = $region9
  $region8: #{extra_corpus_q_memory_forward.5} parent=0 // pred_region
    _
  $region9: #{extra_corpus_q_memory_forward.5} parent=0 // pred_fallthru
    _
  // Predicated region
  $region10: #{extra_corpus_q_memory_forward.5} parent=0 // pred_check
    _
  $region11: #{extra_corpus_q_memory_forward.5} parent=0 // pred_check_branch
    %13 = sbr.rel (0) target = $region13
  $region12: #{extra_corpus_q_memory_forward.5} parent=0 // pred_region
    _
  $region13: #{extra_corpus_q_memory_forward.5} parent=0 // pred_fallthru
    _
  %v14 = vld [vmem:[%s1] sm:$0xff]
  %v15 = vld [vmem:[%s1 + $0x8] sm:$0xff]
  %v16 = vld [vmem:[%s1 + $0x10] sm:$0xff]
  %v17 = vld [vmem:[%s1 + $0x18] sm:$0xff]
  %v18 = vld [vmem:[%s0] sm:$0xff]
  %v19 = vld [vmem:[%s0 + $0x8] sm:$0xff]
  %v20 = vld [vmem:[%s0 + $0x10] sm:$0xff]
  %v21 = vld [vmem:[%s0 + $0x18] sm:$0xff]
  %v22 = vld [vmem:[%s0 + $0x20] sm:$0xff]
  %v23 = vld [vmem:[%s0 + $0x28] sm:$0xff]
  %v24 = vld [vmem:[%s0 + $0x30] sm:$0xff]
  %v25 = vld [vmem:[%s0 + $0x38] sm:$0xff]
  %v26 = vld [vmem:[%s0 + $0x40] sm:$0xff]
  %v27 = vld [vmem:[%s0 + $0x48] sm:$0xff]
  %v28 = vld [vmem:[%s0 + $0x50] sm:$0xff]
  %v29 = vld [vmem:[%s0 + $0x58] sm:$0xff]
  %v30 = vld [vmem:[%s0 + $0x60] sm:$0xff]
  %v31 = vld [vmem:[%s0 + $0x68] sm:$0xff]
  %v32 = vld [vmem:[%s0 + $0x70] sm:$0xff]
  %v33 = vld [vmem:[%s0 + $0x78] sm:$0xff]
  %v34 = vld [vmem:[%s0 + $0x80] sm:$0xff]
  %v35 = vld [vmem:[%s0 + $0x88] sm:$0xff]
  %v36 = vld [vmem:[%s0 + $0x90] sm:$0xff]
  %v37 = vld [vmem:[%s0 + $0x98] sm:$0xff]
  %v38 = vld [vmem:[%s0 + $0xa0] sm:$0xff]
  %v39 = vld [vmem:[%s0 + $0xa8] sm:$0xff]
  %v40 = vld [vmem:[%s0 + $0xb0] sm:$0xff]
  %v41 = vld [vmem:[%s0 + $0xb8] sm:$0xff]
  %v42 = vld [vmem:[%s0 + $0xc0] sm:$0xff]
  %v43 = vld [vmem:[%s0 + $0xc8] sm:$0xff]
  %v44 = vld [vmem:[%s0 + $0xd0] sm:$0xff]
  %v45 = vld [vmem:[%s0 + $0xd8] sm:$0xff]
  %v46 = vld [vmem:[%s0 + $0xe0] sm:$0xff]
  %v47 = vld [vmem:[%s0 + $0xe8] sm:$0xff]
  %v48 = vld [vmem:[%s0 + $0xf0] sm:$0xff]
  %v49 = vld [vmem:[%s0 + $0xf8] sm:$0xff]
  %v50 = vld [vmem:[%s0 + $0x100] sm:$0xff]
  %v51 = vld [vmem:[%s0 + $0x108] sm:$0xff]
  %v52 = vld [vmem:[%s0 + $0x110] sm:$0xff]
  %v53 = vld [vmem:[%s0 + $0x118] sm:$0xff]
  %v54 = vld [vmem:[%s0 + $0x120] sm:$0xff]
  %v55 = vld [vmem:[%s0 + $0x128] sm:$0xff]
  %v56 = vld [vmem:[%s0 + $0x130] sm:$0xff]
  %v57 = vld [vmem:[%s0 + $0x138] sm:$0xff]
  %v58 = vld [vmem:[%s0 + $0x140] sm:$0xff]
  %v59 = vld [vmem:[%s0 + $0x148] sm:$0xff]
  %v60 = vld [vmem:[%s0 + $0x150] sm:$0xff]
  %v61 = vld [vmem:[%s0 + $0x158] sm:$0xff]
  %v62 = vld [vmem:[%s0 + $0x160] sm:$0xff]
  %v63 = vld [vmem:[%s0 + $0x168] sm:$0xff]
  %v64 = vld [vmem:[%s0 + $0x170] sm:$0xff]
  %v65 = vld [vmem:[%s0 + $0x178] sm:$0xff]
  %v66 = vld [vmem:[%s0 + $0x180] sm:$0xff]
  %v67 = vld [vmem:[%s0 + $0x188] sm:$0xff]
  %v68 = vld [vmem:[%s0 + $0x190] sm:$0xff]
  %v69 = vld [vmem:[%s0 + $0x198] sm:$0xff]
  %v70 = vld [vmem:[%s0 + $0x1a0] sm:$0xff]
  %v71 = vld [vmem:[%s0 + $0x1a8] sm:$0xff]
  %v72 = vld [vmem:[%s0 + $0x1b0] sm:$0xff]
  %v73 = vld [vmem:[%s0 + $0x1b8] sm:$0xff]
  %v74 = vld [vmem:[%s0 + $0x1c0] sm:$0xff]
  %v75 = vld [vmem:[%s0 + $0x1c8] sm:$0xff]
  %v76 = vld [vmem:[%s0 + $0x1d0] sm:$0xff]
  %v77 = vld [vmem:[%s0 + $0x1d8] sm:$0xff]
  %v78 = vld [vmem:[%s0 + $0x1e0] sm:$0xff]
  %v79 = vld [vmem:[%s0 + $0x1e8] sm:$0xff]
  %v80 = vld [vmem:[%s0 + $0x1f0] sm:$0xff]
  %v81 = vld [vmem:[%s0 + $0x1f8] sm:$0xff]
  %v82 = vld [vmem:[%s0 + $0x200] sm:$0xff]
  %v83 = vld [vmem:[%s0 + $0x208] sm:$0xff]
  %v84 = vld [vmem:[%s0 + $0x210] sm:$0xff]
  %v85 = vld [vmem:[%s0 + $0x218] sm:$0xff]
  %v86 = vld [vmem:[%s0 + $0x220] sm:$0xff]
  %v87 = vld [vmem:[%s0 + $0x228] sm:$0xff]
  %v88 = vld [vmem:[%s0 + $0x230] sm:$0xff]
  %v89 = vld [vmem:[%s0 + $0x238] sm:$0xff]
  %v90 = vld [vmem:[%s0 + $0x240] sm:$0xff]
  %v91 = vld [vmem:[%s0 + $0x248] sm:$0xff]
  %v92 = vld [vmem:[%s0 + $0x250] sm:$0xff]
  %v93 = vld [vmem:[%s0 + $0x258] sm:$0xff]
  %v94 = vld [vmem:[%s0 + $0x260] sm:$0xff]
  %v95 = vld [vmem:[%s0 + $0x268] sm:$0xff]
  %v96 = vld [vmem:[%s0 + $0x270] sm:$0xff]
  %v97 = vld [vmem:[%s0 + $0x278] sm:$0xff]
  %v98 = vld [vmem:[%s0 + $0x280] sm:$0xff]
  %v99 = vld [vmem:[%s0 + $0x288] sm:$0xff]
  %v100 = vld [vmem:[%s0 + $0x290] sm:$0xff]
  %v101 = vld [vmem:[%s0 + $0x298] sm:$0xff]
  %v102 = vld [vmem:[%s0 + $0x2a0] sm:$0xff]
  %v103 = vld [vmem:[%s0 + $0x2a8] sm:$0xff]
  %v104 = vld [vmem:[%s0 + $0x2b0] sm:$0xff]
  %v105 = vld [vmem:[%s0 + $0x2b8] sm:$0xff]
  %v106 = vld [vmem:[%s0 + $0x2c0] sm:$0xff]
  %v107 = vld [vmem:[%s0 + $0x2c8] sm:$0xff]
  %v108 = vld [vmem:[%s0 + $0x2d0] sm:$0xff]
  %v109 = vld [vmem:[%s0 + $0x2d8] sm:$0xff]
  %v110 = vld [vmem:[%s0 + $0x2e0] sm:$0xff]
  %v111 = vld [vmem:[%s0 + $0x2e8] sm:$0xff]
  %v112 = vld [vmem:[%s0 + $0x2f0] sm:$0xff]
  %v113 = vld [vmem:[%s0 + $0x2f8] sm:$0xff]
  %v114 = vld [vmem:[%s0 + $0x300] sm:$0xff]
  %v115 = vld [vmem:[%s0 + $0x308] sm:$0xff]
  %v116 = vld [vmem:[%s0 + $0x310] sm:$0xff]
  %v117 = vld [vmem:[%s0 + $0x318] sm:$0xff]
  %v118 = vld [vmem:[%s0 + $0x320] sm:$0xff]
  %v119 = vld [vmem:[%s0 + $0x328] sm:$0xff]
  %v120 = vld [vmem:[%s0 + $0x330] sm:$0xff]
  %v121 = vld [vmem:[%s0 + $0x338] sm:$0xff]
  %v122 = vld [vmem:[%s0 + $0x340] sm:$0xff]
  %v123 = vld [vmem:[%s0 + $0x348] sm:$0xff]
  %v124 = vld [vmem:[%s0 + $0x350] sm:$0xff]
  %v125 = vld [vmem:[%s0 + $0x358] sm:$0xff]
  %v126 = vld [vmem:[%s0 + $0x360] sm:$0xff]
  %v127 = vld [vmem:[%s0 + $0x368] sm:$0xff]
  %v128 = vld [vmem:[%s0 + $0x370] sm:$0xff]
  %v129 = vld [vmem:[%s0 + $0x378] sm:$0xff]
  %v130 = vld [vmem:[%s0 + $0x380] sm:$0xff]
  %v131 = vld [vmem:[%s0 + $0x388] sm:$0xff]
  %v132 = vld [vmem:[%s0 + $0x390] sm:$0xff]
  %v133 = vld [vmem:[%s0 + $0x398] sm:$0xff]
  %v134 = vld [vmem:[%s0 + $0x3a0] sm:$0xff]
  %v135 = vld [vmem:[%s0 + $0x3a8] sm:$0xff]
  %v136 = vld [vmem:[%s0 + $0x3b0] sm:$0xff]
  %v137 = vld [vmem:[%s0 + $0x3b8] sm:$0xff]
  %v138 = vld [vmem:[%s0 + $0x3c0] sm:$0xff]
  %v139 = vld [vmem:[%s0 + $0x3c8] sm:$0xff]
  %v140 = vld [vmem:[%s0 + $0x3d0] sm:$0xff]
  %v141 = vld [vmem:[%s0 + $0x3d8] sm:$0xff]
  %v142 = vld [vmem:[%s0 + $0x3e0] sm:$0xff]
  %v143 = vld [vmem:[%s0 + $0x3e8] sm:$0xff]
  %v144 = vld [vmem:[%s0 + $0x3f0] sm:$0xff]
  %v145 = vld [vmem:[%s0 + $0x3f8] sm:$0xff]
  %v146 = vld [vmem:[%s0 + $0x400] sm:$0xff]
  %v147 = vld [vmem:[%s0 + $0x408] sm:$0xff]
  %v148 = vld [vmem:[%s0 + $0x410] sm:$0xff]
  %v149 = vld [vmem:[%s0 + $0x418] sm:$0xff]
  %v150 = vld [vmem:[%s0 + $0x420] sm:$0xff]
  %v151 = vld [vmem:[%s0 + $0x428] sm:$0xff]
  %v152 = vld [vmem:[%s0 + $0x430] sm:$0xff]
  %v153 = vld [vmem:[%s0 + $0x438] sm:$0xff]
  %v154 = vld [vmem:[%s0 + $0x440] sm:$0xff]
  %v155 = vld [vmem:[%s0 + $0x448] sm:$0xff]
  %v156 = vld [vmem:[%s0 + $0x450] sm:$0xff]
  %v157 = vld [vmem:[%s0 + $0x458] sm:$0xff]
  %v158 = vld [vmem:[%s0 + $0x460] sm:$0xff]
  %v159 = vld [vmem:[%s0 + $0x468] sm:$0xff]
  %v160 = vld [vmem:[%s0 + $0x470] sm:$0xff]
  %v161 = vld [vmem:[%s0 + $0x478] sm:$0xff]
  %v162 = vld [vmem:[%s0 + $0x480] sm:$0xff]
  %v163 = vld [vmem:[%s0 + $0x488] sm:$0xff]
  %v164 = vld [vmem:[%s0 + $0x490] sm:$0xff]
  %v165 = vld [vmem:[%s0 + $0x498] sm:$0xff]
  %v166 = vld [vmem:[%s0 + $0x4a0] sm:$0xff]
  %v167 = vld [vmem:[%s0 + $0x4a8] sm:$0xff]
  %v168 = vld [vmem:[%s0 + $0x4b0] sm:$0xff]
  %v169 = vld [vmem:[%s0 + $0x4b8] sm:$0xff]
  %v170 = vld [vmem:[%s0 + $0x4c0] sm:$0xff]
  %v171 = vld [vmem:[%s0 + $0x4c8] sm:$0xff]
  %v172 = vld [vmem:[%s0 + $0x4d0] sm:$0xff]
  %v173 = vld [vmem:[%s0 + $0x4d8] sm:$0xff]
  %v174 = vld [vmem:[%s0 + $0x4e0] sm:$0xff]
  %v175 = vld [vmem:[%s0 + $0x4e8] sm:$0xff]
  %v176 = vld [vmem:[%s0 + $0x4f0] sm:$0xff]
  %v177 = vld [vmem:[%s0 + $0x4f8] sm:$0xff]
  %v178 = vld [vmem:[%s0 + $0x500] sm:$0xff]
  %v179 = vld [vmem:[%s0 + $0x508] sm:$0xff]
  %v180 = vld [vmem:[%s0 + $0x510] sm:$0xff]
  %v181 = vld [vmem:[%s0 + $0x518] sm:$0xff]
  %v182 = vld [vmem:[%s0 + $0x520] sm:$0xff]
  %v183 = vld [vmem:[%s0 + $0x528] sm:$0xff]
  %v184 = vld [vmem:[%s0 + $0x530] sm:$0xff]
  %v185 = vld [vmem:[%s0 + $0x538] sm:$0xff]
  %v186 = vld [vmem:[%s0 + $0x540] sm:$0xff]
  %v187 = vld [vmem:[%s0 + $0x548] sm:$0xff]
  %v188 = vld [vmem:[%s0 + $0x550] sm:$0xff]
  %v189 = vld [vmem:[%s0 + $0x558] sm:$0xff]
  %v190 = vld [vmem:[%s0 + $0x560] sm:$0xff]
  %v191 = vld [vmem:[%s0 + $0x568] sm:$0xff]
  %v192 = vld [vmem:[%s0 + $0x570] sm:$0xff]
  %v193 = vld [vmem:[%s0 + $0x578] sm:$0xff]
  %v194 = vld [vmem:[%s0 + $0x580] sm:$0xff]
  %v195 = vld [vmem:[%s0 + $0x588] sm:$0xff]
  %v196 = vld [vmem:[%s0 + $0x590] sm:$0xff]
  %v197 = vld [vmem:[%s0 + $0x598] sm:$0xff]
  %v198 = vld [vmem:[%s0 + $0x5a0] sm:$0xff]
  %v199 = vld [vmem:[%s0 + $0x5a8] sm:$0xff]
  %v200 = vld [vmem:[%s0 + $0x5b0] sm:$0xff]
  %v201 = vld [vmem:[%s0 + $0x5b8] sm:$0xff]
  %v202 = vld [vmem:[%s0 + $0x5c0] sm:$0xff]
  %v203 = vld [vmem:[%s0 + $0x5c8] sm:$0xff]
  %v204 = vld [vmem:[%s0 + $0x5d0] sm:$0xff]
  %v205 = vld [vmem:[%s0 + $0x5d8] sm:$0xff]
  %v206 = vld [vmem:[%s0 + $0x5e0] sm:$0xff]
  %v207 = vld [vmem:[%s0 + $0x5e8] sm:$0xff]
  %v208 = vld [vmem:[%s0 + $0x5f0] sm:$0xff]
  %v209 = vld [vmem:[%s0 + $0x5f8] sm:$0xff]
  %v214 = vunpack.c.l.b16 %v14
  %v215 = vunpack.c.h.b16 %v14
  %v216 = vunpack.c.l.b16 %v15
  %v217 = vunpack.c.h.b16 %v15
  %v218 = vunpack.c.l.b16 %v16
  %v219 = vunpack.c.h.b16 %v16
  %v220 = vunpack.c.l.b16 %v17
  %v221 = vunpack.c.h.b16 %v17
  %v222 = vpack.c.b16 %v216, %v214
  %v223 = vpack.c.b16 %v217, %v215
  %v224 = vpack.c.b16 %v220, %v218
  %v225 = vpack.c.b16 %v221, %v219
  %v422 = vunpack.c.l.b16 %v18
  %v423 = vunpack.c.h.b16 %v18
  %v424 = vunpack.c.l.b16 %v19
  %v425 = vunpack.c.h.b16 %v19
  %v426 = vunpack.c.l.b16 %v20
  %v427 = vunpack.c.h.b16 %v20
  %v428 = vunpack.c.l.b16 %v21
  %v429 = vunpack.c.h.b16 %v21
  %v430 = vunpack.c.l.b16 %v22
  %v431 = vunpack.c.h.b16 %v22
  %v432 = vunpack.c.l.b16 %v23
  %v433 = vunpack.c.h.b16 %v23
  %v434 = vunpack.c.l.b16 %v24
  %v435 = vunpack.c.h.b16 %v24
  %v436 = vunpack.c.l.b16 %v25
  %v437 = vunpack.c.h.b16 %v25
  %v438 = vunpack.c.l.b16 %v26
  %v439 = vunpack.c.h.b16 %v26
  %v440 = vunpack.c.l.b16 %v27
  %v441 = vunpack.c.h.b16 %v27
  %v442 = vunpack.c.l.b16 %v28
  %v443 = vunpack.c.h.b16 %v28
  %v444 = vunpack.c.l.b16 %v29
  %v445 = vunpack.c.h.b16 %v29
  %v446 = vunpack.c.l.b16 %v30
  %v447 = vunpack.c.h.b16 %v30
  %v448 = vunpack.c.l.b16 %v31
  %v449 = vunpack.c.h.b16 %v31
  %v450 = vunpack.c.l.b16 %v32
  %v451 = vunpack.c.h.b16 %v32
  %v452 = vunpack.c.l.b16 %v33
  %v453 = vunpack.c.h.b16 %v33
  %v454 = vunpack.c.l.b16 %v34
  %v455 = vunpack.c.h.b16 %v34
  %v456 = vunpack.c.l.b16 %v35
  %v457 = vunpack.c.h.b16 %v35
  %v458 = vunpack.c.l.b16 %v36
  %v459 = vunpack.c.h.b16 %v36
  %v460 = vunpack.c.l.b16 %v37
  %v461 = vunpack.c.h.b16 %v37
  %v462 = vunpack.c.l.b16 %v38
  %v463 = vunpack.c.h.b16 %v38
  %v464 = vunpack.c.l.b16 %v39
  %v465 = vunpack.c.h.b16 %v39
  %v466 = vunpack.c.l.b16 %v40
  %v467 = vunpack.c.h.b16 %v40
  %v468 = vunpack.c.l.b16 %v41
  %v469 = vunpack.c.h.b16 %v41
  %v470 = vunpack.c.l.b16 %v42
  %v471 = vunpack.c.h.b16 %v42
  %v472 = vunpack.c.l.b16 %v43
  %v473 = vunpack.c.h.b16 %v43
  %v474 = vunpack.c.l.b16 %v44
  %v475 = vunpack.c.h.b16 %v44
  %v476 = vunpack.c.l.b16 %v45
  %v477 = vunpack.c.h.b16 %v45
  %v478 = vunpack.c.l.b16 %v46
  %v479 = vunpack.c.h.b16 %v46
  %v480 = vunpack.c.l.b16 %v47
  %v481 = vunpack.c.h.b16 %v47
  %v482 = vunpack.c.l.b16 %v48
  %v483 = vunpack.c.h.b16 %v48
  %v484 = vunpack.c.l.b16 %v49
  %v485 = vunpack.c.h.b16 %v49
  %v486 = vunpack.c.l.b16 %v50
  %v487 = vunpack.c.h.b16 %v50
  %v488 = vunpack.c.l.b16 %v51
  %v489 = vunpack.c.h.b16 %v51
  %v490 = vunpack.c.l.b16 %v52
  %v491 = vunpack.c.h.b16 %v52
  %v492 = vunpack.c.l.b16 %v53
  %v493 = vunpack.c.h.b16 %v53
  %v494 = vunpack.c.l.b16 %v54
  %v495 = vunpack.c.h.b16 %v54
  %v496 = vunpack.c.l.b16 %v55
  %v497 = vunpack.c.h.b16 %v55
  %v498 = vunpack.c.l.b16 %v56
  %v499 = vunpack.c.h.b16 %v56
  %v500 = vunpack.c.l.b16 %v57
  %v501 = vunpack.c.h.b16 %v57
  %v502 = vunpack.c.l.b16 %v58
  %v503 = vunpack.c.h.b16 %v58
  %v504 = vunpack.c.l.b16 %v59
  %v505 = vunpack.c.h.b16 %v59
  %v506 = vunpack.c.l.b16 %v60
  %v507 = vunpack.c.h.b16 %v60
  %v508 = vunpack.c.l.b16 %v61
  %v509 = vunpack.c.h.b16 %v61
  %v510 = vunpack.c.l.b16 %v62
  %v511 = vunpack.c.h.b16 %v62
  %v512 = vunpack.c.l.b16 %v63
  %v513 = vunpack.c.h.b16 %v63
  %v514 = vunpack.c.l.b16 %v64
  %v515 = vunpack.c.h.b16 %v64
  %v516 = vunpack.c.l.b16 %v65
  %v517 = vunpack.c.h.b16 %v65
  %v518 = vunpack.c.l.b16 %v66
  %v519 = vunpack.c.h.b16 %v66
  %v520 = vunpack.c.l.b16 %v67
  %v521 = vunpack.c.h.b16 %v67
  %v522 = vunpack.c.l.b16 %v68
  %v523 = vunpack.c.h.b16 %v68
  %v524 = vunpack.c.l.b16 %v69
  %v525 = vunpack.c.h.b16 %v69
  %v526 = vunpack.c.l.b16 %v70
  %v527 = vunpack.c.h.b16 %v70
  %v528 = vunpack.c.l.b16 %v71
  %v529 = vunpack.c.h.b16 %v71
  %v530 = vunpack.c.l.b16 %v72
  %v531 = vunpack.c.h.b16 %v72
  %v532 = vunpack.c.l.b16 %v73
  %v533 = vunpack.c.h.b16 %v73
  %v534 = vunpack.c.l.b16 %v74
  %v535 = vunpack.c.h.b16 %v74
  %v536 = vunpack.c.l.b16 %v75
  %v537 = vunpack.c.h.b16 %v75
  %v538 = vunpack.c.l.b16 %v76
  %v539 = vunpack.c.h.b16 %v76
  %v540 = vunpack.c.l.b16 %v77
  %v541 = vunpack.c.h.b16 %v77
  %v542 = vunpack.c.l.b16 %v78
  %v543 = vunpack.c.h.b16 %v78
  %v544 = vunpack.c.l.b16 %v79
  %v545 = vunpack.c.h.b16 %v79
  %v546 = vunpack.c.l.b16 %v80
  %v547 = vunpack.c.h.b16 %v80
  %v548 = vunpack.c.l.b16 %v81
  %v549 = vunpack.c.h.b16 %v81
  %v550 = vunpack.c.l.b16 %v82
  %v551 = vunpack.c.h.b16 %v82
  %v552 = vunpack.c.l.b16 %v83
  %v553 = vunpack.c.h.b16 %v83
  %v554 = vunpack.c.l.b16 %v84
  %v555 = vunpack.c.h.b16 %v84
  %v556 = vunpack.c.l.b16 %v85
  %v557 = vunpack.c.h.b16 %v85
  %v558 = vunpack.c.l.b16 %v86
  %v559 = vunpack.c.h.b16 %v86
  %v560 = vunpack.c.l.b16 %v87
  %v561 = vunpack.c.h.b16 %v87
  %v562 = vunpack.c.l.b16 %v88
  %v563 = vunpack.c.h.b16 %v88
  %v564 = vunpack.c.l.b16 %v89
  %v565 = vunpack.c.h.b16 %v89
  %v566 = vunpack.c.l.b16 %v90
  %v567 = vunpack.c.h.b16 %v90
  %v568 = vunpack.c.l.b16 %v91
  %v569 = vunpack.c.h.b16 %v91
  %v570 = vunpack.c.l.b16 %v92
  %v571 = vunpack.c.h.b16 %v92
  %v572 = vunpack.c.l.b16 %v93
  %v573 = vunpack.c.h.b16 %v93
  %v574 = vunpack.c.l.b16 %v94
  %v575 = vunpack.c.h.b16 %v94
  %v576 = vunpack.c.l.b16 %v95
  %v577 = vunpack.c.h.b16 %v95
  %v578 = vunpack.c.l.b16 %v96
  %v579 = vunpack.c.h.b16 %v96
  %v580 = vunpack.c.l.b16 %v97
  %v581 = vunpack.c.h.b16 %v97
  %v582 = vunpack.c.l.b16 %v98
  %v583 = vunpack.c.h.b16 %v98
  %v584 = vunpack.c.l.b16 %v99
  %v585 = vunpack.c.h.b16 %v99
  %v586 = vunpack.c.l.b16 %v100
  %v587 = vunpack.c.h.b16 %v100
  %v588 = vunpack.c.l.b16 %v101
  %v589 = vunpack.c.h.b16 %v101
  %v590 = vunpack.c.l.b16 %v102
  %v591 = vunpack.c.h.b16 %v102
  %v592 = vunpack.c.l.b16 %v103
  %v593 = vunpack.c.h.b16 %v103
  %v594 = vunpack.c.l.b16 %v104
  %v595 = vunpack.c.h.b16 %v104
  %v596 = vunpack.c.l.b16 %v105
  %v597 = vunpack.c.h.b16 %v105
  %v598 = vunpack.c.l.b16 %v106
  %v599 = vunpack.c.h.b16 %v106
  %v600 = vunpack.c.l.b16 %v107
  %v601 = vunpack.c.h.b16 %v107
  %v602 = vunpack.c.l.b16 %v108
  %v603 = vunpack.c.h.b16 %v108
  %v604 = vunpack.c.l.b16 %v109
  %v605 = vunpack.c.h.b16 %v109
  %v606 = vunpack.c.l.b16 %v110
  %v607 = vunpack.c.h.b16 %v110
  %v608 = vunpack.c.l.b16 %v111
  %v609 = vunpack.c.h.b16 %v111
  %v610 = vunpack.c.l.b16 %v112
  %v611 = vunpack.c.h.b16 %v112
  %v612 = vunpack.c.l.b16 %v113
  %v613 = vunpack.c.h.b16 %v113
  %v614 = vunpack.c.l.b16 %v114
  %v615 = vunpack.c.h.b16 %v114
  %v616 = vunpack.c.l.b16 %v115
  %v617 = vunpack.c.h.b16 %v115
  %v618 = vunpack.c.l.b16 %v116
  %v619 = vunpack.c.h.b16 %v116
  %v620 = vunpack.c.l.b16 %v117
  %v621 = vunpack.c.h.b16 %v117
  %v622 = vunpack.c.l.b16 %v118
  %v623 = vunpack.c.h.b16 %v118
  %v624 = vunpack.c.l.b16 %v119
  %v625 = vunpack.c.h.b16 %v119
  %v626 = vunpack.c.l.b16 %v120
  %v627 = vunpack.c.h.b16 %v120
  %v628 = vunpack.c.l.b16 %v121
  %v629 = vunpack.c.h.b16 %v121
  %v630 = vunpack.c.l.b16 %v122
  %v631 = vunpack.c.h.b16 %v122
  %v632 = vunpack.c.l.b16 %v123
  %v633 = vunpack.c.h.b16 %v123
  %v634 = vunpack.c.l.b16 %v124
  %v635 = vunpack.c.h.b16 %v124
  %v636 = vunpack.c.l.b16 %v125
  %v637 = vunpack.c.h.b16 %v125
  %v638 = vunpack.c.l.b16 %v126
  %v639 = vunpack.c.h.b16 %v126
  %v640 = vunpack.c.l.b16 %v127
  %v641 = vunpack.c.h.b16 %v127
  %v642 = vunpack.c.l.b16 %v128
  %v643 = vunpack.c.h.b16 %v128
  %v644 = vunpack.c.l.b16 %v129
  %v645 = vunpack.c.h.b16 %v129
  %v646 = vunpack.c.l.b16 %v130
  %v647 = vunpack.c.h.b16 %v130
  %v648 = vunpack.c.l.b16 %v131
  %v649 = vunpack.c.h.b16 %v131
  %v650 = vunpack.c.l.b16 %v132
  %v651 = vunpack.c.h.b16 %v132
  %v652 = vunpack.c.l.b16 %v133
  %v653 = vunpack.c.h.b16 %v133
  %v654 = vunpack.c.l.b16 %v134
  %v655 = vunpack.c.h.b16 %v134
  %v656 = vunpack.c.l.b16 %v135
  %v657 = vunpack.c.h.b16 %v135
  %v658 = vunpack.c.l.b16 %v136
  %v659 = vunpack.c.h.b16 %v136
  %v660 = vunpack.c.l.b16 %v137
  %v661 = vunpack.c.h.b16 %v137
  %v662 = vunpack.c.l.b16 %v138
  %v663 = vunpack.c.h.b16 %v138
  %v664 = vunpack.c.l.b16 %v139
  %v665 = vunpack.c.h.b16 %v139
  %v666 = vunpack.c.l.b16 %v140
  %v667 = vunpack.c.h.b16 %v140
  %v668 = vunpack.c.l.b16 %v141
  %v669 = vunpack.c.h.b16 %v141
  %v670 = vunpack.c.l.b16 %v142
  %v671 = vunpack.c.h.b16 %v142
  %v672 = vunpack.c.l.b16 %v143
  %v673 = vunpack.c.h.b16 %v143
  %v674 = vunpack.c.l.b16 %v144
  %v675 = vunpack.c.h.b16 %v144
  %v676 = vunpack.c.l.b16 %v145
  %v677 = vunpack.c.h.b16 %v145
  %v678 = vunpack.c.l.b16 %v146
  %v679 = vunpack.c.h.b16 %v146
  %v680 = vunpack.c.l.b16 %v147
  %v681 = vunpack.c.h.b16 %v147
  %v682 = vunpack.c.l.b16 %v148
  %v683 = vunpack.c.h.b16 %v148
  %v684 = vunpack.c.l.b16 %v149
  %v685 = vunpack.c.h.b16 %v149
  %v686 = vunpack.c.l.b16 %v150
  %v687 = vunpack.c.h.b16 %v150
  %v688 = vunpack.c.l.b16 %v151
  %v689 = vunpack.c.h.b16 %v151
  %v690 = vunpack.c.l.b16 %v152
  %v691 = vunpack.c.h.b16 %v152
  %v692 = vunpack.c.l.b16 %v153
  %v693 = vunpack.c.h.b16 %v153
  %v694 = vunpack.c.l.b16 %v154
  %v695 = vunpack.c.h.b16 %v154
  %v696 = vunpack.c.l.b16 %v155
  %v697 = vunpack.c.h.b16 %v155
  %v698 = vunpack.c.l.b16 %v156
  %v699 = vunpack.c.h.b16 %v156
  %v700 = vunpack.c.l.b16 %v157
  %v701 = vunpack.c.h.b16 %v157
  %v702 = vunpack.c.l.b16 %v158
  %v703 = vunpack.c.h.b16 %v158
  %v704 = vunpack.c.l.b16 %v159
  %v705 = vunpack.c.h.b16 %v159
  %v706 = vunpack.c.l.b16 %v160
  %v707 = vunpack.c.h.b16 %v160
  %v708 = vunpack.c.l.b16 %v161
  %v709 = vunpack.c.h.b16 %v161
  %v710 = vunpack.c.l.b16 %v162
  %v711 = vunpack.c.h.b16 %v162
  %v712 = vunpack.c.l.b16 %v163
  %v713 = vunpack.c.h.b16 %v163
  %v714 = vunpack.c.l.b16 %v164
  %v715 = vunpack.c.h.b16 %v164
  %v716 = vunpack.c.l.b16 %v165
  %v717 = vunpack.c.h.b16 %v165
  %v718 = vunpack.c.l.b16 %v166
  %v719 = vunpack.c.h.b16 %v166
  %v720 = vunpack.c.l.b16 %v167
  %v721 = vunpack.c.h.b16 %v167
  %v722 = vunpack.c.l.b16 %v168
  %v723 = vunpack.c.h.b16 %v168
  %v724 = vunpack.c.l.b16 %v169
  %v725 = vunpack.c.h.b16 %v169
  %v726 = vunpack.c.l.b16 %v170
  %v727 = vunpack.c.h.b16 %v170
  %v728 = vunpack.c.l.b16 %v171
  %v729 = vunpack.c.h.b16 %v171
  %v730 = vunpack.c.l.b16 %v172
  %v731 = vunpack.c.h.b16 %v172
  %v732 = vunpack.c.l.b16 %v173
  %v733 = vunpack.c.h.b16 %v173
  %v734 = vunpack.c.l.b16 %v174
  %v735 = vunpack.c.h.b16 %v174
  %v736 = vunpack.c.l.b16 %v175
  %v737 = vunpack.c.h.b16 %v175
  %v738 = vunpack.c.l.b16 %v176
  %v739 = vunpack.c.h.b16 %v176
  %v740 = vunpack.c.l.b16 %v177
  %v741 = vunpack.c.h.b16 %v177
  %v742 = vunpack.c.l.b16 %v178
  %v743 = vunpack.c.h.b16 %v178
  %v744 = vunpack.c.l.b16 %v179
  %v745 = vunpack.c.h.b16 %v179
  %v746 = vunpack.c.l.b16 %v180
  %v747 = vunpack.c.h.b16 %v180
  %v748 = vunpack.c.l.b16 %v181
  %v749 = vunpack.c.h.b16 %v181
  %v750 = vunpack.c.l.b16 %v182
  %v751 = vunpack.c.h.b16 %v182
  %v752 = vunpack.c.l.b16 %v183
  %v753 = vunpack.c.h.b16 %v183
  %v754 = vunpack.c.l.b16 %v184
  %v755 = vunpack.c.h.b16 %v184
  %v756 = vunpack.c.l.b16 %v185
  %v757 = vunpack.c.h.b16 %v185
  %v758 = vunpack.c.l.b16 %v186
  %v759 = vunpack.c.h.b16 %v186
  %v760 = vunpack.c.l.b16 %v187
  %v761 = vunpack.c.h.b16 %v187
  %v762 = vunpack.c.l.b16 %v188
  %v763 = vunpack.c.h.b16 %v188
  %v764 = vunpack.c.l.b16 %v189
  %v765 = vunpack.c.h.b16 %v189
  %v766 = vunpack.c.l.b16 %v190
  %v767 = vunpack.c.h.b16 %v190
  %v768 = vunpack.c.l.b16 %v191
  %v769 = vunpack.c.h.b16 %v191
  %v770 = vunpack.c.l.b16 %v192
  %v771 = vunpack.c.h.b16 %v192
  %v772 = vunpack.c.l.b16 %v193
  %v773 = vunpack.c.h.b16 %v193
  %v774 = vunpack.c.l.b16 %v194
  %v775 = vunpack.c.h.b16 %v194
  %v776 = vunpack.c.l.b16 %v195
  %v777 = vunpack.c.h.b16 %v195
  %v778 = vunpack.c.l.b16 %v196
  %v779 = vunpack.c.h.b16 %v196
  %v780 = vunpack.c.l.b16 %v197
  %v781 = vunpack.c.h.b16 %v197
  %v782 = vunpack.c.l.b16 %v198
  %v783 = vunpack.c.h.b16 %v198
  %v784 = vunpack.c.l.b16 %v199
  %v785 = vunpack.c.h.b16 %v199
  %v786 = vunpack.c.l.b16 %v200
  %v787 = vunpack.c.h.b16 %v200
  %v788 = vunpack.c.l.b16 %v201
  %v789 = vunpack.c.h.b16 %v201
  %v790 = vunpack.c.l.b16 %v202
  %v791 = vunpack.c.h.b16 %v202
  %v792 = vunpack.c.l.b16 %v203
  %v793 = vunpack.c.h.b16 %v203
  %v794 = vunpack.c.l.b16 %v204
  %v795 = vunpack.c.h.b16 %v204
  %v796 = vunpack.c.l.b16 %v205
  %v797 = vunpack.c.h.b16 %v205
  %v798 = vunpack.c.l.b16 %v206
  %v799 = vunpack.c.h.b16 %v206
  %v800 = vunpack.c.l.b16 %v207
  %v801 = vunpack.c.h.b16 %v207
  %v802 = vunpack.c.l.b16 %v208
  %v803 = vunpack.c.h.b16 %v208
  %v804 = vunpack.c.l.b16 %v209
  %v805 = vunpack.c.h.b16 %v209
  %v806 = vpack.c.b16 %v434, %v422
  %v807 = vpack.c.b16 %v435, %v423
  %v808 = vpack.c.b16 %v436, %v424
  %v809 = vpack.c.b16 %v437, %v425
  %v810 = vpack.c.b16 %v438, %v426
  %v811 = vpack.c.b16 %v439, %v427
  %v812 = vpack.c.b16 %v440, %v428
  %v813 = vpack.c.b16 %v441, %v429
  %v814 = vpack.c.b16 %v442, %v430
  %v815 = vpack.c.b16 %v443, %v431
  %v816 = vpack.c.b16 %v444, %v432
  %v817 = vpack.c.b16 %v445, %v433
  %v818 = vpack.c.b16 %v458, %v446
  %v819 = vpack.c.b16 %v459, %v447
  %v820 = vpack.c.b16 %v460, %v448
  %v821 = vpack.c.b16 %v461, %v449
  %v822 = vpack.c.b16 %v462, %v450
  %v823 = vpack.c.b16 %v463, %v451
  %v824 = vpack.c.b16 %v464, %v452
  %v825 = vpack.c.b16 %v465, %v453
  %v826 = vpack.c.b16 %v466, %v454
  %v827 = vpack.c.b16 %v467, %v455
  %v828 = vpack.c.b16 %v468, %v456
  %v829 = vpack.c.b16 %v469, %v457
  %v830 = vpack.c.b16 %v482, %v470
  %v831 = vpack.c.b16 %v483, %v471
  %v832 = vpack.c.b16 %v484, %v472
  %v833 = vpack.c.b16 %v485, %v473
  %v834 = vpack.c.b16 %v486, %v474
  %v835 = vpack.c.b16 %v487, %v475
  %v836 = vpack.c.b16 %v488, %v476
  %v837 = vpack.c.b16 %v489, %v477
  %v838 = vpack.c.b16 %v490, %v478
  %v839 = vpack.c.b16 %v491, %v479
  %v840 = vpack.c.b16 %v492, %v480
  %v841 = vpack.c.b16 %v493, %v481
  %v842 = vpack.c.b16 %v506, %v494
  %v843 = vpack.c.b16 %v507, %v495
  %v844 = vpack.c.b16 %v508, %v496
  %v845 = vpack.c.b16 %v509, %v497
  %v846 = vpack.c.b16 %v510, %v498
  %v847 = vpack.c.b16 %v511, %v499
  %v848 = vpack.c.b16 %v512, %v500
  %v849 = vpack.c.b16 %v513, %v501
  %v850 = vpack.c.b16 %v514, %v502
  %v851 = vpack.c.b16 %v515, %v503
  %v852 = vpack.c.b16 %v516, %v504
  %v853 = vpack.c.b16 %v517, %v505
  %v854 = vpack.c.b16 %v530, %v518
  %v855 = vpack.c.b16 %v531, %v519
  %v856 = vpack.c.b16 %v532, %v520
  %v857 = vpack.c.b16 %v533, %v521
  %v858 = vpack.c.b16 %v534, %v522
  %v859 = vpack.c.b16 %v535, %v523
  %v860 = vpack.c.b16 %v536, %v524
  %v861 = vpack.c.b16 %v537, %v525
  %v862 = vpack.c.b16 %v538, %v526
  %v863 = vpack.c.b16 %v539, %v527
  %v864 = vpack.c.b16 %v540, %v528
  %v865 = vpack.c.b16 %v541, %v529
  %v866 = vpack.c.b16 %v554, %v542
  %v867 = vpack.c.b16 %v555, %v543
  %v868 = vpack.c.b16 %v556, %v544
  %v869 = vpack.c.b16 %v557, %v545
  %v870 = vpack.c.b16 %v558, %v546
  %v871 = vpack.c.b16 %v559, %v547
  %v872 = vpack.c.b16 %v560, %v548
  %v873 = vpack.c.b16 %v561, %v549
  %v874 = vpack.c.b16 %v562, %v550
  %v875 = vpack.c.b16 %v563, %v551
  %v876 = vpack.c.b16 %v564, %v552
  %v877 = vpack.c.b16 %v565, %v553
  %v878 = vpack.c.b16 %v578, %v566
  %v879 = vpack.c.b16 %v579, %v567
  %v880 = vpack.c.b16 %v580, %v568
  %v881 = vpack.c.b16 %v581, %v569
  %v882 = vpack.c.b16 %v582, %v570
  %v883 = vpack.c.b16 %v583, %v571
  %v884 = vpack.c.b16 %v584, %v572
  %v885 = vpack.c.b16 %v585, %v573
  %v886 = vpack.c.b16 %v586, %v574
  %v887 = vpack.c.b16 %v587, %v575
  %v888 = vpack.c.b16 %v588, %v576
  %v889 = vpack.c.b16 %v589, %v577
  %v890 = vpack.c.b16 %v602, %v590
  %v891 = vpack.c.b16 %v603, %v591
  %v892 = vpack.c.b16 %v604, %v592
  %v893 = vpack.c.b16 %v605, %v593
  %v894 = vpack.c.b16 %v606, %v594
  %v895 = vpack.c.b16 %v607, %v595
  %v896 = vpack.c.b16 %v608, %v596
  %v897 = vpack.c.b16 %v609, %v597
  %v898 = vpack.c.b16 %v610, %v598
  %v899 = vpack.c.b16 %v611, %v599
  %v900 = vpack.c.b16 %v612, %v600
  %v901 = vpack.c.b16 %v613, %v601
  %v902 = vpack.c.b16 %v626, %v614
  %v903 = vpack.c.b16 %v627, %v615
  %v904 = vpack.c.b16 %v628, %v616
  %v905 = vpack.c.b16 %v629, %v617
  %v906 = vpack.c.b16 %v630, %v618
  %v907 = vpack.c.b16 %v631, %v619
  %v908 = vpack.c.b16 %v632, %v620
  %v909 = vpack.c.b16 %v633, %v621
  %v910 = vpack.c.b16 %v634, %v622
  %v911 = vpack.c.b16 %v635, %v623
  %v912 = vpack.c.b16 %v636, %v624
  %v913 = vpack.c.b16 %v637, %v625
  %v914 = vpack.c.b16 %v650, %v638
  %v915 = vpack.c.b16 %v651, %v639
  %v916 = vpack.c.b16 %v652, %v640
  %v917 = vpack.c.b16 %v653, %v641
  %v918 = vpack.c.b16 %v654, %v642
  %v919 = vpack.c.b16 %v655, %v643
  %v920 = vpack.c.b16 %v656, %v644
  %v921 = vpack.c.b16 %v657, %v645
  %v922 = vpack.c.b16 %v658, %v646
  %v923 = vpack.c.b16 %v659, %v647
  %v924 = vpack.c.b16 %v660, %v648
  %v925 = vpack.c.b16 %v661, %v649
  %v926 = vpack.c.b16 %v674, %v662
  %v927 = vpack.c.b16 %v675, %v663
  %v928 = vpack.c.b16 %v676, %v664
  %v929 = vpack.c.b16 %v677, %v665
  %v930 = vpack.c.b16 %v678, %v666
  %v931 = vpack.c.b16 %v679, %v667
  %v932 = vpack.c.b16 %v680, %v668
  %v933 = vpack.c.b16 %v681, %v669
  %v934 = vpack.c.b16 %v682, %v670
  %v935 = vpack.c.b16 %v683, %v671
  %v936 = vpack.c.b16 %v684, %v672
  %v937 = vpack.c.b16 %v685, %v673
  %v938 = vpack.c.b16 %v698, %v686
  %v939 = vpack.c.b16 %v699, %v687
  %v940 = vpack.c.b16 %v700, %v688
  %v941 = vpack.c.b16 %v701, %v689
  %v942 = vpack.c.b16 %v702, %v690
  %v943 = vpack.c.b16 %v703, %v691
  %v944 = vpack.c.b16 %v704, %v692
  %v945 = vpack.c.b16 %v705, %v693
  %v946 = vpack.c.b16 %v706, %v694
  %v947 = vpack.c.b16 %v707, %v695
  %v948 = vpack.c.b16 %v708, %v696
  %v949 = vpack.c.b16 %v709, %v697
  %v950 = vpack.c.b16 %v722, %v710
  %v951 = vpack.c.b16 %v723, %v711
  %v952 = vpack.c.b16 %v724, %v712
  %v953 = vpack.c.b16 %v725, %v713
  %v954 = vpack.c.b16 %v726, %v714
  %v955 = vpack.c.b16 %v727, %v715
  %v956 = vpack.c.b16 %v728, %v716
  %v957 = vpack.c.b16 %v729, %v717
  %v958 = vpack.c.b16 %v730, %v718
  %v959 = vpack.c.b16 %v731, %v719
  %v960 = vpack.c.b16 %v732, %v720
  %v961 = vpack.c.b16 %v733, %v721
  %v962 = vpack.c.b16 %v746, %v734
  %v963 = vpack.c.b16 %v747, %v735
  %v964 = vpack.c.b16 %v748, %v736
  %v965 = vpack.c.b16 %v749, %v737
  %v966 = vpack.c.b16 %v750, %v738
  %v967 = vpack.c.b16 %v751, %v739
  %v968 = vpack.c.b16 %v752, %v740
  %v969 = vpack.c.b16 %v753, %v741
  %v970 = vpack.c.b16 %v754, %v742
  %v971 = vpack.c.b16 %v755, %v743
  %v972 = vpack.c.b16 %v756, %v744
  %v973 = vpack.c.b16 %v757, %v745
  %v974 = vpack.c.b16 %v770, %v758
  %v975 = vpack.c.b16 %v771, %v759
  %v976 = vpack.c.b16 %v772, %v760
  %v977 = vpack.c.b16 %v773, %v761
  %v978 = vpack.c.b16 %v774, %v762
  %v979 = vpack.c.b16 %v775, %v763
  %v980 = vpack.c.b16 %v776, %v764
  %v981 = vpack.c.b16 %v777, %v765
  %v982 = vpack.c.b16 %v778, %v766
  %v983 = vpack.c.b16 %v779, %v767
  %v984 = vpack.c.b16 %v780, %v768
  %v985 = vpack.c.b16 %v781, %v769
  %v986 = vpack.c.b16 %v794, %v782
  %v987 = vpack.c.b16 %v795, %v783
  %v988 = vpack.c.b16 %v796, %v784
  %v989 = vpack.c.b16 %v797, %v785
  %v990 = vpack.c.b16 %v798, %v786
  %v991 = vpack.c.b16 %v799, %v787
  %v992 = vpack.c.b16 %v800, %v788
  %v993 = vpack.c.b16 %v801, %v789
  %v994 = vpack.c.b16 %v802, %v790
  %v995 = vpack.c.b16 %v803, %v791
  %v996 = vpack.c.b16 %v804, %v792
  %v997 = vpack.c.b16 %v805, %v793
  %1190 = vmatprep.subr.bf16.mxu0 %v891
  %1191 = vmatpush1.bf16.msra.mxu0 %v890
  %1192 = vmatprep.subr.bf16.mxu0 %v879
  %1193 = vmatpush1.bf16.msra.mxu0 %v878
  %1194 = vmatprep.subr.bf16.mxu0 %v867
  %1195 = vmatpush1.bf16.msra.mxu0 %v866
  %1196 = vmatprep.subr.bf16.mxu0 %v855
  %1197 = vmatpush1.bf16.msra.mxu0 %v854
  %1198 = vmatprep.subr.bf16.mxu0 %v843
  %1199 = vmatpush1.bf16.msra.mxu0 %v842
  %1200 = vmatprep.subr.bf16.mxu0 %v831
  %1201 = vmatpush1.bf16.msra.mxu0 %v830
  %1202 = vmatprep.subr.bf16.mxu0 %v819
  %1203 = vmatpush1.bf16.msra.mxu0 %v818
  %1204 = vmatprep.subr.bf16.mxu0 %v807
  %1205 = vmatpush1.bf16.msra.mxu0 %v806
  %1206 = vmatprep.subr.bf16.mxu0 %v987
  %1207 = vmatpush2.bf16.msra.mxu0 %v986
  %1208 = vmatprep.subr.bf16.mxu0 %v975
  %1209 = vmatpush2.bf16.msra.mxu0 %v974
  %1210 = vmatprep.subr.bf16.mxu0 %v963
  %1211 = vmatpush2.bf16.msra.mxu0 %v962
  %1212 = vmatprep.subr.bf16.mxu0 %v951
  %1213 = vmatpush2.bf16.msra.mxu0 %v950
  %1214 = vmatprep.subr.bf16.mxu0 %v939
  %1215 = vmatpush2.bf16.msra.mxu0 %v938
  %1216 = vmatprep.subr.bf16.mxu0 %v927
  %1217 = vmatpush2.bf16.msra.mxu0 %v926
  %1218 = vmatprep.subr.bf16.mxu0 %v915
  %1219 = vmatpush2.bf16.msra.mxu0 %v914
  %1220 = vmatprep.subr.bf16.mxu0 %v903
  %1221 = vmatpush2.bf16.msra.mxu0 %v902
  %1222 = vmatprep.mubr.bf16.mxu0 %v223
  %1223 = vmatmul.mubr.bf16.gmra.mxu0 %v222
  %v1224 = vpop.f32.mrf.mxu0
  %v1225 = vadd.f32 0.0, %v1224
  %v1226 = vpop.f32.mrf.mxu0
  %v1227 = vadd.f32 0.0, %v1226
  %v1228 = vpop.f32.mrf.mxu0
  %v1229 = vadd.f32 0.0, %v1228
  %v1230 = vpop.f32.mrf.mxu0
  %v1231 = vadd.f32 0.0, %v1230
  %1232 = vmatprep.mubr.bf16.mxu0 %v225
  %1233 = vmatmul.mubr.bf16.gmra.mxu0 %v224
  %v1234 = vpop.f32.mrf.mxu0
  %v1235 = vadd.f32 0.0, %v1234
  %v1236 = vpop.f32.mrf.mxu0
  %v1237 = vadd.f32 0.0, %v1236
  %v1238 = vpop.f32.mrf.mxu0
  %v1239 = vadd.f32 0.0, %v1238
  %v1240 = vpop.f32.mrf.mxu0
  %v1241 = vadd.f32 0.0, %v1240
  %1242 = vdwg.mxu0
  %1243 = vmatprep.subr.bf16.mxu0 %v893
  %1244 = vmatpush1.bf16.msra.mxu0 %v892
  %1245 = vmatprep.subr.bf16.mxu0 %v881
  %1246 = vmatpush1.bf16.msra.mxu0 %v880
  %1247 = vmatprep.subr.bf16.mxu0 %v869
  %1248 = vmatpush1.bf16.msra.mxu0 %v868
  %1249 = vmatprep.subr.bf16.mxu0 %v857
  %1250 = vmatpush1.bf16.msra.mxu0 %v856
  %1251 = vmatprep.subr.bf16.mxu0 %v845
  %1252 = vmatpush1.bf16.msra.mxu0 %v844
  %1253 = vmatprep.subr.bf16.mxu0 %v833
  %1254 = vmatpush1.bf16.msra.mxu0 %v832
  %1255 = vmatprep.subr.bf16.mxu0 %v821
  %1256 = vmatpush1.bf16.msra.mxu0 %v820
  %1257 = vmatprep.subr.bf16.mxu0 %v809
  %1258 = vmatpush1.bf16.msra.mxu0 %v808
  %1259 = vmatprep.subr.bf16.mxu0 %v989
  %1260 = vmatpush2.bf16.msra.mxu0 %v988
  %1261 = vmatprep.subr.bf16.mxu0 %v977
  %1262 = vmatpush2.bf16.msra.mxu0 %v976
  %1263 = vmatprep.subr.bf16.mxu0 %v965
  %1264 = vmatpush2.bf16.msra.mxu0 %v964
  %1265 = vmatprep.subr.bf16.mxu0 %v953
  %1266 = vmatpush2.bf16.msra.mxu0 %v952
  %1267 = vmatprep.subr.bf16.mxu0 %v941
  %1268 = vmatpush2.bf16.msra.mxu0 %v940
  %1269 = vmatprep.subr.bf16.mxu0 %v929
  %1270 = vmatpush2.bf16.msra.mxu0 %v928
  %1271 = vmatprep.subr.bf16.mxu0 %v917
  %1272 = vmatpush2.bf16.msra.mxu0 %v916
  %1273 = vmatprep.subr.bf16.mxu0 %v905
  %1274 = vmatpush2.bf16.msra.mxu0 %v904
  %1275 = vmatprep.mubr.bf16.mxu0 %v223
  %1276 = vmatmul.mubr.bf16.gmra.mxu0 %v222
  %v1277 = vpop.f32.mrf.mxu0
  %v1278 = vadd.f32 0.0, %v1277
  %v1279 = vpop.f32.mrf.mxu0
  %v1280 = vadd.f32 0.0, %v1279
  %v1281 = vpop.f32.mrf.mxu0
  %v1282 = vadd.f32 0.0, %v1281
  %v1283 = vpop.f32.mrf.mxu0
  %v1284 = vadd.f32 0.0, %v1283
  %1285 = vmatprep.mubr.bf16.mxu0 %v225
  %1286 = vmatmul.mubr.bf16.gmra.mxu0 %v224
  %v1287 = vpop.f32.mrf.mxu0
  %v1288 = vadd.f32 0.0, %v1287
  %v1289 = vpop.f32.mrf.mxu0
  %v1290 = vadd.f32 0.0, %v1289
  %v1291 = vpop.f32.mrf.mxu0
  %v1292 = vadd.f32 0.0, %v1291
  %v1293 = vpop.f32.mrf.mxu0
  %v1294 = vadd.f32 0.0, %v1293
  %1295 = vdwg.mxu0
  %1296 = vmatprep.subr.bf16.mxu0 %v895
  %1297 = vmatpush1.bf16.msra.mxu0 %v894
  %1298 = vmatprep.subr.bf16.mxu0 %v883
  %1299 = vmatpush1.bf16.msra.mxu0 %v882
  %1300 = vmatprep.subr.bf16.mxu0 %v871
  %1301 = vmatpush1.bf16.msra.mxu0 %v870
  %1302 = vmatprep.subr.bf16.mxu0 %v859
  %1303 = vmatpush1.bf16.msra.mxu0 %v858
  %1304 = vmatprep.subr.bf16.mxu0 %v847
  %1305 = vmatpush1.bf16.msra.mxu0 %v846
  %1306 = vmatprep.subr.bf16.mxu0 %v835
  %1307 = vmatpush1.bf16.msra.mxu0 %v834
  %1308 = vmatprep.subr.bf16.mxu0 %v823
  %1309 = vmatpush1.bf16.msra.mxu0 %v822
  %1310 = vmatprep.subr.bf16.mxu0 %v811
  %1311 = vmatpush1.bf16.msra.mxu0 %v810
  %1312 = vmatprep.subr.bf16.mxu0 %v991
  %1313 = vmatpush2.bf16.msra.mxu0 %v990
  %1314 = vmatprep.subr.bf16.mxu0 %v979
  %1315 = vmatpush2.bf16.msra.mxu0 %v978
  %1316 = vmatprep.subr.bf16.mxu0 %v967
  %1317 = vmatpush2.bf16.msra.mxu0 %v966
  %1318 = vmatprep.subr.bf16.mxu0 %v955
  %1319 = vmatpush2.bf16.msra.mxu0 %v954
  %1320 = vmatprep.subr.bf16.mxu0 %v943
  %1321 = vmatpush2.bf16.msra.mxu0 %v942
  %1322 = vmatprep.subr.bf16.mxu0 %v931
  %1323 = vmatpush2.bf16.msra.mxu0 %v930
  %1324 = vmatprep.subr.bf16.mxu0 %v919
  %1325 = vmatpush2.bf16.msra.mxu0 %v918
  %1326 = vmatprep.subr.bf16.mxu0 %v907
  %1327 = vmatpush2.bf16.msra.mxu0 %v906
  %1328 = vmatprep.mubr.bf16.mxu0 %v223
  %1329 = vmatmul.mubr.bf16.gmra.mxu0 %v222
  %v1330 = vpop.f32.mrf.mxu0
  %v1331 = vadd.f32 0.0, %v1330
  %v1332 = vpop.f32.mrf.mxu0
  %v1333 = vadd.f32 0.0, %v1332
  %v1334 = vpop.f32.mrf.mxu0
  %v1335 = vadd.f32 0.0, %v1334
  %v1336 = vpop.f32.mrf.mxu0
  %v1337 = vadd.f32 0.0, %v1336
  %1338 = vmatprep.mubr.bf16.mxu0 %v225
  %1339 = vmatmul.mubr.bf16.gmra.mxu0 %v224
  %v1340 = vpop.f32.mrf.mxu0
  %v1341 = vadd.f32 0.0, %v1340
  %v1342 = vpop.f32.mrf.mxu0
  %v1343 = vadd.f32 0.0, %v1342
  %v1344 = vpop.f32.mrf.mxu0
  %v1345 = vadd.f32 0.0, %v1344
  %v1346 = vpop.f32.mrf.mxu0
  %v1347 = vadd.f32 0.0, %v1346
  %1348 = vdwg.mxu0
  %1349 = vmatprep.subr.bf16.mxu0 %v897
  %1350 = vmatpush1.bf16.msra.mxu0 %v896
  %1351 = vmatprep.subr.bf16.mxu0 %v885
  %1352 = vmatpush1.bf16.msra.mxu0 %v884
  %1353 = vmatprep.subr.bf16.mxu0 %v873
  %1354 = vmatpush1.bf16.msra.mxu0 %v872
  %1355 = vmatprep.subr.bf16.mxu0 %v861
  %1356 = vmatpush1.bf16.msra.mxu0 %v860
  %1357 = vmatprep.subr.bf16.mxu0 %v849
  %1358 = vmatpush1.bf16.msra.mxu0 %v848
  %1359 = vmatprep.subr.bf16.mxu0 %v837
  %1360 = vmatpush1.bf16.msra.mxu0 %v836
  %1361 = vmatprep.subr.bf16.mxu0 %v825
  %1362 = vmatpush1.bf16.msra.mxu0 %v824
  %1363 = vmatprep.subr.bf16.mxu0 %v813
  %1364 = vmatpush1.bf16.msra.mxu0 %v812
  %1365 = vmatprep.subr.bf16.mxu0 %v993
  %1366 = vmatpush2.bf16.msra.mxu0 %v992
  %1367 = vmatprep.subr.bf16.mxu0 %v981
  %1368 = vmatpush2.bf16.msra.mxu0 %v980
  %1369 = vmatprep.subr.bf16.mxu0 %v969
  %1370 = vmatpush2.bf16.msra.mxu0 %v968
  %1371 = vmatprep.subr.bf16.mxu0 %v957
  %1372 = vmatpush2.bf16.msra.mxu0 %v956
  %1373 = vmatprep.subr.bf16.mxu0 %v945
  %1374 = vmatpush2.bf16.msra.mxu0 %v944
  %1375 = vmatprep.subr.bf16.mxu0 %v933
  %1376 = vmatpush2.bf16.msra.mxu0 %v932
  %1377 = vmatprep.subr.bf16.mxu0 %v921
  %1378 = vmatpush2.bf16.msra.mxu0 %v920
  %1379 = vmatprep.subr.bf16.mxu0 %v909
  %1380 = vmatpush2.bf16.msra.mxu0 %v908
  %1381 = vmatprep.mubr.bf16.mxu0 %v223
  %1382 = vmatmul.mubr.bf16.gmra.mxu0 %v222
  %v1383 = vpop.f32.mrf.mxu0
  %v1384 = vadd.f32 0.0, %v1383
  %v1385 = vpop.f32.mrf.mxu0
  %v1386 = vadd.f32 0.0, %v1385
  %v1387 = vpop.f32.mrf.mxu0
  %v1388 = vadd.f32 0.0, %v1387
  %v1389 = vpop.f32.mrf.mxu0
  %v1390 = vadd.f32 0.0, %v1389
  %1391 = vmatprep.mubr.bf16.mxu0 %v225
  %1392 = vmatmul.mubr.bf16.gmra.mxu0 %v224
  %v1393 = vpop.f32.mrf.mxu0
  %v1394 = vadd.f32 0.0, %v1393
  %v1395 = vpop.f32.mrf.mxu0
  %v1396 = vadd.f32 0.0, %v1395
  %v1397 = vpop.f32.mrf.mxu0
  %v1398 = vadd.f32 0.0, %v1397
  %v1399 = vpop.f32.mrf.mxu0
  %v1400 = vadd.f32 0.0, %v1399
  %1401 = vdwg.mxu0
  %1402 = vmatprep.subr.bf16.mxu0 %v899
  %1403 = vmatpush1.bf16.msra.mxu0 %v898
  %1404 = vmatprep.subr.bf16.mxu0 %v887
  %1405 = vmatpush1.bf16.msra.mxu0 %v886
  %1406 = vmatprep.subr.bf16.mxu0 %v875
  %1407 = vmatpush1.bf16.msra.mxu0 %v874
  %1408 = vmatprep.subr.bf16.mxu0 %v863
  %1409 = vmatpush1.bf16.msra.mxu0 %v862
  %1410 = vmatprep.subr.bf16.mxu0 %v851
  %1411 = vmatpush1.bf16.msra.mxu0 %v850
  %1412 = vmatprep.subr.bf16.mxu0 %v839
  %1413 = vmatpush1.bf16.msra.mxu0 %v838
  %1414 = vmatprep.subr.bf16.mxu0 %v827
  %1415 = vmatpush1.bf16.msra.mxu0 %v826
  %1416 = vmatprep.subr.bf16.mxu0 %v815
  %1417 = vmatpush1.bf16.msra.mxu0 %v814
  %1418 = vmatprep.subr.bf16.mxu0 %v995
  %1419 = vmatpush2.bf16.msra.mxu0 %v994
  %1420 = vmatprep.subr.bf16.mxu0 %v983
  %1421 = vmatpush2.bf16.msra.mxu0 %v982
  %1422 = vmatprep.subr.bf16.mxu0 %v971
  %1423 = vmatpush2.bf16.msra.mxu0 %v970
  %1424 = vmatprep.subr.bf16.mxu0 %v959
  %1425 = vmatpush2.bf16.msra.mxu0 %v958
  %1426 = vmatprep.subr.bf16.mxu0 %v947
  %1427 = vmatpush2.bf16.msra.mxu0 %v946
  %1428 = vmatprep.subr.bf16.mxu0 %v935
  %1429 = vmatpush2.bf16.msra.mxu0 %v934
  %1430 = vmatprep.subr.bf16.mxu0 %v923
  %1431 = vmatpush2.bf16.msra.mxu0 %v922
  %1432 = vmatprep.subr.bf16.mxu0 %v911
  %1433 = vmatpush2.bf16.msra.mxu0 %v910
  %1434 = vmatprep.mubr.bf16.mxu0 %v223
  %1435 = vmatmul.mubr.bf16.gmra.mxu0 %v222
  %v1436 = vpop.f32.mrf.mxu0
  %v1437 = vadd.f32 0.0, %v1436
  %v1438 = vpop.f32.mrf.mxu0
  %v1439 = vadd.f32 0.0, %v1438
  %v1440 = vpop.f32.mrf.mxu0
  %v1441 = vadd.f32 0.0, %v1440
  %v1442 = vpop.f32.mrf.mxu0
  %v1443 = vadd.f32 0.0, %v1442
  %1444 = vmatprep.mubr.bf16.mxu0 %v225
  %1445 = vmatmul.mubr.bf16.gmra.mxu0 %v224
  %v1446 = vpop.f32.mrf.mxu0
  %v1447 = vadd.f32 0.0, %v1446
  %v1448 = vpop.f32.mrf.mxu0
  %v1449 = vadd.f32 0.0, %v1448
  %v1450 = vpop.f32.mrf.mxu0
  %v1451 = vadd.f32 0.0, %v1450
  %v1452 = vpop.f32.mrf.mxu0
  %v1453 = vadd.f32 0.0, %v1452
  %1454 = vdwg.mxu0
  %1455 = vmatprep.subr.bf16.mxu0 %v901
  %1456 = vmatpush1.bf16.msra.mxu0 %v900
  %1457 = vmatprep.subr.bf16.mxu0 %v889
  %1458 = vmatpush1.bf16.msra.mxu0 %v888
  %1459 = vmatprep.subr.bf16.mxu0 %v877
  %1460 = vmatpush1.bf16.msra.mxu0 %v876
  %1461 = vmatprep.subr.bf16.mxu0 %v865
  %1462 = vmatpush1.bf16.msra.mxu0 %v864
  %1463 = vmatprep.subr.bf16.mxu0 %v853
  %1464 = vmatpush1.bf16.msra.mxu0 %v852
  %1465 = vmatprep.subr.bf16.mxu0 %v841
  %1466 = vmatpush1.bf16.msra.mxu0 %v840
  %1467 = vmatprep.subr.bf16.mxu0 %v829
  %1468 = vmatpush1.bf16.msra.mxu0 %v828
  %1469 = vmatprep.subr.bf16.mxu0 %v817
  %1470 = vmatpush1.bf16.msra.mxu0 %v816
  %1471 = vmatprep.subr.bf16.mxu0 %v997
  %1472 = vmatpush2.bf16.msra.mxu0 %v996
  %1473 = vmatprep.subr.bf16.mxu0 %v985
  %1474 = vmatpush2.bf16.msra.mxu0 %v984
  %1475 = vmatprep.subr.bf16.mxu0 %v973
  %1476 = vmatpush2.bf16.msra.mxu0 %v972
  %1477 = vmatprep.subr.bf16.mxu0 %v961
  %1478 = vmatpush2.bf16.msra.mxu0 %v960
  %1479 = vmatprep.subr.bf16.mxu0 %v949
  %1480 = vmatpush2.bf16.msra.mxu0 %v948
  %1481 = vmatprep.subr.bf16.mxu0 %v937
  %1482 = vmatpush2.bf16.msra.mxu0 %v936
  %1483 = vmatprep.subr.bf16.mxu0 %v925
  %1484 = vmatpush2.bf16.msra.mxu0 %v924
  %1485 = vmatprep.subr.bf16.mxu0 %v913
  %1486 = vmatpush2.bf16.msra.mxu0 %v912
  %1487 = vmatprep.mubr.bf16.mxu0 %v223
  %1488 = vmatmul.mubr.bf16.gmra.mxu0 %v222
  %v1489 = vpop.f32.mrf.mxu0
  %v1490 = vadd.f32 0.0, %v1489
  %v1491 = vpop.f32.mrf.mxu0
  %v1492 = vadd.f32 0.0, %v1491
  %v1493 = vpop.f32.mrf.mxu0
  %v1494 = vadd.f32 0.0, %v1493
  %v1495 = vpop.f32.mrf.mxu0
  %v1496 = vadd.f32 0.0, %v1495
  %1497 = vmatprep.mubr.bf16.mxu0 %v225
  %1498 = vmatmul.mubr.bf16.gmra.mxu0 %v224
  %v1499 = vpop.f32.mrf.mxu0
  %v1500 = vadd.f32 0.0, %v1499
  %v1501 = vpop.f32.mrf.mxu0
  %v1502 = vadd.f32 0.0, %v1501
  %v1503 = vpop.f32.mrf.mxu0
  %v1504 = vadd.f32 0.0, %v1503
  %v1505 = vpop.f32.mrf.mxu0
  %v1506 = vadd.f32 0.0, %v1505
  %1507 = vdwg.mxu0
  %v1508 = vmax.f32 %v1225, %v1280
  %v1509 = vmax.f32 %v1227, %v1331
  %v1510 = vmax.f32 %v1278, %v1333
  %v1511 = vmax.f32 %v1229, %v1284
  %v1512 = vmax.f32 %v1231, %v1335
  %v1513 = vmax.f32 %v1282, %v1337
  %v1514 = vmax.f32 %v1235, %v1290
  %v1515 = vmax.f32 %v1237, %v1341
  %v1516 = vmax.f32 %v1288, %v1343
  %v1517 = vmax.f32 %v1239, %v1294
  %v1518 = vmax.f32 %v1241, %v1345
  %v1519 = vmax.f32 %v1292, %v1347
  %v1520 = vmax.f32 %v1384, %v1439
  %v1521 = vmax.f32 %v1386, %v1490
  %v1522 = vmax.f32 %v1437, %v1492
  %v1523 = vmax.f32 %v1388, %v1443
  %v1524 = vmax.f32 %v1390, %v1494
  %v1525 = vmax.f32 %v1441, %v1496
  %v1526 = vmax.f32 %v1394, %v1449
  %v1527 = vmax.f32 %v1396, %v1500
  %v1528 = vmax.f32 %v1447, %v1502
  %v1529 = vmax.f32 %v1398, %v1453
  %v1530 = vmax.f32 %v1400, %v1504
  %v1531 = vmax.f32 %v1451, %v1506
  %v1532 = vmax.f32 %v1508, %v1520
  %v1533 = vmax.f32 %v1509, %v1521
  %v1534 = vmax.f32 %v1510, %v1522
  %v1535 = vmax.f32 %v1511, %v1523
  %v1536 = vmax.f32 %v1512, %v1524
  %v1537 = vmax.f32 %v1513, %v1525
  %v1538 = vmax.f32 %v1514, %v1526
  %v1539 = vmax.f32 %v1515, %v1527
  %v1540 = vmax.f32 %v1516, %v1528
  %v1541 = vmax.f32 %v1517, %v1529
  %v1542 = vmax.f32 %v1518, %v1530
  %v1543 = vmax.f32 %v1519, %v1531
  %v1544 = vld [vmem:[%s2] sm:$0xff]
  %v1545 = vld [vmem:[%s2 + $0x8] sm:$0xff]
  %v1546 = vld [vmem:[%s2 + $0x10] sm:$0xff]
  %v1547 = vld [vmem:[%s2 + $0x18] sm:$0xff]
  %1549 = vset.pattern.permute.xlu0 0
  %1550 = vperm.xlu0 %1549, %v1544
  %v1551 = vpop.permute.xlu0 %1550
  %1554 = vset.pattern.permute.xlu0 0
  %1555 = vperm.xlu0 %1554, %v1545
  %v1556 = vpop.permute.xlu0 %1555
  %1559 = vset.pattern.permute.xlu0 0
  %1560 = vperm.xlu0 %1559, %v1546
  %v1561 = vpop.permute.xlu0 %1560
  %1564 = vset.pattern.permute.xlu0 0
  %1565 = vperm.xlu0 %1564, %v1547
  %v1566 = vpop.permute.xlu0 %1565
  %v1568 = vadd.f32 %v1532, %v1551
  %v1569 = vadd.f32 %v1533, %v1551
  %v1570 = vadd.f32 %v1534, %v1551
  %v1571 = vadd.f32 %v1535, %v1556
  %v1572 = vadd.f32 %v1536, %v1556
  %v1573 = vadd.f32 %v1537, %v1556
  %v1574 = vadd.f32 %v1538, %v1561
  %v1575 = vadd.f32 %v1539, %v1561
  %v1576 = vadd.f32 %v1540, %v1561
  %v1577 = vadd.f32 %v1541, %v1566
  %v1578 = vadd.f32 %v1542, %v1566
  %v1579 = vadd.f32 %v1543, %v1566
  %vm1580 = vcmp.gt.f32.partialorder %v1568, 0.0
  %vm1581 = vcmp.gt.f32.partialorder %v1569, 0.0
  %vm1582 = vcmp.gt.f32.partialorder %v1570, 0.0
  %vm1583 = vcmp.gt.f32.partialorder %v1571, 0.0
  %vm1584 = vcmp.gt.f32.partialorder %v1572, 0.0
  %vm1585 = vcmp.gt.f32.partialorder %v1573, 0.0
  %vm1586 = vcmp.gt.f32.partialorder %v1574, 0.0
  %vm1587 = vcmp.gt.f32.partialorder %v1575, 0.0
  %vm1588 = vcmp.gt.f32.partialorder %v1576, 0.0
  %vm1589 = vcmp.gt.f32.partialorder %v1577, 0.0
  %vm1590 = vcmp.gt.f32.partialorder %v1578, 0.0
  %vm1591 = vcmp.gt.f32.partialorder %v1579, 0.0
  %v1592 = vmul.f32 %v1568, 0.01
  %v1593 = vmul.f32 %v1569, 0.01
  %v1594 = vmul.f32 %v1570, 0.01
  %v1595 = vmul.f32 %v1571, 0.01
  %v1596 = vmul.f32 %v1572, 0.01
  %v1597 = vmul.f32 %v1573, 0.01
  %v1598 = vmul.f32 %v1574, 0.01
  %v1599 = vmul.f32 %v1575, 0.01
  %v1600 = vmul.f32 %v1576, 0.01
  %v1601 = vmul.f32 %v1577, 0.01
  %v1602 = vmul.f32 %v1578, 0.01
  %v1603 = vmul.f32 %v1579, 0.01
  %v1604 = vsel %vm1580, %v1568, %v1592
  %v1605 = vsel %vm1581, %v1569, %v1593
  %v1606 = vsel %vm1582, %v1570, %v1594
  %v1607 = vsel %vm1583, %v1571, %v1595
  %v1608 = vsel %vm1584, %v1572, %v1596
  %v1609 = vsel %vm1585, %v1573, %v1597
  %v1610 = vsel %vm1586, %v1574, %v1598
  %v1611 = vsel %vm1587, %v1575, %v1599
  %v1612 = vsel %vm1588, %v1576, %v1600
  %v1613 = vsel %vm1589, %v1577, %v1601
  %v1614 = vsel %vm1590, %v1578, %v1602
  %v1615 = vsel %vm1591, %v1579, %v1603
  %v1616 = vpack.c.bf16 %v1607, %v1604
  %v1617 = vpack.c.bf16 %v1608, %v1605
  %v1618 = vpack.c.bf16 %v1609, %v1606
  %v1619 = vpack.c.bf16 %v1613, %v1610
  %v1620 = vpack.c.bf16 %v1614, %v1611
  %v1621 = vpack.c.bf16 %v1615, %v1612
  %v1628 = vunpack.c.l.b16 %v1616
  %v1629 = vunpack.c.l.b16 %v1617
  %v1630 = vunpack.c.l.b16 %v1618
  %v1631 = vunpack.c.h.b16 %v1616
  %v1632 = vunpack.c.h.b16 %v1617
  %v1633 = vunpack.c.h.b16 %v1618
  %v1634 = vunpack.c.l.b16 %v1619
  %v1635 = vunpack.c.l.b16 %v1620
  %v1636 = vunpack.c.l.b16 %v1621
  %v1637 = vunpack.c.h.b16 %v1619
  %v1638 = vunpack.c.h.b16 %v1620
  %v1639 = vunpack.c.h.b16 %v1621
  %v1640 = vpack.c.b16 %v1629, %v1628
  %v1641 = vpack.c.b16 %v1630, %v1630
  %v1642 = vpack.c.b16 %v1632, %v1631
  %v1643 = vpack.c.b16 %v1633, %v1633
  %v1644 = vpack.c.b16 %v1635, %v1634
  %v1645 = vpack.c.b16 %v1636, %v1636
  %v1646 = vpack.c.b16 %v1638, %v1637
  %v1647 = vpack.c.b16 %v1639, %v1639
  %1656 = vst [vmem:[%s3] sm:$0xff] %v1640
  %1657 = vst [vmem:[%s3 + $0x8] sm:$0xf] %v1641
  %1658 = vst [vmem:[%s3 + $0xc] sm:$0xff] %v1642
  %1659 = vst [vmem:[%s3 + $0x14] sm:$0xf] %v1643
  %1660 = vst [vmem:[%s3 + $0x18] sm:$0xff] %v1644
  %1661 = vst [vmem:[%s3 + $0x20] sm:$0xf] %v1645
  %1662 = vst [vmem:[%s3 + $0x24] sm:$0xff] %v1646
  %1663 = vst [vmem:[%s3 + $0x2c] sm:$0xf] %v1647
  // Predicated region
  $region14: #{extra_corpus_q_memory_forward.5} parent=0 // pred_check
    _
  $region15: #{extra_corpus_q_memory_forward.5} parent=0 // pred_check_branch
    %1665 = sbr.rel (0) target = $region17
  $region16: #{extra_corpus_q_memory_forward.5} parent=0 // pred_region
    _
  $region17: #{extra_corpus_q_memory_forward.5} parent=0 // pred_fallthru
    _
  // Predicated region
  $region18: #{extra_corpus_q_memory_forward.5} parent=0 // pred_check
    _
  $region19: #{extra_corpus_q_memory_forward.5} parent=0 // pred_check_branch
    %1667 = sbr.rel (0) target = $region21
  $region20: #{extra_corpus_q_memory_forward.5} parent=0 // pred_region
    _
  $region21: #{extra_corpus_q_memory_forward.5} parent=0 // pred_fallthru
    _

// kernel: extra_corpus_q_memory_forward.6
$region0: #{extra_corpus_q_memory_forward.6}
  #allocation0 [shape = 'u32[]', space=smem, size = 0x4, offset = 0x4, fixed_abs, tag = 'smem constant byte address 0x4 - core index']
  #allocation1 [shape = 'u32[144,128]{1,0:T(1,128)}', space=vmem, size = 0x12000, scoped, tag = 'internal scratch']
  %s0 = inlined_call_operand.vmem [shape: bf16[288,256], index: 0, kind: input, shape index: {}]
  %s1 = inlined_call_operand.vmem [shape: bf16[32,288], index: 1, kind: input, shape index: {}]
  %s2 = inlined_call_operand.vmem [shape: f32[32,1], index: 2, kind: input, shape index: {}]
  %s3 = inlined_call_operand.vmem [shape: bf16[32,256], index: 3, kind: output, shape index: {}]
  %s4 = sld [smem:[#allocation0]]
  $region22: #{extra_corpus_q_memory_forward.6} parent=0
    _
  %s6 = ssub.s32 1, %s4
  %s7 = scalar_select 0, %s6, %s4
  // Predicated region
  $region2: #{extra_corpus_q_memory_forward.6} parent=0 // pred_check
    _
  $region3: #{extra_corpus_q_memory_forward.6} parent=0 // pred_check_branch
    %9 = sbr.rel (0) target = $region5
  $region4: #{extra_corpus_q_memory_forward.6} parent=0 // pred_region
    _
  $region5: #{extra_corpus_q_memory_forward.6} parent=0 // pred_fallthru
    _
  // Predicated region
  $region6: #{extra_corpus_q_memory_forward.6} parent=0 // pred_check
    _
  $region7: #{extra_corpus_q_memory_forward.6} parent=0 // pred_check_branch
    %11 = sbr.rel (0) target = $region9
  $region8: #{extra_corpus_q_memory_forward.6} parent=0 // pred_region
    _
  $region9: #{extra_corpus_q_memory_forward.6} parent=0 // pred_fallthru
    _
  // Predicated region
  $region10: #{extra_corpus_q_memory_forward.6} parent=0 // pred_check
    _
  $region11: #{extra_corpus_q_memory_forward.6} parent=0 // pred_check_branch
    %13 = sbr.rel (0) target = $region13
  $region12: #{extra_corpus_q_memory_forward.6} parent=0 // pred_region
    _
  $region13: #{extra_corpus_q_memory_forward.6} parent=0 // pred_fallthru
    _
  %v15 = vld [vmem:[%s1] sm:$0xff]
  %v16 = vld [vmem:[%s1 + $0x8] sm:$0xf]
  %v17 = vld [vmem:[%s1 + $0xc] sm:$0xff]
  %v18 = vld [vmem:[%s1 + $0x14] sm:$0xf]
  %v19 = vld [vmem:[%s1 + $0x18] sm:$0xff]
  %v20 = vld [vmem:[%s1 + $0x20] sm:$0xf]
  %v21 = vld [vmem:[%s1 + $0x24] sm:$0xff]
  %v22 = vld [vmem:[%s1 + $0x2c] sm:$0xf]
  %v23 = vld [vmem:[%s0] sm:$0xff]
  %v24 = vld [vmem:[%s0 + $0x8] sm:$0xff]
  %v25 = vld [vmem:[%s0 + $0x10] sm:$0xff]
  %v26 = vld [vmem:[%s0 + $0x18] sm:$0xff]
  %v27 = vld [vmem:[%s0 + $0x20] sm:$0xff]
  %v28 = vld [vmem:[%s0 + $0x28] sm:$0xff]
  %v29 = vld [vmem:[%s0 + $0x30] sm:$0xff]
  %v30 = vld [vmem:[%s0 + $0x38] sm:$0xff]
  %v31 = vld [vmem:[%s0 + $0x40] sm:$0xff]
  %v32 = vld [vmem:[%s0 + $0x48] sm:$0xff]
  %v33 = vld [vmem:[%s0 + $0x50] sm:$0xff]
  %v34 = vld [vmem:[%s0 + $0x58] sm:$0xff]
  %v35 = vld [vmem:[%s0 + $0x60] sm:$0xff]
  %v36 = vld [vmem:[%s0 + $0x68] sm:$0xff]
  %v37 = vld [vmem:[%s0 + $0x70] sm:$0xff]
  %v38 = vld [vmem:[%s0 + $0x78] sm:$0xff]
  %v39 = vld [vmem:[%s0 + $0x80] sm:$0xff]
  %v40 = vld [vmem:[%s0 + $0x88] sm:$0xff]
  %v41 = vld [vmem:[%s0 + $0x90] sm:$0xff]
  %v42 = vld [vmem:[%s0 + $0x98] sm:$0xff]
  %v43 = vld [vmem:[%s0 + $0xa0] sm:$0xff]
  %v44 = vld [vmem:[%s0 + $0xa8] sm:$0xff]
  %v45 = vld [vmem:[%s0 + $0xb0] sm:$0xff]
  %v46 = vld [vmem:[%s0 + $0xb8] sm:$0xff]
  %v47 = vld [vmem:[%s0 + $0xc0] sm:$0xff]
  %v48 = vld [vmem:[%s0 + $0xc8] sm:$0xff]
  %v49 = vld [vmem:[%s0 + $0xd0] sm:$0xff]
  %v50 = vld [vmem:[%s0 + $0xd8] sm:$0xff]
  %v51 = vld [vmem:[%s0 + $0xe0] sm:$0xff]
  %v52 = vld [vmem:[%s0 + $0xe8] sm:$0xff]
  %v53 = vld [vmem:[%s0 + $0xf0] sm:$0xff]
  %v54 = vld [vmem:[%s0 + $0xf8] sm:$0xff]
  %v55 = vld [vmem:[%s0 + $0x100] sm:$0xff]
  %v56 = vld [vmem:[%s0 + $0x108] sm:$0xff]
  %v57 = vld [vmem:[%s0 + $0x110] sm:$0xff]
  %v58 = vld [vmem:[%s0 + $0x118] sm:$0xff]
  %v59 = vld [vmem:[%s2] sm:$0xff]
  %v60 = vld [vmem:[%s2 + $0x8] sm:$0xff]
  %v61 = vld [vmem:[%s2 + $0x10] sm:$0xff]
  %v62 = vld [vmem:[%s2 + $0x18] sm:$0xff]
  %64 = vset.pattern.permute.xlu0 0
  %65 = vperm.xlu0 %64, %v59
  %v66 = vpop.permute.xlu0 %65
  %69 = vset.pattern.permute.xlu0 0
  %70 = vperm.xlu0 %69, %v60
  %v71 = vpop.permute.xlu0 %70
  %74 = vset.pattern.permute.xlu0 0
  %75 = vperm.xlu0 %74, %v61
  %v76 = vpop.permute.xlu0 %75
  %79 = vset.pattern.permute.xlu0 0
  %80 = vperm.xlu0 %79, %v62
  %v81 = vpop.permute.xlu0 %80
  %v91 = vunpack.c.l.b16 %v15
  %v92 = vunpack.c.h.b16 %v15
  %v93 = vunpack.c.l.b16 %v16
  %v94 = vunpack.c.l.b16 %v17
  %v95 = vunpack.c.h.b16 %v17
  %v96 = vunpack.c.l.b16 %v18
  %v97 = vunpack.c.l.b16 %v19
  %v98 = vunpack.c.h.b16 %v19
  %v99 = vunpack.c.l.b16 %v20
  %v100 = vunpack.c.l.b16 %v21
  %v101 = vunpack.c.h.b16 %v21
  %v102 = vunpack.c.l.b16 %v22
  %v103 = vpack.c.b16 %v94, %v91
  %v104 = vpack.c.b16 %v95, %v92
  %v105 = vpack.c.b16 %v96, %v93
  %v106 = vpack.c.b16 %v100, %v97
  %v107 = vpack.c.b16 %v101, %v98
  %v108 = vpack.c.b16 %v102, %v99
  %v149 = vunpack.c.l.b16 %v23
  %v150 = vunpack.c.h.b16 %v23
  %v151 = vunpack.c.l.b16 %v24
  %v152 = vunpack.c.h.b16 %v24
  %v153 = vunpack.c.l.b16 %v25
  %v154 = vunpack.c.h.b16 %v25
  %v155 = vunpack.c.l.b16 %v26
  %v156 = vunpack.c.h.b16 %v26
  %v157 = vunpack.c.l.b16 %v27
  %v158 = vunpack.c.h.b16 %v27
  %v159 = vunpack.c.l.b16 %v28
  %v160 = vunpack.c.h.b16 %v28
  %v161 = vunpack.c.l.b16 %v29
  %v162 = vunpack.c.h.b16 %v29
  %v163 = vunpack.c.l.b16 %v30
  %v164 = vunpack.c.h.b16 %v30
  %v165 = vunpack.c.l.b16 %v31
  %v166 = vunpack.c.h.b16 %v31
  %v167 = vunpack.c.l.b16 %v32
  %v168 = vunpack.c.h.b16 %v32
  %v169 = vunpack.c.l.b16 %v33
  %v170 = vunpack.c.h.b16 %v33
  %v171 = vunpack.c.l.b16 %v34
  %v172 = vunpack.c.h.b16 %v34
  %v173 = vunpack.c.l.b16 %v35
  %v174 = vunpack.c.h.b16 %v35
  %v175 = vunpack.c.l.b16 %v36
  %v176 = vunpack.c.h.b16 %v36
  %v177 = vunpack.c.l.b16 %v37
  %v178 = vunpack.c.h.b16 %v37
  %v179 = vunpack.c.l.b16 %v38
  %v180 = vunpack.c.h.b16 %v38
  %v181 = vunpack.c.l.b16 %v39
  %v182 = vunpack.c.h.b16 %v39
  %v183 = vunpack.c.l.b16 %v40
  %v184 = vunpack.c.h.b16 %v40
  %v185 = vunpack.c.l.b16 %v41
  %v186 = vunpack.c.h.b16 %v41
  %v187 = vunpack.c.l.b16 %v42
  %v188 = vunpack.c.h.b16 %v42
  %v189 = vunpack.c.l.b16 %v43
  %v190 = vunpack.c.h.b16 %v43
  %v191 = vunpack.c.l.b16 %v44
  %v192 = vunpack.c.h.b16 %v44
  %v193 = vunpack.c.l.b16 %v45
  %v194 = vunpack.c.h.b16 %v45
  %v195 = vunpack.c.l.b16 %v46
  %v196 = vunpack.c.h.b16 %v46
  %v197 = vunpack.c.l.b16 %v47
  %v198 = vunpack.c.h.b16 %v47
  %v199 = vunpack.c.l.b16 %v48
  %v200 = vunpack.c.h.b16 %v48
  %v201 = vunpack.c.l.b16 %v49
  %v202 = vunpack.c.h.b16 %v49
  %v203 = vunpack.c.l.b16 %v50
  %v204 = vunpack.c.h.b16 %v50
  %v205 = vunpack.c.l.b16 %v51
  %v206 = vunpack.c.h.b16 %v51
  %v207 = vunpack.c.l.b16 %v52
  %v208 = vunpack.c.h.b16 %v52
  %v209 = vunpack.c.l.b16 %v53
  %v210 = vunpack.c.h.b16 %v53
  %v211 = vunpack.c.l.b16 %v54
  %v212 = vunpack.c.h.b16 %v54
  %v213 = vunpack.c.l.b16 %v55
  %v214 = vunpack.c.h.b16 %v55
  %v215 = vunpack.c.l.b16 %v56
  %v216 = vunpack.c.h.b16 %v56
  %v217 = vunpack.c.l.b16 %v57
  %v218 = vunpack.c.h.b16 %v57
  %v219 = vunpack.c.l.b16 %v58
  %v220 = vunpack.c.h.b16 %v58
  %v221 = vpack.c.b16 %v151, %v149
  %v222 = vpack.c.b16 %v152, %v150
  %v223 = vpack.c.b16 %v155, %v153
  %v224 = vpack.c.b16 %v156, %v154
  %v225 = vpack.c.b16 %v159, %v157
  %v226 = vpack.c.b16 %v160, %v158
  %v227 = vpack.c.b16 %v163, %v161
  %v228 = vpack.c.b16 %v164, %v162
  %v229 = vpack.c.b16 %v167, %v165
  %v230 = vpack.c.b16 %v168, %v166
  %v231 = vpack.c.b16 %v171, %v169
  %v232 = vpack.c.b16 %v172, %v170
  %v233 = vpack.c.b16 %v175, %v173
  %v234 = vpack.c.b16 %v176, %v174
  %v235 = vpack.c.b16 %v179, %v177
  %v236 = vpack.c.b16 %v180, %v178
  %v237 = vpack.c.b16 %v183, %v181
  %v238 = vpack.c.b16 %v184, %v182
  %v239 = vpack.c.b16 %v187, %v185
  %v240 = vpack.c.b16 %v188, %v186
  %v241 = vpack.c.b16 %v191, %v189
  %v242 = vpack.c.b16 %v192, %v190
  %v243 = vpack.c.b16 %v195, %v193
  %v244 = vpack.c.b16 %v196, %v194
  %v245 = vpack.c.b16 %v199, %v197
  %v246 = vpack.c.b16 %v200, %v198
  %v247 = vpack.c.b16 %v203, %v201
  %v248 = vpack.c.b16 %v204, %v202
  %v249 = vpack.c.b16 %v207, %v205
  %v250 = vpack.c.b16 %v208, %v206
  %v251 = vpack.c.b16 %v211, %v209
  %v252 = vpack.c.b16 %v212, %v210
  %v253 = vpack.c.b16 %v215, %v213
  %v254 = vpack.c.b16 %v216, %v214
  %v255 = vpack.c.b16 %v219, %v217
  %v256 = vpack.c.b16 %v220, %v218
  %vm293 = vcmask 261120
  %v295 = vsel %vm293, %v105, 0
  %v298 = vsel %vm293, %v108, 0
  %300 = vmatprep.subr.bf16.mxu0 %v236
  %301 = vmatpush1.bf16.msra.mxu0 %v235
  %302 = vmatprep.subr.bf16.mxu0 %v234
  %303 = vmatpush1.bf16.msra.mxu0 %v233
  %304 = vmatprep.subr.bf16.mxu0 %v232
  %305 = vmatpush1.bf16.msra.mxu0 %v231
  %306 = vmatprep.subr.bf16.mxu0 %v230
  %307 = vmatpush1.bf16.msra.mxu0 %v229
  %308 = vmatprep.subr.bf16.mxu0 %v228
  %309 = vmatpush1.bf16.msra.mxu0 %v227
  %310 = vmatprep.subr.bf16.mxu0 %v226
  %311 = vmatpush1.bf16.msra.mxu0 %v225
  %312 = vmatprep.subr.bf16.mxu0 %v224
  %313 = vmatpush1.bf16.msra.mxu0 %v223
  %314 = vmatprep.subr.bf16.mxu0 %v222
  %315 = vmatpush1.bf16.msra.mxu0 %v221
  %316 = vmatprep.subr.bf16.mxu0 %v252
  %317 = vmatpush2.bf16.msra.mxu0 %v251
  %318 = vmatprep.subr.bf16.mxu0 %v250
  %319 = vmatpush2.bf16.msra.mxu0 %v249
  %320 = vmatprep.subr.bf16.mxu0 %v248
  %321 = vmatpush2.bf16.msra.mxu0 %v247
  %322 = vmatprep.subr.bf16.mxu0 %v246
  %323 = vmatpush2.bf16.msra.mxu0 %v245
  %324 = vmatprep.subr.bf16.mxu0 %v244
  %325 = vmatpush2.bf16.msra.mxu0 %v243
  %326 = vmatprep.subr.bf16.mxu0 %v242
  %327 = vmatpush2.bf16.msra.mxu0 %v241
  %328 = vmatprep.subr.bf16.mxu0 %v240
  %329 = vmatpush2.bf16.msra.mxu0 %v239
  %330 = vmatprep.subr.bf16.mxu0 %v238
  %331 = vmatpush2.bf16.msra.mxu0 %v237
  %332 = vmatprep.mubr.bf16.mxu0 %v104
  %333 = vmatmul.mubr.bf16.gmra.mxu0 %v103
  %v334 = vpop.f32.mrf.mxu0
  %v335 = vadd.f32 %v66, %v334
  %v336 = vpop.f32.mrf.mxu0
  %v337 = vadd.f32 %v66, %v336
  %v338 = vpop.f32.mrf.mxu0
  %v339 = vadd.f32 %v71, %v338
  %v340 = vpop.f32.mrf.mxu0
  %v341 = vadd.f32 %v71, %v340
  %342 = vmatprep.mubr.bf16.mxu0 %v107
  %343 = vmatmul.mubr.bf16.gmra.mxu0 %v106
  %v344 = vpop.f32.mrf.mxu0
  %v345 = vadd.f32 %v76, %v344
  %v346 = vpop.f32.mrf.mxu0
  %v347 = vadd.f32 %v76, %v346
  %v348 = vpop.f32.mrf.mxu0
  %v349 = vadd.f32 %v81, %v348
  %v350 = vpop.f32.mrf.mxu0
  %v351 = vadd.f32 %v81, %v350
  %352 = vdwg.mxu0
  %353 = vmatprep.subr.bf16.mxu0 0
  %354 = vmatpush1.bf16.msra.mxu0 0
  %355 = vmatprep.subr.bf16.mxu0 0
  %356 = vmatpush1.bf16.msra.mxu0 0
  %357 = vmatprep.subr.bf16.mxu0 0
  %358 = vmatpush1.bf16.msra.mxu0 0
  %359 = vmatprep.subr.bf16.mxu0 0
  %360 = vmatpush1.bf16.msra.mxu0 0
  %361 = vmatprep.subr.bf16.mxu0 0
  %362 = vmatpush1.bf16.msra.mxu0 0
  %363 = vmatprep.subr.bf16.mxu0 0
  %364 = vmatpush1.bf16.msra.mxu0 0
  %365 = vmatprep.subr.bf16.mxu0 %v256
  %366 = vmatpush1.bf16.msra.mxu0 %v255
  %367 = vmatprep.subr.bf16.mxu0 %v254
  %368 = vmatpush1.bf16.msra.mxu0 %v253
  %369 = vmatprep.subr.bf16.mxu0 0
  %370 = vmatpush2.bf16.msra.mxu0 0
  %371 = vmatprep.subr.bf16.mxu0 0
  %372 = vmatpush2.bf16.msra.mxu0 0
  %373 = vmatprep.subr.bf16.mxu0 0
  %374 = vmatpush2.bf16.msra.mxu0 0
  %375 = vmatprep.subr.bf16.mxu0 0
  %376 = vmatpush2.bf16.msra.mxu0 0
  %377 = vmatprep.subr.bf16.mxu0 0
  %378 = vmatpush2.bf16.msra.mxu0 0
  %379 = vmatprep.subr.bf16.mxu0 0
  %380 = vmatpush2.bf16.msra.mxu0 0
  %381 = vmatprep.subr.bf16.mxu0 0
  %382 = vmatpush2.bf16.msra.mxu0 0
  %383 = vmatprep.subr.bf16.mxu0 0
  %384 = vmatpush2.bf16.msra.mxu0 0
  %385 = vmatprep.mubr.bf16.mxu0 0
  %386 = vmatmul.mubr.bf16.gmra.mxu0 %v295
  %v387 = vpop.f32.mrf.mxu0
  %v388 = vadd.f32 %v335, %v387
  %v389 = vpop.f32.mrf.mxu0
  %v390 = vadd.f32 %v337, %v389
  %v391 = vpop.f32.mrf.mxu0
  %v392 = vadd.f32 %v339, %v391
  %v393 = vpop.f32.mrf.mxu0
  %v394 = vadd.f32 %v341, %v393
  %395 = vmatprep.mubr.bf16.mxu0 0
  %396 = vmatmul.mubr.bf16.gmra.mxu0 %v298
  %v397 = vpop.f32.mrf.mxu0
  %v398 = vadd.f32 %v345, %v397
  %v399 = vpop.f32.mrf.mxu0
  %v400 = vadd.f32 %v347, %v399
  %v401 = vpop.f32.mrf.mxu0
  %v402 = vadd.f32 %v349, %v401
  %v403 = vpop.f32.mrf.mxu0
  %v404 = vadd.f32 %v351, %v403
  %405 = vdwg.mxu0
  %vm406 = vcmp.gt.f32.partialorder %v388, 0.0
  %vm407 = vcmp.gt.f32.partialorder %v390, 0.0
  %vm408 = vcmp.gt.f32.partialorder %v392, 0.0
  %vm409 = vcmp.gt.f32.partialorder %v394, 0.0
  %vm410 = vcmp.gt.f32.partialorder %v398, 0.0
  %vm411 = vcmp.gt.f32.partialorder %v400, 0.0
  %vm412 = vcmp.gt.f32.partialorder %v402, 0.0
  %vm413 = vcmp.gt.f32.partialorder %v404, 0.0
  %v414 = vmul.f32 %v388, 0.01
  %v415 = vmul.f32 %v390, 0.01
  %v416 = vmul.f32 %v392, 0.01
  %v417 = vmul.f32 %v394, 0.01
  %v418 = vmul.f32 %v398, 0.01
  %v419 = vmul.f32 %v400, 0.01
  %v420 = vmul.f32 %v402, 0.01
  %v421 = vmul.f32 %v404, 0.01
  %v422 = vsel %vm406, %v388, %v414
  %v423 = vsel %vm407, %v390, %v415
  %v424 = vsel %vm408, %v392, %v416
  %v425 = vsel %vm409, %v394, %v417
  %v426 = vsel %vm410, %v398, %v418
  %v427 = vsel %vm411, %v400, %v419
  %v428 = vsel %vm412, %v402, %v420
  %v429 = vsel %vm413, %v404, %v421
  %v430 = vpack.c.bf16 %v424, %v422
  %v431 = vpack.c.bf16 %v425, %v423
  %v432 = vpack.c.bf16 %v428, %v426
  %v433 = vpack.c.bf16 %v429, %v427
  %v438 = vunpack.c.l.b16 %v430
  %v439 = vunpack.c.l.b16 %v431
  %v440 = vunpack.c.h.b16 %v430
  %v441 = vunpack.c.h.b16 %v431
  %v442 = vunpack.c.l.b16 %v432
  %v443 = vunpack.c.l.b16 %v433
  %v444 = vunpack.c.h.b16 %v432
  %v445 = vunpack.c.h.b16 %v433
  %v446 = vpack.c.b16 %v439, %v438
  %v447 = vpack.c.b16 %v441, %v440
  %v448 = vpack.c.b16 %v443, %v442
  %v449 = vpack.c.b16 %v445, %v444
  %454 = vst [vmem:[%s3] sm:$0xff] %v446
  %455 = vst [vmem:[%s3 + $0x8] sm:$0xff] %v447
  %456 = vst [vmem:[%s3 + $0x10] sm:$0xff] %v448
  %457 = vst [vmem:[%s3 + $0x18] sm:$0xff] %v449
  // Predicated region
  $region14: #{extra_corpus_q_memory_forward.6} parent=0 // pred_check
    _
  $region15: #{extra_corpus_q_memory_forward.6} parent=0 // pred_check_branch
    %459 = sbr.rel (0) target = $region17
  $region16: #{extra_corpus_q_memory_forward.6} parent=0 // pred_region
    _
  $region17: #{extra_corpus_q_memory_forward.6} parent=0 // pred_fallthru
    _
  // Predicated region
  $region18: #{extra_corpus_q_memory_forward.6} parent=0 // pred_check
    _
  $region19: #{extra_corpus_q_memory_forward.6} parent=0 // pred_check_branch
    %461 = sbr.rel (0) target = $region21
  $region20: #{extra_corpus_q_memory_forward.6} parent=0 // pred_region
    _
  $region21: #{extra_corpus_q_memory_forward.6} parent=0 // pred_fallthru
    _

// kernel: extra_corpus_q_memory_forward.7
$region0: #{extra_corpus_q_memory_forward.7}
  #allocation0 [shape = 'u32[]', space=smem, size = 0x4, offset = 0x4, fixed_abs, tag = 'smem constant byte address 0x4 - core index']
  #allocation1 [shape = 'u32[144,128]{1,0:T(1,128)}', space=vmem, size = 0x12000, scoped, tag = 'internal scratch']
  %s0 = inlined_call_operand.vmem [shape: bf16[4,1568], index: 0, kind: input, shape index: {}]
  %s1 = inlined_call_operand.vmem [shape: bf16[1568,128], index: 1, kind: input, shape index: {}]
  %s2 = inlined_call_operand.vmem [shape: f32[1,128], index: 2, kind: input, shape index: {}]
  %s3 = inlined_call_operand.vmem [shape: bf16[128,128], index: 3, kind: input, shape index: {}]
  %s4 = inlined_call_operand.vmem [shape: f32[1,128], index: 4, kind: input, shape index: {}]
  %s5 = inlined_call_operand.vmem [shape: bf16[128,768], index: 5, kind: input, shape index: {}]
  %s6 = inlined_call_operand.vmem [shape: f32[1,768], index: 6, kind: input, shape index: {}]
  %s7 = inlined_call_operand.vmem [shape: bf16[256,768], index: 7, kind: input, shape index: {}]
  %s8 = inlined_call_operand.vmem [shape: f32[1,256], index: 8, kind: input, shape index: {}]
  %s9 = inlined_call_operand.vmem [shape: f32[2,256], index: 9, kind: input, shape index: {}]
  %s10 = inlined_call_operand.hbm [shape: f32[10,2,256], index: 10, kind: output, shape index: {0}]
  %s11 = inlined_call_operand.hbm [shape: f32[2,256], index: 11, kind: output, shape index: {1}]
  %12 = xla_tuple %s10, %s11
  %s13 = sld [smem:[#allocation0]]
  $region58: #{extra_corpus_q_memory_forward.7} parent=0
    _
  %s15 = ssub.s32 1, %s13
  %s16 = scalar_select 0, %s15, %s13
  $region1: #{extra_corpus_q_memory_forward.7} parent=0
    #allocation2 [shape = 'u8[20480]{0}', space=vmem, size = 0x5000, scoped, tag = 'output window, operand 0, single buffered']
    #allocation3 [shape = 's32[1]{0}', space=sflag, size = 0x4, scoped, tag = 'scoped memory for extra_corpus_q_memory_forward.7']
    #allocation4 [shape = 'u8[2048]{0}', space=vmem, size = 0x800, scoped, tag = 'output window, operand 1, single buffered']
    #allocation5 [shape = 's32[1]{0}', space=sflag, size = 0x4, scoped, tag = 'scoped memory for extra_corpus_q_memory_forward.7']
    %17 = vsyncpa [#allocation3], 0
    %18 = vsyncpa [#allocation5], 0
    // Predicated region
    $region2: #{extra_corpus_q_memory_forward.7} parent=1 // pred_check
      _
    $region3: #{extra_corpus_q_memory_forward.7} parent=1 // pred_check_branch
      %20 = sbr.rel (0) target = $region5
    $region4: #{extra_corpus_q_memory_forward.7} parent=1 // pred_region
      _
    $region5: #{extra_corpus_q_memory_forward.7} parent=1 // pred_fallthru
      _
    // Predicated region
    $region6: #{extra_corpus_q_memory_forward.7} parent=1 // pred_check
      _
    $region7: #{extra_corpus_q_memory_forward.7} parent=1 // pred_check_branch
      %22 = sbr.rel (0) target = $region9
    $region8: #{extra_corpus_q_memory_forward.7} parent=1 // pred_region
      _
    $region9: #{extra_corpus_q_memory_forward.7} parent=1 // pred_fallthru
      _
    // Predicated region
    $region10: #{extra_corpus_q_memory_forward.7} parent=1 // pred_check
      _
    $region11: #{extra_corpus_q_memory_forward.7} parent=1 // pred_check_branch
      %24 = sbr.rel (0) target = $region13
    $region12: #{extra_corpus_q_memory_forward.7} parent=1 // pred_region
      _
    $region13: #{extra_corpus_q_memory_forward.7} parent=1 // pred_fallthru
      _
    // Predicated region
    $region14: #{extra_corpus_q_memory_forward.7} parent=1 // pred_check
      _
    $region15: #{extra_corpus_q_memory_forward.7} parent=1 // pred_check_branch
      %26 = sbr.rel (0) target = $region17
    $region16: #{extra_corpus_q_memory_forward.7} parent=1 // pred_region
      _
    $region17: #{extra_corpus_q_memory_forward.7} parent=1 // pred_fallthru
      _
    // Predicated region
    $region18: #{extra_corpus_q_memory_forward.7} parent=1 // pred_check
      _
    $region19: #{extra_corpus_q_memory_forward.7} parent=1 // pred_check_branch
      %28 = sbr.rel (0) target = $region21
    $region20: #{extra_corpus_q_memory_forward.7} parent=1 // pred_region
      _
    $region21: #{extra_corpus_q_memory_forward.7} parent=1 // pred_fallthru
      _
    // Predicated region
    $region22: #{extra_corpus_q_memory_forward.7} parent=1 // pred_check
      _
    $region23: #{extra_corpus_q_memory_forward.7} parent=1 // pred_check_branch
      %30 = sbr.rel (0) target = $region25
    $region24: #{extra_corpus_q_memory_forward.7} parent=1 // pred_region
      _
    $region25: #{extra_corpus_q_memory_forward.7} parent=1 // pred_fallthru
      _
    // Predicated region
    $region26: #{extra_corpus_q_memory_forward.7} parent=1 // pred_check
      _
    $region27: #{extra_corpus_q_memory_forward.7} parent=1 // pred_check_branch
      %32 = sbr.rel (0) target = $region29
    $region28: #{extra_corpus_q_memory_forward.7} parent=1 // pred_region
      _
    $region29: #{extra_corpus_q_memory_forward.7} parent=1 // pred_fallthru
      _
    // Predicated region
    $region30: #{extra_corpus_q_memory_forward.7} parent=1 // pred_check
      _
    $region31: #{extra_corpus_q_memory_forward.7} parent=1 // pred_check_branch
      %34 = sbr.rel (0) target = $region33
    $region32: #{extra_corpus_q_memory_forward.7} parent=1 // pred_region
      _
    $region33: #{extra_corpus_q_memory_forward.7} parent=1 // pred_fallthru
      _
    // Predicated region
    $region34: #{extra_corpus_q_memory_forward.7} parent=1 // pred_check
      _
    $region35: #{extra_corpus_q_memory_forward.7} parent=1 // pred_check_branch
      %36 = sbr.rel (0) target = $region37
    $region36: #{extra_corpus_q_memory_forward.7} parent=1 // pred_region
      _
    $region37: #{extra_corpus_q_memory_forward.7} parent=1 // pred_fallthru
      _
    // Predicated region
    $region38: #{extra_corpus_q_memory_forward.7} parent=1 // pred_check
      _
    $region39: #{extra_corpus_q_memory_forward.7} parent=1 // pred_check_branch
      %38 = sbr.rel (0) target = $region41
    $region40: #{extra_corpus_q_memory_forward.7} parent=1 // pred_region
      _
    $region41: #{extra_corpus_q_memory_forward.7} parent=1 // pred_fallthru
      _
    %v40 = vld [vmem:[%s0] sm:$0xff]
    %v41 = vld [vmem:[%s0 + $0x8] sm:$0xff]
    %v42 = vld [vmem:[%s0 + $0x10] sm:$0xff]
    %v43 = vld [vmem:[%s0 + $0x18] sm:$0x3]
    %v44 = vld [vmem:[%s1] sm:$0xf]
    %v45 = vld [vmem:[%s1 + $0x4] sm:$0xf]
    %v46 = vld [vmem:[%s1 + $0x8] sm:$0xf]
    %v47 = vld [vmem:[%s1 + $0xc] sm:$0xf]
    %v48 = vld [vmem:[%s1 + $0x10] sm:$0xf]
    %v49 = vld [vmem:[%s1 + $0x14] sm:$0xf]
    %v50 = vld [vmem:[%s1 + $0x18] sm:$0xf]
    %v51 = vld [vmem:[%s1 + $0x1c] sm:$0xf]
    %v52 = vld [vmem:[%s1 + $0x20] sm:$0xf]
    %v53 = vld [vmem:[%s1 + $0x24] sm:$0xf]
    %v54 = vld [vmem:[%s1 + $0x28] sm:$0xf]
    %v55 = vld [vmem:[%s1 + $0x2c] sm:$0xf]
    %v56 = vld [vmem:[%s1 + $0x30] sm:$0xf]
    %v57 = vld [vmem:[%s1 + $0x34] sm:$0xf]
    %v58 = vld [vmem:[%s1 + $0x38] sm:$0xf]
    %v59 = vld [vmem:[%s1 + $0x3c] sm:$0xf]
    %v60 = vld [vmem:[%s1 + $0x40] sm:$0xf]
    %v61 = vld [vmem:[%s1 + $0x44] sm:$0xf]
    %v62 = vld [vmem:[%s1 + $0x48] sm:$0xf]
    %v63 = vld [vmem:[%s1 + $0x4c] sm:$0xf]
    %v64 = vld [vmem:[%s1 + $0x50] sm:$0xf]
    %v65 = vld [vmem:[%s1 + $0x54] sm:$0xf]
    %v66 = vld [vmem:[%s1 + $0x58] sm:$0xf]
    %v67 = vld [vmem:[%s1 + $0x5c] sm:$0xf]
    %v68 = vld [vmem:[%s1 + $0x60] sm:$0xf]
    %v69 = vld [vmem:[%s1 + $0x64] sm:$0xf]
    %v70 = vld [vmem:[%s1 + $0x68] sm:$0xf]
    %v71 = vld [vmem:[%s1 + $0x6c] sm:$0xf]
    %v72 = vld [vmem:[%s1 + $0x70] sm:$0xf]
    %v73 = vld [vmem:[%s1 + $0x74] sm:$0xf]
    %v74 = vld [vmem:[%s1 + $0x78] sm:$0xf]
    %v75 = vld [vmem:[%s1 + $0x7c] sm:$0xf]
    %v76 = vld [vmem:[%s1 + $0x80] sm:$0xf]
    %v77 = vld [vmem:[%s1 + $0x84] sm:$0xf]
    %v78 = vld [vmem:[%s1 + $0x88] sm:$0xf]
    %v79 = vld [vmem:[%s1 + $0x8c] sm:$0xf]
    %v80 = vld [vmem:[%s1 + $0x90] sm:$0xf]
    %v81 = vld [vmem:[%s1 + $0x94] sm:$0xf]
    %v82 = vld [vmem:[%s1 + $0x98] sm:$0xf]
    %v83 = vld [vmem:[%s1 + $0x9c] sm:$0xf]
    %v84 = vld [vmem:[%s1 + $0xa0] sm:$0xf]
    %v85 = vld [vmem:[%s1 + $0xa4] sm:$0xf]
    %v86 = vld [vmem:[%s1 + $0xa8] sm:$0xf]
    %v87 = vld [vmem:[%s1 + $0xac] sm:$0xf]
    %v88 = vld [vmem:[%s1 + $0xb0] sm:$0xf]
    %v89 = vld [vmem:[%s1 + $0xb4] sm:$0xf]
    %v90 = vld [vmem:[%s1 + $0xb8] sm:$0xf]
    %v91 = vld [vmem:[%s1 + $0xbc] sm:$0xf]
    %v92 = vld [vmem:[%s1 + $0xc0] sm:$0xf]
    %v93 = vld [vmem:[%s1 + $0xc4] sm:$0xf]
    %v94 = vld [vmem:[%s1 + $0xc8] sm:$0xf]
    %v95 = vld [vmem:[%s1 + $0xcc] sm:$0xf]
    %v96 = vld [vmem:[%s1 + $0xd0] sm:$0xf]
    %v97 = vld [vmem:[%s1 + $0xd4] sm:$0xf]
    %v98 = vld [vmem:[%s1 + $0xd8] sm:$0xf]
    %v99 = vld [vmem:[%s1 + $0xdc] sm:$0xf]
    %v100 = vld [vmem:[%s1 + $0xe0] sm:$0xf]
    %v101 = vld [vmem:[%s1 + $0xe4] sm:$0xf]
    %v102 = vld [vmem:[%s1 + $0xe8] sm:$0xf]
    %v103 = vld [vmem:[%s1 + $0xec] sm:$0xf]
    %v104 = vld [vmem:[%s1 + $0xf0] sm:$0xf]
    %v105 = vld [vmem:[%s1 + $0xf4] sm:$0xf]
    %v106 = vld [vmem:[%s1 + $0xf8] sm:$0xf]
    %v107 = vld [vmem:[%s1 + $0xfc] sm:$0xf]
    %v108 = vld [vmem:[%s1 + $0x100] sm:$0xf]
    %v109 = vld [vmem:[%s1 + $0x104] sm:$0xf]
    %v110 = vld [vmem:[%s1 + $0x108] sm:$0xf]
    %v111 = vld [vmem:[%s1 + $0x10c] sm:$0xf]
    %v112 = vld [vmem:[%s1 + $0x110] sm:$0xf]
    %v113 = vld [vmem:[%s1 + $0x114] sm:$0xf]
    %v114 = vld [vmem:[%s1 + $0x118] sm:$0xf]
    %v115 = vld [vmem:[%s1 + $0x11c] sm:$0xf]
    %v116 = vld [vmem:[%s1 + $0x120] sm:$0xf]
    %v117 = vld [vmem:[%s1 + $0x124] sm:$0xf]
    %v118 = vld [vmem:[%s1 + $0x128] sm:$0xf]
    %v119 = vld [vmem:[%s1 + $0x12c] sm:$0xf]
    %v120 = vld [vmem:[%s1 + $0x130] sm:$0xf]
    %v121 = vld [vmem:[%s1 + $0x134] sm:$0xf]
    %v122 = vld [vmem:[%s1 + $0x138] sm:$0xf]
    %v123 = vld [vmem:[%s1 + $0x13c] sm:$0xf]
    %v124 = vld [vmem:[%s1 + $0x140] sm:$0xf]
    %v125 = vld [vmem:[%s1 + $0x144] sm:$0xf]
    %v126 = vld [vmem:[%s1 + $0x148] sm:$0xf]
    %v127 = vld [vmem:[%s1 + $0x14c] sm:$0xf]
    %v128 = vld [vmem:[%s1 + $0x150] sm:$0xf]
    %v129 = vld [vmem:[%s1 + $0x154] sm:$0xf]
    %v130 = vld [vmem:[%s1 + $0x158] sm:$0xf]
    %v131 = vld [vmem:[%s1 + $0x15c] sm:$0xf]
    %v132 = vld [vmem:[%s1 + $0x160] sm:$0xf]
    %v133 = vld [vmem:[%s1 + $0x164] sm:$0xf]
    %v134 = vld [vmem:[%s1 + $0x168] sm:$0xf]
    %v135 = vld [vmem:[%s1 + $0x16c] sm:$0xf]
    %v136 = vld [vmem:[%s1 + $0x170] sm:$0xf]
    %v137 = vld [vmem:[%s1 + $0x174] sm:$0xf]
    %v138 = vld [vmem:[%s1 + $0x178] sm:$0xf]
    %v139 = vld [vmem:[%s1 + $0x17c] sm:$0xf]
    %v140 = vld [vmem:[%s1 + $0x180] sm:$0xf]
    %v141 = vld [vmem:[%s1 + $0x184] sm:$0xf]
    %v142 = vld [vmem:[%s1 + $0x188] sm:$0xf]
    %v143 = vld [vmem:[%s1 + $0x18c] sm:$0xf]
    %v144 = vld [vmem:[%s1 + $0x190] sm:$0xf]
    %v145 = vld [vmem:[%s1 + $0x194] sm:$0xf]
    %v146 = vld [vmem:[%s1 + $0x198] sm:$0xf]
    %v147 = vld [vmem:[%s1 + $0x19c] sm:$0xf]
    %v148 = vld [vmem:[%s1 + $0x1a0] sm:$0xf]
    %v149 = vld [vmem:[%s1 + $0x1a4] sm:$0xf]
    %v150 = vld [vmem:[%s1 + $0x1a8] sm:$0xf]
    %v151 = vld [vmem:[%s1 + $0x1ac] sm:$0xf]
    %v152 = vld [vmem:[%s1 + $0x1b0] sm:$0xf]
    %v153 = vld [vmem:[%s1 + $0x1b4] sm:$0xf]
    %v154 = vld [vmem:[%s1 + $0x1b8] sm:$0xf]
    %v155 = vld [vmem:[%s1 + $0x1bc] sm:$0xf]
    %v156 = vld [vmem:[%s1 + $0x1c0] sm:$0xf]
    %v157 = vld [vmem:[%s1 + $0x1c4] sm:$0xf]
    %v158 = vld [vmem:[%s1 + $0x1c8] sm:$0xf]
    %v159 = vld [vmem:[%s1 + $0x1cc] sm:$0xf]
    %v160 = vld [vmem:[%s1 + $0x1d0] sm:$0xf]
    %v161 = vld [vmem:[%s1 + $0x1d4] sm:$0xf]
    %v162 = vld [vmem:[%s1 + $0x1d8] sm:$0xf]
    %v163 = vld [vmem:[%s1 + $0x1dc] sm:$0xf]
    %v164 = vld [vmem:[%s1 + $0x1e0] sm:$0xf]
    %v165 = vld [vmem:[%s1 + $0x1e4] sm:$0xf]
    %v166 = vld [vmem:[%s1 + $0x1e8] sm:$0xf]
    %v167 = vld [vmem:[%s1 + $0x1ec] sm:$0xf]
    %v168 = vld [vmem:[%s1 + $0x1f0] sm:$0xf]
    %v169 = vld [vmem:[%s1 + $0x1f4] sm:$0xf]
    %v170 = vld [vmem:[%s1 + $0x1f8] sm:$0xf]
    %v171 = vld [vmem:[%s1 + $0x1fc] sm:$0xf]
    %v172 = vld [vmem:[%s1 + $0x200] sm:$0xf]
    %v173 = vld [vmem:[%s1 + $0x204] sm:$0xf]
    %v174 = vld [vmem:[%s1 + $0x208] sm:$0xf]
    %v175 = vld [vmem:[%s1 + $0x20c] sm:$0xf]
    %v176 = vld [vmem:[%s1 + $0x210] sm:$0xf]
    %v177 = vld [vmem:[%s1 + $0x214] sm:$0xf]
    %v178 = vld [vmem:[%s1 + $0x218] sm:$0xf]
    %v179 = vld [vmem:[%s1 + $0x21c] sm:$0xf]
    %v180 = vld [vmem:[%s1 + $0x220] sm:$0xf]
    %v181 = vld [vmem:[%s1 + $0x224] sm:$0xf]
    %v182 = vld [vmem:[%s1 + $0x228] sm:$0xf]
    %v183 = vld [vmem:[%s1 + $0x22c] sm:$0xf]
    %v184 = vld [vmem:[%s1 + $0x230] sm:$0xf]
    %v185 = vld [vmem:[%s1 + $0x234] sm:$0xf]
    %v186 = vld [vmem:[%s1 + $0x238] sm:$0xf]
    %v187 = vld [vmem:[%s1 + $0x23c] sm:$0xf]
    %v188 = vld [vmem:[%s1 + $0x240] sm:$0xf]
    %v189 = vld [vmem:[%s1 + $0x244] sm:$0xf]
    %v190 = vld [vmem:[%s1 + $0x248] sm:$0xf]
    %v191 = vld [vmem:[%s1 + $0x24c] sm:$0xf]
    %v192 = vld [vmem:[%s1 + $0x250] sm:$0xf]
    %v193 = vld [vmem:[%s1 + $0x254] sm:$0xf]
    %v194 = vld [vmem:[%s1 + $0x258] sm:$0xf]
    %v195 = vld [vmem:[%s1 + $0x25c] sm:$0xf]
    %v196 = vld [vmem:[%s1 + $0x260] sm:$0xf]
    %v197 = vld [vmem:[%s1 + $0x264] sm:$0xf]
    %v198 = vld [vmem:[%s1 + $0x268] sm:$0xf]
    %v199 = vld [vmem:[%s1 + $0x26c] sm:$0xf]
    %v200 = vld [vmem:[%s1 + $0x270] sm:$0xf]
    %v201 = vld [vmem:[%s1 + $0x274] sm:$0xf]
    %v202 = vld [vmem:[%s1 + $0x278] sm:$0xf]
    %v203 = vld [vmem:[%s1 + $0x27c] sm:$0xf]
    %v204 = vld [vmem:[%s1 + $0x280] sm:$0xf]
    %v205 = vld [vmem:[%s1 + $0x284] sm:$0xf]
    %v206 = vld [vmem:[%s1 + $0x288] sm:$0xf]
    %v207 = vld [vmem:[%s1 + $0x28c] sm:$0xf]
    %v208 = vld [vmem:[%s1 + $0x290] sm:$0xf]
    %v209 = vld [vmem:[%s1 + $0x294] sm:$0xf]
    %v210 = vld [vmem:[%s1 + $0x298] sm:$0xf]
    %v211 = vld [vmem:[%s1 + $0x29c] sm:$0xf]
    %v212 = vld [vmem:[%s1 + $0x2a0] sm:$0xf]
    %v213 = vld [vmem:[%s1 + $0x2a4] sm:$0xf]
    %v214 = vld [vmem:[%s1 + $0x2a8] sm:$0xf]
    %v215 = vld [vmem:[%s1 + $0x2ac] sm:$0xf]
    %v216 = vld [vmem:[%s1 + $0x2b0] sm:$0xf]
    %v217 = vld [vmem:[%s1 + $0x2b4] sm:$0xf]
    %v218 = vld [vmem:[%s1 + $0x2b8] sm:$0xf]
    %v219 = vld [vmem:[%s1 + $0x2bc] sm:$0xf]
    %v220 = vld [vmem:[%s1 + $0x2c0] sm:$0xf]
    %v221 = vld [vmem:[%s1 + $0x2c4] sm:$0xf]
    %v222 = vld [vmem:[%s1 + $0x2c8] sm:$0xf]
    %v223 = vld [vmem:[%s1 + $0x2cc] sm:$0xf]
    %v224 = vld [vmem:[%s1 + $0x2d0] sm:$0xf]
    %v225 = vld [vmem:[%s1 + $0x2d4] sm:$0xf]
    %v226 = vld [vmem:[%s1 + $0x2d8] sm:$0xf]
    %v227 = vld [vmem:[%s1 + $0x2dc] sm:$0xf]
    %v228 = vld [vmem:[%s1 + $0x2e0] sm:$0xf]
    %v229 = vld [vmem:[%s1 + $0x2e4] sm:$0xf]
    %v230 = vld [vmem:[%s1 + $0x2e8] sm:$0xf]
    %v231 = vld [vmem:[%s1 + $0x2ec] sm:$0xf]
    %v232 = vld [vmem:[%s1 + $0x2f0] sm:$0xf]
    %v233 = vld [vmem:[%s1 + $0x2f4] sm:$0xf]
    %v234 = vld [vmem:[%s1 + $0x2f8] sm:$0xf]
    %v235 = vld [vmem:[%s1 + $0x2fc] sm:$0xf]
    %v236 = vld [vmem:[%s1 + $0x300] sm:$0xf]
    %v237 = vld [vmem:[%s1 + $0x304] sm:$0xf]
    %v238 = vld [vmem:[%s1 + $0x308] sm:$0xf]
    %v239 = vld [vmem:[%s1 + $0x30c] sm:$0xf]
    %v240 = vld [vmem:[%s2] sm:$0x1]
    %v242 = vlaneseq
    %v243 = vshrl.u32 %v242, 7
    %v244 = vsub.s32 0, %v243
    %v245 = vrot.slane %v240, %v244
    %v251 = vcombine.high %v40, %v40
    %v253 = vunpack.c.l.s4 1983009808
    %v254 = vunpack.c.0.s8 %v253
    %v255 = vlaneseq
    %v256 = vshrl.u32 %v255, 7
    %v257 = vsub.s32 %v254, %v256
    %v258 = vrot.slane %v40, %v257
    %v260 = vunpack.c.l.s4 1983009808
    %v261 = vunpack.c.0.s8 %v260
    %v262 = vlaneseq
    %v263 = vshrl.u32 %v262, 7
    %v264 = vsub.s32 %v261, %v263
    %v265 = vrot.slane %v251, %v264
    %v266 = vcombine.high %v258, %v258
    %v267 = vcombine.high %v265, %v265
    %v268 = vcombine.high %v41, %v41
    %v270 = vunpack.c.l.s4 1983009808
    %v271 = vunpack.c.0.s8 %v270
    %v272 = vlaneseq
    %v273 = vshrl.u32 %v272, 7
    %v274 = vsub.s32 %v271, %v273
    %v275 = vrot.slane %v41, %v274
    %v277 = vunpack.c.l.s4 1983009808
    %v278 = vunpack.c.0.s8 %v277
    %v279 = vlaneseq
    %v280 = vshrl.u32 %v279, 7
    %v281 = vsub.s32 %v278, %v280
    %v282 = vrot.slane %v268, %v281
    %v283 = vcombine.high %v275, %v275
    %v284 = vcombine.high %v282, %v282
    %v285 = vcombine.high %v42, %v42
    %v287 = vunpack.c.l.s4 1983009808
    %v288 = vunpack.c.0.s8 %v287
    %v289 = vlaneseq
    %v290 = vshrl.u32 %v289, 7
    %v291 = vsub.s32 %v288, %v290
    %v292 = vrot.slane %v42, %v291
    %v294 = vunpack.c.l.s4 1983009808
    %v295 = vunpack.c.0.s8 %v294
    %v296 = vlaneseq
    %v297 = vshrl.u32 %v296, 7
    %v298 = vsub.s32 %v295, %v297
    %v299 = vrot.slane %v285, %v298
    %v300 = vcombine.high %v292, %v292
    %v301 = vcombine.high %v299, %v299
    %v303 = vunpack.c.l.s4 1983009808
    %v304 = vunpack.c.0.s8 %v303
    %v305 = vlaneseq
    %v306 = vshrl.u32 %v305, 7
    %v307 = vsub.s32 %v304, %v306
    %v308 = vrot.slane %v43, %v307
    %v517 = vunpack.c.l.b16 %v44
    %v518 = vunpack.c.l.b16 %v45
    %v519 = vunpack.c.l.b16 %v46
    %v520 = vunpack.c.l.b16 %v47
    %v521 = vunpack.c.l.b16 %v48
    %v522 = vunpack.c.l.b16 %v49
    %v523 = vunpack.c.l.b16 %v50
    %v524 = vunpack.c.l.b16 %v51
    %v525 = vunpack.c.l.b16 %v52
    %v526 = vunpack.c.l.b16 %v53
    %v527 = vunpack.c.l.b16 %v54
    %v528 = vunpack.c.l.b16 %v55
    %v529 = vunpack.c.l.b16 %v56
    %v530 = vunpack.c.l.b16 %v57
    %v531 = vunpack.c.l.b16 %v58
    %v532 = vunpack.c.l.b16 %v59
    %v533 = vunpack.c.l.b16 %v60
    %v534 = vunpack.c.l.b16 %v61
    %v535 = vunpack.c.l.b16 %v62
    %v536 = vunpack.c.l.b16 %v63
    %v537 = vunpack.c.l.b16 %v64
    %v538 = vunpack.c.l.b16 %v65
    %v539 = vunpack.c.l.b16 %v66
    %v540 = vunpack.c.l.b16 %v67
    %v541 = vunpack.c.l.b16 %v68
    %v542 = vunpack.c.l.b16 %v69
    %v543 = vunpack.c.l.b16 %v70
    %v544 = vunpack.c.l.b16 %v71
    %v545 = vunpack.c.l.b16 %v72
    %v546 = vunpack.c.l.b16 %v73
    %v547 = vunpack.c.l.b16 %v74
    %v548 = vunpack.c.l.b16 %v75
    %v549 = vunpack.c.l.b16 %v76
    %v550 = vunpack.c.l.b16 %v77
    %v551 = vunpack.c.l.b16 %v78
    %v552 = vunpack.c.l.b16 %v79
    %v553 = vunpack.c.l.b16 %v80
    %v554 = vunpack.c.l.b16 %v81
    %v555 = vunpack.c.l.b16 %v82
    %v556 = vunpack.c.l.b16 %v83
    %v557 = vunpack.c.l.b16 %v84
    %v558 = vunpack.c.l.b16 %v85
    %v559 = vunpack.c.l.b16 %v86
    %v560 = vunpack.c.l.b16 %v87
    %v561 = vunpack.c.l.b16 %v88
    %v562 = vunpack.c.l.b16 %v89
    %v563 = vunpack.c.l.b16 %v90
    %v564 = vunpack.c.l.b16 %v91
    %v565 = vunpack.c.l.b16 %v92
    %v566 = vunpack.c.l.b16 %v93
    %v567 = vunpack.c.l.b16 %v94
    %v568 = vunpack.c.l.b16 %v95
    %v569 = vunpack.c.l.b16 %v96
    %v570 = vunpack.c.l.b16 %v97
    %v571 = vunpack.c.l.b16 %v98
    %v572 = vunpack.c.l.b16 %v99
    %v573 = vunpack.c.l.b16 %v100
    %v574 = vunpack.c.l.b16 %v101
    %v575 = vunpack.c.l.b16 %v102
    %v576 = vunpack.c.l.b16 %v103
    %v577 = vunpack.c.l.b16 %v104
    %v578 = vunpack.c.l.b16 %v105
    %v579 = vunpack.c.l.b16 %v106
    %v580 = vunpack.c.l.b16 %v107
    %v581 = vunpack.c.l.b16 %v108
    %v582 = vunpack.c.l.b16 %v109
    %v583 = vunpack.c.l.b16 %v110
    %v584 = vunpack.c.l.b16 %v111
    %v585 = vunpack.c.l.b16 %v112
    %v586 = vunpack.c.l.b16 %v113
    %v587 = vunpack.c.l.b16 %v114
    %v588 = vunpack.c.l.b16 %v115
    %v589 = vunpack.c.l.b16 %v116
    %v590 = vunpack.c.l.b16 %v117
    %v591 = vunpack.c.l.b16 %v118
    %v592 = vunpack.c.l.b16 %v119
    %v593 = vunpack.c.l.b16 %v120
    %v594 = vunpack.c.l.b16 %v121
    %v595 = vunpack.c.l.b16 %v122
    %v596 = vunpack.c.l.b16 %v123
    %v597 = vunpack.c.l.b16 %v124
    %v598 = vunpack.c.l.b16 %v125
    %v599 = vunpack.c.l.b16 %v126
    %v600 = vunpack.c.l.b16 %v127
    %v601 = vunpack.c.l.b16 %v128
    %v602 = vunpack.c.l.b16 %v129
    %v603 = vunpack.c.l.b16 %v130
    %v604 = vunpack.c.l.b16 %v131
    %v605 = vunpack.c.l.b16 %v132
    %v606 = vunpack.c.l.b16 %v133
    %v607 = vunpack.c.l.b16 %v134
    %v608 = vunpack.c.l.b16 %v135
    %v609 = vunpack.c.l.b16 %v136
    %v610 = vunpack.c.l.b16 %v137
    %v611 = vunpack.c.l.b16 %v138
    %v612 = vunpack.c.l.b16 %v139
    %v613 = vunpack.c.l.b16 %v140
    %v614 = vunpack.c.l.b16 %v141
    %v615 = vunpack.c.l.b16 %v142
    %v616 = vunpack.c.l.b16 %v143
    %v617 = vunpack.c.l.b16 %v144
    %v618 = vunpack.c.l.b16 %v145
    %v619 = vunpack.c.l.b16 %v146
    %v620 = vunpack.c.l.b16 %v147
    %v621 = vunpack.c.l.b16 %v148
    %v622 = vunpack.c.l.b16 %v149
    %v623 = vunpack.c.l.b16 %v150
    %v624 = vunpack.c.l.b16 %v151
    %v625 = vunpack.c.l.b16 %v152
    %v626 = vunpack.c.l.b16 %v153
    %v627 = vunpack.c.l.b16 %v154
    %v628 = vunpack.c.l.b16 %v155
    %v629 = vunpack.c.l.b16 %v156
    %v630 = vunpack.c.l.b16 %v157
    %v631 = vunpack.c.l.b16 %v158
    %v632 = vunpack.c.l.b16 %v159
    %v633 = vunpack.c.l.b16 %v160
    %v634 = vunpack.c.l.b16 %v161
    %v635 = vunpack.c.l.b16 %v162
    %v636 = vunpack.c.l.b16 %v163
    %v637 = vunpack.c.l.b16 %v164
    %v638 = vunpack.c.l.b16 %v165
    %v639 = vunpack.c.l.b16 %v166
    %v640 = vunpack.c.l.b16 %v167
    %v641 = vunpack.c.l.b16 %v168
    %v642 = vunpack.c.l.b16 %v169
    %v643 = vunpack.c.l.b16 %v170
    %v644 = vunpack.c.l.b16 %v171
    %v645 = vunpack.c.l.b16 %v172
    %v646 = vunpack.c.l.b16 %v173
    %v647 = vunpack.c.l.b16 %v174
    %v648 = vunpack.c.l.b16 %v175
    %v649 = vunpack.c.l.b16 %v176
    %v650 = vunpack.c.l.b16 %v177
    %v651 = vunpack.c.l.b16 %v178
    %v652 = vunpack.c.l.b16 %v179
    %v653 = vunpack.c.l.b16 %v180
    %v654 = vunpack.c.l.b16 %v181
    %v655 = vunpack.c.l.b16 %v182
    %v656 = vunpack.c.l.b16 %v183
    %v657 = vunpack.c.l.b16 %v184
    %v658 = vunpack.c.l.b16 %v185
    %v659 = vunpack.c.l.b16 %v186
    %v660 = vunpack.c.l.b16 %v187
    %v661 = vunpack.c.l.b16 %v188
    %v662 = vunpack.c.l.b16 %v189
    %v663 = vunpack.c.l.b16 %v190
    %v664 = vunpack.c.l.b16 %v191
    %v665 = vunpack.c.l.b16 %v192
    %v666 = vunpack.c.l.b16 %v193
    %v667 = vunpack.c.l.b16 %v194
    %v668 = vunpack.c.l.b16 %v195
    %v669 = vunpack.c.l.b16 %v196
    %v670 = vunpack.c.l.b16 %v197
    %v671 = vunpack.c.l.b16 %v198
    %v672 = vunpack.c.l.b16 %v199
    %v673 = vunpack.c.l.b16 %v200
    %v674 = vunpack.c.l.b16 %v201
    %v675 = vunpack.c.l.b16 %v202
    %v676 = vunpack.c.l.b16 %v203
    %v677 = vunpack.c.l.b16 %v204
    %v678 = vunpack.c.l.b16 %v205
    %v679 = vunpack.c.l.b16 %v206
    %v680 = vunpack.c.l.b16 %v207
    %v681 = vunpack.c.l.b16 %v208
    %v682 = vunpack.c.l.b16 %v209
    %v683 = vunpack.c.l.b16 %v210
    %v684 = vunpack.c.l.b16 %v211
    %v685 = vunpack.c.l.b16 %v212
    %v686 = vunpack.c.l.b16 %v213
    %v687 = vunpack.c.l.b16 %v214
    %v688 = vunpack.c.l.b16 %v215
    %v689 = vunpack.c.l.b16 %v216
    %v690 = vunpack.c.l.b16 %v217
    %v691 = vunpack.c.l.b16 %v218
    %v692 = vunpack.c.l.b16 %v219
    %v693 = vunpack.c.l.b16 %v220
    %v694 = vunpack.c.l.b16 %v221
    %v695 = vunpack.c.l.b16 %v222
    %v696 = vunpack.c.l.b16 %v223
    %v697 = vunpack.c.l.b16 %v224
    %v698 = vunpack.c.l.b16 %v225
    %v699 = vunpack.c.l.b16 %v226
    %v700 = vunpack.c.l.b16 %v227
    %v701 = vunpack.c.l.b16 %v228
    %v702 = vunpack.c.l.b16 %v229
    %v703 = vunpack.c.l.b16 %v230
    %v704 = vunpack.c.l.b16 %v231
    %v705 = vunpack.c.l.b16 %v232
    %v706 = vunpack.c.l.b16 %v233
    %v707 = vunpack.c.l.b16 %v234
    %v708 = vunpack.c.l.b16 %v235
    %v709 = vunpack.c.l.b16 %v236
    %v710 = vunpack.c.l.b16 %v237
    %v711 = vunpack.c.l.b16 %v238
    %v712 = vunpack.c.l.b16 %v239
    %v713 = vpack.c.b16 %v518, %v517
    %v714 = vpack.c.b16 %v520, %v519
    %v715 = vpack.c.b16 %v522, %v521
    %v716 = vpack.c.b16 %v524, %v523
    %v717 = vpack.c.b16 %v526, %v525
    %v718 = vpack.c.b16 %v528, %v527
    %v719 = vpack.c.b16 %v530, %v529
    %v720 = vpack.c.b16 %v532, %v531
    %v721 = vpack.c.b16 %v534, %v533
    %v722 = vpack.c.b16 %v536, %v535
    %v723 = vpack.c.b16 %v538, %v537
    %v724 = vpack.c.b16 %v540, %v539
    %v725 = vpack.c.b16 %v542, %v541
    %v726 = vpack.c.b16 %v544, %v543
    %v727 = vpack.c.b16 %v546, %v545
    %v728 = vpack.c.b16 %v548, %v547
    %v729 = vpack.c.b16 %v550, %v549
    %v730 = vpack.c.b16 %v552, %v551
    %v731 = vpack.c.b16 %v554, %v553
    %v732 = vpack.c.b16 %v556, %v555
    %v733 = vpack.c.b16 %v558, %v557
    %v734 = vpack.c.b16 %v560, %v559
    %v735 = vpack.c.b16 %v562, %v561
    %v736 = vpack.c.b16 %v564, %v563
    %v737 = vpack.c.b16 %v566, %v565
    %v738 = vpack.c.b16 %v568, %v567
    %v739 = vpack.c.b16 %v570, %v569
    %v740 = vpack.c.b16 %v572, %v571
    %v741 = vpack.c.b16 %v574, %v573
    %v742 = vpack.c.b16 %v576, %v575
    %v743 = vpack.c.b16 %v578, %v577
    %v744 = vpack.c.b16 %v580, %v579
    %v745 = vpack.c.b16 %v582, %v581
    %v746 = vpack.c.b16 %v584, %v583
    %v747 = vpack.c.b16 %v586, %v585
    %v748 = vpack.c.b16 %v588, %v587
    %v749 = vpack.c.b16 %v590, %v589
    %v750 = vpack.c.b16 %v592, %v591
    %v751 = vpack.c.b16 %v594, %v593
    %v752 = vpack.c.b16 %v596, %v595
    %v753 = vpack.c.b16 %v598, %v597
    %v754 = vpack.c.b16 %v600, %v599
    %v755 = vpack.c.b16 %v602, %v601
    %v756 = vpack.c.b16 %v604, %v603
    %v757 = vpack.c.b16 %v606, %v605
    %v758 = vpack.c.b16 %v608, %v607
    %v759 = vpack.c.b16 %v610, %v609
    %v760 = vpack.c.b16 %v612, %v611
    %v761 = vpack.c.b16 %v614, %v613
    %v762 = vpack.c.b16 %v616, %v615
    %v763 = vpack.c.b16 %v618, %v617
    %v764 = vpack.c.b16 %v620, %v619
    %v765 = vpack.c.b16 %v622, %v621
    %v766 = vpack.c.b16 %v624, %v623
    %v767 = vpack.c.b16 %v626, %v625
    %v768 = vpack.c.b16 %v628, %v627
    %v769 = vpack.c.b16 %v630, %v629
    %v770 = vpack.c.b16 %v632, %v631
    %v771 = vpack.c.b16 %v634, %v633
    %v772 = vpack.c.b16 %v636, %v635
    %v773 = vpack.c.b16 %v638, %v637
    %v774 = vpack.c.b16 %v640, %v639
    %v775 = vpack.c.b16 %v642, %v641
    %v776 = vpack.c.b16 %v644, %v643
    %v777 = vpack.c.b16 %v646, %v645
    %v778 = vpack.c.b16 %v648, %v647
    %v779 = vpack.c.b16 %v650, %v649
    %v780 = vpack.c.b16 %v652, %v651
    %v781 = vpack.c.b16 %v654, %v653
    %v782 = vpack.c.b16 %v656, %v655
    %v783 = vpack.c.b16 %v658, %v657
    %v784 = vpack.c.b16 %v660, %v659
    %v785 = vpack.c.b16 %v662, %v661
    %v786 = vpack.c.b16 %v664, %v663
    %v787 = vpack.c.b16 %v666, %v665
    %v788 = vpack.c.b16 %v668, %v667
    %v789 = vpack.c.b16 %v670, %v669
    %v790 = vpack.c.b16 %v672, %v671
    %v791 = vpack.c.b16 %v674, %v673
    %v792 = vpack.c.b16 %v676, %v675
    %v793 = vpack.c.b16 %v678, %v677
    %v794 = vpack.c.b16 %v680, %v679
    %v795 = vpack.c.b16 %v682, %v681
    %v796 = vpack.c.b16 %v684, %v683
    %v797 = vpack.c.b16 %v686, %v685
    %v798 = vpack.c.b16 %v688, %v687
    %v799 = vpack.c.b16 %v690, %v689
    %v800 = vpack.c.b16 %v692, %v691
    %v801 = vpack.c.b16 %v694, %v693
    %v802 = vpack.c.b16 %v696, %v695
    %v803 = vpack.c.b16 %v698, %v697
    %v804 = vpack.c.b16 %v700, %v699
    %v805 = vpack.c.b16 %v702, %v701
    %v806 = vpack.c.b16 %v704, %v703
    %v807 = vpack.c.b16 %v706, %v705
    %v808 = vpack.c.b16 %v708, %v707
    %v809 = vpack.c.b16 %v710, %v709
    %v810 = vpack.c.b16 %v712, %v711
    %vm909 = vcmask 261120
    %v911 = vsel %vm909, %v308, 0
    %913 = vmatprep.subr.bf16.mxu0 0
    %914 = vmatpush1.bf16.msra.mxu0 %v720
    %915 = vmatprep.subr.bf16.mxu0 0
    %916 = vmatpush1.bf16.msra.mxu0 %v719
    %917 = vmatprep.subr.bf16.mxu0 0
    %918 = vmatpush1.bf16.msra.mxu0 %v718
    %919 = vmatprep.subr.bf16.mxu0 0
    %920 = vmatpush1.bf16.msra.mxu0 %v717
    %921 = vmatprep.subr.bf16.mxu0 0
    %922 = vmatpush1.bf16.msra.mxu0 %v716
    %923 = vmatprep.subr.bf16.mxu0 0
    %924 = vmatpush1.bf16.msra.mxu0 %v715
    %925 = vmatprep.subr.bf16.mxu0 0
    %926 = vmatpush1.bf16.msra.mxu0 %v714
    %927 = vmatprep.subr.bf16.mxu0 0
    %928 = vmatpush1.bf16.msra.mxu0 %v713
    %929 = vmatprep.subr.bf16.mxu0 0
    %930 = vmatpush2.bf16.msra.mxu0 %v728
    %931 = vmatprep.subr.bf16.mxu0 0
    %932 = vmatpush2.bf16.msra.mxu0 %v727
    %933 = vmatprep.subr.bf16.mxu0 0
    %934 = vmatpush2.bf16.msra.mxu0 %v726
    %935 = vmatprep.subr.bf16.mxu0 0
    %936 = vmatpush2.bf16.msra.mxu0 %v725
    %937 = vmatprep.subr.bf16.mxu0 0
    %938 = vmatpush2.bf16.msra.mxu0 %v724
    %939 = vmatprep.subr.bf16.mxu0 0
    %940 = vmatpush2.bf16.msra.mxu0 %v723
    %941 = vmatprep.subr.bf16.mxu0 0
    %942 = vmatpush2.bf16.msra.mxu0 %v722
    %943 = vmatprep.subr.bf16.mxu0 0
    %944 = vmatpush2.bf16.msra.mxu0 %v721
    %945 = vmatprep.mubr.bf16.mxu0 %v266
    %946 = vmatmul.mubr.bf16.gmra.mxu0 %v258
    %v947 = vpop.f32.mrf.mxu0
    %v948 = vadd.f32 %v245, %v947
    %v949 = vpop.f32.mrf.mxu0
    %v950 = vpop.f32.mrf.mxu0
    %v951 = vpop.f32.mrf.mxu0
    %952 = vdwg.mxu0
    %953 = vmatprep.subr.bf16.mxu0 0
    %954 = vmatpush1.bf16.msra.mxu0 %v736
    %955 = vmatprep.subr.bf16.mxu0 0
    %956 = vmatpush1.bf16.msra.mxu0 %v735
    %957 = vmatprep.subr.bf16.mxu0 0
    %958 = vmatpush1.bf16.msra.mxu0 %v734
    %959 = vmatprep.subr.bf16.mxu0 0
    %960 = vmatpush1.bf16.msra.mxu0 %v733
    %961 = vmatprep.subr.bf16.mxu0 0
    %962 = vmatpush1.bf16.msra.mxu0 %v732
    %963 = vmatprep.subr.bf16.mxu0 0
    %964 = vmatpush1.bf16.msra.mxu0 %v731
    %965 = vmatprep.subr.bf16.mxu0 0
    %966 = vmatpush1.bf16.msra.mxu0 %v730
    %967 = vmatprep.subr.bf16.mxu0 0
    %968 = vmatpush1.bf16.msra.mxu0 %v729
    %969 = vmatprep.subr.bf16.mxu0 0
    %970 = vmatpush2.bf16.msra.mxu0 %v744
    %971 = vmatprep.subr.bf16.mxu0 0
    %972 = vmatpush2.bf16.msra.mxu0 %v743
    %973 = vmatprep.subr.bf16.mxu0 0
    %974 = vmatpush2.bf16.msra.mxu0 %v742
    %975 = vmatprep.subr.bf16.mxu0 0
    %976 = vmatpush2.bf16.msra.mxu0 %v741
    %977 = vmatprep.subr.bf16.mxu0 0
    %978 = vmatpush2.bf16.msra.mxu0 %v740
    %979 = vmatprep.subr.bf16.mxu0 0
    %980 = vmatpush2.bf16.msra.mxu0 %v739
    %981 = vmatprep.subr.bf16.mxu0 0
    %982 = vmatpush2.bf16.msra.mxu0 %v738
    %983 = vmatprep.subr.bf16.mxu0 0
    %984 = vmatpush2.bf16.msra.mxu0 %v737
    %985 = vmatprep.mubr.bf16.mxu0 %v267
    %986 = vmatmul.mubr.bf16.gmra.mxu0 %v265
    %v987 = vpop.f32.mrf.mxu0
    %v988 = vadd.f32 %v948, %v987
    %v989 = vpop.f32.mrf.mxu0
    %v990 = vpop.f32.mrf.mxu0
    %v991 = vpop.f32.mrf.mxu0
    %992 = vdwg.mxu0
    %993 = vmatprep.subr.bf16.mxu0 0
    %994 = vmatpush1.bf16.msra.mxu0 %v752
    %995 = vmatprep.subr.bf16.mxu0 0
    %996 = vmatpush1.bf16.msra.mxu0 %v751
    %997 = vmatprep.subr.bf16.mxu0 0
    %998 = vmatpush1.bf16.msra.mxu0 %v750
    %999 = vmatprep.subr.bf16.mxu0 0
    %1000 = vmatpush1.bf16.msra.mxu0 %v749
    %1001 = vmatprep.subr.bf16.mxu0 0
    %1002 = vmatpush1.bf16.msra.mxu0 %v748
    %1003 = vmatprep.subr.bf16.mxu0 0
    %1004 = vmatpush1.bf16.msra.mxu0 %v747
    %1005 = vmatprep.subr.bf16.mxu0 0
    %1006 = vmatpush1.bf16.msra.mxu0 %v746
    %1007 = vmatprep.subr.bf16.mxu0 0
    %1008 = vmatpush1.bf16.msra.mxu0 %v745
    %1009 = vmatprep.subr.bf16.mxu0 0
    %1010 = vmatpush2.bf16.msra.mxu0 %v760
    %1011 = vmatprep.subr.bf16.mxu0 0
    %1012 = vmatpush2.bf16.msra.mxu0 %v759
    %1013 = vmatprep.subr.bf16.mxu0 0
    %1014 = vmatpush2.bf16.msra.mxu0 %v758
    %1015 = vmatprep.subr.bf16.mxu0 0
    %1016 = vmatpush2.bf16.msra.mxu0 %v757
    %1017 = vmatprep.subr.bf16.mxu0 0
    %1018 = vmatpush2.bf16.msra.mxu0 %v756
    %1019 = vmatprep.subr.bf16.mxu0 0
    %1020 = vmatpush2.bf16.msra.mxu0 %v755
    %1021 = vmatprep.subr.bf16.mxu0 0
    %1022 = vmatpush2.bf16.msra.mxu0 %v754
    %1023 = vmatprep.subr.bf16.mxu0 0
    %1024 = vmatpush2.bf16.msra.mxu0 %v753
    %1025 = vmatprep.mubr.bf16.mxu0 %v283
    %1026 = vmatmul.mubr.bf16.gmra.mxu0 %v275
    %v1027 = vpop.f32.mrf.mxu0
    %v1028 = vadd.f32 %v988, %v1027
    %v1029 = vpop.f32.mrf.mxu0
    %v1030 = vpop.f32.mrf.mxu0
    %v1031 = vpop.f32.mrf.mxu0
    %1032 = vdwg.mxu0
    %1033 = vmatprep.subr.bf16.mxu0 0
    %1034 = vmatpush1.bf16.msra.mxu0 %v768
    %1035 = vmatprep.subr.bf16.mxu0 0
    %1036 = vmatpush1.bf16.msra.mxu0 %v767
    %1037 = vmatprep.subr.bf16.mxu0 0
    %1038 = vmatpush1.bf16.msra.mxu0 %v766
    %1039 = vmatprep.subr.bf16.mxu0 0
    %1040 = vmatpush1.bf16.msra.mxu0 %v765
    %1041 = vmatprep.subr.bf16.mxu0 0
    %1042 = vmatpush1.bf16.msra.mxu0 %v764
    %1043 = vmatprep.subr.bf16.mxu0 0
    %1044 = vmatpush1.bf16.msra.mxu0 %v763
    %1045 = vmatprep.subr.bf16.mxu0 0
    %1046 = vmatpush1.bf16.msra.mxu0 %v762
    %1047 = vmatprep.subr.bf16.mxu0 0
    %1048 = vmatpush1.bf16.msra.mxu0 %v761
    %1049 = vmatprep.subr.bf16.mxu0 0
    %1050 = vmatpush2.bf16.msra.mxu0 %v776
    %1051 = vmatprep.subr.bf16.mxu0 0
    %1052 = vmatpush2.bf16.msra.mxu0 %v775
    %1053 = vmatprep.subr.bf16.mxu0 0
    %1054 = vmatpush2.bf16.msra.mxu0 %v774
    %1055 = vmatprep.subr.bf16.mxu0 0
    %1056 = vmatpush2.bf16.msra.mxu0 %v773
    %1057 = vmatprep.subr.bf16.mxu0 0
    %1058 = vmatpush2.bf16.msra.mxu0 %v772
    %1059 = vmatprep.subr.bf16.mxu0 0
    %1060 = vmatpush2.bf16.msra.mxu0 %v771
    %1061 = vmatprep.subr.bf16.mxu0 0
    %1062 = vmatpush2.bf16.msra.mxu0 %v770
    %1063 = vmatprep.subr.bf16.mxu0 0
    %1064 = vmatpush2.bf16.msra.mxu0 %v769
    %1065 = vmatprep.mubr.bf16.mxu0 %v284
    %1066 = vmatmul.mubr.bf16.gmra.mxu0 %v282
    %v1067 = vpop.f32.mrf.mxu0
    %v1068 = vadd.f32 %v1028, %v1067
    %v1069 = vpop.f32.mrf.mxu0
    %v1070 = vpop.f32.mrf.mxu0
    %v1071 = vpop.f32.mrf.mxu0
    %1072 = vdwg.mxu0
    %1073 = vmatprep.subr.bf16.mxu0 0
    %1074 = vmatpush1.bf16.msra.mxu0 %v784
    %1075 = vmatprep.subr.bf16.mxu0 0
    %1076 = vmatpush1.bf16.msra.mxu0 %v783
    %1077 = vmatprep.subr.bf16.mxu0 0
    %1078 = vmatpush1.bf16.msra.mxu0 %v782
    %1079 = vmatprep.subr.bf16.mxu0 0
    %1080 = vmatpush1.bf16.msra.mxu0 %v781
    %1081 = vmatprep.subr.bf16.mxu0 0
    %1082 = vmatpush1.bf16.msra.mxu0 %v780
    %1083 = vmatprep.subr.bf16.mxu0 0
    %1084 = vmatpush1.bf16.msra.mxu0 %v779
    %1085 = vmatprep.subr.bf16.mxu0 0
    %1086 = vmatpush1.bf16.msra.mxu0 %v778
    %1087 = vmatprep.subr.bf16.mxu0 0
    %1088 = vmatpush1.bf16.msra.mxu0 %v777
    %1089 = vmatprep.subr.bf16.mxu0 0
    %1090 = vmatpush2.bf16.msra.mxu0 %v792
    %1091 = vmatprep.subr.bf16.mxu0 0
    %1092 = vmatpush2.bf16.msra.mxu0 %v791
    %1093 = vmatprep.subr.bf16.mxu0 0
    %1094 = vmatpush2.bf16.msra.mxu0 %v790
    %1095 = vmatprep.subr.bf16.mxu0 0
    %1096 = vmatpush2.bf16.msra.mxu0 %v789
    %1097 = vmatprep.subr.bf16.mxu0 0
    %1098 = vmatpush2.bf16.msra.mxu0 %v788
    %1099 = vmatprep.subr.bf16.mxu0 0
    %1100 = vmatpush2.bf16.msra.mxu0 %v787
    %1101 = vmatprep.subr.bf16.mxu0 0
    %1102 = vmatpush2.bf16.msra.mxu0 %v786
    %1103 = vmatprep.subr.bf16.mxu0 0
    %1104 = vmatpush2.bf16.msra.mxu0 %v785
    %1105 = vmatprep.mubr.bf16.mxu0 %v300
    %1106 = vmatmul.mubr.bf16.gmra.mxu0 %v292
    %v1107 = vpop.f32.mrf.mxu0
    %v1108 = vadd.f32 %v1068, %v1107
    %v1109 = vpop.f32.mrf.mxu0
    %v1110 = vpop.f32.mrf.mxu0
    %v1111 = vpop.f32.mrf.mxu0
    %1112 = vdwg.mxu0
    %1113 = vmatprep.subr.bf16.mxu0 0
    %1114 = vmatpush1.bf16.msra.mxu0 %v800
    %1115 = vmatprep.subr.bf16.mxu0 0
    %1116 = vmatpush1.bf16.msra.mxu0 %v799
    %1117 = vmatprep.subr.bf16.mxu0 0
    %1118 = vmatpush1.bf16.msra.mxu0 %v798
    %1119 = vmatprep.subr.bf16.mxu0 0
    %1120 = vmatpush1.bf16.msra.mxu0 %v797
    %1121 = vmatprep.subr.bf16.mxu0 0
    %1122 = vmatpush1.bf16.msra.mxu0 %v796
    %1123 = vmatprep.subr.bf16.mxu0 0
    %1124 = vmatpush1.bf16.msra.mxu0 %v795
    %1125 = vmatprep.subr.bf16.mxu0 0
    %1126 = vmatpush1.bf16.msra.mxu0 %v794
    %1127 = vmatprep.subr.bf16.mxu0 0
    %1128 = vmatpush1.bf16.msra.mxu0 %v793
    %1129 = vmatprep.subr.bf16.mxu0 0
    %1130 = vmatpush2.bf16.msra.mxu0 %v808
    %1131 = vmatprep.subr.bf16.mxu0 0
    %1132 = vmatpush2.bf16.msra.mxu0 %v807
    %1133 = vmatprep.subr.bf16.mxu0 0
    %1134 = vmatpush2.bf16.msra.mxu0 %v806
    %1135 = vmatprep.subr.bf16.mxu0 0
    %1136 = vmatpush2.bf16.msra.mxu0 %v805
    %1137 = vmatprep.subr.bf16.mxu0 0
    %1138 = vmatpush2.bf16.msra.mxu0 %v804
    %1139 = vmatprep.subr.bf16.mxu0 0
    %1140 = vmatpush2.bf16.msra.mxu0 %v803
    %1141 = vmatprep.subr.bf16.mxu0 0
    %1142 = vmatpush2.bf16.msra.mxu0 %v802
    %1143 = vmatprep.subr.bf16.mxu0 0
    %1144 = vmatpush2.bf16.msra.mxu0 %v801
    %1145 = vmatprep.mubr.bf16.mxu0 %v301
    %1146 = vmatmul.mubr.bf16.gmra.mxu0 %v299
    %v1147 = vpop.f32.mrf.mxu0
    %v1148 = vadd.f32 %v1108, %v1147
    %v1149 = vpop.f32.mrf.mxu0
    %v1150 = vpop.f32.mrf.mxu0
    %v1151 = vpop.f32.mrf.mxu0
    %1152 = vdwg.mxu0
    %1153 = vmatprep.subr.bf16.mxu0 0
    %1154 = vmatpush1.bf16.msra.mxu0 0
    %1155 = vmatprep.subr.bf16.mxu0 0
    %1156 = vmatpush1.bf16.msra.mxu0 0
    %1157 = vmatprep.subr.bf16.mxu0 0
    %1158 = vmatpush1.bf16.msra.mxu0 0
    %1159 = vmatprep.subr.bf16.mxu0 0
    %1160 = vmatpush1.bf16.msra.mxu0 0
    %1161 = vmatprep.subr.bf16.mxu0 0
    %1162 = vmatpush1.bf16.msra.mxu0 0
    %1163 = vmatprep.subr.bf16.mxu0 0
    %1164 = vmatpush1.bf16.msra.mxu0 0
    %1165 = vmatprep.subr.bf16.mxu0 0
    %1166 = vmatpush1.bf16.msra.mxu0 %v810
    %1167 = vmatprep.subr.bf16.mxu0 0
    %1168 = vmatpush1.bf16.msra.mxu0 %v809
    %1169 = vmatprep.subr.bf16.mxu0 0
    %1170 = vmatpush2.bf16.msra.mxu0 0
    %1171 = vmatprep.subr.bf16.mxu0 0
    %1172 = vmatpush2.bf16.msra.mxu0 0
    %1173 = vmatprep.subr.bf16.mxu0 0
    %1174 = vmatpush2.bf16.msra.mxu0 0
    %1175 = vmatprep.subr.bf16.mxu0 0
    %1176 = vmatpush2.bf16.msra.mxu0 0
    %1177 = vmatprep.subr.bf16.mxu0 0
    %1178 = vmatpush2.bf16.msra.mxu0 0
    %1179 = vmatprep.subr.bf16.mxu0 0
    %1180 = vmatpush2.bf16.msra.mxu0 0
    %1181 = vmatprep.subr.bf16.mxu0 0
    %1182 = vmatpush2.bf16.msra.mxu0 0
    %1183 = vmatprep.subr.bf16.mxu0 0
    %1184 = vmatpush2.bf16.msra.mxu0 0
    %1185 = vmatprep.mubr.bf16.mxu0 0
    %1186 = vmatmul.mubr.bf16.gmra.mxu0 %v911
    %v1187 = vpop.f32.mrf.mxu0
    %v1188 = vadd.f32 %v1148, %v1187
    %v1189 = vpop.f32.mrf.mxu0
    %v1190 = vpop.f32.mrf.mxu0
    %v1191 = vpop.f32.mrf.mxu0
    %1192 = vdwg.mxu0
    %vm1193 = vcmp.gt.f32.partialorder %v1188, 0.0
    %v1194 = vmul.f32 %v1188, 0.01
    %v1195 = vsel %vm1193, %v1188, %v1194
    %v1196 = vpack.c.bf16 %v1195, %v1195
    %v1197 = vld [vmem:[%s3] sm:$0xf]
    %v1198 = vld [vmem:[%s3 + $0x4] sm:$0xf]
    %v1199 = vld [vmem:[%s3 + $0x8] sm:$0xf]
    %v1200 = vld [vmem:[%s3 + $0xc] sm:$0xf]
    %v1201 = vld [vmem:[%s3 + $0x10] sm:$0xf]
    %v1202 = vld [vmem:[%s3 + $0x14] sm:$0xf]
    %v1203 = vld [vmem:[%s3 + $0x18] sm:$0xf]
    %v1204 = vld [vmem:[%s3 + $0x1c] sm:$0xf]
    %v1205 = vld [vmem:[%s3 + $0x20] sm:$0xf]
    %v1206 = vld [vmem:[%s3 + $0x24] sm:$0xf]
    %v1207 = vld [vmem:[%s3 + $0x28] sm:$0xf]
    %v1208 = vld [vmem:[%s3 + $0x2c] sm:$0xf]
    %v1209 = vld [vmem:[%s3 + $0x30] sm:$0xf]
    %v1210 = vld [vmem:[%s3 + $0x34] sm:$0xf]
    %v1211 = vld [vmem:[%s3 + $0x38] sm:$0xf]
    %v1212 = vld [vmem:[%s3 + $0x3c] sm:$0xf]
    %v1213 = vld [vmem:[%s4] sm:$0x1]
    %v1215 = vlaneseq
    %v1216 = vshrl.u32 %v1215, 7
    %v1217 = vsub.s32 0, %v1216
    %v1218 = vrot.slane %v1213, %v1217
    %v1236 = vunpack.c.l.b16 %v1197
    %v1237 = vunpack.c.l.b16 %v1198
    %v1238 = vunpack.c.l.b16 %v1199
    %v1239 = vunpack.c.l.b16 %v1200
    %v1240 = vunpack.c.l.b16 %v1201
    %v1241 = vunpack.c.l.b16 %v1202
    %v1242 = vunpack.c.l.b16 %v1203
    %v1243 = vunpack.c.l.b16 %v1204
    %v1244 = vunpack.c.l.b16 %v1205
    %v1245 = vunpack.c.l.b16 %v1206
    %v1246 = vunpack.c.l.b16 %v1207
    %v1247 = vunpack.c.l.b16 %v1208
    %v1248 = vunpack.c.l.b16 %v1209
    %v1249 = vunpack.c.l.b16 %v1210
    %v1250 = vunpack.c.l.b16 %v1211
    %v1251 = vunpack.c.l.b16 %v1212
    %v1252 = vpack.c.b16 %v1237, %v1236
    %v1253 = vpack.c.b16 %v1239, %v1238
    %v1254 = vpack.c.b16 %v1241, %v1240
    %v1255 = vpack.c.b16 %v1243, %v1242
    %v1256 = vpack.c.b16 %v1245, %v1244
    %v1257 = vpack.c.b16 %v1247, %v1246
    %v1258 = vpack.c.b16 %v1249, %v1248
    %v1259 = vpack.c.b16 %v1251, %v1250
    %1268 = vmatprep.subr.bf16.mxu0 0
    %1269 = vmatpush1.bf16.msra.mxu0 %v1259
    %1270 = vmatprep.subr.bf16.mxu0 0
    %1271 = vmatpush1.bf16.msra.mxu0 %v1258
    %1272 = vmatprep.subr.bf16.mxu0 0
    %1273 = vmatpush1.bf16.msra.mxu0 %v1257
    %1274 = vmatprep.subr.bf16.mxu0 0
    %1275 = vmatpush1.bf16.msra.mxu0 %v1256
    %1276 = vmatprep.subr.bf16.mxu0 0
    %1277 = vmatpush1.bf16.msra.mxu0 %v1255
    %1278 = vmatprep.subr.bf16.mxu0 0
    %1279 = vmatpush1.bf16.msra.mxu0 %v1254
    %1280 = vmatprep.subr.bf16.mxu0 0
    %1281 = vmatpush1.bf16.msra.mxu0 %v1253
    %1282 = vmatprep.subr.bf16.mxu0 0
    %1283 = vmatpush1.bf16.msra.mxu0 %v1252
    %1284 = vmatprep.subr.bf16.mxu0 0
    %1285 = vmatpush2.bf16.msra.mxu0 0
    %1286 = vmatprep.subr.bf16.mxu0 0
    %1287 = vmatpush2.bf16.msra.mxu0 0
    %1288 = vmatprep.subr.bf16.mxu0 0
    %1289 = vmatpush2.bf16.msra.mxu0 0
    %1290 = vmatprep.subr.bf16.mxu0 0
    %1291 = vmatpush2.bf16.msra.mxu0 0
    %1292 = vmatprep.subr.bf16.mxu0 0
    %1293 = vmatpush2.bf16.msra.mxu0 0
    %1294 = vmatprep.subr.bf16.mxu0 0
    %1295 = vmatpush2.bf16.msra.mxu0 0
    %1296 = vmatprep.subr.bf16.mxu0 0
    %1297 = vmatpush2.bf16.msra.mxu0 0
    %1298 = vmatprep.subr.bf16.mxu0 0
    %1299 = vmatpush2.bf16.msra.mxu0 0
    %1300 = vmatprep.mubr.bf16.mxu0 0
    %1301 = vmatmul.mubr.bf16.gmra.mxu0 %v1196
    %v1302 = vpop.f32.mrf.mxu0
    %v1303 = vadd.f32 %v1218, %v1302
    %v1304 = vpop.f32.mrf.mxu0
    %v1305 = vpop.f32.mrf.mxu0
    %v1306 = vpop.f32.mrf.mxu0
    %1307 = vdwg.mxu0
    %vm1308 = vcmp.gt.f32.partialorder %v1303, 0.0
    %v1309 = vmin.f32 %v1303, 0.0
    %v1310 = vmul.f32 %v1309, 1.442695
    %v1311 = vpow.pop %v1310
    %v1312 = vsub.f32 %v1311, 1.0
    %v1313 = vsel %vm1308, %v1303, %v1312
    %v1314 = vpack.c.bf16 %v1313, %v1313
    %v1315 = vld [vmem:[%s5] sm:$0xff]
    %v1316 = vld [vmem:[%s5 + $0x8] sm:$0xff]
    %v1317 = vld [vmem:[%s5 + $0x10] sm:$0xff]
    %v1318 = vld [vmem:[%s5 + $0x18] sm:$0xff]
    %v1319 = vld [vmem:[%s5 + $0x20] sm:$0xff]
    %v1320 = vld [vmem:[%s5 + $0x28] sm:$0xff]
    %v1321 = vld [vmem:[%s5 + $0x30] sm:$0xff]
    %v1322 = vld [vmem:[%s5 + $0x38] sm:$0xff]
    %v1323 = vld [vmem:[%s5 + $0x40] sm:$0xff]
    %v1324 = vld [vmem:[%s5 + $0x48] sm:$0xff]
    %v1325 = vld [vmem:[%s5 + $0x50] sm:$0xff]
    %v1326 = vld [vmem:[%s5 + $0x58] sm:$0xff]
    %v1327 = vld [vmem:[%s5 + $0x60] sm:$0xff]
    %v1328 = vld [vmem:[%s5 + $0x68] sm:$0xff]
    %v1329 = vld [vmem:[%s5 + $0x70] sm:$0xff]
    %v1330 = vld [vmem:[%s5 + $0x78] sm:$0xff]
    %v1331 = vld [vmem:[%s5 + $0x80] sm:$0xff]
    %v1332 = vld [vmem:[%s5 + $0x88] sm:$0xff]
    %v1333 = vld [vmem:[%s5 + $0x90] sm:$0xff]
    %v1334 = vld [vmem:[%s5 + $0x98] sm:$0xff]
    %v1335 = vld [vmem:[%s5 + $0xa0] sm:$0xff]
    %v1336 = vld [vmem:[%s5 + $0xa8] sm:$0xff]
    %v1337 = vld [vmem:[%s5 + $0xb0] sm:$0xff]
    %v1338 = vld [vmem:[%s5 + $0xb8] sm:$0xff]
    %v1339 = vld [vmem:[%s5 + $0xc0] sm:$0xff]
    %v1340 = vld [vmem:[%s5 + $0xc8] sm:$0xff]
    %v1341 = vld [vmem:[%s5 + $0xd0] sm:$0xff]
    %v1342 = vld [vmem:[%s5 + $0xd8] sm:$0xff]
    %v1343 = vld [vmem:[%s5 + $0xe0] sm:$0xff]
    %v1344 = vld [vmem:[%s5 + $0xe8] sm:$0xff]
    %v1345 = vld [vmem:[%s5 + $0xf0] sm:$0xff]
    %v1346 = vld [vmem:[%s5 + $0xf8] sm:$0xff]
    %v1347 = vld [vmem:[%s5 + $0x100] sm:$0xff]
    %v1348 = vld [vmem:[%s5 + $0x108] sm:$0xff]
    %v1349 = vld [vmem:[%s5 + $0x110] sm:$0xff]
    %v1350 = vld [vmem:[%s5 + $0x118] sm:$0xff]
    %v1351 = vld [vmem:[%s5 + $0x120] sm:$0xff]
    %v1352 = vld [vmem:[%s5 + $0x128] sm:$0xff]
    %v1353 = vld [vmem:[%s5 + $0x130] sm:$0xff]
    %v1354 = vld [vmem:[%s5 + $0x138] sm:$0xff]
    %v1355 = vld [vmem:[%s5 + $0x140] sm:$0xff]
    %v1356 = vld [vmem:[%s5 + $0x148] sm:$0xff]
    %v1357 = vld [vmem:[%s5 + $0x150] sm:$0xff]
    %v1358 = vld [vmem:[%s5 + $0x158] sm:$0xff]
    %v1359 = vld [vmem:[%s5 + $0x160] sm:$0xff]
    %v1360 = vld [vmem:[%s5 + $0x168] sm:$0xff]
    %v1361 = vld [vmem:[%s5 + $0x170] sm:$0xff]
    %v1362 = vld [vmem:[%s5 + $0x178] sm:$0xff]
    %v1363 = vld [vmem:[%s6] sm:$0x3f]
    %v1365 = vlaneseq
    %v1366 = vshrl.u32 %v1365, 7
    %v1367 = vsub.s32 0, %v1366
    %v1368 = vrot.slane %v1363, %v1367
    %v1369 = vlaneseq
    %v1370 = vshrl.u32 %v1369, 7
    %v1371 = vsub.s32 1, %v1370
    %v1372 = vrot.slane %v1363, %v1371
    %v1373 = vlaneseq
    %v1374 = vshrl.u32 %v1373, 7
    %v1375 = vsub.s32 2, %v1374
    %v1376 = vrot.slane %v1363, %v1375
    %v1377 = vlaneseq
    %v1378 = vshrl.u32 %v1377, 7
    %v1379 = vsub.s32 3, %v1378
    %v1380 = vrot.slane %v1363, %v1379
    %v1381 = vlaneseq
    %v1382 = vshrl.u32 %v1381, 7
    %v1383 = vsub.s32 4, %v1382
    %v1384 = vrot.slane %v1363, %v1383
    %v1385 = vlaneseq
    %v1386 = vshrl.u32 %v1385, 7
    %v1387 = vsub.s32 5, %v1386
    %v1388 = vrot.slane %v1363, %v1387
    %v1443 = vunpack.c.l.b16 %v1315
    %v1444 = vunpack.c.h.b16 %v1315
    %v1445 = vunpack.c.l.b16 %v1316
    %v1446 = vunpack.c.h.b16 %v1316
    %v1447 = vunpack.c.l.b16 %v1317
    %v1448 = vunpack.c.h.b16 %v1317
    %v1449 = vunpack.c.l.b16 %v1318
    %v1450 = vunpack.c.h.b16 %v1318
    %v1451 = vunpack.c.l.b16 %v1319
    %v1452 = vunpack.c.h.b16 %v1319
    %v1453 = vunpack.c.l.b16 %v1320
    %v1454 = vunpack.c.h.b16 %v1320
    %v1455 = vunpack.c.l.b16 %v1321
    %v1456 = vunpack.c.h.b16 %v1321
    %v1457 = vunpack.c.l.b16 %v1322
    %v1458 = vunpack.c.h.b16 %v1322
    %v1459 = vunpack.c.l.b16 %v1323
    %v1460 = vunpack.c.h.b16 %v1323
    %v1461 = vunpack.c.l.b16 %v1324
    %v1462 = vunpack.c.h.b16 %v1324
    %v1463 = vunpack.c.l.b16 %v1325
    %v1464 = vunpack.c.h.b16 %v1325
    %v1465 = vunpack.c.l.b16 %v1326
    %v1466 = vunpack.c.h.b16 %v1326
    %v1467 = vunpack.c.l.b16 %v1327
    %v1468 = vunpack.c.h.b16 %v1327
    %v1469 = vunpack.c.l.b16 %v1328
    %v1470 = vunpack.c.h.b16 %v1328
    %v1471 = vunpack.c.l.b16 %v1329
    %v1472 = vunpack.c.h.b16 %v1329
    %v1473 = vunpack.c.l.b16 %v1330
    %v1474 = vunpack.c.h.b16 %v1330
    %v1475 = vunpack.c.l.b16 %v1331
    %v1476 = vunpack.c.h.b16 %v1331
    %v1477 = vunpack.c.l.b16 %v1332
    %v1478 = vunpack.c.h.b16 %v1332
    %v1479 = vunpack.c.l.b16 %v1333
    %v1480 = vunpack.c.h.b16 %v1333
    %v1481 = vunpack.c.l.b16 %v1334
    %v1482 = vunpack.c.h.b16 %v1334
    %v1483 = vunpack.c.l.b16 %v1335
    %v1484 = vunpack.c.h.b16 %v1335
    %v1485 = vunpack.c.l.b16 %v1336
    %v1486 = vunpack.c.h.b16 %v1336
    %v1487 = vunpack.c.l.b16 %v1337
    %v1488 = vunpack.c.h.b16 %v1337
    %v1489 = vunpack.c.l.b16 %v1338
    %v1490 = vunpack.c.h.b16 %v1338
    %v1491 = vunpack.c.l.b16 %v1339
    %v1492 = vunpack.c.h.b16 %v1339
    %v1493 = vunpack.c.l.b16 %v1340
    %v1494 = vunpack.c.h.b16 %v1340
    %v1495 = vunpack.c.l.b16 %v1341
    %v1496 = vunpack.c.h.b16 %v1341
    %v1497 = vunpack.c.l.b16 %v1342
    %v1498 = vunpack.c.h.b16 %v1342
    %v1499 = vunpack.c.l.b16 %v1343
    %v1500 = vunpack.c.h.b16 %v1343
    %v1501 = vunpack.c.l.b16 %v1344
    %v1502 = vunpack.c.h.b16 %v1344
    %v1503 = vunpack.c.l.b16 %v1345
    %v1504 = vunpack.c.h.b16 %v1345
    %v1505 = vunpack.c.l.b16 %v1346
    %v1506 = vunpack.c.h.b16 %v1346
    %v1507 = vunpack.c.l.b16 %v1347
    %v1508 = vunpack.c.h.b16 %v1347
    %v1509 = vunpack.c.l.b16 %v1348
    %v1510 = vunpack.c.h.b16 %v1348
    %v1511 = vunpack.c.l.b16 %v1349
    %v1512 = vunpack.c.h.b16 %v1349
    %v1513 = vunpack.c.l.b16 %v1350
    %v1514 = vunpack.c.h.b16 %v1350
    %v1515 = vunpack.c.l.b16 %v1351
    %v1516 = vunpack.c.h.b16 %v1351
    %v1517 = vunpack.c.l.b16 %v1352
    %v1518 = vunpack.c.h.b16 %v1352
    %v1519 = vunpack.c.l.b16 %v1353
    %v1520 = vunpack.c.h.b16 %v1353
    %v1521 = vunpack.c.l.b16 %v1354
    %v1522 = vunpack.c.h.b16 %v1354
    %v1523 = vunpack.c.l.b16 %v1355
    %v1524 = vunpack.c.h.b16 %v1355
    %v1525 = vunpack.c.l.b16 %v1356
    %v1526 = vunpack.c.h.b16 %v1356
    %v1527 = vunpack.c.l.b16 %v1357
    %v1528 = vunpack.c.h.b16 %v1357
    %v1529 = vunpack.c.l.b16 %v1358
    %v1530 = vunpack.c.h.b16 %v1358
    %v1531 = vunpack.c.l.b16 %v1359
    %v1532 = vunpack.c.h.b16 %v1359
    %v1533 = vunpack.c.l.b16 %v1360
    %v1534 = vunpack.c.h.b16 %v1360
    %v1535 = vunpack.c.l.b16 %v1361
    %v1536 = vunpack.c.h.b16 %v1361
    %v1537 = vunpack.c.l.b16 %v1362
    %v1538 = vunpack.c.h.b16 %v1362
    %v1539 = vpack.c.b16 %v1449, %v1443
    %v1540 = vpack.c.b16 %v1450, %v1444
    %v1541 = vpack.c.b16 %v1451, %v1445
    %v1542 = vpack.c.b16 %v1452, %v1446
    %v1543 = vpack.c.b16 %v1453, %v1447
    %v1544 = vpack.c.b16 %v1454, %v1448
    %v1545 = vpack.c.b16 %v1461, %v1455
    %v1546 = vpack.c.b16 %v1462, %v1456
    %v1547 = vpack.c.b16 %v1463, %v1457
    %v1548 = vpack.c.b16 %v1464, %v1458
    %v1549 = vpack.c.b16 %v1465, %v1459
    %v1550 = vpack.c.b16 %v1466, %v1460
    %v1551 = vpack.c.b16 %v1473, %v1467
    %v1552 = vpack.c.b16 %v1474, %v1468
    %v1553 = vpack.c.b16 %v1475, %v1469
    %v1554 = vpack.c.b16 %v1476, %v1470
    %v1555 = vpack.c.b16 %v1477, %v1471
    %v1556 = vpack.c.b16 %v1478, %v1472
    %v1557 = vpack.c.b16 %v1485, %v1479
    %v1558 = vpack.c.b16 %v1486, %v1480
    %v1559 = vpack.c.b16 %v1487, %v1481
    %v1560 = vpack.c.b16 %v1488, %v1482
    %v1561 = vpack.c.b16 %v1489, %v1483
    %v1562 = vpack.c.b16 %v1490, %v1484
    %v1563 = vpack.c.b16 %v1497, %v1491
    %v1564 = vpack.c.b16 %v1498, %v1492
    %v1565 = vpack.c.b16 %v1499, %v1493
    %v1566 = vpack.c.b16 %v1500, %v1494
    %v1567 = vpack.c.b16 %v1501, %v1495
    %v1568 = vpack.c.b16 %v1502, %v1496
    %v1569 = vpack.c.b16 %v1509, %v1503
    %v1570 = vpack.c.b16 %v1510, %v1504
    %v1571 = vpack.c.b16 %v1511, %v1505
    %v1572 = vpack.c.b16 %v1512, %v1506
    %v1573 = vpack.c.b16 %v1513, %v1507
    %v1574 = vpack.c.b16 %v1514, %v1508
    %v1575 = vpack.c.b16 %v1521, %v1515
    %v1576 = vpack.c.b16 %v1522, %v1516
    %v1577 = vpack.c.b16 %v1523, %v1517
    %v1578 = vpack.c.b16 %v1524, %v1518
    %v1579 = vpack.c.b16 %v1525, %v1519
    %v1580 = vpack.c.b16 %v1526, %v1520
    %v1581 = vpack.c.b16 %v1533, %v1527
    %v1582 = vpack.c.b16 %v1534, %v1528
    %v1583 = vpack.c.b16 %v1535, %v1529
    %v1584 = vpack.c.b16 %v1536, %v1530
    %v1585 = vpack.c.b16 %v1537, %v1531
    %v1586 = vpack.c.b16 %v1538, %v1532
    %1635 = vmatprep.subr.bf16.mxu0 %v1582
    %1636 = vmatpush1.bf16.msra.mxu0 %v1581
    %1637 = vmatprep.subr.bf16.mxu0 %v1576
    %1638 = vmatpush1.bf16.msra.mxu0 %v1575
    %1639 = vmatprep.subr.bf16.mxu0 %v1570
    %1640 = vmatpush1.bf16.msra.mxu0 %v1569
    %1641 = vmatprep.subr.bf16.mxu0 %v1564
    %1642 = vmatpush1.bf16.msra.mxu0 %v1563
    %1643 = vmatprep.subr.bf16.mxu0 %v1558
    %1644 = vmatpush1.bf16.msra.mxu0 %v1557
    %1645 = vmatprep.subr.bf16.mxu0 %v1552
    %1646 = vmatpush1.bf16.msra.mxu0 %v1551
    %1647 = vmatprep.subr.bf16.mxu0 %v1546
    %1648 = vmatpush1.bf16.msra.mxu0 %v1545
    %1649 = vmatprep.subr.bf16.mxu0 %v1540
    %1650 = vmatpush1.bf16.msra.mxu0 %v1539
    %1651 = vmatprep.subr.bf16.mxu0 0
    %1652 = vmatpush2.bf16.msra.mxu0 0
    %1653 = vmatprep.subr.bf16.mxu0 0
    %1654 = vmatpush2.bf16.msra.mxu0 0
    %1655 = vmatprep.subr.bf16.mxu0 0
    %1656 = vmatpush2.bf16.msra.mxu0 0
    %1657 = vmatprep.subr.bf16.mxu0 0
    %1658 = vmatpush2.bf16.msra.mxu0 0
    %1659 = vmatprep.subr.bf16.mxu0 0
    %1660 = vmatpush2.bf16.msra.mxu0 0
    %1661 = vmatprep.subr.bf16.mxu0 0
    %1662 = vmatpush2.bf16.msra.mxu0 0
    %1663 = vmatprep.subr.bf16.mxu0 0
    %1664 = vmatpush2.bf16.msra.mxu0 0
    %1665 = vmatprep.subr.bf16.mxu0 0
    %1666 = vmatpush2.bf16.msra.mxu0 0
    %1667 = vmatprep.mubr.bf16.mxu0 0
    %1668 = vmatmul.mubr.bf16.gmra.mxu0 %v1314
    %v1669 = vpop.f32.mrf.mxu0
    %v1670 = vadd.f32 %v1368, %v1669
    %v1671 = vpop.f32.mrf.mxu0
    %v1672 = vadd.f32 %v1372, %v1671
    %v1673 = vpop.f32.mrf.mxu0
    %v1674 = vpop.f32.mrf.mxu0
    %1675 = vdwg.mxu0
    %1676 = vmatprep.subr.bf16.mxu0 %v1584
    %1677 = vmatpush1.bf16.msra.mxu0 %v1583
    %1678 = vmatprep.subr.bf16.mxu0 %v1578
    %1679 = vmatpush1.bf16.msra.mxu0 %v1577
    %1680 = vmatprep.subr.bf16.mxu0 %v1572
    %1681 = vmatpush1.bf16.msra.mxu0 %v1571
    %1682 = vmatprep.subr.bf16.mxu0 %v1566
    %1683 = vmatpush1.bf16.msra.mxu0 %v1565
    %1684 = vmatprep.subr.bf16.mxu0 %v1560
    %1685 = vmatpush1.bf16.msra.mxu0 %v1559
    %1686 = vmatprep.subr.bf16.mxu0 %v1554
    %1687 = vmatpush1.bf16.msra.mxu0 %v1553
    %1688 = vmatprep.subr.bf16.mxu0 %v1548
    %1689 = vmatpush1.bf16.msra.mxu0 %v1547
    %1690 = vmatprep.subr.bf16.mxu0 %v1542
    %1691 = vmatpush1.bf16.msra.mxu0 %v1541
    %1692 = vmatprep.subr.bf16.mxu0 0
    %1693 = vmatpush2.bf16.msra.mxu0 0
    %1694 = vmatprep.subr.bf16.mxu0 0
    %1695 = vmatpush2.bf16.msra.mxu0 0
    %1696 = vmatprep.subr.bf16.mxu0 0
    %1697 = vmatpush2.bf16.msra.mxu0 0
    %1698 = vmatprep.subr.bf16.mxu0 0
    %1699 = vmatpush2.bf16.msra.mxu0 0
    %1700 = vmatprep.subr.bf16.mxu0 0
    %1701 = vmatpush2.bf16.msra.mxu0 0
    %1702 = vmatprep.subr.bf16.mxu0 0
    %1703 = vmatpush2.bf16.msra.mxu0 0
    %1704 = vmatprep.subr.bf16.mxu0 0
    %1705 = vmatpush2.bf16.msra.mxu0 0
    %1706 = vmatprep.subr.bf16.mxu0 0
    %1707 = vmatpush2.bf16.msra.mxu0 0
    %1708 = vmatprep.mubr.bf16.mxu0 0
    %1709 = vmatmul.mubr.bf16.gmra.mxu0 %v1314
    %v1710 = vpop.f32.mrf.mxu0
    %v1711 = vadd.f32 %v1376, %v1710
    %v1712 = vpop.f32.mrf.mxu0
    %v1713 = vadd.f32 %v1380, %v1712
    %v1714 = vpop.f32.mrf.mxu0
    %v1715 = vpop.f32.mrf.mxu0
    %1716 = vdwg.mxu0
    %1717 = vmatprep.subr.bf16.mxu0 %v1586
    %1718 = vmatpush1.bf16.msra.mxu0 %v1585
    %1719 = vmatprep.subr.bf16.mxu0 %v1580
    %1720 = vmatpush1.bf16.msra.mxu0 %v1579
    %1721 = vmatprep.subr.bf16.mxu0 %v1574
    %1722 = vmatpush1.bf16.msra.mxu0 %v1573
    %1723 = vmatprep.subr.bf16.mxu0 %v1568
    %1724 = vmatpush1.bf16.msra.mxu0 %v1567
    %1725 = vmatprep.subr.bf16.mxu0 %v1562
    %1726 = vmatpush1.bf16.msra.mxu0 %v1561
    %1727 = vmatprep.subr.bf16.mxu0 %v1556
    %1728 = vmatpush1.bf16.msra.mxu0 %v1555
    %1729 = vmatprep.subr.bf16.mxu0 %v1550
    %1730 = vmatpush1.bf16.msra.mxu0 %v1549
    %1731 = vmatprep.subr.bf16.mxu0 %v1544
    %1732 = vmatpush1.bf16.msra.mxu0 %v1543
    %1733 = vmatprep.subr.bf16.mxu0 0
    %1734 = vmatpush2.bf16.msra.mxu0 0
    %1735 = vmatprep.subr.bf16.mxu0 0
    %1736 = vmatpush2.bf16.msra.mxu0 0
    %1737 = vmatprep.subr.bf16.mxu0 0
    %1738 = vmatpush2.bf16.msra.mxu0 0
    %1739 = vmatprep.subr.bf16.mxu0 0
    %1740 = vmatpush2.bf16.msra.mxu0 0
    %1741 = vmatprep.subr.bf16.mxu0 0
    %1742 = vmatpush2.bf16.msra.mxu0 0
    %1743 = vmatprep.subr.bf16.mxu0 0
    %1744 = vmatpush2.bf16.msra.mxu0 0
    %1745 = vmatprep.subr.bf16.mxu0 0
    %1746 = vmatpush2.bf16.msra.mxu0 0
    %1747 = vmatprep.subr.bf16.mxu0 0
    %1748 = vmatpush2.bf16.msra.mxu0 0
    %1749 = vmatprep.mubr.bf16.mxu0 0
    %1750 = vmatmul.mubr.bf16.gmra.mxu0 %v1314
    %v1751 = vpop.f32.mrf.mxu0
    %v1752 = vadd.f32 %v1384, %v1751
    %v1753 = vpop.f32.mrf.mxu0
    %v1754 = vadd.f32 %v1388, %v1753
    %v1755 = vpop.f32.mrf.mxu0
    %v1756 = vpop.f32.mrf.mxu0
    %1757 = vdwg.mxu0
    %v1758 = vld [vmem:[%s7] sm:$0xff]
    %v1759 = vld [vmem:[%s7 + $0x8] sm:$0xff]
    %v1760 = vld [vmem:[%s7 + $0x10] sm:$0xff]
    %v1761 = vld [vmem:[%s7 + $0x18] sm:$0xff]
    %v1762 = vld [vmem:[%s7 + $0x20] sm:$0xff]
    %v1763 = vld [vmem:[%s7 + $0x28] sm:$0xff]
    %v1764 = vld [vmem:[%s7 + $0x30] sm:$0xff]
    %v1765 = vld [vmem:[%s7 + $0x38] sm:$0xff]
    %v1766 = vld [vmem:[%s7 + $0x40] sm:$0xff]
    %v1767 = vld [vmem:[%s7 + $0x48] sm:$0xff]
    %v1768 = vld [vmem:[%s7 + $0x50] sm:$0xff]
    %v1769 = vld [vmem:[%s7 + $0x58] sm:$0xff]
    %v1770 = vld [vmem:[%s7 + $0x60] sm:$0xff]
    %v1771 = vld [vmem:[%s7 + $0x68] sm:$0xff]
    %v1772 = vld [vmem:[%s7 + $0x70] sm:$0xff]
    %v1773 = vld [vmem:[%s7 + $0x78] sm:$0xff]
    %v1774 = vld [vmem:[%s7 + $0x80] sm:$0xff]
    %v1775 = vld [vmem:[%s7 + $0x88] sm:$0xff]
    %v1776 = vld [vmem:[%s7 + $0x90] sm:$0xff]
    %v1777 = vld [vmem:[%s7 + $0x98] sm:$0xff]
    %v1778 = vld [vmem:[%s7 + $0xa0] sm:$0xff]
    %v1779 = vld [vmem:[%s7 + $0xa8] sm:$0xff]
    %v1780 = vld [vmem:[%s7 + $0xb0] sm:$0xff]
    %v1781 = vld [vmem:[%s7 + $0xb8] sm:$0xff]
    %v1782 = vld [vmem:[%s7 + $0xc0] sm:$0xff]
    %v1783 = vld [vmem:[%s7 + $0xc8] sm:$0xff]
    %v1784 = vld [vmem:[%s7 + $0xd0] sm:$0xff]
    %v1785 = vld [vmem:[%s7 + $0xd8] sm:$0xff]
    %v1786 = vld [vmem:[%s7 + $0xe0] sm:$0xff]
    %v1787 = vld [vmem:[%s7 + $0xe8] sm:$0xff]
    %v1788 = vld [vmem:[%s7 + $0xf0] sm:$0xff]
    %v1789 = vld [vmem:[%s7 + $0xf8] sm:$0xff]
    %v1790 = vld [vmem:[%s7 + $0x100] sm:$0xff]
    %v1791 = vld [vmem:[%s7 + $0x108] sm:$0xff]
    %v1792 = vld [vmem:[%s7 + $0x110] sm:$0xff]
    %v1793 = vld [vmem:[%s7 + $0x118] sm:$0xff]
    %v1794 = vld [vmem:[%s7 + $0x120] sm:$0xff]
    %v1795 = vld [vmem:[%s7 + $0x128] sm:$0xff]
    %v1796 = vld [vmem:[%s7 + $0x130] sm:$0xff]
    %v1797 = vld [vmem:[%s7 + $0x138] sm:$0xff]
    %v1798 = vld [vmem:[%s7 + $0x140] sm:$0xff]
    %v1799 = vld [vmem:[%s7 + $0x148] sm:$0xff]
    %v1800 = vld [vmem:[%s7 + $0x150] sm:$0xff]
    %v1801 = vld [vmem:[%s7 + $0x158] sm:$0xff]
    %v1802 = vld [vmem:[%s7 + $0x160] sm:$0xff]
    %v1803 = vld [vmem:[%s7 + $0x168] sm:$0xff]
    %v1804 = vld [vmem:[%s7 + $0x170] sm:$0xff]
    %v1805 = vld [vmem:[%s7 + $0x178] sm:$0xff]
    %v1806 = vld [vmem:[%s7 + $0x180] sm:$0xff]
    %v1807 = vld [vmem:[%s7 + $0x188] sm:$0xff]
    %v1808 = vld [vmem:[%s7 + $0x190] sm:$0xff]
    %v1809 = vld [vmem:[%s7 + $0x198] sm:$0xff]
    %v1810 = vld [vmem:[%s7 + $0x1a0] sm:$0xff]
    %v1811 = vld [vmem:[%s7 + $0x1a8] sm:$0xff]
    %v1812 = vld [vmem:[%s7 + $0x1b0] sm:$0xff]
    %v1813 = vld [vmem:[%s7 + $0x1b8] sm:$0xff]
    %v1814 = vld [vmem:[%s7 + $0x1c0] sm:$0xff]
    %v1815 = vld [vmem:[%s7 + $0x1c8] sm:$0xff]
    %v1816 = vld [vmem:[%s7 + $0x1d0] sm:$0xff]
    %v1817 = vld [vmem:[%s7 + $0x1d8] sm:$0xff]
    %v1818 = vld [vmem:[%s7 + $0x1e0] sm:$0xff]
    %v1819 = vld [vmem:[%s7 + $0x1e8] sm:$0xff]
    %v1820 = vld [vmem:[%s7 + $0x1f0] sm:$0xff]
    %v1821 = vld [vmem:[%s7 + $0x1f8] sm:$0xff]
    %v1822 = vld [vmem:[%s7 + $0x200] sm:$0xff]
    %v1823 = vld [vmem:[%s7 + $0x208] sm:$0xff]
    %v1824 = vld [vmem:[%s7 + $0x210] sm:$0xff]
    %v1825 = vld [vmem:[%s7 + $0x218] sm:$0xff]
    %v1826 = vld [vmem:[%s7 + $0x220] sm:$0xff]
    %v1827 = vld [vmem:[%s7 + $0x228] sm:$0xff]
    %v1828 = vld [vmem:[%s7 + $0x230] sm:$0xff]
    %v1829 = vld [vmem:[%s7 + $0x238] sm:$0xff]
    %v1830 = vld [vmem:[%s7 + $0x240] sm:$0xff]
    %v1831 = vld [vmem:[%s7 + $0x248] sm:$0xff]
    %v1832 = vld [vmem:[%s7 + $0x250] sm:$0xff]
    %v1833 = vld [vmem:[%s7 + $0x258] sm:$0xff]
    %v1834 = vld [vmem:[%s7 + $0x260] sm:$0xff]
    %v1835 = vld [vmem:[%s7 + $0x268] sm:$0xff]
    %v1836 = vld [vmem:[%s7 + $0x270] sm:$0xff]
    %v1837 = vld [vmem:[%s7 + $0x278] sm:$0xff]
    %v1838 = vld [vmem:[%s7 + $0x280] sm:$0xff]
    %v1839 = vld [vmem:[%s7 + $0x288] sm:$0xff]
    %v1840 = vld [vmem:[%s7 + $0x290] sm:$0xff]
    %v1841 = vld [vmem:[%s7 + $0x298] sm:$0xff]
    %v1842 = vld [vmem:[%s7 + $0x2a0] sm:$0xff]
    %v1843 = vld [vmem:[%s7 + $0x2a8] sm:$0xff]
    %v1844 = vld [vmem:[%s7 + $0x2b0] sm:$0xff]
    %v1845 = vld [vmem:[%s7 + $0x2b8] sm:$0xff]
    %v1846 = vld [vmem:[%s7 + $0x2c0] sm:$0xff]
    %v1847 = vld [vmem:[%s7 + $0x2c8] sm:$0xff]
    %v1848 = vld [vmem:[%s7 + $0x2d0] sm:$0xff]
    %v1849 = vld [vmem:[%s7 + $0x2d8] sm:$0xff]
    %v1850 = vld [vmem:[%s7 + $0x2e0] sm:$0xff]
    %v1851 = vld [vmem:[%s7 + $0x2e8] sm:$0xff]
    %v1852 = vld [vmem:[%s7 + $0x2f0] sm:$0xff]
    %v1853 = vld [vmem:[%s7 + $0x2f8] sm:$0xff]
    %v1854 = vld [vmem:[%s8] sm:$0x3]
    %v1855 = vld [vmem:[%s9] sm:$0xf]
    %v1858 = vunpack.c.l.s4 1983009808
    %v1859 = vunpack.c.0.s8 %v1858
    %v1860 = vlaneseq
    %v1861 = vshrl.u32 %v1860, 7
    %v1862 = vsub.s32 %v1859, %v1861
    %v1863 = vrot.slane %v1855, %v1862
    %v1864 = vcombine.high %v1863, %v1863
    %v1867 = vpack.c.bf16 %v1863, %v1863
    %v1868 = vpack.c.bf16 %v1864, %v1864
    %v1965 = vunpack.c.l.b16 %v1758
    %v1966 = vunpack.c.h.b16 %v1758
    %v1967 = vunpack.c.l.b16 %v1759
    %v1968 = vunpack.c.h.b16 %v1759
    %v1969 = vunpack.c.l.b16 %v1760
    %v1970 = vunpack.c.h.b16 %v1760
    %v1971 = vunpack.c.l.b16 %v1761
    %v1972 = vunpack.c.h.b16 %v1761
    %v1973 = vunpack.c.l.b16 %v1762
    %v1974 = vunpack.c.h.b16 %v1762
    %v1975 = vunpack.c.l.b16 %v1763
    %v1976 = vunpack.c.h.b16 %v1763
    %v1977 = vunpack.c.l.b16 %v1764
    %v1978 = vunpack.c.h.b16 %v1764
    %v1979 = vunpack.c.l.b16 %v1765
    %v1980 = vunpack.c.h.b16 %v1765
    %v1981 = vunpack.c.l.b16 %v1766
    %v1982 = vunpack.c.h.b16 %v1766
    %v1983 = vunpack.c.l.b16 %v1767
    %v1984 = vunpack.c.h.b16 %v1767
    %v1985 = vunpack.c.l.b16 %v1768
    %v1986 = vunpack.c.h.b16 %v1768
    %v1987 = vunpack.c.l.b16 %v1769
    %v1988 = vunpack.c.h.b16 %v1769
    %v1989 = vunpack.c.l.b16 %v1770
    %v1990 = vunpack.c.h.b16 %v1770
    %v1991 = vunpack.c.l.b16 %v1771
    %v1992 = vunpack.c.h.b16 %v1771
    %v1993 = vunpack.c.l.b16 %v1772
    %v1994 = vunpack.c.h.b16 %v1772
    %v1995 = vunpack.c.l.b16 %v1773
    %v1996 = vunpack.c.h.b16 %v1773
    %v1997 = vunpack.c.l.b16 %v1774
    %v1998 = vunpack.c.h.b16 %v1774
    %v1999 = vunpack.c.l.b16 %v1775
    %v2000 = vunpack.c.h.b16 %v1775
    %v2001 = vunpack.c.l.b16 %v1776
    %v2002 = vunpack.c.h.b16 %v1776
    %v2003 = vunpack.c.l.b16 %v1777
    %v2004 = vunpack.c.h.b16 %v1777
    %v2005 = vunpack.c.l.b16 %v1778
    %v2006 = vunpack.c.h.b16 %v1778
    %v2007 = vunpack.c.l.b16 %v1779
    %v2008 = vunpack.c.h.b16 %v1779
    %v2009 = vunpack.c.l.b16 %v1780
    %v2010 = vunpack.c.h.b16 %v1780
    %v2011 = vunpack.c.l.b16 %v1781
    %v2012 = vunpack.c.h.b16 %v1781
    %v2013 = vunpack.c.l.b16 %v1782
    %v2014 = vunpack.c.h.b16 %v1782
    %v2015 = vunpack.c.l.b16 %v1783
    %v2016 = vunpack.c.h.b16 %v1783
    %v2017 = vunpack.c.l.b16 %v1784
    %v2018 = vunpack.c.h.b16 %v1784
    %v2019 = vunpack.c.l.b16 %v1785
    %v2020 = vunpack.c.h.b16 %v1785
    %v2021 = vunpack.c.l.b16 %v1786
    %v2022 = vunpack.c.h.b16 %v1786
    %v2023 = vunpack.c.l.b16 %v1787
    %v2024 = vunpack.c.h.b16 %v1787
    %v2025 = vunpack.c.l.b16 %v1788
    %v2026 = vunpack.c.h.b16 %v1788
    %v2027 = vunpack.c.l.b16 %v1789
    %v2028 = vunpack.c.h.b16 %v1789
    %v2029 = vunpack.c.l.b16 %v1790
    %v2030 = vunpack.c.h.b16 %v1790
    %v2031 = vunpack.c.l.b16 %v1791
    %v2032 = vunpack.c.h.b16 %v1791
    %v2033 = vunpack.c.l.b16 %v1792
    %v2034 = vunpack.c.h.b16 %v1792
    %v2035 = vunpack.c.l.b16 %v1793
    %v2036 = vunpack.c.h.b16 %v1793
    %v2037 = vunpack.c.l.b16 %v1794
    %v2038 = vunpack.c.h.b16 %v1794
    %v2039 = vunpack.c.l.b16 %v1795
    %v2040 = vunpack.c.h.b16 %v1795
    %v2041 = vunpack.c.l.b16 %v1796
    %v2042 = vunpack.c.h.b16 %v1796
    %v2043 = vunpack.c.l.b16 %v1797
    %v2044 = vunpack.c.h.b16 %v1797
    %v2045 = vunpack.c.l.b16 %v1798
    %v2046 = vunpack.c.h.b16 %v1798
    %v2047 = vunpack.c.l.b16 %v1799
    %v2048 = vunpack.c.h.b16 %v1799
    %v2049 = vunpack.c.l.b16 %v1800
    %v2050 = vunpack.c.h.b16 %v1800
    %v2051 = vunpack.c.l.b16 %v1801
    %v2052 = vunpack.c.h.b16 %v1801
    %v2053 = vunpack.c.l.b16 %v1802
    %v2054 = vunpack.c.h.b16 %v1802
    %v2055 = vunpack.c.l.b16 %v1803
    %v2056 = vunpack.c.h.b16 %v1803
    %v2057 = vunpack.c.l.b16 %v1804
    %v2058 = vunpack.c.h.b16 %v1804
    %v2059 = vunpack.c.l.b16 %v1805
    %v2060 = vunpack.c.h.b16 %v1805
    %v2061 = vunpack.c.l.b16 %v1806
    %v2062 = vunpack.c.h.b16 %v1806
    %v2063 = vunpack.c.l.b16 %v1807
    %v2064 = vunpack.c.h.b16 %v1807
    %v2065 = vunpack.c.l.b16 %v1808
    %v2066 = vunpack.c.h.b16 %v1808
    %v2067 = vunpack.c.l.b16 %v1809
    %v2068 = vunpack.c.h.b16 %v1809
    %v2069 = vunpack.c.l.b16 %v1810
    %v2070 = vunpack.c.h.b16 %v1810
    %v2071 = vunpack.c.l.b16 %v1811
    %v2072 = vunpack.c.h.b16 %v1811
    %v2073 = vunpack.c.l.b16 %v1812
    %v2074 = vunpack.c.h.b16 %v1812
    %v2075 = vunpack.c.l.b16 %v1813
    %v2076 = vunpack.c.h.b16 %v1813
    %v2077 = vunpack.c.l.b16 %v1814
    %v2078 = vunpack.c.h.b16 %v1814
    %v2079 = vunpack.c.l.b16 %v1815
    %v2080 = vunpack.c.h.b16 %v1815
    %v2081 = vunpack.c.l.b16 %v1816
    %v2082 = vunpack.c.h.b16 %v1816
    %v2083 = vunpack.c.l.b16 %v1817
    %v2084 = vunpack.c.h.b16 %v1817
    %v2085 = vunpack.c.l.b16 %v1818
    %v2086 = vunpack.c.h.b16 %v1818
    %v2087 = vunpack.c.l.b16 %v1819
    %v2088 = vunpack.c.h.b16 %v1819
    %v2089 = vunpack.c.l.b16 %v1820
    %v2090 = vunpack.c.h.b16 %v1820
    %v2091 = vunpack.c.l.b16 %v1821
    %v2092 = vunpack.c.h.b16 %v1821
    %v2093 = vunpack.c.l.b16 %v1822
    %v2094 = vunpack.c.h.b16 %v1822
    %v2095 = vunpack.c.l.b16 %v1823
    %v2096 = vunpack.c.h.b16 %v1823
    %v2097 = vunpack.c.l.b16 %v1824
    %v2098 = vunpack.c.h.b16 %v1824
    %v2099 = vunpack.c.l.b16 %v1825
    %v2100 = vunpack.c.h.b16 %v1825
    %v2101 = vunpack.c.l.b16 %v1826
    %v2102 = vunpack.c.h.b16 %v1826
    %v2103 = vunpack.c.l.b16 %v1827
    %v2104 = vunpack.c.h.b16 %v1827
    %v2105 = vunpack.c.l.b16 %v1828
    %v2106 = vunpack.c.h.b16 %v1828
    %v2107 = vunpack.c.l.b16 %v1829
    %v2108 = vunpack.c.h.b16 %v1829
    %v2109 = vunpack.c.l.b16 %v1830
    %v2110 = vunpack.c.h.b16 %v1830
    %v2111 = vunpack.c.l.b16 %v1831
    %v2112 = vunpack.c.h.b16 %v1831
    %v2113 = vunpack.c.l.b16 %v1832
    %v2114 = vunpack.c.h.b16 %v1832
    %v2115 = vunpack.c.l.b16 %v1833
    %v2116 = vunpack.c.h.b16 %v1833
    %v2117 = vunpack.c.l.b16 %v1834
    %v2118 = vunpack.c.h.b16 %v1834
    %v2119 = vunpack.c.l.b16 %v1835
    %v2120 = vunpack.c.h.b16 %v1835
    %v2121 = vunpack.c.l.b16 %v1836
    %v2122 = vunpack.c.h.b16 %v1836
    %v2123 = vunpack.c.l.b16 %v1837
    %v2124 = vunpack.c.h.b16 %v1837
    %v2125 = vunpack.c.l.b16 %v1838
    %v2126 = vunpack.c.h.b16 %v1838
    %v2127 = vunpack.c.l.b16 %v1839
    %v2128 = vunpack.c.h.b16 %v1839
    %v2129 = vunpack.c.l.b16 %v1840
    %v2130 = vunpack.c.h.b16 %v1840
    %v2131 = vunpack.c.l.b16 %v1841
    %v2132 = vunpack.c.h.b16 %v1841
    %v2133 = vunpack.c.l.b16 %v1842
    %v2134 = vunpack.c.h.b16 %v1842
    %v2135 = vunpack.c.l.b16 %v1843
    %v2136 = vunpack.c.h.b16 %v1843
    %v2137 = vunpack.c.l.b16 %v1844
    %v2138 = vunpack.c.h.b16 %v1844
    %v2139 = vunpack.c.l.b16 %v1845
    %v2140 = vunpack.c.h.b16 %v1845
    %v2141 = vunpack.c.l.b16 %v1846
    %v2142 = vunpack.c.h.b16 %v1846
    %v2143 = vunpack.c.l.b16 %v1847
    %v2144 = vunpack.c.h.b16 %v1847
    %v2145 = vunpack.c.l.b16 %v1848
    %v2146 = vunpack.c.h.b16 %v1848
    %v2147 = vunpack.c.l.b16 %v1849
    %v2148 = vunpack.c.h.b16 %v1849
    %v2149 = vunpack.c.l.b16 %v1850
    %v2150 = vunpack.c.h.b16 %v1850
    %v2151 = vunpack.c.l.b16 %v1851
    %v2152 = vunpack.c.h.b16 %v1851
    %v2153 = vunpack.c.l.b16 %v1852
    %v2154 = vunpack.c.h.b16 %v1852
    %v2155 = vunpack.c.l.b16 %v1853
    %v2156 = vunpack.c.h.b16 %v1853
    %v2157 = vpack.c.b16 %v1971, %v1965
    %v2158 = vpack.c.b16 %v1972, %v1966
    %v2159 = vpack.c.b16 %v1973, %v1967
    %v2160 = vpack.c.b16 %v1974, %v1968
    %v2161 = vpack.c.b16 %v1975, %v1969
    %v2162 = vpack.c.b16 %v1976, %v1970
    %v2163 = vpack.c.b16 %v1983, %v1977
    %v2164 = vpack.c.b16 %v1984, %v1978
    %v2165 = vpack.c.b16 %v1985, %v1979
    %v2166 = vpack.c.b16 %v1986, %v1980
    %v2167 = vpack.c.b16 %v1987, %v1981
    %v2168 = vpack.c.b16 %v1988, %v1982
    %v2169 = vpack.c.b16 %v1995, %v1989
    %v2170 = vpack.c.b16 %v1996, %v1990
    %v2171 = vpack.c.b16 %v1997, %v1991
    %v2172 = vpack.c.b16 %v1998, %v1992
    %v2173 = vpack.c.b16 %v1999, %v1993
    %v2174 = vpack.c.b16 %v2000, %v1994
    %v2175 = vpack.c.b16 %v2007, %v2001
    %v2176 = vpack.c.b16 %v2008, %v2002
    %v2177 = vpack.c.b16 %v2009, %v2003
    %v2178 = vpack.c.b16 %v2010, %v2004
    %v2179 = vpack.c.b16 %v2011, %v2005
    %v2180 = vpack.c.b16 %v2012, %v2006
    %v2181 = vpack.c.b16 %v2019, %v2013
    %v2182 = vpack.c.b16 %v2020, %v2014
    %v2183 = vpack.c.b16 %v2021, %v2015
    %v2184 = vpack.c.b16 %v2022, %v2016
    %v2185 = vpack.c.b16 %v2023, %v2017
    %v2186 = vpack.c.b16 %v2024, %v2018
    %v2187 = vpack.c.b16 %v2031, %v2025
    %v2188 = vpack.c.b16 %v2032, %v2026
    %v2189 = vpack.c.b16 %v2033, %v2027
    %v2190 = vpack.c.b16 %v2034, %v2028
    %v2191 = vpack.c.b16 %v2035, %v2029
    %v2192 = vpack.c.b16 %v2036, %v2030
    %v2193 = vpack.c.b16 %v2043, %v2037
    %v2194 = vpack.c.b16 %v2044, %v2038
    %v2195 = vpack.c.b16 %v2045, %v2039
    %v2196 = vpack.c.b16 %v2046, %v2040
    %v2197 = vpack.c.b16 %v2047, %v2041
    %v2198 = vpack.c.b16 %v2048, %v2042
    %v2199 = vpack.c.b16 %v2055, %v2049
    %v2200 = vpack.c.b16 %v2056, %v2050
    %v2201 = vpack.c.b16 %v2057, %v2051
    %v2202 = vpack.c.b16 %v2058, %v2052
    %v2203 = vpack.c.b16 %v2059, %v2053
    %v2204 = vpack.c.b16 %v2060, %v2054
    %v2205 = vpack.c.b16 %v2067, %v2061
    %v2206 = vpack.c.b16 %v2068, %v2062
    %v2207 = vpack.c.b16 %v2069, %v2063
    %v2208 = vpack.c.b16 %v2070, %v2064
    %v2209 = vpack.c.b16 %v2071, %v2065
    %v2210 = vpack.c.b16 %v2072, %v2066
    %v2211 = vpack.c.b16 %v2079, %v2073
    %v2212 = vpack.c.b16 %v2080, %v2074
    %v2213 = vpack.c.b16 %v2081, %v2075
    %v2214 = vpack.c.b16 %v2082, %v2076
    %v2215 = vpack.c.b16 %v2083, %v2077
    %v2216 = vpack.c.b16 %v2084, %v2078
    %v2217 = vpack.c.b16 %v2091, %v2085
    %v2218 = vpack.c.b16 %v2092, %v2086
    %v2219 = vpack.c.b16 %v2093, %v2087
    %v2220 = vpack.c.b16 %v2094, %v2088
    %v2221 = vpack.c.b16 %v2095, %v2089
    %v2222 = vpack.c.b16 %v2096, %v2090
    %v2223 = vpack.c.b16 %v2103, %v2097
    %v2224 = vpack.c.b16 %v2104, %v2098
    %v2225 = vpack.c.b16 %v2105, %v2099
    %v2226 = vpack.c.b16 %v2106, %v2100
    %v2227 = vpack.c.b16 %v2107, %v2101
    %v2228 = vpack.c.b16 %v2108, %v2102
    %v2229 = vpack.c.b16 %v2115, %v2109
    %v2230 = vpack.c.b16 %v2116, %v2110
    %v2231 = vpack.c.b16 %v2117, %v2111
    %v2232 = vpack.c.b16 %v2118, %v2112
    %v2233 = vpack.c.b16 %v2119, %v2113
    %v2234 = vpack.c.b16 %v2120, %v2114
    %v2235 = vpack.c.b16 %v2127, %v2121
    %v2236 = vpack.c.b16 %v2128, %v2122
    %v2237 = vpack.c.b16 %v2129, %v2123
    %v2238 = vpack.c.b16 %v2130, %v2124
    %v2239 = vpack.c.b16 %v2131, %v2125
    %v2240 = vpack.c.b16 %v2132, %v2126
    %v2241 = vpack.c.b16 %v2139, %v2133
    %v2242 = vpack.c.b16 %v2140, %v2134
    %v2243 = vpack.c.b16 %v2141, %v2135
    %v2244 = vpack.c.b16 %v2142, %v2136
    %v2245 = vpack.c.b16 %v2143, %v2137
    %v2246 = vpack.c.b16 %v2144, %v2138
    %v2247 = vpack.c.b16 %v2151, %v2145
    %v2248 = vpack.c.b16 %v2152, %v2146
    %v2249 = vpack.c.b16 %v2153, %v2147
    %v2250 = vpack.c.b16 %v2154, %v2148
    %v2251 = vpack.c.b16 %v2155, %v2149
    %v2252 = vpack.c.b16 %v2156, %v2150
    %2349 = vmatprep.subr.bf16.mxu0 %v2200
    %2350 = vmatpush1.bf16.msra.mxu0 %v2199
    %2351 = vmatprep.subr.bf16.mxu0 %v2194
    %2352 = vmatpush1.bf16.msra.mxu0 %v2193
    %2353 = vmatprep.subr.bf16.mxu0 %v2188
    %2354 = vmatpush1.bf16.msra.mxu0 %v2187
    %2355 = vmatprep.subr.bf16.mxu0 %v2182
    %2356 = vmatpush1.bf16.msra.mxu0 %v2181
    %2357 = vmatprep.subr.bf16.mxu0 %v2176
    %2358 = vmatpush1.bf16.msra.mxu0 %v2175
    %2359 = vmatprep.subr.bf16.mxu0 %v2170
    %2360 = vmatpush1.bf16.msra.mxu0 %v2169
    %2361 = vmatprep.subr.bf16.mxu0 %v2164
    %2362 = vmatpush1.bf16.msra.mxu0 %v2163
    %2363 = vmatprep.subr.bf16.mxu0 %v2158
    %2364 = vmatpush1.bf16.msra.mxu0 %v2157
    %2365 = vmatprep.subr.bf16.mxu0 %v2248
    %2366 = vmatpush2.bf16.msra.mxu0 %v2247
    %2367 = vmatprep.subr.bf16.mxu0 %v2242
    %2368 = vmatpush2.bf16.msra.mxu0 %v2241
    %2369 = vmatprep.subr.bf16.mxu0 %v2236
    %2370 = vmatpush2.bf16.msra.mxu0 %v2235
    %2371 = vmatprep.subr.bf16.mxu0 %v2230
    %2372 = vmatpush2.bf16.msra.mxu0 %v2229
    %2373 = vmatprep.subr.bf16.mxu0 %v2224
    %2374 = vmatpush2.bf16.msra.mxu0 %v2223
    %2375 = vmatprep.subr.bf16.mxu0 %v2218
    %2376 = vmatpush2.bf16.msra.mxu0 %v2217
    %2377 = vmatprep.subr.bf16.mxu0 %v2212
    %2378 = vmatpush2.bf16.msra.mxu0 %v2211
    %2379 = vmatprep.subr.bf16.mxu0 %v2206
    %2380 = vmatpush2.bf16.msra.mxu0 %v2205
    %2381 = vmatprep.mubr.bf16.mxu0 %v1868
    %2382 = vmatmul.mubr.bf16.gmra.mxu0 %v1867
    %v2383 = vpop.f32.mrf.mxu0
    %v2384 = vadd.f32 0.0, %v2383
    %v2385 = vpop.f32.mrf.mxu0
    %v2386 = vadd.f32 0.0, %v2385
    %v2387 = vpop.f32.mrf.mxu0
    %v2388 = vpop.f32.mrf.mxu0
    %2389 = vdwg.mxu0
    %2390 = vmatprep.subr.bf16.mxu0 %v2202
    %2391 = vmatpush1.bf16.msra.mxu0 %v2201
    %2392 = vmatprep.subr.bf16.mxu0 %v2196
    %2393 = vmatpush1.bf16.msra.mxu0 %v2195
    %2394 = vmatprep.subr.bf16.mxu0 %v2190
    %2395 = vmatpush1.bf16.msra.mxu0 %v2189
    %2396 = vmatprep.subr.bf16.mxu0 %v2184
    %2397 = vmatpush1.bf16.msra.mxu0 %v2183
    %2398 = vmatprep.subr.bf16.mxu0 %v2178
    %2399 = vmatpush1.bf16.msra.mxu0 %v2177
    %2400 = vmatprep.subr.bf16.mxu0 %v2172
    %2401 = vmatpush1.bf16.msra.mxu0 %v2171
    %2402 = vmatprep.subr.bf16.mxu0 %v2166
    %2403 = vmatpush1.bf16.msra.mxu0 %v2165
    %2404 = vmatprep.subr.bf16.mxu0 %v2160
    %2405 = vmatpush1.bf16.msra.mxu0 %v2159
    %2406 = vmatprep.subr.bf16.mxu0 %v2250
    %2407 = vmatpush2.bf16.msra.mxu0 %v2249
    %2408 = vmatprep.subr.bf16.mxu0 %v2244
    %2409 = vmatpush2.bf16.msra.mxu0 %v2243
    %2410 = vmatprep.subr.bf16.mxu0 %v2238
    %2411 = vmatpush2.bf16.msra.mxu0 %v2237
    %2412 = vmatprep.subr.bf16.mxu0 %v2232
    %2413 = vmatpush2.bf16.msra.mxu0 %v2231
    %2414 = vmatprep.subr.bf16.mxu0 %v2226
    %2415 = vmatpush2.bf16.msra.mxu0 %v2225
    %2416 = vmatprep.subr.bf16.mxu0 %v2220
    %2417 = vmatpush2.bf16.msra.mxu0 %v2219
    %2418 = vmatprep.subr.bf16.mxu0 %v2214
    %2419 = vmatpush2.bf16.msra.mxu0 %v2213
    %2420 = vmatprep.subr.bf16.mxu0 %v2208
    %2421 = vmatpush2.bf16.msra.mxu0 %v2207
    %2422 = vmatprep.mubr.bf16.mxu0 %v1868
    %2423 = vmatmul.mubr.bf16.gmra.mxu0 %v1867
    %v2424 = vpop.f32.mrf.mxu0
    %v2425 = vadd.f32 0.0, %v2424
    %v2426 = vpop.f32.mrf.mxu0
    %v2427 = vadd.f32 0.0, %v2426
    %v2428 = vpop.f32.mrf.mxu0
    %v2429 = vpop.f32.mrf.mxu0
    %2430 = vdwg.mxu0
    %2431 = vmatprep.subr.bf16.mxu0 %v2204
    %2432 = vmatpush1.bf16.msra.mxu0 %v2203
    %2433 = vmatprep.subr.bf16.mxu0 %v2198
    %2434 = vmatpush1.bf16.msra.mxu0 %v2197
    %2435 = vmatprep.subr.bf16.mxu0 %v2192
    %2436 = vmatpush1.bf16.msra.mxu0 %v2191
    %2437 = vmatprep.subr.bf16.mxu0 %v2186
    %2438 = vmatpush1.bf16.msra.mxu0 %v2185
    %2439 = vmatprep.subr.bf16.mxu0 %v2180
    %2440 = vmatpush1.bf16.msra.mxu0 %v2179
    %2441 = vmatprep.subr.bf16.mxu0 %v2174
    %2442 = vmatpush1.bf16.msra.mxu0 %v2173
    %2443 = vmatprep.subr.bf16.mxu0 %v2168
    %2444 = vmatpush1.bf16.msra.mxu0 %v2167
    %2445 = vmatprep.subr.bf16.mxu0 %v2162
    %2446 = vmatpush1.bf16.msra.mxu0 %v2161
    %2447 = vmatprep.subr.bf16.mxu0 %v2252
    %2448 = vmatpush2.bf16.msra.mxu0 %v2251
    %2449 = vmatprep.subr.bf16.mxu0 %v2246
    %2450 = vmatpush2.bf16.msra.mxu0 %v2245
    %2451 = vmatprep.subr.bf16.mxu0 %v2240
    %2452 = vmatpush2.bf16.msra.mxu0 %v2239
    %2453 = vmatprep.subr.bf16.mxu0 %v2234
    %2454 = vmatpush2.bf16.msra.mxu0 %v2233
    %2455 = vmatprep.subr.bf16.mxu0 %v2228
    %2456 = vmatpush2.bf16.msra.mxu0 %v2227
    %2457 = vmatprep.subr.bf16.mxu0 %v2222
    %2458 = vmatpush2.bf16.msra.mxu0 %v2221
    %2459 = vmatprep.subr.bf16.mxu0 %v2216
    %2460 = vmatpush2.bf16.msra.mxu0 %v2215
    %2461 = vmatprep.subr.bf16.mxu0 %v2210
    %2462 = vmatpush2.bf16.msra.mxu0 %v2209
    %2463 = vmatprep.mubr.bf16.mxu0 %v1868
    %2464 = vmatmul.mubr.bf16.gmra.mxu0 %v1867
    %v2465 = vpop.f32.mrf.mxu0
    %v2466 = vadd.f32 0.0, %v2465
    %v2467 = vpop.f32.mrf.mxu0
    %v2468 = vadd.f32 0.0, %v2467
    %v2469 = vpop.f32.mrf.mxu0
    %v2470 = vpop.f32.mrf.mxu0
    %2471 = vdwg.mxu0
    %v2472 = vadd.f32 %v1670, %v2384
    %v2473 = vadd.f32 %v1672, %v2386
    %v2474 = vxor.u32 %v2472, 2147483648
    %v2475 = vxor.u32 %v2473, 2147483648
    %v2476 = vmul.f32 %v2474, 1.442695
    %v2477 = vpow.pop %v2476
    %v2478 = vmul.f32 %v2475, 1.442695
    %v2479 = vpow.pop %v2478
    %v2480 = vadd.f32 %v2477, 1.0
    %v2481 = vadd.f32 %v2479, 1.0
    %v2482 = vrcp.pop %v2480
    %v2483 = vmul.f32 1.0, %v2482
    %v2484 = vrcp.pop %v2481
    %v2485 = vmul.f32 1.0, %v2484
    %v2486 = vadd.f32 %v1711, %v2425
    %v2487 = vadd.f32 %v1713, %v2427
    %v2488 = vxor.u32 %v2486, 2147483648
    %v2489 = vxor.u32 %v2487, 2147483648
    %v2490 = vmul.f32 %v2488, 1.442695
    %v2491 = vpow.pop %v2490
    %v2492 = vmul.f32 %v2489, 1.442695
    %v2493 = vpow.pop %v2492
    %v2494 = vadd.f32 %v2491, 1.0
    %v2495 = vadd.f32 %v2493, 1.0
    %v2496 = vrcp.pop %v2494
    %v2497 = vmul.f32 1.0, %v2496
    %v2498 = vrcp.pop %v2495
    %v2499 = vmul.f32 1.0, %v2498
    %v2501 = vlaneseq
    %v2502 = vshrl.u32 %v2501, 7
    %v2503 = vsub.s32 0, %v2502
    %v2504 = vrot.slane %v1854, %v2503
    %v2505 = vlaneseq
    %v2506 = vshrl.u32 %v2505, 7
    %v2507 = vsub.s32 1, %v2506
    %v2508 = vrot.slane %v1854, %v2507
    %v2511 = vadd.f32 %v2466, %v2504
    %v2512 = vadd.f32 %v2468, %v2508
    %v2513 = vmul.f32 %v2483, %v2511
    %v2514 = vmul.f32 %v2485, %v2512
    %v2515 = vadd.f32 %v1752, %v2513
    %v2516 = vadd.f32 %v1754, %v2514
    %v2517 = vtanh.pop %v2515
    %v2518 = vtanh.pop %v2516
    %v2519 = vsub.f32 1.0, %v2497
    %v2520 = vsub.f32 1.0, %v2499
    %v2521 = vmul.f32 %v2519, %v2517
    %v2522 = vmul.f32 %v2520, %v2518
    %v2523 = vmul.f32 %v2497, %v1863
    %v2524 = vmul.f32 %v2499, %v1864
    %v2525 = vadd.f32 %v2521, %v2523
    %v2526 = vadd.f32 %v2522, %v2524
    %v2529 = vcombine.low %v2525, %v2526
    %v2531 = vunpack.c.l.s4 1983009808
    %v2532 = vunpack.c.0.s8 %v2531
    %v2533 = vlaneseq
    %v2534 = vshrl.u32 %v2533, 7
    %v2535 = vsub.s32 %v2532, %v2534
    %v2536 = vrot.slane %v2529, %v2535
    %2538 = vst [vmem:[#allocation2] sm:$0xf] %v2536
    %v2539 = vpack.c.bf16 %v2525, %v2525
    %v2540 = vpack.c.bf16 %v2526, %v2526
    %2541 = vmatprep.subr.bf16.mxu0 %v2200
    %2542 = vmatpush1.bf16.msra.mxu0 %v2199
    %2543 = vmatprep.subr.bf16.mxu0 %v2194
    %2544 = vmatpush1.bf16.msra.mxu0 %v2193
    %2545 = vmatprep.subr.bf16.mxu0 %v2188
    %2546 = vmatpush1.bf16.msra.mxu0 %v2187
    %2547 = vmatprep.subr.bf16.mxu0 %v2182
    %2548 = vmatpush1.bf16.msra.mxu0 %v2181
    %2549 = vmatprep.subr.bf16.mxu0 %v2176
    %2550 = vmatpush1.bf16.msra.mxu0 %v2175
    %2551 = vmatprep.subr.bf16.mxu0 %v2170
    %2552 = vmatpush1.bf16.msra.mxu0 %v2169
    %2553 = vmatprep.subr.bf16.mxu0 %v2164
    %2554 = vmatpush1.bf16.msra.mxu0 %v2163
    %2555 = vmatprep.subr.bf16.mxu0 %v2158
    %2556 = vmatpush1.bf16.msra.mxu0 %v2157
    %2557 = vmatprep.subr.bf16.mxu0 %v2248
    %2558 = vmatpush2.bf16.msra.mxu0 %v2247
    %2559 = vmatprep.subr.bf16.mxu0 %v2242
    %2560 = vmatpush2.bf16.msra.mxu0 %v2241
    %2561 = vmatprep.subr.bf16.mxu0 %v2236
    %2562 = vmatpush2.bf16.msra.mxu0 %v2235
    %2563 = vmatprep.subr.bf16.mxu0 %v2230
    %2564 = vmatpush2.bf16.msra.mxu0 %v2229
    %2565 = vmatprep.subr.bf16.mxu0 %v2224
    %2566 = vmatpush2.bf16.msra.mxu0 %v2223
    %2567 = vmatprep.subr.bf16.mxu0 %v2218
    %2568 = vmatpush2.bf16.msra.mxu0 %v2217
    %2569 = vmatprep.subr.bf16.mxu0 %v2212
    %2570 = vmatpush2.bf16.msra.mxu0 %v2211
    %2571 = vmatprep.subr.bf16.mxu0 %v2206
    %2572 = vmatpush2.bf16.msra.mxu0 %v2205
    %2573 = vmatprep.mubr.bf16.mxu0 %v2540
    %2574 = vmatmul.mubr.bf16.gmra.mxu0 %v2539
    %v2575 = vpop.f32.mrf.mxu0
    %v2576 = vadd.f32 0.0, %v2575
    %v2577 = vpop.f32.mrf.mxu0
    %v2578 = vadd.f32 0.0, %v2577
    %v2579 = vpop.f32.mrf.mxu0
    %v2580 = vpop.f32.mrf.mxu0
    %2581 = vdwg.mxu0
    %2582 = vmatprep.subr.bf16.mxu0 %v2202
    %2583 = vmatpush1.bf16.msra.mxu0 %v2201
    %2584 = vmatprep.subr.bf16.mxu0 %v2196
    %2585 = vmatpush1.bf16.msra.mxu0 %v2195
    %2586 = vmatprep.subr.bf16.mxu0 %v2190
    %2587 = vmatpush1.bf16.msra.mxu0 %v2189
    %2588 = vmatprep.subr.bf16.mxu0 %v2184
    %2589 = vmatpush1.bf16.msra.mxu0 %v2183
    %2590 = vmatprep.subr.bf16.mxu0 %v2178
    %2591 = vmatpush1.bf16.msra.mxu0 %v2177
    %2592 = vmatprep.subr.bf16.mxu0 %v2172
    %2593 = vmatpush1.bf16.msra.mxu0 %v2171
    %2594 = vmatprep.subr.bf16.mxu0 %v2166
    %2595 = vmatpush1.bf16.msra.mxu0 %v2165
    %2596 = vmatprep.subr.bf16.mxu0 %v2160
    %2597 = vmatpush1.bf16.msra.mxu0 %v2159
    %2598 = vmatprep.subr.bf16.mxu0 %v2250
    %2599 = vmatpush2.bf16.msra.mxu0 %v2249
    %2600 = vmatprep.subr.bf16.mxu0 %v2244
    %2601 = vmatpush2.bf16.msra.mxu0 %v2243
    %2602 = vmatprep.subr.bf16.mxu0 %v2238
    %2603 = vmatpush2.bf16.msra.mxu0 %v2237
    %2604 = vmatprep.subr.bf16.mxu0 %v2232
    %2605 = vmatpush2.bf16.msra.mxu0 %v2231
    %2606 = vmatprep.subr.bf16.mxu0 %v2226
    %2607 = vmatpush2.bf16.msra.mxu0 %v2225
    %2608 = vmatprep.subr.bf16.mxu0 %v2220
    %2609 = vmatpush2.bf16.msra.mxu0 %v2219
    %2610 = vmatprep.subr.bf16.mxu0 %v2214
    %2611 = vmatpush2.bf16.msra.mxu0 %v2213
    %2612 = vmatprep.subr.bf16.mxu0 %v2208
    %2613 = vmatpush2.bf16.msra.mxu0 %v2207
    %2614 = vmatprep.mubr.bf16.mxu0 %v2540
    %2615 = vmatmul.mubr.bf16.gmra.mxu0 %v2539
    %v2616 = vpop.f32.mrf.mxu0
    %v2617 = vadd.f32 0.0, %v2616
    %v2618 = vpop.f32.mrf.mxu0
    %v2619 = vadd.f32 0.0, %v2618
    %v2620 = vpop.f32.mrf.mxu0
    %v2621 = vpop.f32.mrf.mxu0
    %2622 = vdwg.mxu0
    %2623 = vmatprep.subr.bf16.mxu0 %v2204
    %2624 = vmatpush1.bf16.msra.mxu0 %v2203
    %2625 = vmatprep.subr.bf16.mxu0 %v2198
    %2626 = vmatpush1.bf16.msra.mxu0 %v2197
    %2627 = vmatprep.subr.bf16.mxu0 %v2192
    %2628 = vmatpush1.bf16.msra.mxu0 %v2191
    %2629 = vmatprep.subr.bf16.mxu0 %v2186
    %2630 = vmatpush1.bf16.msra.mxu0 %v2185
    %2631 = vmatprep.subr.bf16.mxu0 %v2180
    %2632 = vmatpush1.bf16.msra.mxu0 %v2179
    %2633 = vmatprep.subr.bf16.mxu0 %v2174
    %2634 = vmatpush1.bf16.msra.mxu0 %v2173
    %2635 = vmatprep.subr.bf16.mxu0 %v2168
    %2636 = vmatpush1.bf16.msra.mxu0 %v2167
    %2637 = vmatprep.subr.bf16.mxu0 %v2162
    %2638 = vmatpush1.bf16.msra.mxu0 %v2161
    %2639 = vmatprep.subr.bf16.mxu0 %v2252
    %2640 = vmatpush2.bf16.msra.mxu0 %v2251
    %2641 = vmatprep.subr.bf16.mxu0 %v2246
    %2642 = vmatpush2.bf16.msra.mxu0 %v2245
    %2643 = vmatprep.subr.bf16.mxu0 %v2240
    %2644 = vmatpush2.bf16.msra.mxu0 %v2239
    %2645 = vmatprep.subr.bf16.mxu0 %v2234
    %2646 = vmatpush2.bf16.msra.mxu0 %v2233
    %2647 = vmatprep.subr.bf16.mxu0 %v2228
    %2648 = vmatpush2.bf16.msra.mxu0 %v2227
    %2649 = vmatprep.subr.bf16.mxu0 %v2222
    %2650 = vmatpush2.bf16.msra.mxu0 %v2221
    %2651 = vmatprep.subr.bf16.mxu0 %v2216
    %2652 = vmatpush2.bf16.msra.mxu0 %v2215
    %2653 = vmatprep.subr.bf16.mxu0 %v2210
    %2654 = vmatpush2.bf16.msra.mxu0 %v2209
    %2655 = vmatprep.mubr.bf16.mxu0 %v2540
    %2656 = vmatmul.mubr.bf16.gmra.mxu0 %v2539
    %v2657 = vpop.f32.mrf.mxu0
    %v2658 = vadd.f32 0.0, %v2657
    %v2659 = vpop.f32.mrf.mxu0
    %v2660 = vadd.f32 0.0, %v2659
    %v2661 = vpop.f32.mrf.mxu0
    %v2662 = vpop.f32.mrf.mxu0
    %2663 = vdwg.mxu0
    %v2664 = vadd.f32 %v1670, %v2576
    %v2665 = vadd.f32 %v1672, %v2578
    %v2666 = vxor.u32 %v2664, 2147483648
    %v2667 = vxor.u32 %v2665, 2147483648
    %v2668 = vmul.f32 %v2666, 1.442695
    %v2669 = vpow.pop %v2668
    %v2670 = vmul.f32 %v2667, 1.442695
    %v2671 = vpow.pop %v2670
    %v2672 = vadd.f32 %v2669, 1.0
    %v2673 = vadd.f32 %v2671, 1.0
    %v2674 = vrcp.pop %v2672
    %v2675 = vmul.f32 1.0, %v2674
    %v2676 = vrcp.pop %v2673
    %v2677 = vmul.f32 1.0, %v2676
    %v2678 = vadd.f32 %v1711, %v2617
    %v2679 = vadd.f32 %v1713, %v2619
    %v2680 = vxor.u32 %v2678, 2147483648
    %v2681 = vxor.u32 %v2679, 2147483648
    %v2682 = vmul.f32 %v2680, 1.442695
    %v2683 = vpow.pop %v2682
    %v2684 = vmul.f32 %v2681, 1.442695
    %v2685 = vpow.pop %v2684
    %v2686 = vadd.f32 %v2683, 1.0
    %v2687 = vadd.f32 %v2685, 1.0
    %v2688 = vrcp.pop %v2686
    %v2689 = vmul.f32 1.0, %v2688
    %v2690 = vrcp.pop %v2687
    %v2691 = vmul.f32 1.0, %v2690
    %v2692 = vadd.f32 %v2658, %v2504
    %v2693 = vadd.f32 %v2660, %v2508
    %v2694 = vmul.f32 %v2675, %v2692
    %v2695 = vmul.f32 %v2677, %v2693
    %v2696 = vadd.f32 %v1752, %v2694
    %v2697 = vadd.f32 %v1754, %v2695
    %v2698 = vtanh.pop %v2696
    %v2699 = vtanh.pop %v2697
    %v2700 = vsub.f32 1.0, %v2689
    %v2701 = vsub.f32 1.0, %v2691
    %v2702 = vmul.f32 %v2700, %v2698
    %v2703 = vmul.f32 %v2701, %v2699
    %v2704 = vmul.f32 %v2689, %v2525
    %v2705 = vmul.f32 %v2691, %v2526
    %v2706 = vadd.f32 %v2702, %v2704
    %v2707 = vadd.f32 %v2703, %v2705
    %v2710 = vcombine.low %v2706, %v2707
    %v2712 = vunpack.c.l.s4 1983009808
    %v2713 = vunpack.c.0.s8 %v2712
    %v2714 = vlaneseq
    %v2715 = vshrl.u32 %v2714, 7
    %v2716 = vsub.s32 %v2713, %v2715
    %v2717 = vrot.slane %v2710, %v2716
    %s2719 = scalar_lea.vmem [#allocation2], 4
    %2720 = vst [vmem:[%s2719] sm:$0xf] %v2717
    %v2721 = vpack.c.bf16 %v2706, %v2706
    %v2722 = vpack.c.bf16 %v2707, %v2707
    %2723 = vmatprep.subr.bf16.mxu0 %v2200
    %2724 = vmatpush1.bf16.msra.mxu0 %v2199
    %2725 = vmatprep.subr.bf16.mxu0 %v2194
    %2726 = vmatpush1.bf16.msra.mxu0 %v2193
    %2727 = vmatprep.subr.bf16.mxu0 %v2188
    %2728 = vmatpush1.bf16.msra.mxu0 %v2187
    %2729 = vmatprep.subr.bf16.mxu0 %v2182
    %2730 = vmatpush1.bf16.msra.mxu0 %v2181
    %2731 = vmatprep.subr.bf16.mxu0 %v2176
    %2732 = vmatpush1.bf16.msra.mxu0 %v2175
    %2733 = vmatprep.subr.bf16.mxu0 %v2170
    %2734 = vmatpush1.bf16.msra.mxu0 %v2169
    %2735 = vmatprep.subr.bf16.mxu0 %v2164
    %2736 = vmatpush1.bf16.msra.mxu0 %v2163
    %2737 = vmatprep.subr.bf16.mxu0 %v2158
    %2738 = vmatpush1.bf16.msra.mxu0 %v2157
    %2739 = vmatprep.subr.bf16.mxu0 %v2248
    %2740 = vmatpush2.bf16.msra.mxu0 %v2247
    %2741 = vmatprep.subr.bf16.mxu0 %v2242
    %2742 = vmatpush2.bf16.msra.mxu0 %v2241
    %2743 = vmatprep.subr.bf16.mxu0 %v2236
    %2744 = vmatpush2.bf16.msra.mxu0 %v2235
    %2745 = vmatprep.subr.bf16.mxu0 %v2230
    %2746 = vmatpush2.bf16.msra.mxu0 %v2229
    %2747 = vmatprep.subr.bf16.mxu0 %v2224
    %2748 = vmatpush2.bf16.msra.mxu0 %v2223
    %2749 = vmatprep.subr.bf16.mxu0 %v2218
    %2750 = vmatpush2.bf16.msra.mxu0 %v2217
    %2751 = vmatprep.subr.bf16.mxu0 %v2212
    %2752 = vmatpush2.bf16.msra.mxu0 %v2211
    %2753 = vmatprep.subr.bf16.mxu0 %v2206
    %2754 = vmatpush2.bf16.msra.mxu0 %v2205
    %2755 = vmatprep.mubr.bf16.mxu0 %v2722
    %2756 = vmatmul.mubr.bf16.gmra.mxu0 %v2721
    %v2757 = vpop.f32.mrf.mxu0
    %v2758 = vadd.f32 0.0, %v2757
    %v2759 = vpop.f32.mrf.mxu0
    %v2760 = vadd.f32 0.0, %v2759
    %v2761 = vpop.f32.mrf.mxu0
    %v2762 = vpop.f32.mrf.mxu0
    %2763 = vdwg.mxu0
    %2764 = vmatprep.subr.bf16.mxu0 %v2202
    %2765 = vmatpush1.bf16.msra.mxu0 %v2201
    %2766 = vmatprep.subr.bf16.mxu0 %v2196
    %2767 = vmatpush1.bf16.msra.mxu0 %v2195
    %2768 = vmatprep.subr.bf16.mxu0 %v2190
    %2769 = vmatpush1.bf16.msra.mxu0 %v2189
    %2770 = vmatprep.subr.bf16.mxu0 %v2184
    %2771 = vmatpush1.bf16.msra.mxu0 %v2183
    %2772 = vmatprep.subr.bf16.mxu0 %v2178
    %2773 = vmatpush1.bf16.msra.mxu0 %v2177
    %2774 = vmatprep.subr.bf16.mxu0 %v2172
    %2775 = vmatpush1.bf16.msra.mxu0 %v2171
    %2776 = vmatprep.subr.bf16.mxu0 %v2166
    %2777 = vmatpush1.bf16.msra.mxu0 %v2165
    %2778 = vmatprep.subr.bf16.mxu0 %v2160
    %2779 = vmatpush1.bf16.msra.mxu0 %v2159
    %2780 = vmatprep.subr.bf16.mxu0 %v2250
    %2781 = vmatpush2.bf16.msra.mxu0 %v2249
    %2782 = vmatprep.subr.bf16.mxu0 %v2244
    %2783 = vmatpush2.bf16.msra.mxu0 %v2243
    %2784 = vmatprep.subr.bf16.mxu0 %v2238
    %2785 = vmatpush2.bf16.msra.mxu0 %v2237
    %2786 = vmatprep.subr.bf16.mxu0 %v2232
    %2787 = vmatpush2.bf16.msra.mxu0 %v2231
    %2788 = vmatprep.subr.bf16.mxu0 %v2226
    %2789 = vmatpush2.bf16.msra.mxu0 %v2225
    %2790 = vmatprep.subr.bf16.mxu0 %v2220
    %2791 = vmatpush2.bf16.msra.mxu0 %v2219
    %2792 = vmatprep.subr.bf16.mxu0 %v2214
    %2793 = vmatpush2.bf16.msra.mxu0 %v2213
    %2794 = vmatprep.subr.bf16.mxu0 %v2208
    %2795 = vmatpush2.bf16.msra.mxu0 %v2207
    %2796 = vmatprep.mubr.bf16.mxu0 %v2722
    %2797 = vmatmul.mubr.bf16.gmra.mxu0 %v2721
    %v2798 = vpop.f32.mrf.mxu0
    %v2799 = vadd.f32 0.0, %v2798
    %v2800 = vpop.f32.mrf.mxu0
    %v2801 = vadd.f32 0.0, %v2800
    %v2802 = vpop.f32.mrf.mxu0
    %v2803 = vpop.f32.mrf.mxu0
    %2804 = vdwg.mxu0
    %2805 = vmatprep.subr.bf16.mxu0 %v2204
    %2806 = vmatpush1.bf16.msra.mxu0 %v2203
    %2807 = vmatprep.subr.bf16.mxu0 %v2198
    %2808 = vmatpush1.bf16.msra.mxu0 %v2197
    %2809 = vmatprep.subr.bf16.mxu0 %v2192
    %2810 = vmatpush1.bf16.msra.mxu0 %v2191
    %2811 = vmatprep.subr.bf16.mxu0 %v2186
    %2812 = vmatpush1.bf16.msra.mxu0 %v2185
    %2813 = vmatprep.subr.bf16.mxu0 %v2180
    %2814 = vmatpush1.bf16.msra.mxu0 %v2179
    %2815 = vmatprep.subr.bf16.mxu0 %v2174
    %2816 = vmatpush1.bf16.msra.mxu0 %v2173
    %2817 = vmatprep.subr.bf16.mxu0 %v2168
    %2818 = vmatpush1.bf16.msra.mxu0 %v2167
    %2819 = vmatprep.subr.bf16.mxu0 %v2162
    %2820 = vmatpush1.bf16.msra.mxu0 %v2161
    %2821 = vmatprep.subr.bf16.mxu0 %v2252
    %2822 = vmatpush2.bf16.msra.mxu0 %v2251
    %2823 = vmatprep.subr.bf16.mxu0 %v2246
    %2824 = vmatpush2.bf16.msra.mxu0 %v2245
    %2825 = vmatprep.subr.bf16.mxu0 %v2240
    %2826 = vmatpush2.bf16.msra.mxu0 %v2239
    %2827 = vmatprep.subr.bf16.mxu0 %v2234
    %2828 = vmatpush2.bf16.msra.mxu0 %v2233
    %2829 = vmatprep.subr.bf16.mxu0 %v2228
    %2830 = vmatpush2.bf16.msra.mxu0 %v2227
    %2831 = vmatprep.subr.bf16.mxu0 %v2222
    %2832 = vmatpush2.bf16.msra.mxu0 %v2221
    %2833 = vmatprep.subr.bf16.mxu0 %v2216
    %2834 = vmatpush2.bf16.msra.mxu0 %v2215
    %2835 = vmatprep.subr.bf16.mxu0 %v2210
    %2836 = vmatpush2.bf16.msra.mxu0 %v2209
    %2837 = vmatprep.mubr.bf16.mxu0 %v2722
    %2838 = vmatmul.mubr.bf16.gmra.mxu0 %v2721
    %v2839 = vpop.f32.mrf.mxu0
    %v2840 = vadd.f32 0.0, %v2839
    %v2841 = vpop.f32.mrf.mxu0
    %v2842 = vadd.f32 0.0, %v2841
    %v2843 = vpop.f32.mrf.mxu0
    %v2844 = vpop.f32.mrf.mxu0
    %2845 = vdwg.mxu0
    %v2846 = vadd.f32 %v1670, %v2758
    %v2847 = vadd.f32 %v1672, %v2760
    %v2848 = vxor.u32 %v2846, 2147483648
    %v2849 = vxor.u32 %v2847, 2147483648
    %v2850 = vmul.f32 %v2848, 1.442695
    %v2851 = vpow.pop %v2850
    %v2852 = vmul.f32 %v2849, 1.442695
    %v2853 = vpow.pop %v2852
    %v2854 = vadd.f32 %v2851, 1.0
    %v2855 = vadd.f32 %v2853, 1.0
    %v2856 = vrcp.pop %v2854
    %v2857 = vmul.f32 1.0, %v2856
    %v2858 = vrcp.pop %v2855
    %v2859 = vmul.f32 1.0, %v2858
    %v2860 = vadd.f32 %v1711, %v2799
    %v2861 = vadd.f32 %v1713, %v2801
    %v2862 = vxor.u32 %v2860, 2147483648
    %v2863 = vxor.u32 %v2861, 2147483648
    %v2864 = vmul.f32 %v2862, 1.442695
    %v2865 = vpow.pop %v2864
    %v2866 = vmul.f32 %v2863, 1.442695
    %v2867 = vpow.pop %v2866
    %v2868 = vadd.f32 %v2865, 1.0
    %v2869 = vadd.f32 %v2867, 1.0
    %v2870 = vrcp.pop %v2868
    %v2871 = vmul.f32 1.0, %v2870
    %v2872 = vrcp.pop %v2869
    %v2873 = vmul.f32 1.0, %v2872
    %v2874 = vadd.f32 %v2840, %v2504
    %v2875 = vadd.f32 %v2842, %v2508
    %v2876 = vmul.f32 %v2857, %v2874
    %v2877 = vmul.f32 %v2859, %v2875
    %v2878 = vadd.f32 %v1752, %v2876
    %v2879 = vadd.f32 %v1754, %v2877
    %v2880 = vtanh.pop %v2878
    %v2881 = vtanh.pop %v2879
    %v2882 = vsub.f32 1.0, %v2871
    %v2883 = vsub.f32 1.0, %v2873
    %v2884 = vmul.f32 %v2882, %v2880
    %v2885 = vmul.f32 %v2883, %v2881
    %v2886 = vmul.f32 %v2871, %v2706
    %v2887 = vmul.f32 %v2873, %v2707
    %v2888 = vadd.f32 %v2884, %v2886
    %v2889 = vadd.f32 %v2885, %v2887
    %v2892 = vcombine.low %v2888, %v2889
    %v2894 = vunpack.c.l.s4 1983009808
    %v2895 = vunpack.c.0.s8 %v2894
    %v2896 = vlaneseq
    %v2897 = vshrl.u32 %v2896, 7
    %v2898 = vsub.s32 %v2895, %v2897
    %v2899 = vrot.slane %v2892, %v2898
    %s2901 = scalar_lea.vmem [#allocation2], 8
    %2902 = vst [vmem:[%s2901] sm:$0xf] %v2899
    %v2903 = vpack.c.bf16 %v2888, %v2888
    %v2904 = vpack.c.bf16 %v2889, %v2889
    %2905 = vmatprep.subr.bf16.mxu0 %v2200
    %2906 = vmatpush1.bf16.msra.mxu0 %v2199
    %2907 = vmatprep.subr.bf16.mxu0 %v2194
    %2908 = vmatpush1.bf16.msra.mxu0 %v2193
    %2909 = vmatprep.subr.bf16.mxu0 %v2188
    %2910 = vmatpush1.bf16.msra.mxu0 %v2187
    %2911 = vmatprep.subr.bf16.mxu0 %v2182
    %2912 = vmatpush1.bf16.msra.mxu0 %v2181
    %2913 = vmatprep.subr.bf16.mxu0 %v2176
    %2914 = vmatpush1.bf16.msra.mxu0 %v2175
    %2915 = vmatprep.subr.bf16.mxu0 %v2170
    %2916 = vmatpush1.bf16.msra.mxu0 %v2169
    %2917 = vmatprep.subr.bf16.mxu0 %v2164
    %2918 = vmatpush1.bf16.msra.mxu0 %v2163
    %2919 = vmatprep.subr.bf16.mxu0 %v2158
    %2920 = vmatpush1.bf16.msra.mxu0 %v2157
    %2921 = vmatprep.subr.bf16.mxu0 %v2248
    %2922 = vmatpush2.bf16.msra.mxu0 %v2247
    %2923 = vmatprep.subr.bf16.mxu0 %v2242
    %2924 = vmatpush2.bf16.msra.mxu0 %v2241
    %2925 = vmatprep.subr.bf16.mxu0 %v2236
    %2926 = vmatpush2.bf16.msra.mxu0 %v2235
    %2927 = vmatprep.subr.bf16.mxu0 %v2230
    %2928 = vmatpush2.bf16.msra.mxu0 %v2229
    %2929 = vmatprep.subr.bf16.mxu0 %v2224
    %2930 = vmatpush2.bf16.msra.mxu0 %v2223
    %2931 = vmatprep.subr.bf16.mxu0 %v2218
    %2932 = vmatpush2.bf16.msra.mxu0 %v2217
    %2933 = vmatprep.subr.bf16.mxu0 %v2212
    %2934 = vmatpush2.bf16.msra.mxu0 %v2211
    %2935 = vmatprep.subr.bf16.mxu0 %v2206
    %2936 = vmatpush2.bf16.msra.mxu0 %v2205
    %2937 = vmatprep.mubr.bf16.mxu0 %v2904
    %2938 = vmatmul.mubr.bf16.gmra.mxu0 %v2903
    %v2939 = vpop.f32.mrf.mxu0
    %v2940 = vadd.f32 0.0, %v2939
    %v2941 = vpop.f32.mrf.mxu0
    %v2942 = vadd.f32 0.0, %v2941
    %v2943 = vpop.f32.mrf.mxu0
    %v2944 = vpop.f32.mrf.mxu0
    %2945 = vdwg.mxu0
    %2946 = vmatprep.subr.bf16.mxu0 %v2202
    %2947 = vmatpush1.bf16.msra.mxu0 %v2201
    %2948 = vmatprep.subr.bf16.mxu0 %v2196
    %2949 = vmatpush1.bf16.msra.mxu0 %v2195
    %2950 = vmatprep.subr.bf16.mxu0 %v2190
    %2951 = vmatpush1.bf16.msra.mxu0 %v2189
    %2952 = vmatprep.subr.bf16.mxu0 %v2184
    %2953 = vmatpush1.bf16.msra.mxu0 %v2183
    %2954 = vmatprep.subr.bf16.mxu0 %v2178
    %2955 = vmatpush1.bf16.msra.mxu0 %v2177
    %2956 = vmatprep.subr.bf16.mxu0 %v2172
    %2957 = vmatpush1.bf16.msra.mxu0 %v2171
    %2958 = vmatprep.subr.bf16.mxu0 %v2166
    %2959 = vmatpush1.bf16.msra.mxu0 %v2165
    %2960 = vmatprep.subr.bf16.mxu0 %v2160
    %2961 = vmatpush1.bf16.msra.mxu0 %v2159
    %2962 = vmatprep.subr.bf16.mxu0 %v2250
    %2963 = vmatpush2.bf16.msra.mxu0 %v2249
    %2964 = vmatprep.subr.bf16.mxu0 %v2244
    %2965 = vmatpush2.bf16.msra.mxu0 %v2243
    %2966 = vmatprep.subr.bf16.mxu0 %v2238
    %2967 = vmatpush2.bf16.msra.mxu0 %v2237
    %2968 = vmatprep.subr.bf16.mxu0 %v2232
    %2969 = vmatpush2.bf16.msra.mxu0 %v2231
    %2970 = vmatprep.subr.bf16.mxu0 %v2226
    %2971 = vmatpush2.bf16.msra.mxu0 %v2225
    %2972 = vmatprep.subr.bf16.mxu0 %v2220
    %2973 = vmatpush2.bf16.msra.mxu0 %v2219
    %2974 = vmatprep.subr.bf16.mxu0 %v2214
    %2975 = vmatpush2.bf16.msra.mxu0 %v2213
    %2976 = vmatprep.subr.bf16.mxu0 %v2208
    %2977 = vmatpush2.bf16.msra.mxu0 %v2207
    %2978 = vmatprep.mubr.bf16.mxu0 %v2904
    %2979 = vmatmul.mubr.bf16.gmra.mxu0 %v2903
    %v2980 = vpop.f32.mrf.mxu0
    %v2981 = vadd.f32 0.0, %v2980
    %v2982 = vpop.f32.mrf.mxu0
    %v2983 = vadd.f32 0.0, %v2982
    %v2984 = vpop.f32.mrf.mxu0
    %v2985 = vpop.f32.mrf.mxu0
    %2986 = vdwg.mxu0
    %2987 = vmatprep.subr.bf16.mxu0 %v2204
    %2988 = vmatpush1.bf16.msra.mxu0 %v2203
    %2989 = vmatprep.subr.bf16.mxu0 %v2198
    %2990 = vmatpush1.bf16.msra.mxu0 %v2197
    %2991 = vmatprep.subr.bf16.mxu0 %v2192
    %2992 = vmatpush1.bf16.msra.mxu0 %v2191
    %2993 = vmatprep.subr.bf16.mxu0 %v2186
    %2994 = vmatpush1.bf16.msra.mxu0 %v2185
    %2995 = vmatprep.subr.bf16.mxu0 %v2180
    %2996 = vmatpush1.bf16.msra.mxu0 %v2179
    %2997 = vmatprep.subr.bf16.mxu0 %v2174
    %2998 = vmatpush1.bf16.msra.mxu0 %v2173
    %2999 = vmatprep.subr.bf16.mxu0 %v2168
    %3000 = vmatpush1.bf16.msra.mxu0 %v2167
    %3001 = vmatprep.subr.bf16.mxu0 %v2162
    %3002 = vmatpush1.bf16.msra.mxu0 %v2161
    %3003 = vmatprep.subr.bf16.mxu0 %v2252
    %3004 = vmatpush2.bf16.msra.mxu0 %v2251
    %3005 = vmatprep.subr.bf16.mxu0 %v2246
    %3006 = vmatpush2.bf16.msra.mxu0 %v2245
    %3007 = vmatprep.subr.bf16.mxu0 %v2240
    %3008 = vmatpush2.bf16.msra.mxu0 %v2239
    %3009 = vmatprep.subr.bf16.mxu0 %v2234
    %3010 = vmatpush2.bf16.msra.mxu0 %v2233
    %3011 = vmatprep.subr.bf16.mxu0 %v2228
    %3012 = vmatpush2.bf16.msra.mxu0 %v2227
    %3013 = vmatprep.subr.bf16.mxu0 %v2222
    %3014 = vmatpush2.bf16.msra.mxu0 %v2221
    %3015 = vmatprep.subr.bf16.mxu0 %v2216
    %3016 = vmatpush2.bf16.msra.mxu0 %v2215
    %3017 = vmatprep.subr.bf16.mxu0 %v2210
    %3018 = vmatpush2.bf16.msra.mxu0 %v2209
    %3019 = vmatprep.mubr.bf16.mxu0 %v2904
    %3020 = vmatmul.mubr.bf16.gmra.mxu0 %v2903
    %v3021 = vpop.f32.mrf.mxu0
    %v3022 = vadd.f32 0.0, %v3021
    %v3023 = vpop.f32.mrf.mxu0
    %v3024 = vadd.f32 0.0, %v3023
    %v3025 = vpop.f32.mrf.mxu0
    %v3026 = vpop.f32.mrf.mxu0
    %3027 = vdwg.mxu0
    %v3028 = vadd.f32 %v1670, %v2940
    %v3029 = vadd.f32 %v1672, %v2942
    %v3030 = vxor.u32 %v3028, 2147483648
    %v3031 = vxor.u32 %v3029, 2147483648
    %v3032 = vmul.f32 %v3030, 1.442695
    %v3033 = vpow.pop %v3032
    %v3034 = vmul.f32 %v3031, 1.442695
    %v3035 = vpow.pop %v3034
    %v3036 = vadd.f32 %v3033, 1.0
    %v3037 = vadd.f32 %v3035, 1.0
    %v3038 = vrcp.pop %v3036
    %v3039 = vmul.f32 1.0, %v3038
    %v3040 = vrcp.pop %v3037
    %v3041 = vmul.f32 1.0, %v3040
    %v3042 = vadd.f32 %v1711, %v2981
    %v3043 = vadd.f32 %v1713, %v2983
    %v3044 = vxor.u32 %v3042, 2147483648
    %v3045 = vxor.u32 %v3043, 2147483648
    %v3046 = vmul.f32 %v3044, 1.442695
    %v3047 = vpow.pop %v3046
    %v3048 = vmul.f32 %v3045, 1.442695
    %v3049 = vpow.pop %v3048
    %v3050 = vadd.f32 %v3047, 1.0
    %v3051 = vadd.f32 %v3049, 1.0
    %v3052 = vrcp.pop %v3050
    %v3053 = vmul.f32 1.0, %v3052
    %v3054 = vrcp.pop %v3051
    %v3055 = vmul.f32 1.0, %v3054
    %v3056 = vadd.f32 %v3022, %v2504
    %v3057 = vadd.f32 %v3024, %v2508
    %v3058 = vmul.f32 %v3039, %v3056
    %v3059 = vmul.f32 %v3041, %v3057
    %v3060 = vadd.f32 %v1752, %v3058
    %v3061 = vadd.f32 %v1754, %v3059
    %v3062 = vtanh.pop %v3060
    %v3063 = vtanh.pop %v3061
    %v3064 = vsub.f32 1.0, %v3053
    %v3065 = vsub.f32 1.0, %v3055
    %v3066 = vmul.f32 %v3064, %v3062
    %v3067 = vmul.f32 %v3065, %v3063
    %v3068 = vmul.f32 %v3053, %v2888
    %v3069 = vmul.f32 %v3055, %v2889
    %v3070 = vadd.f32 %v3066, %v3068
    %v3071 = vadd.f32 %v3067, %v3069
    %v3074 = vcombine.low %v3070, %v3071
    %v3076 = vunpack.c.l.s4 1983009808
    %v3077 = vunpack.c.0.s8 %v3076
    %v3078 = vlaneseq
    %v3079 = vshrl.u32 %v3078, 7
    %v3080 = vsub.s32 %v3077, %v3079
    %v3081 = vrot.slane %v3074, %v3080
    %s3083 = scalar_lea.vmem [#allocation2], 12
    %3084 = vst [vmem:[%s3083] sm:$0xf] %v3081
    %v3085 = vpack.c.bf16 %v3070, %v3070
    %v3086 = vpack.c.bf16 %v3071, %v3071
    %3087 = vmatprep.subr.bf16.mxu0 %v2200
    %3088 = vmatpush1.bf16.msra.mxu0 %v2199
    %3089 = vmatprep.subr.bf16.mxu0 %v2194
    %3090 = vmatpush1.bf16.msra.mxu0 %v2193
    %3091 = vmatprep.subr.bf16.mxu0 %v2188
    %3092 = vmatpush1.bf16.msra.mxu0 %v2187
    %3093 = vmatprep.subr.bf16.mxu0 %v2182
    %3094 = vmatpush1.bf16.msra.mxu0 %v2181
    %3095 = vmatprep.subr.bf16.mxu0 %v2176
    %3096 = vmatpush1.bf16.msra.mxu0 %v2175
    %3097 = vmatprep.subr.bf16.mxu0 %v2170
    %3098 = vmatpush1.bf16.msra.mxu0 %v2169
    %3099 = vmatprep.subr.bf16.mxu0 %v2164
    %3100 = vmatpush1.bf16.msra.mxu0 %v2163
    %3101 = vmatprep.subr.bf16.mxu0 %v2158
    %3102 = vmatpush1.bf16.msra.mxu0 %v2157
    %3103 = vmatprep.subr.bf16.mxu0 %v2248
    %3104 = vmatpush2.bf16.msra.mxu0 %v2247
    %3105 = vmatprep.subr.bf16.mxu0 %v2242
    %3106 = vmatpush2.bf16.msra.mxu0 %v2241
    %3107 = vmatprep.subr.bf16.mxu0 %v2236
    %3108 = vmatpush2.bf16.msra.mxu0 %v2235
    %3109 = vmatprep.subr.bf16.mxu0 %v2230
    %3110 = vmatpush2.bf16.msra.mxu0 %v2229
    %3111 = vmatprep.subr.bf16.mxu0 %v2224
    %3112 = vmatpush2.bf16.msra.mxu0 %v2223
    %3113 = vmatprep.subr.bf16.mxu0 %v2218
    %3114 = vmatpush2.bf16.msra.mxu0 %v2217
    %3115 = vmatprep.subr.bf16.mxu0 %v2212
    %3116 = vmatpush2.bf16.msra.mxu0 %v2211
    %3117 = vmatprep.subr.bf16.mxu0 %v2206
    %3118 = vmatpush2.bf16.msra.mxu0 %v2205
    %3119 = vmatprep.mubr.bf16.mxu0 %v3086
    %3120 = vmatmul.mubr.bf16.gmra.mxu0 %v3085
    %v3121 = vpop.f32.mrf.mxu0
    %v3122 = vadd.f32 0.0, %v3121
    %v3123 = vpop.f32.mrf.mxu0
    %v3124 = vadd.f32 0.0, %v3123
    %v3125 = vpop.f32.mrf.mxu0
    %v3126 = vpop.f32.mrf.mxu0
    %3127 = vdwg.mxu0
    %3128 = vmatprep.subr.bf16.mxu0 %v2202
    %3129 = vmatpush1.bf16.msra.mxu0 %v2201
    %3130 = vmatprep.subr.bf16.mxu0 %v2196
    %3131 = vmatpush1.bf16.msra.mxu0 %v2195
    %3132 = vmatprep.subr.bf16.mxu0 %v2190
    %3133 = vmatpush1.bf16.msra.mxu0 %v2189
    %3134 = vmatprep.subr.bf16.mxu0 %v2184
    %3135 = vmatpush1.bf16.msra.mxu0 %v2183
    %3136 = vmatprep.subr.bf16.mxu0 %v2178
    %3137 = vmatpush1.bf16.msra.mxu0 %v2177
    %3138 = vmatprep.subr.bf16.mxu0 %v2172
    %3139 = vmatpush1.bf16.msra.mxu0 %v2171
    %3140 = vmatprep.subr.bf16.mxu0 %v2166
    %3141 = vmatpush1.bf16.msra.mxu0 %v2165
    %3142 = vmatprep.subr.bf16.mxu0 %v2160
    %3143 = vmatpush1.bf16.msra.mxu0 %v2159
    %3144 = vmatprep.subr.bf16.mxu0 %v2250
    %3145 = vmatpush2.bf16.msra.mxu0 %v2249
    %3146 = vmatprep.subr.bf16.mxu0 %v2244
    %3147 = vmatpush2.bf16.msra.mxu0 %v2243
    %3148 = vmatprep.subr.bf16.mxu0 %v2238
    %3149 = vmatpush2.bf16.msra.mxu0 %v2237
    %3150 = vmatprep.subr.bf16.mxu0 %v2232
    %3151 = vmatpush2.bf16.msra.mxu0 %v2231
    %3152 = vmatprep.subr.bf16.mxu0 %v2226
    %3153 = vmatpush2.bf16.msra.mxu0 %v2225
    %3154 = vmatprep.subr.bf16.mxu0 %v2220
    %3155 = vmatpush2.bf16.msra.mxu0 %v2219
    %3156 = vmatprep.subr.bf16.mxu0 %v2214
    %3157 = vmatpush2.bf16.msra.mxu0 %v2213
    %3158 = vmatprep.subr.bf16.mxu0 %v2208
    %3159 = vmatpush2.bf16.msra.mxu0 %v2207
    %3160 = vmatprep.mubr.bf16.mxu0 %v3086
    %3161 = vmatmul.mubr.bf16.gmra.mxu0 %v3085
    %v3162 = vpop.f32.mrf.mxu0
    %v3163 = vadd.f32 0.0, %v3162
    %v3164 = vpop.f32.mrf.mxu0
    %v3165 = vadd.f32 0.0, %v3164
    %v3166 = vpop.f32.mrf.mxu0
    %v3167 = vpop.f32.mrf.mxu0
    %3168 = vdwg.mxu0
    %3169 = vmatprep.subr.bf16.mxu0 %v2204
    %3170 = vmatpush1.bf16.msra.mxu0 %v2203
    %3171 = vmatprep.subr.bf16.mxu0 %v2198
    %3172 = vmatpush1.bf16.msra.mxu0 %v2197
    %3173 = vmatprep.subr.bf16.mxu0 %v2192
    %3174 = vmatpush1.bf16.msra.mxu0 %v2191
    %3175 = vmatprep.subr.bf16.mxu0 %v2186
    %3176 = vmatpush1.bf16.msra.mxu0 %v2185
    %3177 = vmatprep.subr.bf16.mxu0 %v2180
    %3178 = vmatpush1.bf16.msra.mxu0 %v2179
    %3179 = vmatprep.subr.bf16.mxu0 %v2174
    %3180 = vmatpush1.bf16.msra.mxu0 %v2173
    %3181 = vmatprep.subr.bf16.mxu0 %v2168
    %3182 = vmatpush1.bf16.msra.mxu0 %v2167
    %3183 = vmatprep.subr.bf16.mxu0 %v2162
    %3184 = vmatpush1.bf16.msra.mxu0 %v2161
    %3185 = vmatprep.subr.bf16.mxu0 %v2252
    %3186 = vmatpush2.bf16.msra.mxu0 %v2251
    %3187 = vmatprep.subr.bf16.mxu0 %v2246
    %3188 = vmatpush2.bf16.msra.mxu0 %v2245
    %3189 = vmatprep.subr.bf16.mxu0 %v2240
    %3190 = vmatpush2.bf16.msra.mxu0 %v2239
    %3191 = vmatprep.subr.bf16.mxu0 %v2234
    %3192 = vmatpush2.bf16.msra.mxu0 %v2233
    %3193 = vmatprep.subr.bf16.mxu0 %v2228
    %3194 = vmatpush2.bf16.msra.mxu0 %v2227
    %3195 = vmatprep.subr.bf16.mxu0 %v2222
    %3196 = vmatpush2.bf16.msra.mxu0 %v2221
    %3197 = vmatprep.subr.bf16.mxu0 %v2216
    %3198 = vmatpush2.bf16.msra.mxu0 %v2215
    %3199 = vmatprep.subr.bf16.mxu0 %v2210
    %3200 = vmatpush2.bf16.msra.mxu0 %v2209
    %3201 = vmatprep.mubr.bf16.mxu0 %v3086
    %3202 = vmatmul.mubr.bf16.gmra.mxu0 %v3085
    %v3203 = vpop.f32.mrf.mxu0
    %v3204 = vadd.f32 0.0, %v3203
    %v3205 = vpop.f32.mrf.mxu0
    %v3206 = vadd.f32 0.0, %v3205
    %v3207 = vpop.f32.mrf.mxu0
    %v3208 = vpop.f32.mrf.mxu0
    %3209 = vdwg.mxu0
    %v3210 = vadd.f32 %v1670, %v3122
    %v3211 = vadd.f32 %v1672, %v3124
    %v3212 = vxor.u32 %v3210, 2147483648
    %v3213 = vxor.u32 %v3211, 2147483648
    %v3214 = vmul.f32 %v3212, 1.442695
    %v3215 = vpow.pop %v3214
    %v3216 = vmul.f32 %v3213, 1.442695
    %v3217 = vpow.pop %v3216
    %v3218 = vadd.f32 %v3215, 1.0
    %v3219 = vadd.f32 %v3217, 1.0
    %v3220 = vrcp.pop %v3218
    %v3221 = vmul.f32 1.0, %v3220
    %v3222 = vrcp.pop %v3219
    %v3223 = vmul.f32 1.0, %v3222
    %v3224 = vadd.f32 %v1711, %v3163
    %v3225 = vadd.f32 %v1713, %v3165
    %v3226 = vxor.u32 %v3224, 2147483648
    %v3227 = vxor.u32 %v3225, 2147483648
    %v3228 = vmul.f32 %v3226, 1.442695
    %v3229 = vpow.pop %v3228
    %v3230 = vmul.f32 %v3227, 1.442695
    %v3231 = vpow.pop %v3230
    %v3232 = vadd.f32 %v3229, 1.0
    %v3233 = vadd.f32 %v3231, 1.0
    %v3234 = vrcp.pop %v3232
    %v3235 = vmul.f32 1.0, %v3234
    %v3236 = vrcp.pop %v3233
    %v3237 = vmul.f32 1.0, %v3236
    %v3238 = vadd.f32 %v3204, %v2504
    %v3239 = vadd.f32 %v3206, %v2508
    %v3240 = vmul.f32 %v3221, %v3238
    %v3241 = vmul.f32 %v3223, %v3239
    %v3242 = vadd.f32 %v1752, %v3240
    %v3243 = vadd.f32 %v1754, %v3241
    %v3244 = vtanh.pop %v3242
    %v3245 = vtanh.pop %v3243
    %v3246 = vsub.f32 1.0, %v3235
    %v3247 = vsub.f32 1.0, %v3237
    %v3248 = vmul.f32 %v3246, %v3244
    %v3249 = vmul.f32 %v3247, %v3245
    %v3250 = vmul.f32 %v3235, %v3070
    %v3251 = vmul.f32 %v3237, %v3071
    %v3252 = vadd.f32 %v3248, %v3250
    %v3253 = vadd.f32 %v3249, %v3251
    %v3256 = vcombine.low %v3252, %v3253
    %v3258 = vunpack.c.l.s4 1983009808
    %v3259 = vunpack.c.0.s8 %v3258
    %v3260 = vlaneseq
    %v3261 = vshrl.u32 %v3260, 7
    %v3262 = vsub.s32 %v3259, %v3261
    %v3263 = vrot.slane %v3256, %v3262
    %s3265 = scalar_lea.vmem [#allocation2], 16
    %3266 = vst [vmem:[%s3265] sm:$0xf] %v3263
    %v3267 = vpack.c.bf16 %v3252, %v3252
    %v3268 = vpack.c.bf16 %v3253, %v3253
    %3269 = vmatprep.subr.bf16.mxu0 %v2200
    %3270 = vmatpush1.bf16.msra.mxu0 %v2199
    %3271 = vmatprep.subr.bf16.mxu0 %v2194
    %3272 = vmatpush1.bf16.msra.mxu0 %v2193
    %3273 = vmatprep.subr.bf16.mxu0 %v2188
    %3274 = vmatpush1.bf16.msra.mxu0 %v2187
    %3275 = vmatprep.subr.bf16.mxu0 %v2182
    %3276 = vmatpush1.bf16.msra.mxu0 %v2181
    %3277 = vmatprep.subr.bf16.mxu0 %v2176
    %3278 = vmatpush1.bf16.msra.mxu0 %v2175
    %3279 = vmatprep.subr.bf16.mxu0 %v2170
    %3280 = vmatpush1.bf16.msra.mxu0 %v2169
    %3281 = vmatprep.subr.bf16.mxu0 %v2164
    %3282 = vmatpush1.bf16.msra.mxu0 %v2163
    %3283 = vmatprep.subr.bf16.mxu0 %v2158
    %3284 = vmatpush1.bf16.msra.mxu0 %v2157
    %3285 = vmatprep.subr.bf16.mxu0 %v2248
    %3286 = vmatpush2.bf16.msra.mxu0 %v2247
    %3287 = vmatprep.subr.bf16.mxu0 %v2242
    %3288 = vmatpush2.bf16.msra.mxu0 %v2241
    %3289 = vmatprep.subr.bf16.mxu0 %v2236
    %3290 = vmatpush2.bf16.msra.mxu0 %v2235
    %3291 = vmatprep.subr.bf16.mxu0 %v2230
    %3292 = vmatpush2.bf16.msra.mxu0 %v2229
    %3293 = vmatprep.subr.bf16.mxu0 %v2224
    %3294 = vmatpush2.bf16.msra.mxu0 %v2223
    %3295 = vmatprep.subr.bf16.mxu0 %v2218
    %3296 = vmatpush2.bf16.msra.mxu0 %v2217
    %3297 = vmatprep.subr.bf16.mxu0 %v2212
    %3298 = vmatpush2.bf16.msra.mxu0 %v2211
    %3299 = vmatprep.subr.bf16.mxu0 %v2206
    %3300 = vmatpush2.bf16.msra.mxu0 %v2205
    %3301 = vmatprep.mubr.bf16.mxu0 %v3268
    %3302 = vmatmul.mubr.bf16.gmra.mxu0 %v3267
    %v3303 = vpop.f32.mrf.mxu0
    %v3304 = vadd.f32 0.0, %v3303
    %v3305 = vpop.f32.mrf.mxu0
    %v3306 = vadd.f32 0.0, %v3305
    %v3307 = vpop.f32.mrf.mxu0
    %v3308 = vpop.f32.mrf.mxu0
    %3309 = vdwg.mxu0
    %3310 = vmatprep.subr.bf16.mxu0 %v2202
    %3311 = vmatpush1.bf16.msra.mxu0 %v2201
    %3312 = vmatprep.subr.bf16.mxu0 %v2196
    %3313 = vmatpush1.bf16.msra.mxu0 %v2195
    %3314 = vmatprep.subr.bf16.mxu0 %v2190
    %3315 = vmatpush1.bf16.msra.mxu0 %v2189
    %3316 = vmatprep.subr.bf16.mxu0 %v2184
    %3317 = vmatpush1.bf16.msra.mxu0 %v2183
    %3318 = vmatprep.subr.bf16.mxu0 %v2178
    %3319 = vmatpush1.bf16.msra.mxu0 %v2177
    %3320 = vmatprep.subr.bf16.mxu0 %v2172
    %3321 = vmatpush1.bf16.msra.mxu0 %v2171
    %3322 = vmatprep.subr.bf16.mxu0 %v2166
    %3323 = vmatpush1.bf16.msra.mxu0 %v2165
    %3324 = vmatprep.subr.bf16.mxu0 %v2160
    %3325 = vmatpush1.bf16.msra.mxu0 %v2159
    %3326 = vmatprep.subr.bf16.mxu0 %v2250
    %3327 = vmatpush2.bf16.msra.mxu0 %v2249
    %3328 = vmatprep.subr.bf16.mxu0 %v2244
    %3329 = vmatpush2.bf16.msra.mxu0 %v2243
    %3330 = vmatprep.subr.bf16.mxu0 %v2238
    %3331 = vmatpush2.bf16.msra.mxu0 %v2237
    %3332 = vmatprep.subr.bf16.mxu0 %v2232
    %3333 = vmatpush2.bf16.msra.mxu0 %v2231
    %3334 = vmatprep.subr.bf16.mxu0 %v2226
    %3335 = vmatpush2.bf16.msra.mxu0 %v2225
    %3336 = vmatprep.subr.bf16.mxu0 %v2220
    %3337 = vmatpush2.bf16.msra.mxu0 %v2219
    %3338 = vmatprep.subr.bf16.mxu0 %v2214
    %3339 = vmatpush2.bf16.msra.mxu0 %v2213
    %3340 = vmatprep.subr.bf16.mxu0 %v2208
    %3341 = vmatpush2.bf16.msra.mxu0 %v2207
    %3342 = vmatprep.mubr.bf16.mxu0 %v3268
    %3343 = vmatmul.mubr.bf16.gmra.mxu0 %v3267
    %v3344 = vpop.f32.mrf.mxu0
    %v3345 = vadd.f32 0.0, %v3344
    %v3346 = vpop.f32.mrf.mxu0
    %v3347 = vadd.f32 0.0, %v3346
    %v3348 = vpop.f32.mrf.mxu0
    %v3349 = vpop.f32.mrf.mxu0
    %3350 = vdwg.mxu0
    %3351 = vmatprep.subr.bf16.mxu0 %v2204
    %3352 = vmatpush1.bf16.msra.mxu0 %v2203
    %3353 = vmatprep.subr.bf16.mxu0 %v2198
    %3354 = vmatpush1.bf16.msra.mxu0 %v2197
    %3355 = vmatprep.subr.bf16.mxu0 %v2192
    %3356 = vmatpush1.bf16.msra.mxu0 %v2191
    %3357 = vmatprep.subr.bf16.mxu0 %v2186
    %3358 = vmatpush1.bf16.msra.mxu0 %v2185
    %3359 = vmatprep.subr.bf16.mxu0 %v2180
    %3360 = vmatpush1.bf16.msra.mxu0 %v2179
    %3361 = vmatprep.subr.bf16.mxu0 %v2174
    %3362 = vmatpush1.bf16.msra.mxu0 %v2173
    %3363 = vmatprep.subr.bf16.mxu0 %v2168
    %3364 = vmatpush1.bf16.msra.mxu0 %v2167
    %3365 = vmatprep.subr.bf16.mxu0 %v2162
    %3366 = vmatpush1.bf16.msra.mxu0 %v2161
    %3367 = vmatprep.subr.bf16.mxu0 %v2252
    %3368 = vmatpush2.bf16.msra.mxu0 %v2251
    %3369 = vmatprep.subr.bf16.mxu0 %v2246
    %3370 = vmatpush2.bf16.msra.mxu0 %v2245
    %3371 = vmatprep.subr.bf16.mxu0 %v2240
    %3372 = vmatpush2.bf16.msra.mxu0 %v2239
    %3373 = vmatprep.subr.bf16.mxu0 %v2234
    %3374 = vmatpush2.bf16.msra.mxu0 %v2233
    %3375 = vmatprep.subr.bf16.mxu0 %v2228
    %3376 = vmatpush2.bf16.msra.mxu0 %v2227
    %3377 = vmatprep.subr.bf16.mxu0 %v2222
    %3378 = vmatpush2.bf16.msra.mxu0 %v2221
    %3379 = vmatprep.subr.bf16.mxu0 %v2216
    %3380 = vmatpush2.bf16.msra.mxu0 %v2215
    %3381 = vmatprep.subr.bf16.mxu0 %v2210
    %3382 = vmatpush2.bf16.msra.mxu0 %v2209
    %3383 = vmatprep.mubr.bf16.mxu0 %v3268
    %3384 = vmatmul.mubr.bf16.gmra.mxu0 %v3267
    %v3385 = vpop.f32.mrf.mxu0
    %v3386 = vadd.f32 0.0, %v3385
    %v3387 = vpop.f32.mrf.mxu0
    %v3388 = vadd.f32 0.0, %v3387
    %v3389 = vpop.f32.mrf.mxu0
    %v3390 = vpop.f32.mrf.mxu0
    %3391 = vdwg.mxu0
    %v3394 = vrot.slane %v3304, 6
    %v3395 = vrot.slane %v3306, 6
    %v3398 = vadd.f32 %v1670, %v3394
    %v3399 = vadd.f32 %v1672, %v3395
    %v3400 = vxor.u32 %v3398, 2147483648
    %v3401 = vxor.u32 %v3399, 2147483648
    %v3402 = vmul.f32 %v3400, 1.442695
    %v3403 = vpow.pop %v3402
    %v3404 = vmul.f32 %v3401, 1.442695
    %v3405 = vpow.pop %v3404
    %v3406 = vadd.f32 %v3403, 1.0
    %v3407 = vadd.f32 %v3405, 1.0
    %v3408 = vrcp.pop %v3406
    %v3409 = vmul.f32 1.0, %v3408
    %v3410 = vrcp.pop %v3407
    %v3411 = vmul.f32 1.0, %v3410
    %v3414 = vrot.slane %v3345, 6
    %v3415 = vrot.slane %v3347, 6
    %v3418 = vadd.f32 %v1711, %v3414
    %v3419 = vadd.f32 %v1713, %v3415
    %v3420 = vxor.u32 %v3418, 2147483648
    %v3421 = vxor.u32 %v3419, 2147483648
    %v3422 = vmul.f32 %v3420, 1.442695
    %v3423 = vpow.pop %v3422
    %v3424 = vmul.f32 %v3421, 1.442695
    %v3425 = vpow.pop %v3424
    %v3426 = vadd.f32 %v3423, 1.0
    %v3427 = vadd.f32 %v3425, 1.0
    %v3428 = vrcp.pop %v3426
    %v3429 = vmul.f32 1.0, %v3428
    %v3430 = vrcp.pop %v3427
    %v3431 = vmul.f32 1.0, %v3430
    %v3432 = vadd.f32 %v3386, %v2504
    %v3433 = vadd.f32 %v3388, %v2508
    %v3436 = vrot.slane %v3432, 6
    %v3437 = vrot.slane %v3433, 6
    %v3440 = vmul.f32 %v3409, %v3436
    %v3441 = vmul.f32 %v3411, %v3437
    %v3442 = vadd.f32 %v1752, %v3440
    %v3443 = vadd.f32 %v1754, %v3441
    %v3444 = vtanh.pop %v3442
    %v3445 = vtanh.pop %v3443
    %v3446 = vsub.f32 1.0, %v3429
    %v3447 = vsub.f32 1.0, %v3431
    %v3448 = vmul.f32 %v3446, %v3444
    %v3449 = vmul.f32 %v3447, %v3445
    %v3450 = vrot.slane %v3252, 6
    %v3451 = vrot.slane %v3253, 6
    %v3454 = vmul.f32 %v3429, %v3450
    %v3455 = vmul.f32 %v3431, %v3451
    %v3456 = vadd.f32 %v3448, %v3454
    %v3457 = vadd.f32 %v3449, %v3455
    %v3460 = vcombine.low %v3456, %v3457
    %v3462 = vunpack.c.l.s4 1983009808
    %v3463 = vunpack.c.0.s8 %v3462
    %v3464 = vlaneseq
    %v3465 = vshrl.u32 %v3464, 7
    %v3466 = vsub.s32 %v3463, %v3465
    %v3467 = vrot.slane %v3460, %v3466
    %v3468 = vcombine.high %v3467, %v3467
    %s3470 = scalar_lea.vmem [#allocation2], 20
    %3471 = vst [vmem:[%s3470] sm:$0xf] %v3468
    %v3472 = vpack.c.bf16 %v3456, %v3456
    %v3473 = vpack.c.bf16 %v3457, %v3457
    %v3476 = vrot.slane %v3472, 1
    %v3477 = vrot.slane %v3473, 1
    %3480 = vmatprep.subr.bf16.mxu0 %v2200
    %3481 = vmatpush1.bf16.msra.mxu0 %v2199
    %3482 = vmatprep.subr.bf16.mxu0 %v2194
    %3483 = vmatpush1.bf16.msra.mxu0 %v2193
    %3484 = vmatprep.subr.bf16.mxu0 %v2188
    %3485 = vmatpush1.bf16.msra.mxu0 %v2187
    %3486 = vmatprep.subr.bf16.mxu0 %v2182
    %3487 = vmatpush1.bf16.msra.mxu0 %v2181
    %3488 = vmatprep.subr.bf16.mxu0 %v2176
    %3489 = vmatpush1.bf16.msra.mxu0 %v2175
    %3490 = vmatprep.subr.bf16.mxu0 %v2170
    %3491 = vmatpush1.bf16.msra.mxu0 %v2169
    %3492 = vmatprep.subr.bf16.mxu0 %v2164
    %3493 = vmatpush1.bf16.msra.mxu0 %v2163
    %3494 = vmatprep.subr.bf16.mxu0 %v2158
    %3495 = vmatpush1.bf16.msra.mxu0 %v2157
    %3496 = vmatprep.subr.bf16.mxu0 %v2248
    %3497 = vmatpush2.bf16.msra.mxu0 %v2247
    %3498 = vmatprep.subr.bf16.mxu0 %v2242
    %3499 = vmatpush2.bf16.msra.mxu0 %v2241
    %3500 = vmatprep.subr.bf16.mxu0 %v2236
    %3501 = vmatpush2.bf16.msra.mxu0 %v2235
    %3502 = vmatprep.subr.bf16.mxu0 %v2230
    %3503 = vmatpush2.bf16.msra.mxu0 %v2229
    %3504 = vmatprep.subr.bf16.mxu0 %v2224
    %3505 = vmatpush2.bf16.msra.mxu0 %v2223
    %3506 = vmatprep.subr.bf16.mxu0 %v2218
    %3507 = vmatpush2.bf16.msra.mxu0 %v2217
    %3508 = vmatprep.subr.bf16.mxu0 %v2212
    %3509 = vmatpush2.bf16.msra.mxu0 %v2211
    %3510 = vmatprep.subr.bf16.mxu0 %v2206
    %3511 = vmatpush2.bf16.msra.mxu0 %v2205
    %3512 = vmatprep.mubr.bf16.mxu0 %v3477
    %3513 = vmatmul.mubr.bf16.gmra.mxu0 %v3476
    %v3514 = vpop.f32.mrf.mxu0
    %v3515 = vadd.f32 0.0, %v3514
    %v3516 = vpop.f32.mrf.mxu0
    %v3517 = vadd.f32 0.0, %v3516
    %v3518 = vpop.f32.mrf.mxu0
    %v3519 = vpop.f32.mrf.mxu0
    %3520 = vdwg.mxu0
    %3521 = vmatprep.subr.bf16.mxu0 %v2202
    %3522 = vmatpush1.bf16.msra.mxu0 %v2201
    %3523 = vmatprep.subr.bf16.mxu0 %v2196
    %3524 = vmatpush1.bf16.msra.mxu0 %v2195
    %3525 = vmatprep.subr.bf16.mxu0 %v2190
    %3526 = vmatpush1.bf16.msra.mxu0 %v2189
    %3527 = vmatprep.subr.bf16.mxu0 %v2184
    %3528 = vmatpush1.bf16.msra.mxu0 %v2183
    %3529 = vmatprep.subr.bf16.mxu0 %v2178
    %3530 = vmatpush1.bf16.msra.mxu0 %v2177
    %3531 = vmatprep.subr.bf16.mxu0 %v2172
    %3532 = vmatpush1.bf16.msra.mxu0 %v2171
    %3533 = vmatprep.subr.bf16.mxu0 %v2166
    %3534 = vmatpush1.bf16.msra.mxu0 %v2165
    %3535 = vmatprep.subr.bf16.mxu0 %v2160
    %3536 = vmatpush1.bf16.msra.mxu0 %v2159
    %3537 = vmatprep.subr.bf16.mxu0 %v2250
    %3538 = vmatpush2.bf16.msra.mxu0 %v2249
    %3539 = vmatprep.subr.bf16.mxu0 %v2244
    %3540 = vmatpush2.bf16.msra.mxu0 %v2243
    %3541 = vmatprep.subr.bf16.mxu0 %v2238
    %3542 = vmatpush2.bf16.msra.mxu0 %v2237
    %3543 = vmatprep.subr.bf16.mxu0 %v2232
    %3544 = vmatpush2.bf16.msra.mxu0 %v2231
    %3545 = vmatprep.subr.bf16.mxu0 %v2226
    %3546 = vmatpush2.bf16.msra.mxu0 %v2225
    %3547 = vmatprep.subr.bf16.mxu0 %v2220
    %3548 = vmatpush2.bf16.msra.mxu0 %v2219
    %3549 = vmatprep.subr.bf16.mxu0 %v2214
    %3550 = vmatpush2.bf16.msra.mxu0 %v2213
    %3551 = vmatprep.subr.bf16.mxu0 %v2208
    %3552 = vmatpush2.bf16.msra.mxu0 %v2207
    %3553 = vmatprep.mubr.bf16.mxu0 %v3477
    %3554 = vmatmul.mubr.bf16.gmra.mxu0 %v3476
    %v3555 = vpop.f32.mrf.mxu0
    %v3556 = vadd.f32 0.0, %v3555
    %v3557 = vpop.f32.mrf.mxu0
    %v3558 = vadd.f32 0.0, %v3557
    %v3559 = vpop.f32.mrf.mxu0
    %v3560 = vpop.f32.mrf.mxu0
    %3561 = vdwg.mxu0
    %3562 = vmatprep.subr.bf16.mxu0 %v2204
    %3563 = vmatpush1.bf16.msra.mxu0 %v2203
    %3564 = vmatprep.subr.bf16.mxu0 %v2198
    %3565 = vmatpush1.bf16.msra.mxu0 %v2197
    %3566 = vmatprep.subr.bf16.mxu0 %v2192
    %3567 = vmatpush1.bf16.msra.mxu0 %v2191
    %3568 = vmatprep.subr.bf16.mxu0 %v2186
    %3569 = vmatpush1.bf16.msra.mxu0 %v2185
    %3570 = vmatprep.subr.bf16.mxu0 %v2180
    %3571 = vmatpush1.bf16.msra.mxu0 %v2179
    %3572 = vmatprep.subr.bf16.mxu0 %v2174
    %3573 = vmatpush1.bf16.msra.mxu0 %v2173
    %3574 = vmatprep.subr.bf16.mxu0 %v2168
    %3575 = vmatpush1.bf16.msra.mxu0 %v2167
    %3576 = vmatprep.subr.bf16.mxu0 %v2162
    %3577 = vmatpush1.bf16.msra.mxu0 %v2161
    %3578 = vmatprep.subr.bf16.mxu0 %v2252
    %3579 = vmatpush2.bf16.msra.mxu0 %v2251
    %3580 = vmatprep.subr.bf16.mxu0 %v2246
    %3581 = vmatpush2.bf16.msra.mxu0 %v2245
    %3582 = vmatprep.subr.bf16.mxu0 %v2240
    %3583 = vmatpush2.bf16.msra.mxu0 %v2239
    %3584 = vmatprep.subr.bf16.mxu0 %v2234
    %3585 = vmatpush2.bf16.msra.mxu0 %v2233
    %3586 = vmatprep.subr.bf16.mxu0 %v2228
    %3587 = vmatpush2.bf16.msra.mxu0 %v2227
    %3588 = vmatprep.subr.bf16.mxu0 %v2222
    %3589 = vmatpush2.bf16.msra.mxu0 %v2221
    %3590 = vmatprep.subr.bf16.mxu0 %v2216
    %3591 = vmatpush2.bf16.msra.mxu0 %v2215
    %3592 = vmatprep.subr.bf16.mxu0 %v2210
    %3593 = vmatpush2.bf16.msra.mxu0 %v2209
    %3594 = vmatprep.mubr.bf16.mxu0 %v3477
    %3595 = vmatmul.mubr.bf16.gmra.mxu0 %v3476
    %v3596 = vpop.f32.mrf.mxu0
    %v3597 = vadd.f32 0.0, %v3596
    %v3598 = vpop.f32.mrf.mxu0
    %v3599 = vadd.f32 0.0, %v3598
    %v3600 = vpop.f32.mrf.mxu0
    %v3601 = vpop.f32.mrf.mxu0
    %3602 = vdwg.mxu0
    %v3605 = vrot.slane %v3515, 6
    %v3606 = vrot.slane %v3517, 6
    %v3609 = vadd.f32 %v1670, %v3605
    %v3610 = vadd.f32 %v1672, %v3606
    %v3611 = vxor.u32 %v3609, 2147483648
    %v3612 = vxor.u32 %v3610, 2147483648
    %v3613 = vmul.f32 %v3611, 1.442695
    %v3614 = vpow.pop %v3613
    %v3615 = vmul.f32 %v3612, 1.442695
    %v3616 = vpow.pop %v3615
    %v3617 = vadd.f32 %v3614, 1.0
    %v3618 = vadd.f32 %v3616, 1.0
    %v3619 = vrcp.pop %v3617
    %v3620 = vmul.f32 1.0, %v3619
    %v3621 = vrcp.pop %v3618
    %v3622 = vmul.f32 1.0, %v3621
    %v3625 = vrot.slane %v3556, 6
    %v3626 = vrot.slane %v3558, 6
    %v3629 = vadd.f32 %v1711, %v3625
    %v3630 = vadd.f32 %v1713, %v3626
    %v3631 = vxor.u32 %v3629, 2147483648
    %v3632 = vxor.u32 %v3630, 2147483648
    %v3633 = vmul.f32 %v3631, 1.442695
    %v3634 = vpow.pop %v3633
    %v3635 = vmul.f32 %v3632, 1.442695
    %v3636 = vpow.pop %v3635
    %v3637 = vadd.f32 %v3634, 1.0
    %v3638 = vadd.f32 %v3636, 1.0
    %v3639 = vrcp.pop %v3637
    %v3640 = vmul.f32 1.0, %v3639
    %v3641 = vrcp.pop %v3638
    %v3642 = vmul.f32 1.0, %v3641
    %v3643 = vadd.f32 %v3597, %v2504
    %v3644 = vadd.f32 %v3599, %v2508
    %v3647 = vrot.slane %v3643, 6
    %v3648 = vrot.slane %v3644, 6
    %v3651 = vmul.f32 %v3620, %v3647
    %v3652 = vmul.f32 %v3622, %v3648
    %v3653 = vadd.f32 %v1752, %v3651
    %v3654 = vadd.f32 %v1754, %v3652
    %v3655 = vtanh.pop %v3653
    %v3656 = vtanh.pop %v3654
    %v3657 = vsub.f32 1.0, %v3640
    %v3658 = vsub.f32 1.0, %v3642
    %v3659 = vmul.f32 %v3657, %v3655
    %v3660 = vmul.f32 %v3658, %v3656
    %v3661 = vmul.f32 %v3640, %v3456
    %v3662 = vmul.f32 %v3642, %v3457
    %v3663 = vadd.f32 %v3659, %v3661
    %v3664 = vadd.f32 %v3660, %v3662
    %v3667 = vcombine.low %v3663, %v3664
    %v3669 = vunpack.c.l.s4 1983009808
    %v3670 = vunpack.c.0.s8 %v3669
    %v3671 = vlaneseq
    %v3672 = vshrl.u32 %v3671, 7
    %v3673 = vsub.s32 %v3670, %v3672
    %v3674 = vrot.slane %v3667, %v3673
    %v3675 = vcombine.high %v3674, %v3674
    %s3677 = scalar_lea.vmem [#allocation2], 24
    %3678 = vst [vmem:[%s3677] sm:$0xf] %v3675
    %v3679 = vpack.c.bf16 %v3663, %v3663
    %v3680 = vpack.c.bf16 %v3664, %v3664
    %v3683 = vrot.slane %v3679, 1
    %v3684 = vrot.slane %v3680, 1
    %3687 = vmatprep.subr.bf16.mxu0 %v2200
    %3688 = vmatpush1.bf16.msra.mxu0 %v2199
    %3689 = vmatprep.subr.bf16.mxu0 %v2194
    %3690 = vmatpush1.bf16.msra.mxu0 %v2193
    %3691 = vmatprep.subr.bf16.mxu0 %v2188
    %3692 = vmatpush1.bf16.msra.mxu0 %v2187
    %3693 = vmatprep.subr.bf16.mxu0 %v2182
    %3694 = vmatpush1.bf16.msra.mxu0 %v2181
    %3695 = vmatprep.subr.bf16.mxu0 %v2176
    %3696 = vmatpush1.bf16.msra.mxu0 %v2175
    %3697 = vmatprep.subr.bf16.mxu0 %v2170
    %3698 = vmatpush1.bf16.msra.mxu0 %v2169
    %3699 = vmatprep.subr.bf16.mxu0 %v2164
    %3700 = vmatpush1.bf16.msra.mxu0 %v2163
    %3701 = vmatprep.subr.bf16.mxu0 %v2158
    %3702 = vmatpush1.bf16.msra.mxu0 %v2157
    %3703 = vmatprep.subr.bf16.mxu0 %v2248
    %3704 = vmatpush2.bf16.msra.mxu0 %v2247
    %3705 = vmatprep.subr.bf16.mxu0 %v2242
    %3706 = vmatpush2.bf16.msra.mxu0 %v2241
    %3707 = vmatprep.subr.bf16.mxu0 %v2236
    %3708 = vmatpush2.bf16.msra.mxu0 %v2235
    %3709 = vmatprep.subr.bf16.mxu0 %v2230
    %3710 = vmatpush2.bf16.msra.mxu0 %v2229
    %3711 = vmatprep.subr.bf16.mxu0 %v2224
    %3712 = vmatpush2.bf16.msra.mxu0 %v2223
    %3713 = vmatprep.subr.bf16.mxu0 %v2218
    %3714 = vmatpush2.bf16.msra.mxu0 %v2217
    %3715 = vmatprep.subr.bf16.mxu0 %v2212
    %3716 = vmatpush2.bf16.msra.mxu0 %v2211
    %3717 = vmatprep.subr.bf16.mxu0 %v2206
    %3718 = vmatpush2.bf16.msra.mxu0 %v2205
    %3719 = vmatprep.mubr.bf16.mxu0 %v3684
    %3720 = vmatmul.mubr.bf16.gmra.mxu0 %v3683
    %v3721 = vpop.f32.mrf.mxu0
    %v3722 = vadd.f32 0.0, %v3721
    %v3723 = vpop.f32.mrf.mxu0
    %v3724 = vadd.f32 0.0, %v3723
    %v3725 = vpop.f32.mrf.mxu0
    %v3726 = vpop.f32.mrf.mxu0
    %3727 = vdwg.mxu0
    %3728 = vmatprep.subr.bf16.mxu0 %v2202
    %3729 = vmatpush1.bf16.msra.mxu0 %v2201
    %3730 = vmatprep.subr.bf16.mxu0 %v2196
    %3731 = vmatpush1.bf16.msra.mxu0 %v2195
    %3732 = vmatprep.subr.bf16.mxu0 %v2190
    %3733 = vmatpush1.bf16.msra.mxu0 %v2189
    %3734 = vmatprep.subr.bf16.mxu0 %v2184
    %3735 = vmatpush1.bf16.msra.mxu0 %v2183
    %3736 = vmatprep.subr.bf16.mxu0 %v2178
    %3737 = vmatpush1.bf16.msra.mxu0 %v2177
    %3738 = vmatprep.subr.bf16.mxu0 %v2172
    %3739 = vmatpush1.bf16.msra.mxu0 %v2171
    %3740 = vmatprep.subr.bf16.mxu0 %v2166
    %3741 = vmatpush1.bf16.msra.mxu0 %v2165
    %3742 = vmatprep.subr.bf16.mxu0 %v2160
    %3743 = vmatpush1.bf16.msra.mxu0 %v2159
    %3744 = vmatprep.subr.bf16.mxu0 %v2250
    %3745 = vmatpush2.bf16.msra.mxu0 %v2249
    %3746 = vmatprep.subr.bf16.mxu0 %v2244
    %3747 = vmatpush2.bf16.msra.mxu0 %v2243
    %3748 = vmatprep.subr.bf16.mxu0 %v2238
    %3749 = vmatpush2.bf16.msra.mxu0 %v2237
    %3750 = vmatprep.subr.bf16.mxu0 %v2232
    %3751 = vmatpush2.bf16.msra.mxu0 %v2231
    %3752 = vmatprep.subr.bf16.mxu0 %v2226
    %3753 = vmatpush2.bf16.msra.mxu0 %v2225
    %3754 = vmatprep.subr.bf16.mxu0 %v2220
    %3755 = vmatpush2.bf16.msra.mxu0 %v2219
    %3756 = vmatprep.subr.bf16.mxu0 %v2214
    %3757 = vmatpush2.bf16.msra.mxu0 %v2213
    %3758 = vmatprep.subr.bf16.mxu0 %v2208
    %3759 = vmatpush2.bf16.msra.mxu0 %v2207
    %3760 = vmatprep.mubr.bf16.mxu0 %v3684
    %3761 = vmatmul.mubr.bf16.gmra.mxu0 %v3683
    %v3762 = vpop.f32.mrf.mxu0
    %v3763 = vadd.f32 0.0, %v3762
    %v3764 = vpop.f32.mrf.mxu0
    %v3765 = vadd.f32 0.0, %v3764
    %v3766 = vpop.f32.mrf.mxu0
    %v3767 = vpop.f32.mrf.mxu0
    %3768 = vdwg.mxu0
    %3769 = vmatprep.subr.bf16.mxu0 %v2204
    %3770 = vmatpush1.bf16.msra.mxu0 %v2203
    %3771 = vmatprep.subr.bf16.mxu0 %v2198
    %3772 = vmatpush1.bf16.msra.mxu0 %v2197
    %3773 = vmatprep.subr.bf16.mxu0 %v2192
    %3774 = vmatpush1.bf16.msra.mxu0 %v2191
    %3775 = vmatprep.subr.bf16.mxu0 %v2186
    %3776 = vmatpush1.bf16.msra.mxu0 %v2185
    %3777 = vmatprep.subr.bf16.mxu0 %v2180
    %3778 = vmatpush1.bf16.msra.mxu0 %v2179
    %3779 = vmatprep.subr.bf16.mxu0 %v2174
    %3780 = vmatpush1.bf16.msra.mxu0 %v2173
    %3781 = vmatprep.subr.bf16.mxu0 %v2168
    %3782 = vmatpush1.bf16.msra.mxu0 %v2167
    %3783 = vmatprep.subr.bf16.mxu0 %v2162
    %3784 = vmatpush1.bf16.msra.mxu0 %v2161
    %3785 = vmatprep.subr.bf16.mxu0 %v2252
    %3786 = vmatpush2.bf16.msra.mxu0 %v2251
    %3787 = vmatprep.subr.bf16.mxu0 %v2246
    %3788 = vmatpush2.bf16.msra.mxu0 %v2245
    %3789 = vmatprep.subr.bf16.mxu0 %v2240
    %3790 = vmatpush2.bf16.msra.mxu0 %v2239
    %3791 = vmatprep.subr.bf16.mxu0 %v2234
    %3792 = vmatpush2.bf16.msra.mxu0 %v2233
    %3793 = vmatprep.subr.bf16.mxu0 %v2228
    %3794 = vmatpush2.bf16.msra.mxu0 %v2227
    %3795 = vmatprep.subr.bf16.mxu0 %v2222
    %3796 = vmatpush2.bf16.msra.mxu0 %v2221
    %3797 = vmatprep.subr.bf16.mxu0 %v2216
    %3798 = vmatpush2.bf16.msra.mxu0 %v2215
    %3799 = vmatprep.subr.bf16.mxu0 %v2210
    %3800 = vmatpush2.bf16.msra.mxu0 %v2209
    %3801 = vmatprep.mubr.bf16.mxu0 %v3684
    %3802 = vmatmul.mubr.bf16.gmra.mxu0 %v3683
    %v3803 = vpop.f32.mrf.mxu0
    %v3804 = vadd.f32 0.0, %v3803
    %v3805 = vpop.f32.mrf.mxu0
    %v3806 = vadd.f32 0.0, %v3805
    %v3807 = vpop.f32.mrf.mxu0
    %v3808 = vpop.f32.mrf.mxu0
    %3809 = vdwg.mxu0
    %v3812 = vrot.slane %v3722, 6
    %v3813 = vrot.slane %v3724, 6
    %v3816 = vadd.f32 %v1670, %v3812
    %v3817 = vadd.f32 %v1672, %v3813
    %v3818 = vxor.u32 %v3816, 2147483648
    %v3819 = vxor.u32 %v3817, 2147483648
    %v3820 = vmul.f32 %v3818, 1.442695
    %v3821 = vpow.pop %v3820
    %v3822 = vmul.f32 %v3819, 1.442695
    %v3823 = vpow.pop %v3822
    %v3824 = vadd.f32 %v3821, 1.0
    %v3825 = vadd.f32 %v3823, 1.0
    %v3826 = vrcp.pop %v3824
    %v3827 = vmul.f32 1.0, %v3826
    %v3828 = vrcp.pop %v3825
    %v3829 = vmul.f32 1.0, %v3828
    %v3832 = vrot.slane %v3763, 6
    %v3833 = vrot.slane %v3765, 6
    %v3836 = vadd.f32 %v1711, %v3832
    %v3837 = vadd.f32 %v1713, %v3833
    %v3838 = vxor.u32 %v3836, 2147483648
    %v3839 = vxor.u32 %v3837, 2147483648
    %v3840 = vmul.f32 %v3838, 1.442695
    %v3841 = vpow.pop %v3840
    %v3842 = vmul.f32 %v3839, 1.442695
    %v3843 = vpow.pop %v3842
    %v3844 = vadd.f32 %v3841, 1.0
    %v3845 = vadd.f32 %v3843, 1.0
    %v3846 = vrcp.pop %v3844
    %v3847 = vmul.f32 1.0, %v3846
    %v3848 = vrcp.pop %v3845
    %v3849 = vmul.f32 1.0, %v3848
    %v3850 = vadd.f32 %v3804, %v2504
    %v3851 = vadd.f32 %v3806, %v2508
    %v3854 = vrot.slane %v3850, 6
    %v3855 = vrot.slane %v3851, 6
    %v3858 = vmul.f32 %v3827, %v3854
    %v3859 = vmul.f32 %v3829, %v3855
    %v3860 = vadd.f32 %v1752, %v3858
    %v3861 = vadd.f32 %v1754, %v3859
    %v3862 = vtanh.pop %v3860
    %v3863 = vtanh.pop %v3861
    %v3864 = vsub.f32 1.0, %v3847
    %v3865 = vsub.f32 1.0, %v3849
    %v3866 = vmul.f32 %v3864, %v3862
    %v3867 = vmul.f32 %v3865, %v3863
    %v3868 = vmul.f32 %v3847, %v3663
    %v3869 = vmul.f32 %v3849, %v3664
    %v3870 = vadd.f32 %v3866, %v3868
    %v3871 = vadd.f32 %v3867, %v3869
    %v3874 = vcombine.low %v3870, %v3871
    %v3876 = vunpack.c.l.s4 1983009808
    %v3877 = vunpack.c.0.s8 %v3876
    %v3878 = vlaneseq
    %v3879 = vshrl.u32 %v3878, 7
    %v3880 = vsub.s32 %v3877, %v3879
    %v3881 = vrot.slane %v3874, %v3880
    %v3882 = vcombine.high %v3881, %v3881
    %s3884 = scalar_lea.vmem [#allocation2], 28
    %3885 = vst [vmem:[%s3884] sm:$0xf] %v3882
    %v3886 = vpack.c.bf16 %v3870, %v3870
    %v3887 = vpack.c.bf16 %v3871, %v3871
    %v3890 = vrot.slane %v3886, 1
    %v3891 = vrot.slane %v3887, 1
    %3894 = vmatprep.subr.bf16.mxu0 %v2200
    %3895 = vmatpush1.bf16.msra.mxu0 %v2199
    %3896 = vmatprep.subr.bf16.mxu0 %v2194
    %3897 = vmatpush1.bf16.msra.mxu0 %v2193
    %3898 = vmatprep.subr.bf16.mxu0 %v2188
    %3899 = vmatpush1.bf16.msra.mxu0 %v2187
    %3900 = vmatprep.subr.bf16.mxu0 %v2182
    %3901 = vmatpush1.bf16.msra.mxu0 %v2181
    %3902 = vmatprep.subr.bf16.mxu0 %v2176
    %3903 = vmatpush1.bf16.msra.mxu0 %v2175
    %3904 = vmatprep.subr.bf16.mxu0 %v2170
    %3905 = vmatpush1.bf16.msra.mxu0 %v2169
    %3906 = vmatprep.subr.bf16.mxu0 %v2164
    %3907 = vmatpush1.bf16.msra.mxu0 %v2163
    %3908 = vmatprep.subr.bf16.mxu0 %v2158
    %3909 = vmatpush1.bf16.msra.mxu0 %v2157
    %3910 = vmatprep.subr.bf16.mxu0 %v2248
    %3911 = vmatpush2.bf16.msra.mxu0 %v2247
    %3912 = vmatprep.subr.bf16.mxu0 %v2242
    %3913 = vmatpush2.bf16.msra.mxu0 %v2241
    %3914 = vmatprep.subr.bf16.mxu0 %v2236
    %3915 = vmatpush2.bf16.msra.mxu0 %v2235
    %3916 = vmatprep.subr.bf16.mxu0 %v2230
    %3917 = vmatpush2.bf16.msra.mxu0 %v2229
    %3918 = vmatprep.subr.bf16.mxu0 %v2224
    %3919 = vmatpush2.bf16.msra.mxu0 %v2223
    %3920 = vmatprep.subr.bf16.mxu0 %v2218
    %3921 = vmatpush2.bf16.msra.mxu0 %v2217
    %3922 = vmatprep.subr.bf16.mxu0 %v2212
    %3923 = vmatpush2.bf16.msra.mxu0 %v2211
    %3924 = vmatprep.subr.bf16.mxu0 %v2206
    %3925 = vmatpush2.bf16.msra.mxu0 %v2205
    %3926 = vmatprep.mubr.bf16.mxu0 %v3891
    %3927 = vmatmul.mubr.bf16.gmra.mxu0 %v3890
    %v3928 = vpop.f32.mrf.mxu0
    %v3929 = vadd.f32 0.0, %v3928
    %v3930 = vpop.f32.mrf.mxu0
    %v3931 = vadd.f32 0.0, %v3930
    %v3932 = vpop.f32.mrf.mxu0
    %v3933 = vpop.f32.mrf.mxu0
    %3934 = vdwg.mxu0
    %3935 = vmatprep.subr.bf16.mxu0 %v2202
    %3936 = vmatpush1.bf16.msra.mxu0 %v2201
    %3937 = vmatprep.subr.bf16.mxu0 %v2196
    %3938 = vmatpush1.bf16.msra.mxu0 %v2195
    %3939 = vmatprep.subr.bf16.mxu0 %v2190
    %3940 = vmatpush1.bf16.msra.mxu0 %v2189
    %3941 = vmatprep.subr.bf16.mxu0 %v2184
    %3942 = vmatpush1.bf16.msra.mxu0 %v2183
    %3943 = vmatprep.subr.bf16.mxu0 %v2178
    %3944 = vmatpush1.bf16.msra.mxu0 %v2177
    %3945 = vmatprep.subr.bf16.mxu0 %v2172
    %3946 = vmatpush1.bf16.msra.mxu0 %v2171
    %3947 = vmatprep.subr.bf16.mxu0 %v2166
    %3948 = vmatpush1.bf16.msra.mxu0 %v2165
    %3949 = vmatprep.subr.bf16.mxu0 %v2160
    %3950 = vmatpush1.bf16.msra.mxu0 %v2159
    %3951 = vmatprep.subr.bf16.mxu0 %v2250
    %3952 = vmatpush2.bf16.msra.mxu0 %v2249
    %3953 = vmatprep.subr.bf16.mxu0 %v2244
    %3954 = vmatpush2.bf16.msra.mxu0 %v2243
    %3955 = vmatprep.subr.bf16.mxu0 %v2238
    %3956 = vmatpush2.bf16.msra.mxu0 %v2237
    %3957 = vmatprep.subr.bf16.mxu0 %v2232
    %3958 = vmatpush2.bf16.msra.mxu0 %v2231
    %3959 = vmatprep.subr.bf16.mxu0 %v2226
    %3960 = vmatpush2.bf16.msra.mxu0 %v2225
    %3961 = vmatprep.subr.bf16.mxu0 %v2220
    %3962 = vmatpush2.bf16.msra.mxu0 %v2219
    %3963 = vmatprep.subr.bf16.mxu0 %v2214
    %3964 = vmatpush2.bf16.msra.mxu0 %v2213
    %3965 = vmatprep.subr.bf16.mxu0 %v2208
    %3966 = vmatpush2.bf16.msra.mxu0 %v2207
    %3967 = vmatprep.mubr.bf16.mxu0 %v3891
    %3968 = vmatmul.mubr.bf16.gmra.mxu0 %v3890
    %v3969 = vpop.f32.mrf.mxu0
    %v3970 = vadd.f32 0.0, %v3969
    %v3971 = vpop.f32.mrf.mxu0
    %v3972 = vadd.f32 0.0, %v3971
    %v3973 = vpop.f32.mrf.mxu0
    %v3974 = vpop.f32.mrf.mxu0
    %3975 = vdwg.mxu0
    %3976 = vmatprep.subr.bf16.mxu0 %v2204
    %3977 = vmatpush1.bf16.msra.mxu0 %v2203
    %3978 = vmatprep.subr.bf16.mxu0 %v2198
    %3979 = vmatpush1.bf16.msra.mxu0 %v2197
    %3980 = vmatprep.subr.bf16.mxu0 %v2192
    %3981 = vmatpush1.bf16.msra.mxu0 %v2191
    %3982 = vmatprep.subr.bf16.mxu0 %v2186
    %3983 = vmatpush1.bf16.msra.mxu0 %v2185
    %3984 = vmatprep.subr.bf16.mxu0 %v2180
    %3985 = vmatpush1.bf16.msra.mxu0 %v2179
    %3986 = vmatprep.subr.bf16.mxu0 %v2174
    %3987 = vmatpush1.bf16.msra.mxu0 %v2173
    %3988 = vmatprep.subr.bf16.mxu0 %v2168
    %3989 = vmatpush1.bf16.msra.mxu0 %v2167
    %3990 = vmatprep.subr.bf16.mxu0 %v2162
    %3991 = vmatpush1.bf16.msra.mxu0 %v2161
    %3992 = vmatprep.subr.bf16.mxu0 %v2252
    %3993 = vmatpush2.bf16.msra.mxu0 %v2251
    %3994 = vmatprep.subr.bf16.mxu0 %v2246
    %3995 = vmatpush2.bf16.msra.mxu0 %v2245
    %3996 = vmatprep.subr.bf16.mxu0 %v2240
    %3997 = vmatpush2.bf16.msra.mxu0 %v2239
    %3998 = vmatprep.subr.bf16.mxu0 %v2234
    %3999 = vmatpush2.bf16.msra.mxu0 %v2233
    %4000 = vmatprep.subr.bf16.mxu0 %v2228
    %4001 = vmatpush2.bf16.msra.mxu0 %v2227
    %4002 = vmatprep.subr.bf16.mxu0 %v2222
    %4003 = vmatpush2.bf16.msra.mxu0 %v2221
    %4004 = vmatprep.subr.bf16.mxu0 %v2216
    %4005 = vmatpush2.bf16.msra.mxu0 %v2215
    %4006 = vmatprep.subr.bf16.mxu0 %v2210
    %4007 = vmatpush2.bf16.msra.mxu0 %v2209
    %4008 = vmatprep.mubr.bf16.mxu0 %v3891
    %4009 = vmatmul.mubr.bf16.gmra.mxu0 %v3890
    %v4010 = vpop.f32.mrf.mxu0
    %v4011 = vadd.f32 0.0, %v4010
    %v4012 = vpop.f32.mrf.mxu0
    %v4013 = vadd.f32 0.0, %v4012
    %v4014 = vpop.f32.mrf.mxu0
    %v4015 = vpop.f32.mrf.mxu0
    %4016 = vdwg.mxu0
    %v4019 = vrot.slane %v3929, 6
    %v4020 = vrot.slane %v3931, 6
    %v4023 = vadd.f32 %v1670, %v4019
    %v4024 = vadd.f32 %v1672, %v4020
    %v4025 = vxor.u32 %v4023, 2147483648
    %v4026 = vxor.u32 %v4024, 2147483648
    %v4027 = vmul.f32 %v4025, 1.442695
    %v4028 = vpow.pop %v4027
    %v4029 = vmul.f32 %v4026, 1.442695
    %v4030 = vpow.pop %v4029
    %v4031 = vadd.f32 %v4028, 1.0
    %v4032 = vadd.f32 %v4030, 1.0
    %v4033 = vrcp.pop %v4031
    %v4034 = vmul.f32 1.0, %v4033
    %v4035 = vrcp.pop %v4032
    %v4036 = vmul.f32 1.0, %v4035
    %v4039 = vrot.slane %v3970, 6
    %v4040 = vrot.slane %v3972, 6
    %v4043 = vadd.f32 %v1711, %v4039
    %v4044 = vadd.f32 %v1713, %v4040
    %v4045 = vxor.u32 %v4043, 2147483648
    %v4046 = vxor.u32 %v4044, 2147483648
    %v4047 = vmul.f32 %v4045, 1.442695
    %v4048 = vpow.pop %v4047
    %v4049 = vmul.f32 %v4046, 1.442695
    %v4050 = vpow.pop %v4049
    %v4051 = vadd.f32 %v4048, 1.0
    %v4052 = vadd.f32 %v4050, 1.0
    %v4053 = vrcp.pop %v4051
    %v4054 = vmul.f32 1.0, %v4053
    %v4055 = vrcp.pop %v4052
    %v4056 = vmul.f32 1.0, %v4055
    %v4057 = vadd.f32 %v4011, %v2504
    %v4058 = vadd.f32 %v4013, %v2508
    %v4061 = vrot.slane %v4057, 6
    %v4062 = vrot.slane %v4058, 6
    %v4065 = vmul.f32 %v4034, %v4061
    %v4066 = vmul.f32 %v4036, %v4062
    %v4067 = vadd.f32 %v1752, %v4065
    %v4068 = vadd.f32 %v1754, %v4066
    %v4069 = vtanh.pop %v4067
    %v4070 = vtanh.pop %v4068
    %v4071 = vsub.f32 1.0, %v4054
    %v4072 = vsub.f32 1.0, %v4056
    %v4073 = vmul.f32 %v4071, %v4069
    %v4074 = vmul.f32 %v4072, %v4070
    %v4075 = vmul.f32 %v4054, %v3870
    %v4076 = vmul.f32 %v4056, %v3871
    %v4077 = vadd.f32 %v4073, %v4075
    %v4078 = vadd.f32 %v4074, %v4076
    %v4081 = vcombine.low %v4077, %v4078
    %v4083 = vunpack.c.l.s4 1983009808
    %v4084 = vunpack.c.0.s8 %v4083
    %v4085 = vlaneseq
    %v4086 = vshrl.u32 %v4085, 7
    %v4087 = vsub.s32 %v4084, %v4086
    %v4088 = vrot.slane %v4081, %v4087
    %v4089 = vcombine.high %v4088, %v4088
    %s4091 = scalar_lea.vmem [#allocation2], 32
    %4092 = vst [vmem:[%s4091] sm:$0xf] %v4089
    %v4093 = vpack.c.bf16 %v4077, %v4077
    %v4094 = vpack.c.bf16 %v4078, %v4078
    %v4097 = vrot.slane %v4093, 1
    %v4098 = vrot.slane %v4094, 1
    %4101 = vmatprep.subr.bf16.mxu0 %v2200
    %4102 = vmatpush1.bf16.msra.mxu0 %v2199
    %4103 = vmatprep.subr.bf16.mxu0 %v2194
    %4104 = vmatpush1.bf16.msra.mxu0 %v2193
    %4105 = vmatprep.subr.bf16.mxu0 %v2188
    %4106 = vmatpush1.bf16.msra.mxu0 %v2187
    %4107 = vmatprep.subr.bf16.mxu0 %v2182
    %4108 = vmatpush1.bf16.msra.mxu0 %v2181
    %4109 = vmatprep.subr.bf16.mxu0 %v2176
    %4110 = vmatpush1.bf16.msra.mxu0 %v2175
    %4111 = vmatprep.subr.bf16.mxu0 %v2170
    %4112 = vmatpush1.bf16.msra.mxu0 %v2169
    %4113 = vmatprep.subr.bf16.mxu0 %v2164
    %4114 = vmatpush1.bf16.msra.mxu0 %v2163
    %4115 = vmatprep.subr.bf16.mxu0 %v2158
    %4116 = vmatpush1.bf16.msra.mxu0 %v2157
    %4117 = vmatprep.subr.bf16.mxu0 %v2248
    %4118 = vmatpush2.bf16.msra.mxu0 %v2247
    %4119 = vmatprep.subr.bf16.mxu0 %v2242
    %4120 = vmatpush2.bf16.msra.mxu0 %v2241
    %4121 = vmatprep.subr.bf16.mxu0 %v2236
    %4122 = vmatpush2.bf16.msra.mxu0 %v2235
    %4123 = vmatprep.subr.bf16.mxu0 %v2230
    %4124 = vmatpush2.bf16.msra.mxu0 %v2229
    %4125 = vmatprep.subr.bf16.mxu0 %v2224
    %4126 = vmatpush2.bf16.msra.mxu0 %v2223
    %4127 = vmatprep.subr.bf16.mxu0 %v2218
    %4128 = vmatpush2.bf16.msra.mxu0 %v2217
    %4129 = vmatprep.subr.bf16.mxu0 %v2212
    %4130 = vmatpush2.bf16.msra.mxu0 %v2211
    %4131 = vmatprep.subr.bf16.mxu0 %v2206
    %4132 = vmatpush2.bf16.msra.mxu0 %v2205
    %4133 = vmatprep.mubr.bf16.mxu0 %v4098
    %4134 = vmatmul.mubr.bf16.gmra.mxu0 %v4097
    %v4135 = vpop.f32.mrf.mxu0
    %v4136 = vadd.f32 0.0, %v4135
    %v4137 = vpop.f32.mrf.mxu0
    %v4138 = vadd.f32 0.0, %v4137
    %v4139 = vpop.f32.mrf.mxu0
    %v4140 = vpop.f32.mrf.mxu0
    %4141 = vdwg.mxu0
    %4142 = vmatprep.subr.bf16.mxu0 %v2202
    %4143 = vmatpush1.bf16.msra.mxu0 %v2201
    %4144 = vmatprep.subr.bf16.mxu0 %v2196
    %4145 = vmatpush1.bf16.msra.mxu0 %v2195
    %4146 = vmatprep.subr.bf16.mxu0 %v2190
    %4147 = vmatpush1.bf16.msra.mxu0 %v2189
    %4148 = vmatprep.subr.bf16.mxu0 %v2184
    %4149 = vmatpush1.bf16.msra.mxu0 %v2183
    %4150 = vmatprep.subr.bf16.mxu0 %v2178
    %4151 = vmatpush1.bf16.msra.mxu0 %v2177
    %4152 = vmatprep.subr.bf16.mxu0 %v2172
    %4153 = vmatpush1.bf16.msra.mxu0 %v2171
    %4154 = vmatprep.subr.bf16.mxu0 %v2166
    %4155 = vmatpush1.bf16.msra.mxu0 %v2165
    %4156 = vmatprep.subr.bf16.mxu0 %v2160
    %4157 = vmatpush1.bf16.msra.mxu0 %v2159
    %4158 = vmatprep.subr.bf16.mxu0 %v2250
    %4159 = vmatpush2.bf16.msra.mxu0 %v2249
    %4160 = vmatprep.subr.bf16.mxu0 %v2244
    %4161 = vmatpush2.bf16.msra.mxu0 %v2243
    %4162 = vmatprep.subr.bf16.mxu0 %v2238
    %4163 = vmatpush2.bf16.msra.mxu0 %v2237
    %4164 = vmatprep.subr.bf16.mxu0 %v2232
    %4165 = vmatpush2.bf16.msra.mxu0 %v2231
    %4166 = vmatprep.subr.bf16.mxu0 %v2226
    %4167 = vmatpush2.bf16.msra.mxu0 %v2225
    %4168 = vmatprep.subr.bf16.mxu0 %v2220
    %4169 = vmatpush2.bf16.msra.mxu0 %v2219
    %4170 = vmatprep.subr.bf16.mxu0 %v2214
    %4171 = vmatpush2.bf16.msra.mxu0 %v2213
    %4172 = vmatprep.subr.bf16.mxu0 %v2208
    %4173 = vmatpush2.bf16.msra.mxu0 %v2207
    %4174 = vmatprep.mubr.bf16.mxu0 %v4098
    %4175 = vmatmul.mubr.bf16.gmra.mxu0 %v4097
    %v4176 = vpop.f32.mrf.mxu0
    %v4177 = vadd.f32 0.0, %v4176
    %v4178 = vpop.f32.mrf.mxu0
    %v4179 = vadd.f32 0.0, %v4178
    %v4180 = vpop.f32.mrf.mxu0
    %v4181 = vpop.f32.mrf.mxu0
    %4182 = vdwg.mxu0
    %4183 = vmatprep.subr.bf16.mxu0 %v2204
    %4184 = vmatpush1.bf16.msra.mxu0 %v2203
    %4185 = vmatprep.subr.bf16.mxu0 %v2198
    %4186 = vmatpush1.bf16.msra.mxu0 %v2197
    %4187 = vmatprep.subr.bf16.mxu0 %v2192
    %4188 = vmatpush1.bf16.msra.mxu0 %v2191
    %4189 = vmatprep.subr.bf16.mxu0 %v2186
    %4190 = vmatpush1.bf16.msra.mxu0 %v2185
    %4191 = vmatprep.subr.bf16.mxu0 %v2180
    %4192 = vmatpush1.bf16.msra.mxu0 %v2179
    %4193 = vmatprep.subr.bf16.mxu0 %v2174
    %4194 = vmatpush1.bf16.msra.mxu0 %v2173
    %4195 = vmatprep.subr.bf16.mxu0 %v2168
    %4196 = vmatpush1.bf16.msra.mxu0 %v2167
    %4197 = vmatprep.subr.bf16.mxu0 %v2162
    %4198 = vmatpush1.bf16.msra.mxu0 %v2161
    %4199 = vmatprep.subr.bf16.mxu0 %v2252
    %4200 = vmatpush2.bf16.msra.mxu0 %v2251
    %4201 = vmatprep.subr.bf16.mxu0 %v2246
    %4202 = vmatpush2.bf16.msra.mxu0 %v2245
    %4203 = vmatprep.subr.bf16.mxu0 %v2240
    %4204 = vmatpush2.bf16.msra.mxu0 %v2239
    %4205 = vmatprep.subr.bf16.mxu0 %v2234
    %4206 = vmatpush2.bf16.msra.mxu0 %v2233
    %4207 = vmatprep.subr.bf16.mxu0 %v2228
    %4208 = vmatpush2.bf16.msra.mxu0 %v2227
    %4209 = vmatprep.subr.bf16.mxu0 %v2222
    %4210 = vmatpush2.bf16.msra.mxu0 %v2221
    %4211 = vmatprep.subr.bf16.mxu0 %v2216
    %4212 = vmatpush2.bf16.msra.mxu0 %v2215
    %4213 = vmatprep.subr.bf16.mxu0 %v2210
    %4214 = vmatpush2.bf16.msra.mxu0 %v2209
    %4215 = vmatprep.mubr.bf16.mxu0 %v4098
    %4216 = vmatmul.mubr.bf16.gmra.mxu0 %v4097
    %v4217 = vpop.f32.mrf.mxu0
    %v4218 = vadd.f32 0.0, %v4217
    %v4219 = vpop.f32.mrf.mxu0
    %v4220 = vadd.f32 0.0, %v4219
    %v4221 = vpop.f32.mrf.mxu0
    %v4222 = vpop.f32.mrf.mxu0
    %4223 = vdwg.mxu0
    %v4226 = vrot.slane %v4136, 6
    %v4227 = vrot.slane %v4138, 6
    %v4230 = vadd.f32 %v1670, %v4226
    %v4231 = vadd.f32 %v1672, %v4227
    %v4232 = vxor.u32 %v4230, 2147483648
    %v4233 = vxor.u32 %v4231, 2147483648
    %v4234 = vmul.f32 %v4232, 1.442695
    %v4235 = vpow.pop %v4234
    %v4236 = vmul.f32 %v4233, 1.442695
    %v4237 = vpow.pop %v4236
    %v4238 = vadd.f32 %v4235, 1.0
    %v4239 = vadd.f32 %v4237, 1.0
    %v4240 = vrcp.pop %v4238
    %v4241 = vmul.f32 1.0, %v4240
    %v4242 = vrcp.pop %v4239
    %v4243 = vmul.f32 1.0, %v4242
    %v4246 = vrot.slane %v4177, 6
    %v4247 = vrot.slane %v4179, 6
    %v4250 = vadd.f32 %v1711, %v4246
    %v4251 = vadd.f32 %v1713, %v4247
    %v4252 = vxor.u32 %v4250, 2147483648
    %v4253 = vxor.u32 %v4251, 2147483648
    %v4254 = vmul.f32 %v4252, 1.442695
    %v4255 = vpow.pop %v4254
    %v4256 = vmul.f32 %v4253, 1.442695
    %v4257 = vpow.pop %v4256
    %v4258 = vadd.f32 %v4255, 1.0
    %v4259 = vadd.f32 %v4257, 1.0
    %v4260 = vrcp.pop %v4258
    %v4261 = vmul.f32 1.0, %v4260
    %v4262 = vrcp.pop %v4259
    %v4263 = vmul.f32 1.0, %v4262
    %v4264 = vadd.f32 %v4218, %v2504
    %v4265 = vadd.f32 %v4220, %v2508
    %v4268 = vrot.slane %v4264, 6
    %v4269 = vrot.slane %v4265, 6
    %v4272 = vmul.f32 %v4241, %v4268
    %v4273 = vmul.f32 %v4243, %v4269
    %v4274 = vadd.f32 %v1752, %v4272
    %v4275 = vadd.f32 %v1754, %v4273
    %v4276 = vtanh.pop %v4274
    %v4277 = vtanh.pop %v4275
    %v4278 = vsub.f32 1.0, %v4261
    %v4279 = vsub.f32 1.0, %v4263
    %v4280 = vmul.f32 %v4278, %v4276
    %v4281 = vmul.f32 %v4279, %v4277
    %v4282 = vmul.f32 %v4261, %v4077
    %v4283 = vmul.f32 %v4263, %v4078
    %v4284 = vadd.f32 %v4280, %v4282
    %v4285 = vadd.f32 %v4281, %v4283
    %v4288 = vcombine.low %v4284, %v4285
    %v4290 = vunpack.c.l.s4 1983009808
    %v4291 = vunpack.c.0.s8 %v4290
    %v4292 = vlaneseq
    %v4293 = vshrl.u32 %v4292, 7
    %v4294 = vsub.s32 %v4291, %v4293
    %v4295 = vrot.slane %v4288, %v4294
    %v4296 = vcombine.high %v4295, %v4295
    %s4298 = scalar_lea.vmem [#allocation2], 36
    %4299 = vst [vmem:[%s4298] sm:$0xf] %v4296
    %4300 = vst [vmem:[#allocation4] sm:$0xf] %v4296
    // Predicated region
    $region42: #{extra_corpus_q_memory_forward.7} parent=1 // pred_check
      _
    $region43: #{extra_corpus_q_memory_forward.7} parent=1 // pred_check_branch
      %4302 = sbr.rel (0) target = $region45
    $region44: #{extra_corpus_q_memory_forward.7} parent=1 // pred_region
      %s4304 = ssub.s32 640, 640
      %4305 = vsyncadd [#allocation3], %s4304
      %s4306 = sshll.u32 [#allocation2], 4
      %s4307 = int_to_ptr.vmem [resolvable:$true] %s4306
      %4312 = dma.vmem_to_hbm [thread:$0]  %s4307, 640, %s10, [#allocation3], 64, 64, 4
    $region45: #{extra_corpus_q_memory_forward.7} parent=1 // pred_fallthru
      _
    // Predicated region
    $region46: #{extra_corpus_q_memory_forward.7} parent=1 // pred_check
      _
    $region47: #{extra_corpus_q_memory_forward.7} parent=1 // pred_check_branch
      %4314 = sbr.rel (0) target = $region49
    $region48: #{extra_corpus_q_memory_forward.7} parent=1 // pred_region
      %s4316 = ssub.s32 64, 64
      %4317 = vsyncadd [#allocation5], %s4316
      %s4319 = sshll.u32 [#allocation4], 4
      %s4320 = int_to_ptr.vmem [resolvable:$true] %s4319
      %4322 = dma.vmem_to_hbm [thread:$0]  %s4320, 64, %s11, [#allocation5]
    $region49: #{extra_corpus_q_memory_forward.7} parent=1 // pred_fallthru
      _
    // Predicated region
    $region50: #{extra_corpus_q_memory_forward.7} parent=1 // pred_check
      _
    $region51: #{extra_corpus_q_memory_forward.7} parent=1 // pred_check_branch
      %4324 = sbr.rel (0) target = $region53
    $region52: #{extra_corpus_q_memory_forward.7} parent=1 // pred_region
      %4325 = dma.done [#allocation3], 640
    $region53: #{extra_corpus_q_memory_forward.7} parent=1 // pred_fallthru
      _
    // Predicated region
    $region54: #{extra_corpus_q_memory_forward.7} parent=1 // pred_check
      _
    $region55: #{extra_corpus_q_memory_forward.7} parent=1 // pred_check_branch
      %4327 = sbr.rel (0) target = $region57
    $region56: #{extra_corpus_q_memory_forward.7} parent=1 // pred_region
      %4328 = dma.done [#allocation5], 64
    $region57: #{extra_corpus_q_memory_forward.7} parent=1 // pred_fallthru
      _
    %4329 = vsyncpa [#allocation3], 1
    %4330 = vsyncpa [#allocation5], 1

</llo_original>
